<compile_context>
chip_gen: v6e
topology: v6e:2x2x1
jax: 0.10.0
libtpu: 0.0.40
codegen_flags: <defaults>
</compile_context>

<pallas_src>
import functools

import jax
import jax.numpy as jnp
from jax.experimental import pallas as pl
from jax.experimental.pallas import tpu as pltpu

EPS = 1e-5
LANE = 128                       # lane-dense channel padding for every slab
_INV_SQRT2 = 0.7071067811865476


def _gelu(x):
    # exact (erf-based) GELU, matching torch.nn.GELU() default
    return 0.5 * x * (1.0 + jax.lax.erf(x * _INV_SQRT2))


def _colstats(x):
    """Per-channel [sum ; sum of squares] of a (rows, C) tile -> (1, 2, C)."""
    return jnp.stack([jnp.sum(x, axis=0), jnp.sum(x * x, axis=0)])[None]


# ------------------------------ Pallas kernels ------------------------------

def _conv_first_kernel(x_ref, w3_ref, wsc_ref,
                       y3_ref, st3_ref, ysc_ref, stsc_ref, *, tile_h, width):
    """Layer 1: merged-branch 3x3 conv (implicit GEMM over a row-halo slab)
    fused with the 1x1 shortcut conv (shares the input tile).  Emits raw
    (pre-BN) outputs plus per-tile partial BN statistics."""
    x = x_ref[0].astype(jnp.bfloat16)                    # (tile_h+2, W+2, Cin)
    acc = None
    for kh in range(3):
        for kw in range(3):
            patch = x[kh:kh + tile_h, kw:kw + width, :].reshape(
                tile_h * width, x.shape[-1])
            d = jnp.dot(patch, w3_ref[kh * 3 + kw],
                        preferred_element_type=jnp.float32)
            acc = d if acc is None else acc + d
    y3_ref[...] = acc
    st3_ref[...] = _colstats(acc)

    # fused 1x1 shortcut conv on the interior (non-halo) pixels
    xin = x[1:1 + tile_h, 1:1 + width, :].reshape(tile_h * width, x.shape[-1])
    sc = jnp.dot(xin, wsc_ref[...], preferred_element_type=jnp.float32)
    ysc_ref[...] = sc
    stsc_ref[...] = _colstats(sc)


def _conv_kernel(x_ref, aff_ref, w_ref, y_ref, yst_ref, ast_ref,
                 *, tile_h, width):
    """Chain conv layer: applies the *previous* layer's BatchNorm (global
    batch stats folded into scale/shift) + GELU to its raw input slab, then
    the merged-branch 3x3 conv as nine shifted bf16 matmuls.  Also emits
    partial stats of the activated input (these are exactly the bn_1 /
    bn_1_2 statistics for that channel group -> no extra HBM pass later)."""
    x = x_ref[0]                                          # (tile_h+2, W+2, 128)
    xn = _gelu(x * aff_ref[0:1, :] + aff_ref[1:2, :])     # prev BN + GELU (f32)
    xb = xn.astype(jnp.bfloat16)
    acc = None
    for kh in range(3):
        for kw in range(3):
            patch = xb[kh:kh + tile_h, kw:kw + width, :].reshape(
                tile_h * width, LANE)
            d = jnp.dot(patch, w_ref[kh * 3 + kw],
                        preferred_element_type=jnp.float32)
            acc = d if acc is None else acc + d
    y_ref[...] = acc
    yst_ref[...] = _colstats(acc)
    a_in = xn[1:1 + tile_h, 1:1 + width, :].reshape(tile_h * width, LANE)
    ast_ref[...] = _colstats(a_in)


def _act_stats_kernel(y_ref, aff_ref, st_ref):
    """Partial stats of gelu(batchnorm(y)) for the last chain layer (it has
    no consumer conv to fuse this into)."""
    g = _gelu(y_ref[...] * aff_ref[0:1, :] + aff_ref[1:2, :])
    st_ref[...] = _colstats(g)


def _merge_kernel(ysc_ref, y3_ref, y5_ref, y7_ref, coef_ref,
                  s3_ref, s5_ref, s7_ref, o_ref, st_ref):
    """Fused residual merge:  s = gelu( shortcut_bn + bn_1(cat1) + bn_1_2(cat2) ).
    All BN means/vars are global batch statistics pre-folded into per-channel
    scale/shift rows of `coef`.  The channel regrouping (merged branch slab ->
    cat position, summing branch1 + branch2) is done with 0/1 selection
    matrices on the otherwise idle MXU so every store stays 128-lane dense.
    Also emits the partial stats of s for bn_2."""
    coef = coef_ref[...]
    s = ysc_ref[...] * coef[0:1] + coef[1:2]              # shortcut conv-BN

    def piece(y, i, sel_ref):
        g = _gelu(y * coef[i:i + 1] + coef[i + 1:i + 2])          # conv BN + GELU
        n = g * coef[i + 2:i + 3] + coef[i + 3:i + 4]             # bn_1 / bn_1_2
        return jnp.dot(n, sel_ref[...], preferred_element_type=jnp.float32)

    s = s + piece(y3_ref[...], 2, s3_ref)
    s = s + piece(y5_ref[...], 6, s5_ref)
    s = s + piece(y7_ref[...], 10, s7_ref)
    s = _gelu(s)
    o_ref[...] = s
    st_ref[...] = _colstats(s)


def _affine_kernel(x_ref, aff_ref, o_ref):
    """Final bn_2 normalization (global stats folded into scale/shift)."""
    o_ref[...] = x_ref[...] * aff_ref[0:1, :] + aff_ref[1:2, :]


# ----------------------------- pallas_call wrappers --------------------------

def _cparams():
    return pltpu.CompilerParams(
        dimension_semantics=("parallel",),        # shard row tiles across TCs
        vmem_limit_bytes=48 * 1024 * 1024,        # explicit budget (v7x: 64 MiB)
    )


def _cost(flops, transcendentals, bytes_accessed):
    return pl.CostEstimate(flops=int(flops), transcendentals=int(transcendentals),
                           bytes_accessed=int(bytes_accessed))


def conv_first(x_halo, w3, wsc, *, tile_h, width, rows_total):
    steps = x_halo.shape[0]
    rows = tile_h * width
    cin = x_halo.shape[-1]
    return pl.pallas_call(
        functools.partial(_conv_first_kernel, tile_h=tile_h, width=width),
        grid=(steps,),
        in_specs=[
            pl.BlockSpec((1, tile_h + 2, width + 2, cin), lambda i: (i, 0, 0, 0)),
            pl.BlockSpec((9, cin, LANE), lambda i: (0, 0, 0)),
            pl.BlockSpec((cin, LANE), lambda i: (0, 0)),
        ],
        out_specs=(
            pl.BlockSpec((rows, LANE), lambda i: (i, 0)),
            pl.BlockSpec((1, 2, LANE), lambda i: (i, 0, 0)),
            pl.BlockSpec((rows, LANE), lambda i: (i, 0)),
            pl.BlockSpec((1, 2, LANE), lambda i: (i, 0, 0)),
        ),
        out_shape=(
            jax.ShapeDtypeStruct((rows_total, LANE), jnp.float32),
            jax.ShapeDtypeStruct((steps, 2, LANE), jnp.float32),
            jax.ShapeDtypeStruct((rows_total, LANE), jnp.float32),
            jax.ShapeDtypeStruct((steps, 2, LANE), jnp.float32),
        ),
        compiler_params=_cparams(),
        cost_estimate=_cost(2 * rows_total * 10 * cin * LANE, 0,
                            4 * (x_halo.size + 2 * rows_total * LANE)),
    )(x_halo, w3, wsc)


def conv_chain(x_halo, aff_in, w, *, tile_h, width, rows_total):
    steps = x_halo.shape[0]
    rows = tile_h * width
    return pl.pallas_call(
        functools.partial(_conv_kernel, tile_h=tile_h, width=width),
        grid=(steps,),
        in_specs=[
            pl.BlockSpec((1, tile_h + 2, width + 2, LANE), lambda i: (i, 0, 0, 0)),
            pl.BlockSpec((2, LANE), lambda i: (0, 0)),
            pl.BlockSpec((9, LANE, LANE), lambda i: (0, 0, 0)),
        ],
        out_specs=(
            pl.BlockSpec((rows, LANE), lambda i: (i, 0)),
            pl.BlockSpec((1, 2, LANE), lambda i: (i, 0, 0)),
            pl.BlockSpec((1, 2, LANE), lambda i: (i, 0, 0)),
        ),
        out_shape=(
            jax.ShapeDtypeStruct((rows_total, LANE), jnp.float32),
            jax.ShapeDtypeStruct((steps, 2, LANE), jnp.float32),
            jax.ShapeDtypeStruct((steps, 2, LANE), jnp.float32),
        ),
        compiler_params=_cparams(),
        cost_estimate=_cost(2 * rows_total * 9 * LANE * LANE,
                            2 * rows_total * LANE,
                            4 * (x_halo.size + rows_total * LANE)),
    )(x_halo, aff_in, w)


def act_stats(y, aff, *, rows):
    steps = y.shape[0] // rows
    return pl.pallas_call(
        _act_stats_kernel,
        grid=(steps,),
        in_specs=[
            pl.BlockSpec((rows, LANE), lambda i: (i, 0)),
            pl.BlockSpec((2, LANE), lambda i: (0, 0)),
        ],
        out_specs=pl.BlockSpec((1, 2, LANE), lambda i: (i, 0, 0)),
        out_shape=jax.ShapeDtypeStruct((steps, 2, LANE), jnp.float32),
        compiler_params=_cparams(),
    )(y, aff)


def merge_residual(ysc, y3, y5, y7, coef, sel3, sel5, sel7, *, rows):
    total = ysc.shape[0]
    steps = total // rows
    slab = pl.BlockSpec((rows, LANE), lambda i: (i, 0))
    sel = pl.BlockSpec((LANE, LANE), lambda i: (0, 0))
    return pl.pallas_call(
        _merge_kernel,
        grid=(steps,),
        in_specs=[slab, slab, slab, slab,
                  pl.BlockSpec((14, LANE), lambda i: (0, 0)),
                  sel, sel, sel],
        out_specs=(
            pl.BlockSpec((rows, LANE), lambda i: (i, 0)),
            pl.BlockSpec((1, 2, LANE), lambda i: (i, 0, 0)),
        ),
        out_shape=(
            jax.ShapeDtypeStruct((total, LANE), jnp.float32),
            jax.ShapeDtypeStruct((steps, 2, LANE), jnp.float32),
        ),
        compiler_params=_cparams(),
        cost_estimate=_cost(6 * total * LANE * LANE, 4 * total * LANE,
                            4 * total * LANE * 6),
    )(ysc, y3, y5, y7, coef, sel3, sel5, sel7)


def bn_apply(x, aff, *, rows):
    total = x.shape[0]
    steps = total // rows
    return pl.pallas_call(
        _affine_kernel,
        grid=(steps,),
        in_specs=[
            pl.BlockSpec((rows, LANE), lambda i: (i, 0)),
            pl.BlockSpec((2, LANE), lambda i: (0, 0)),
        ],
        out_specs=pl.BlockSpec((rows, LANE), lambda i: (i, 0)),
        out_shape=jax.ShapeDtypeStruct((total, LANE), jnp.float32),
        compiler_params=_cparams(),
    )(x, aff)


# --------------------------------- JAX glue ----------------------------------

def _reflect_pad(x_nhwc):
    # ReflectionPad2d((1,1,1,1)) for the 3x3 'same' convs
    return jnp.pad(x_nhwc, ((0, 0), (1, 1), (1, 1), (0, 0)), mode="reflect")


def _halo_slabs(xp, tile_h):
    """(N, H+2, W+2, C) padded map -> (N*T, tile_h+2, W+2, C) row slabs with a
    1-row halo on each side.  Cheap XLA gather (~(tile_h+2)/tile_h of the base
    bytes) instead of materializing a 9x im2col in HBM."""
    n, hp, wp, c = xp.shape
    h = hp - 2
    t = h // tile_h
    idx = (jnp.arange(t)[:, None] * tile_h
           + jnp.arange(tile_h + 2)[None, :]).reshape(-1)
    slabs = jnp.take(xp, idx, axis=1)                 # (N, T*(tile_h+2), W+2, C)
    return slabs.reshape(n * t, tile_h + 2, wp, c)


def _choose_tile_h(h, w, target_rows=2048):
    """Largest tile_h dividing H with tile_h*W <= target_rows and a
    sublane-friendly (multiple of 8) row count."""
    best = None
    for t in range(1, h + 1):
        if h % t == 0 and t * w <= target_rows and (t * w) % 8 == 0:
            best = t
    return best if best is not None else h


def _finalize_stats(part, count):
    tot = jnp.sum(part, axis=0)                       # (2, LANE)
    mean = tot[0] / count
    var = jnp.maximum(tot[1] / count - mean * mean, 0.0)   # one-pass variance
    return mean, var


def _fold_affine(mean, var, gamma, beta):
    scale = gamma * jax.lax.rsqrt(var + EPS)
    return jnp.stack([scale, beta - mean * scale])    # (2, LANE)


def _lane_pad_vec(v, fill):
    return jnp.concatenate([v.astype(jnp.float32),
                            jnp.full((LANE - v.shape[0],), fill, jnp.float32)])


def _merge_first_weight(w1, w2, cin, c1):
    w = jnp.zeros((3, 3, cin, LANE), jnp.float32)
    w = w.at[..., :c1].set(w1).at[..., c1:2 * c1].set(w2)
    return w.reshape(9, cin, LANE).astype(jnp.bfloat16)


def _merge_chain_weight(w1, w2, ci, co):
    w = jnp.zeros((3, 3, LANE, LANE), jnp.float32)    # block-diagonal: branches
    w = w.at[:, :, :ci, :co].set(w1)                  # never mix channels
    w = w.at[:, :, ci:2 * ci, co:2 * co].set(w2)
    return w.reshape(9, LANE, LANE).astype(jnp.bfloat16)


def _shortcut_weight(wsc, cin, cout):
    return jnp.zeros((cin, LANE), jnp.float32).at[:, :cout].set(wsc).astype(
        jnp.bfloat16)


def _select_matrix(c, offset):
    """0/1 matrix summing branch-1 ([0,c)) and branch-2 ([c,2c)) channels of a
    merged slab into cat-aligned output lanes [offset, offset+c)."""
    idx = jnp.arange(c)
    s = jnp.zeros((LANE, LANE), jnp.float32)
    s = s.at[idx, offset + idx].set(1.0)
    s = s.at[c + idx, offset + idx].set(1.0)
    return s


def init_params(in_channels, u, key, alpha=1.67):
    w = alpha * u
    c1, c2, c3 = int(w * 0.167), int(w * 0.333), int(w * 0.5)
    cout = c1 + c2 + c3
    ks = jax.random.split(key, 7)

    def wn(k, shape):
        return jax.random.normal(k, shape, dtype=jnp.float32) * 0.1

    ones = lambda c: jnp.ones((c,), jnp.float32)
    zeros = lambda c: jnp.zeros((c,), jnp.float32)
    return {
        "c1": c1, "c2": c2, "c3": c3, "cout": cout,
        "w_sc": wn(ks[0], (in_channels, cout)),          # 1x1 conv (Cin, Cout)
        "w3_1": wn(ks[1], (3, 3, in_channels, c1)),      # HWIO
        "w5_1": wn(ks[2], (3, 3, c1, c2)),
        "w7_1": wn(ks[3], (3, 3, c2, c3)),
        "w3_2": wn(ks[4], (3, 3, in_channels, c1)),
        "w5_2": wn(ks[5], (3, 3, c1, c2)),
        "w7_2": wn(ks[6], (3, 3, c2, c3)),
        # BatchNorm affine params (torch defaults)
        "g_sc": ones(cout), "b_sc": zeros(cout),
        "g_bn1": ones(cout), "b_bn1": zeros(cout),
        "g_bn12": ones(cout), "b_bn12": zeros(cout),
        "g_bn2": ones(cout), "b_bn2": zeros(cout),
    }


def gdc_block_forward(x_nchw, params):
    # TODO(synk): dropout path (use_dropout=True) and BatchNorm running-stat
    # updates (training side effects) are not materialized.
    x = jnp.transpose(x_nchw, (0, 2, 3, 1)).astype(jnp.float32)     # NHWC
    n, h, w, cin = x.shape
    m = n * h * w
    c1, c2, c3, cout = params["c1"], params["c2"], params["c3"], params["cout"]

    tile_h = _choose_tile_h(h, w)
    rows = tile_h * w
    ones_l = jnp.ones((LANE,), jnp.float32)
    zeros_l = jnp.zeros((LANE,), jnp.float32)

    # ---- layer 1: merged-branch 3x3 conv + fused 1x1 shortcut conv ---------
    xh = _halo_slabs(_reflect_pad(x), tile_h)
    y3, st3, ysc, stsc = conv_first(
        xh,
        _merge_first_weight(params["w3_1"], params["w3_2"], cin, c1),
        _shortcut_weight(params["w_sc"], cin, cout),
        tile_h=tile_h, width=w, rows_total=m)
    aff3 = _fold_affine(*_finalize_stats(st3, m), ones_l, zeros_l)  # affine=False
    aff_sc = _fold_affine(*_finalize_stats(stsc, m),
                          _lane_pad_vec(params["g_sc"], 1.0),
                          _lane_pad_vec(params["b_sc"], 0.0))

    # ---- layer 2 ("conv5x5"): consumes gelu(bn(y3)) inside the kernel ------
    y3h = _halo_slabs(_reflect_pad(y3.reshape(n, h, w, LANE)), tile_h)
    y5, st5, ast3 = conv_chain(
        y3h, aff3, _merge_chain_weight(params["w5_1"], params["w5_2"], c1, c2),
        tile_h=tile_h, width=w, rows_total=m)
    aff5 = _fold_affine(*_finalize_stats(st5, m), ones_l, zeros_l)

    # ---- layer 3 ("conv7x7"): consumes gelu(bn(y5)) inside the kernel ------
    y5h = _halo_slabs(_reflect_pad(y5.reshape(n, h, w, LANE)), tile_h)
    y7, st7, ast5 = conv_chain(
        y5h, aff5, _merge_chain_weight(params["w7_1"], params["w7_2"], c2, c3),
        tile_h=tile_h, width=w, rows_total=m)
    aff7 = _fold_affine(*_finalize_stats(st7, m), ones_l, zeros_l)

    # stats of gelu(bn(y7)) -- the last chain link has no consumer conv
    ast7 = act_stats(y7, aff7, rows=rows)

    # ---- fold bn_1 / bn_1_2 (global batch stats, affine) per slab channel ---
    def cat_affine(ast, lo, hi):
        gamma = _lane_pad_vec(jnp.concatenate(
            [params["g_bn1"][lo:hi], params["g_bn12"][lo:hi]]), 1.0)
        beta = _lane_pad_vec(jnp.concatenate(
            [params["b_bn1"][lo:hi], params["b_bn12"][lo:hi]]), 0.0)
        return _fold_affine(*_finalize_stats(ast, m), gamma, beta)

    coef = jnp.concatenate(
        [aff_sc, aff3, cat_affine(ast3, 0, c1),
         aff5, cat_affine(ast5, c1, c1 + c2),
         aff7, cat_affine(ast7, c1 + c2, cout)], axis=0)            # (14, LANE)

    # ---- fused residual merge + gelu (+ partial stats for bn_2) ------------
    s_act, st_s = merge_residual(
        ysc, y3, y5, y7, coef,
        _select_matrix(c1, 0), _select_matrix(c2, c1),
        _select_matrix(c3, c1 + c2), rows=rows)
    aff2 = _fold_affine(*_finalize_stats(st_s, m),
                        _lane_pad_vec(params["g_bn2"], 1.0),
                        _lane_pad_vec(params["b_bn2"], 0.0))
    out = bn_apply(s_act, aff2, rows=rows)

    out = out.reshape(n, h, w, LANE)[..., :cout]
    return jnp.transpose(out, (0, 3, 1, 2))                         # NCHW


if __name__ == "__main__":
    in_channels, u = 4, 12     # -> c1=3, c2=6, c3=10, out_channel=19
    key = jax.random.PRNGKey(0)
    kp, kx = jax.random.split(key)
    params = init_params(in_channels, u, kp)
    x = jax.random.normal(kx, (2, in_channels, 16, 16), dtype=jnp.float32)

    fwd = jax.jit(lambda xx: gdc_block_forward(xx, params))
    out = fwd(x)
    jax.block_until_ready(out)
    assert out.shape == (2, params["cout"], 16, 16), out.shape
    assert bool(jnp.all(jnp.isfinite(out)))
    print("KERNEL_OK")
</pallas_src>

<mosaic_0001>
module attributes {stable_mosaic.version = 11 : i64} {
  func.func @_conv_first_kernel(%arg0: i32, %arg1: memref<1x18x18x4xf32, #tpu.memory_space<vmem>>, %arg2: memref<9x4x128xbf16, #tpu.memory_space<vmem>>, %arg3: memref<4x128xbf16, #tpu.memory_space<vmem>>, %arg4: memref<256x128xf32, #tpu.memory_space<vmem>>, %arg5: memref<1x2x128xf32, #tpu.memory_space<vmem>>, %arg6: memref<256x128xf32, #tpu.memory_space<vmem>>, %arg7: memref<1x2x128xf32, #tpu.memory_space<vmem>>) attributes {dimension_semantics = [#tpu.dimension_semantics<parallel>], iteration_bounds = array<i64: 2>, scalar_prefetch = 0 : i64, scratch_operands = 0 : i64, tpu.core_type = #tpu.core_type<tc>, window_params = [{transform_indices = @transform_0, window_bounds = array<i64: 1, 18, 18, 4>}, {pipeline_mode = #tpu.pipeline_mode<synchronous>, transform_indices = @transform_1, window_bounds = array<i64: 9, 4, 128>}, {pipeline_mode = #tpu.pipeline_mode<synchronous>, transform_indices = @transform_2, window_bounds = array<i64: 4, 128>}, {transform_indices = @transform_3, window_bounds = array<i64: 256, 128>}, {transform_indices = @transform_4, window_bounds = array<i64: 1, 2, 128>}, {transform_indices = @transform_5, window_bounds = array<i64: 256, 128>}, {transform_indices = @transform_6, window_bounds = array<i64: 1, 2, 128>}]} {
    %c0 = arith.constant 0 : index
    %c0_0 = arith.constant 0 : index
    %c0_1 = arith.constant 0 : index
    %c0_2 = arith.constant 0 : index
    %0 = vector.load %arg1[%c0, %c0_0, %c0_1, %c0_2] : memref<1x18x18x4xf32, #tpu.memory_space<vmem>>, vector<1x18x18x4xf32>
    %1 = vector.shape_cast %0 : vector<1x18x18x4xf32> to vector<18x18x4xf32>
    %2 = arith.truncf %1 : vector<18x18x4xf32> to vector<18x18x4xbf16>
    %3 = vector.extract_strided_slice %2 {offsets = [0, 0, 0], sizes = [16, 16, 4], strides = [1, 1, 1]} : vector<18x18x4xbf16> to vector<16x16x4xbf16>
    %4 = vector.shape_cast %3 : vector<16x16x4xbf16> to vector<256x4xbf16>
    %c0_3 = arith.constant 0 : index
    %c0_4 = arith.constant 0 : index
    %c0_5 = arith.constant 0 : index
    %5 = vector.load %arg2[%c0_3, %c0_4, %c0_5] : memref<9x4x128xbf16, #tpu.memory_space<vmem>>, vector<1x4x128xbf16>
    %6 = vector.shape_cast %5 : vector<1x4x128xbf16> to vector<4x128xbf16>
    %cst = arith.constant dense<0.000000e+00> : vector<256x128xf32>
    %7 = tpu.matmul %4, %6, %cst {dimension_numbers = #tpu.dot_dimension_numbers<[1], [0], [0], [1], [0, 0, 1, 1], [], []>} : vector<256x4xbf16>, vector<4x128xbf16>, vector<256x128xf32> -> vector<256x128xf32>
    %8 = vector.extract_strided_slice %2 {offsets = [0, 1, 0], sizes = [16, 16, 4], strides = [1, 1, 1]} : vector<18x18x4xbf16> to vector<16x16x4xbf16>
    %9 = vector.shape_cast %8 : vector<16x16x4xbf16> to vector<256x4xbf16>
    %c1 = arith.constant 1 : index
    %c0_6 = arith.constant 0 : index
    %c0_7 = arith.constant 0 : index
    %10 = vector.load %arg2[%c1, %c0_6, %c0_7] : memref<9x4x128xbf16, #tpu.memory_space<vmem>>, vector<1x4x128xbf16>
    %11 = vector.shape_cast %10 : vector<1x4x128xbf16> to vector<4x128xbf16>
    %cst_8 = arith.constant dense<0.000000e+00> : vector<256x128xf32>
    %12 = tpu.matmul %9, %11, %cst_8 {dimension_numbers = #tpu.dot_dimension_numbers<[1], [0], [0], [1], [0, 0, 1, 1], [], []>} : vector<256x4xbf16>, vector<4x128xbf16>, vector<256x128xf32> -> vector<256x128xf32>
    %13 = arith.addf %7, %12 : vector<256x128xf32>
    %14 = vector.extract_strided_slice %2 {offsets = [0, 2, 0], sizes = [16, 16, 4], strides = [1, 1, 1]} : vector<18x18x4xbf16> to vector<16x16x4xbf16>
    %15 = vector.shape_cast %14 : vector<16x16x4xbf16> to vector<256x4xbf16>
    %c2 = arith.constant 2 : index
    %c0_9 = arith.constant 0 : index
    %c0_10 = arith.constant 0 : index
    %16 = vector.load %arg2[%c2, %c0_9, %c0_10] : memref<9x4x128xbf16, #tpu.memory_space<vmem>>, vector<1x4x128xbf16>
    %17 = vector.shape_cast %16 : vector<1x4x128xbf16> to vector<4x128xbf16>
    %cst_11 = arith.constant dense<0.000000e+00> : vector<256x128xf32>
    %18 = tpu.matmul %15, %17, %cst_11 {dimension_numbers = #tpu.dot_dimension_numbers<[1], [0], [0], [1], [0, 0, 1, 1], [], []>} : vector<256x4xbf16>, vector<4x128xbf16>, vector<256x128xf32> -> vector<256x128xf32>
    %19 = arith.addf %13, %18 : vector<256x128xf32>
    %20 = vector.extract_strided_slice %2 {offsets = [1, 0, 0], sizes = [16, 16, 4], strides = [1, 1, 1]} : vector<18x18x4xbf16> to vector<16x16x4xbf16>
    %21 = vector.shape_cast %20 : vector<16x16x4xbf16> to vector<256x4xbf16>
    %c3 = arith.constant 3 : index
    %c0_12 = arith.constant 0 : index
    %c0_13 = arith.constant 0 : index
    %22 = vector.load %arg2[%c3, %c0_12, %c0_13] : memref<9x4x128xbf16, #tpu.memory_space<vmem>>, vector<1x4x128xbf16>
    %23 = vector.shape_cast %22 : vector<1x4x128xbf16> to vector<4x128xbf16>
    %cst_14 = arith.constant dense<0.000000e+00> : vector<256x128xf32>
    %24 = tpu.matmul %21, %23, %cst_14 {dimension_numbers = #tpu.dot_dimension_numbers<[1], [0], [0], [1], [0, 0, 1, 1], [], []>} : vector<256x4xbf16>, vector<4x128xbf16>, vector<256x128xf32> -> vector<256x128xf32>
    %25 = arith.addf %19, %24 : vector<256x128xf32>
    %26 = vector.extract_strided_slice %2 {offsets = [1, 1, 0], sizes = [16, 16, 4], strides = [1, 1, 1]} : vector<18x18x4xbf16> to vector<16x16x4xbf16>
    %27 = vector.shape_cast %26 : vector<16x16x4xbf16> to vector<256x4xbf16>
    %c4 = arith.constant 4 : index
    %c0_15 = arith.constant 0 : index
    %c0_16 = arith.constant 0 : index
    %28 = vector.load %arg2[%c4, %c0_15, %c0_16] : memref<9x4x128xbf16, #tpu.memory_space<vmem>>, vector<1x4x128xbf16>
    %29 = vector.shape_cast %28 : vector<1x4x128xbf16> to vector<4x128xbf16>
    %cst_17 = arith.constant dense<0.000000e+00> : vector<256x128xf32>
    %30 = tpu.matmul %27, %29, %cst_17 {dimension_numbers = #tpu.dot_dimension_numbers<[1], [0], [0], [1], [0, 0, 1, 1], [], []>} : vector<256x4xbf16>, vector<4x128xbf16>, vector<256x128xf32> -> vector<256x128xf32>
    %31 = arith.addf %25, %30 : vector<256x128xf32>
    %32 = vector.extract_strided_slice %2 {offsets = [1, 2, 0], sizes = [16, 16, 4], strides = [1, 1, 1]} : vector<18x18x4xbf16> to vector<16x16x4xbf16>
    %33 = vector.shape_cast %32 : vector<16x16x4xbf16> to vector<256x4xbf16>
    %c5 = arith.constant 5 : index
    %c0_18 = arith.constant 0 : index
    %c0_19 = arith.constant 0 : index
    %34 = vector.load %arg2[%c5, %c0_18, %c0_19] : memref<9x4x128xbf16, #tpu.memory_space<vmem>>, vector<1x4x128xbf16>
    %35 = vector.shape_cast %34 : vector<1x4x128xbf16> to vector<4x128xbf16>
    %cst_20 = arith.constant dense<0.000000e+00> : vector<256x128xf32>
    %36 = tpu.matmul %33, %35, %cst_20 {dimension_numbers = #tpu.dot_dimension_numbers<[1], [0], [0], [1], [0, 0, 1, 1], [], []>} : vector<256x4xbf16>, vector<4x128xbf16>, vector<256x128xf32> -> vector<256x128xf32>
    %37 = arith.addf %31, %36 : vector<256x128xf32>
    %38 = vector.extract_strided_slice %2 {offsets = [2, 0, 0], sizes = [16, 16, 4], strides = [1, 1, 1]} : vector<18x18x4xbf16> to vector<16x16x4xbf16>
    %39 = vector.shape_cast %38 : vector<16x16x4xbf16> to vector<256x4xbf16>
    %c6 = arith.constant 6 : index
    %c0_21 = arith.constant 0 : index
    %c0_22 = arith.constant 0 : index
    %40 = vector.load %arg2[%c6, %c0_21, %c0_22] : memref<9x4x128xbf16, #tpu.memory_space<vmem>>, vector<1x4x128xbf16>
    %41 = vector.shape_cast %40 : vector<1x4x128xbf16> to vector<4x128xbf16>
    %cst_23 = arith.constant dense<0.000000e+00> : vector<256x128xf32>
    %42 = tpu.matmul %39, %41, %cst_23 {dimension_numbers = #tpu.dot_dimension_numbers<[1], [0], [0], [1], [0, 0, 1, 1], [], []>} : vector<256x4xbf16>, vector<4x128xbf16>, vector<256x128xf32> -> vector<256x128xf32>
    %43 = arith.addf %37, %42 : vector<256x128xf32>
    %44 = vector.extract_strided_slice %2 {offsets = [2, 1, 0], sizes = [16, 16, 4], strides = [1, 1, 1]} : vector<18x18x4xbf16> to vector<16x16x4xbf16>
    %45 = vector.shape_cast %44 : vector<16x16x4xbf16> to vector<256x4xbf16>
    %c7 = arith.constant 7 : index
    %c0_24 = arith.constant 0 : index
    %c0_25 = arith.constant 0 : index
    %46 = vector.load %arg2[%c7, %c0_24, %c0_25] : memref<9x4x128xbf16, #tpu.memory_space<vmem>>, vector<1x4x128xbf16>
    %47 = vector.shape_cast %46 : vector<1x4x128xbf16> to vector<4x128xbf16>
    %cst_26 = arith.constant dense<0.000000e+00> : vector<256x128xf32>
    %48 = tpu.matmul %45, %47, %cst_26 {dimension_numbers = #tpu.dot_dimension_numbers<[1], [0], [0], [1], [0, 0, 1, 1], [], []>} : vector<256x4xbf16>, vector<4x128xbf16>, vector<256x128xf32> -> vector<256x128xf32>
    %49 = arith.addf %43, %48 : vector<256x128xf32>
    %50 = vector.extract_strided_slice %2 {offsets = [2, 2, 0], sizes = [16, 16, 4], strides = [1, 1, 1]} : vector<18x18x4xbf16> to vector<16x16x4xbf16>
    %51 = vector.shape_cast %50 : vector<16x16x4xbf16> to vector<256x4xbf16>
    %c8 = arith.constant 8 : index
    %c0_27 = arith.constant 0 : index
    %c0_28 = arith.constant 0 : index
    %52 = vector.load %arg2[%c8, %c0_27, %c0_28] : memref<9x4x128xbf16, #tpu.memory_space<vmem>>, vector<1x4x128xbf16>
    %53 = vector.shape_cast %52 : vector<1x4x128xbf16> to vector<4x128xbf16>
    %cst_29 = arith.constant dense<0.000000e+00> : vector<256x128xf32>
    %54 = tpu.matmul %51, %53, %cst_29 {dimension_numbers = #tpu.dot_dimension_numbers<[1], [0], [0], [1], [0, 0, 1, 1], [], []>} : vector<256x4xbf16>, vector<4x128xbf16>, vector<256x128xf32> -> vector<256x128xf32>
    %55 = arith.addf %49, %54 : vector<256x128xf32>
    %c0_30 = arith.constant 0 : index
    %c0_31 = arith.constant 0 : index
    %56 = vector.load %arg4[%c0_30, %c0_31] : memref<256x128xf32, #tpu.memory_space<vmem>>, vector<256x128xf32>
    tpu.vector_store %arg4[%c0_30, %c0_31], %55 {strides = array<i32>} : memref<256x128xf32, #tpu.memory_space<vmem>>, vector<256x128xf32>,
    %cst_32 = arith.constant dense<0.000000e+00> : vector<128xf32>
    %57 = vector.multi_reduction <add>, %55, %cst_32 [0] : vector<256x128xf32> to vector<128xf32>
    %58 = arith.mulf %55, %55 : vector<256x128xf32>
    %cst_33 = arith.constant dense<0.000000e+00> : vector<128xf32>
    %59 = vector.multi_reduction <add>, %58, %cst_33 [0] : vector<256x128xf32> to vector<128xf32>
    %60 = vector.shape_cast %57 : vector<128xf32> to vector<1x128xf32>
    %61 = vector.shape_cast %59 : vector<128xf32> to vector<1x128xf32>
    %62 = tpu.concatenate %60, %61 in 0 : vector<1x128xf32>, vector<1x128xf32> -> vector<2x128xf32>
    %63 = vector.shape_cast %62 : vector<2x128xf32> to vector<1x2x128xf32>
    %c0_34 = arith.constant 0 : index
    %c0_35 = arith.constant 0 : index
    %c0_36 = arith.constant 0 : index
    %64 = vector.load %arg5[%c0_34, %c0_35, %c0_36] : memref<1x2x128xf32, #tpu.memory_space<vmem>>, vector<1x2x128xf32>
    tpu.vector_store %arg5[%c0_34, %c0_35, %c0_36], %63 {strides = array<i32>} : memref<1x2x128xf32, #tpu.memory_space<vmem>>, vector<1x2x128xf32>,
    %65 = vector.extract_strided_slice %2 {offsets = [1, 1, 0], sizes = [16, 16, 4], strides = [1, 1, 1]} : vector<18x18x4xbf16> to vector<16x16x4xbf16>
    %66 = vector.shape_cast %65 : vector<16x16x4xbf16> to vector<256x4xbf16>
    %c0_37 = arith.constant 0 : index
    %c0_38 = arith.constant 0 : index
    %67 = vector.load %arg3[%c0_37, %c0_38] : memref<4x128xbf16, #tpu.memory_space<vmem>>, vector<4x128xbf16>
    %cst_39 = arith.constant dense<0.000000e+00> : vector<256x128xf32>
    %68 = tpu.matmul %66, %67, %cst_39 {dimension_numbers = #tpu.dot_dimension_numbers<[1], [0], [0], [1], [0, 0, 1, 1], [], []>} : vector<256x4xbf16>, vector<4x128xbf16>, vector<256x128xf32> -> vector<256x128xf32>
    %c0_40 = arith.constant 0 : index
    %c0_41 = arith.constant 0 : index
    %69 = vector.load %arg6[%c0_40, %c0_41] : memref<256x128xf32, #tpu.memory_space<vmem>>, vector<256x128xf32>
    tpu.vector_store %arg6[%c0_40, %c0_41], %68 {strides = array<i32>} : memref<256x128xf32, #tpu.memory_space<vmem>>, vector<256x128xf32>,
    %cst_42 = arith.constant dense<0.000000e+00> : vector<128xf32>
    %70 = vector.multi_reduction <add>, %68, %cst_42 [0] : vector<256x128xf32> to vector<128xf32>
    %71 = arith.mulf %68, %68 : vector<256x128xf32>
    %cst_43 = arith.constant dense<0.000000e+00> : vector<128xf32>
    %72 = vector.multi_reduction <add>, %71, %cst_43 [0] : vector<256x128xf32> to vector<128xf32>
    %73 = vector.shape_cast %70 : vector<128xf32> to vector<1x128xf32>
    %74 = vector.shape_cast %72 : vector<128xf32> to vector<1x128xf32>
    %75 = tpu.concatenate %73, %74 in 0 : vector<1x128xf32>, vector<1x128xf32> -> vector<2x128xf32>
    %76 = vector.shape_cast %75 : vector<2x128xf32> to vector<1x2x128xf32>
    %c0_44 = arith.constant 0 : index
    %c0_45 = arith.constant 0 : index
    %c0_46 = arith.constant 0 : index
    %77 = vector.load %arg7[%c0_44, %c0_45, %c0_46] : memref<1x2x128xf32, #tpu.memory_space<vmem>>, vector<1x2x128xf32>
    tpu.vector_store %arg7[%c0_44, %c0_45, %c0_46], %76 {strides = array<i32>} : memref<1x2x128xf32, #tpu.memory_space<vmem>>, vector<1x2x128xf32>,
    return
  }
  func.func @transform_0(%arg0: i32) -> (i32, i32, i32, i32) {
    %c0_i32 = arith.constant 0 : i32
    %c0_i32_0 = arith.constant 0 : i32
    %c0_i32_1 = arith.constant 0 : i32
    %c0_i32_2 = arith.constant 0 : i32
    return %arg0, %c0_i32, %c0_i32_0, %c0_i32_1 : i32, i32, i32, i32
  }
  func.func @transform_1(%arg0: i32) -> (i32, i32, i32) {
    %c0_i32 = arith.constant 0 : i32
    %c0_i32_0 = arith.constant 0 : i32
    %c0_i32_1 = arith.constant 0 : i32
    %c0_i32_2 = arith.constant 0 : i32
    return %c0_i32, %c0_i32_0, %c0_i32_1 : i32, i32, i32
  }
  func.func @transform_2(%arg0: i32) -> (i32, i32) {
    %c0_i32 = arith.constant 0 : i32
    %c0_i32_0 = arith.constant 0 : i32
    %c0_i32_1 = arith.constant 0 : i32
    return %c0_i32, %c0_i32_0 : i32, i32
  }
  func.func @transform_3(%arg0: i32) -> (i32, i32) {
    %c0_i32 = arith.constant 0 : i32
    %c0_i32_0 = arith.constant 0 : i32
    return %arg0, %c0_i32 : i32, i32
  }
  func.func @transform_4(%arg0: i32) -> (i32, i32, i32) {
    %c0_i32 = arith.constant 0 : i32
    %c0_i32_0 = arith.constant 0 : i32
    %c0_i32_1 = arith.constant 0 : i32
    return %arg0, %c0_i32, %c0_i32_0 : i32, i32, i32
  }
  func.func @transform_5(%arg0: i32) -> (i32, i32) {
    %c0_i32 = arith.constant 0 : i32
    %c0_i32_0 = arith.constant 0 : i32
    return %arg0, %c0_i32 : i32, i32
  }
  func.func @transform_6(%arg0: i32) -> (i32, i32, i32) {
    %c0_i32 = arith.constant 0 : i32
    %c0_i32_0 = arith.constant 0 : i32
    %c0_i32_1 = arith.constant 0 : i32
    return %arg0, %c0_i32, %c0_i32_0 : i32, i32, i32
  }
}

module attributes {stable_mosaic.version = 11 : i64} {
  func.func @_conv_kernel(%arg0: i32, %arg1: memref<1x18x18x128xf32, #tpu.memory_space<vmem>>, %arg2: memref<2x128xf32, #tpu.memory_space<vmem>>, %arg3: memref<9x128x128xbf16, #tpu.memory_space<vmem>>, %arg4: memref<256x128xf32, #tpu.memory_space<vmem>>, %arg5: memref<1x2x128xf32, #tpu.memory_space<vmem>>, %arg6: memref<1x2x128xf32, #tpu.memory_space<vmem>>) attributes {dimension_semantics = [#tpu.dimension_semantics<parallel>], iteration_bounds = array<i64: 2>, scalar_prefetch = 0 : i64, scratch_operands = 0 : i64, tpu.core_type = #tpu.core_type<tc>, window_params = [{transform_indices = @transform_0, window_bounds = array<i64: 1, 18, 18, 128>}, {pipeline_mode = #tpu.pipeline_mode<synchronous>, transform_indices = @transform_1, window_bounds = array<i64: 2, 128>}, {pipeline_mode = #tpu.pipeline_mode<synchronous>, transform_indices = @transform_2, window_bounds = array<i64: 9, 128, 128>}, {transform_indices = @transform_3, window_bounds = array<i64: 256, 128>}, {transform_indices = @transform_4, window_bounds = array<i64: 1, 2, 128>}, {transform_indices = @transform_5, window_bounds = array<i64: 1, 2, 128>}]} {
    %c0 = arith.constant 0 : index
    %c0_0 = arith.constant 0 : index
    %c0_1 = arith.constant 0 : index
    %c0_2 = arith.constant 0 : index
    %0 = vector.load %arg1[%c0, %c0_0, %c0_1, %c0_2] : memref<1x18x18x128xf32, #tpu.memory_space<vmem>>, vector<1x18x18x128xf32>
    %1 = vector.shape_cast %0 : vector<1x18x18x128xf32> to vector<18x18x128xf32>
    %c0_3 = arith.constant 0 : index
    %c0_4 = arith.constant 0 : index
    %2 = vector.load %arg2[%c0_3, %c0_4] : memref<2x128xf32, #tpu.memory_space<vmem>>, vector<1x128xf32>
    %3 = vector.shape_cast %2 : vector<1x128xf32> to vector<1x1x128xf32>
    %4 = vector.broadcast %3 : vector<1x1x128xf32> to vector<18x18x128xf32>
    %5 = arith.mulf %1, %4 : vector<18x18x128xf32>
    %c1 = arith.constant 1 : index
    %c0_5 = arith.constant 0 : index
    %6 = vector.load %arg2[%c1, %c0_5] : memref<2x128xf32, #tpu.memory_space<vmem>>, vector<1x128xf32>
    %7 = vector.shape_cast %6 : vector<1x128xf32> to vector<1x1x128xf32>
    %8 = vector.broadcast %7 : vector<1x1x128xf32> to vector<18x18x128xf32>
    %9 = arith.addf %5, %8 : vector<18x18x128xf32>
    %cst = arith.constant 5.000000e-01 : f32
    %10 = vector.broadcast %cst : f32 to vector<18x18x128xf32>
    %11 = arith.mulf %10, %9 : vector<18x18x128xf32>
    %cst_6 = arith.constant 0.707106769 : f32
    %12 = vector.broadcast %cst_6 : f32 to vector<18x18x128xf32>
    %13 = arith.mulf %9, %12 : vector<18x18x128xf32>
    %14 = math.erf %13 : vector<18x18x128xf32>
    %cst_7 = arith.constant 1.000000e+00 : f32
    %15 = vector.broadcast %cst_7 : f32 to vector<18x18x128xf32>
    %16 = arith.addf %15, %14 : vector<18x18x128xf32>
    %17 = arith.mulf %11, %16 : vector<18x18x128xf32>
    %18 = arith.truncf %17 : vector<18x18x128xf32> to vector<18x18x128xbf16>
    %19 = vector.extract_strided_slice %18 {offsets = [0, 0, 0], sizes = [16, 16, 128], strides = [1, 1, 1]} : vector<18x18x128xbf16> to vector<16x16x128xbf16>
    %20 = vector.shape_cast %19 : vector<16x16x128xbf16> to vector<256x128xbf16>
    %c0_8 = arith.constant 0 : index
    %c0_9 = arith.constant 0 : index
    %c0_10 = arith.constant 0 : index
    %21 = vector.load %arg3[%c0_8, %c0_9, %c0_10] : memref<9x128x128xbf16, #tpu.memory_space<vmem>>, vector<1x128x128xbf16>
    %22 = vector.shape_cast %21 : vector<1x128x128xbf16> to vector<128x128xbf16>
    %cst_11 = arith.constant dense<0.000000e+00> : vector<256x128xf32>
    %23 = tpu.matmul %20, %22, %cst_11 {dimension_numbers = #tpu.dot_dimension_numbers<[1], [0], [0], [1], [0, 0, 1, 1], [], []>} : vector<256x128xbf16>, vector<128x128xbf16>, vector<256x128xf32> -> vector<256x128xf32>
    %24 = vector.extract_strided_slice %18 {offsets = [0, 1, 0], sizes = [16, 16, 128], strides = [1, 1, 1]} : vector<18x18x128xbf16> to vector<16x16x128xbf16>
    %25 = vector.shape_cast %24 : vector<16x16x128xbf16> to vector<256x128xbf16>
    %c1_12 = arith.constant 1 : index
    %c0_13 = arith.constant 0 : index
    %c0_14 = arith.constant 0 : index
    %26 = vector.load %arg3[%c1_12, %c0_13, %c0_14] : memref<9x128x128xbf16, #tpu.memory_space<vmem>>, vector<1x128x128xbf16>
    %27 = vector.shape_cast %26 : vector<1x128x128xbf16> to vector<128x128xbf16>
    %cst_15 = arith.constant dense<0.000000e+00> : vector<256x128xf32>
    %28 = tpu.matmul %25, %27, %cst_15 {dimension_numbers = #tpu.dot_dimension_numbers<[1], [0], [0], [1], [0, 0, 1, 1], [], []>} : vector<256x128xbf16>, vector<128x128xbf16>, vector<256x128xf32> -> vector<256x128xf32>
    %29 = arith.addf %23, %28 : vector<256x128xf32>
    %30 = vector.extract_strided_slice %18 {offsets = [0, 2, 0], sizes = [16, 16, 128], strides = [1, 1, 1]} : vector<18x18x128xbf16> to vector<16x16x128xbf16>
    %31 = vector.shape_cast %30 : vector<16x16x128xbf16> to vector<256x128xbf16>
    %c2 = arith.constant 2 : index
    %c0_16 = arith.constant 0 : index
    %c0_17 = arith.constant 0 : index
    %32 = vector.load %arg3[%c2, %c0_16, %c0_17] : memref<9x128x128xbf16, #tpu.memory_space<vmem>>, vector<1x128x128xbf16>
    %33 = vector.shape_cast %32 : vector<1x128x128xbf16> to vector<128x128xbf16>
    %cst_18 = arith.constant dense<0.000000e+00> : vector<256x128xf32>
    %34 = tpu.matmul %31, %33, %cst_18 {dimension_numbers = #tpu.dot_dimension_numbers<[1], [0], [0], [1], [0, 0, 1, 1], [], []>} : vector<256x128xbf16>, vector<128x128xbf16>, vector<256x128xf32> -> vector<256x128xf32>
    %35 = arith.addf %29, %34 : vector<256x128xf32>
    %36 = vector.extract_strided_slice %18 {offsets = [1, 0, 0], sizes = [16, 16, 128], strides = [1, 1, 1]} : vector<18x18x128xbf16> to vector<16x16x128xbf16>
    %37 = vector.shape_cast %36 : vector<16x16x128xbf16> to vector<256x128xbf16>
    %c3 = arith.constant 3 : index
    %c0_19 = arith.constant 0 : index
    %c0_20 = arith.constant 0 : index
    %38 = vector.load %arg3[%c3, %c0_19, %c0_20] : memref<9x128x128xbf16, #tpu.memory_space<vmem>>, vector<1x128x128xbf16>
    %39 = vector.shape_cast %38 : vector<1x128x128xbf16> to vector<128x128xbf16>
    %cst_21 = arith.constant dense<0.000000e+00> : vector<256x128xf32>
    %40 = tpu.matmul %37, %39, %cst_21 {dimension_numbers = #tpu.dot_dimension_numbers<[1], [0], [0], [1], [0, 0, 1, 1], [], []>} : vector<256x128xbf16>, vector<128x128xbf16>, vector<256x128xf32> -> vector<256x128xf32>
    %41 = arith.addf %35, %40 : vector<256x128xf32>
    %42 = vector.extract_strided_slice %18 {offsets = [1, 1, 0], sizes = [16, 16, 128], strides = [1, 1, 1]} : vector<18x18x128xbf16> to vector<16x16x128xbf16>
    %43 = vector.shape_cast %42 : vector<16x16x128xbf16> to vector<256x128xbf16>
    %c4 = arith.constant 4 : index
    %c0_22 = arith.constant 0 : index
    %c0_23 = arith.constant 0 : index
    %44 = vector.load %arg3[%c4, %c0_22, %c0_23] : memref<9x128x128xbf16, #tpu.memory_space<vmem>>, vector<1x128x128xbf16>
    %45 = vector.shape_cast %44 : vector<1x128x128xbf16> to vector<128x128xbf16>
    %cst_24 = arith.constant dense<0.000000e+00> : vector<256x128xf32>
    %46 = tpu.matmul %43, %45, %cst_24 {dimension_numbers = #tpu.dot_dimension_numbers<[1], [0], [0], [1], [0, 0, 1, 1], [], []>} : vector<256x128xbf16>, vector<128x128xbf16>, vector<256x128xf32> -> vector<256x128xf32>
    %47 = arith.addf %41, %46 : vector<256x128xf32>
    %48 = vector.extract_strided_slice %18 {offsets = [1, 2, 0], sizes = [16, 16, 128], strides = [1, 1, 1]} : vector<18x18x128xbf16> to vector<16x16x128xbf16>
    %49 = vector.shape_cast %48 : vector<16x16x128xbf16> to vector<256x128xbf16>
    %c5 = arith.constant 5 : index
    %c0_25 = arith.constant 0 : index
    %c0_26 = arith.constant 0 : index
    %50 = vector.load %arg3[%c5, %c0_25, %c0_26] : memref<9x128x128xbf16, #tpu.memory_space<vmem>>, vector<1x128x128xbf16>
    %51 = vector.shape_cast %50 : vector<1x128x128xbf16> to vector<128x128xbf16>
    %cst_27 = arith.constant dense<0.000000e+00> : vector<256x128xf32>
    %52 = tpu.matmul %49, %51, %cst_27 {dimension_numbers = #tpu.dot_dimension_numbers<[1], [0], [0], [1], [0, 0, 1, 1], [], []>} : vector<256x128xbf16>, vector<128x128xbf16>, vector<256x128xf32> -> vector<256x128xf32>
    %53 = arith.addf %47, %52 : vector<256x128xf32>
    %54 = vector.extract_strided_slice %18 {offsets = [2, 0, 0], sizes = [16, 16, 128], strides = [1, 1, 1]} : vector<18x18x128xbf16> to vector<16x16x128xbf16>
    %55 = vector.shape_cast %54 : vector<16x16x128xbf16> to vector<256x128xbf16>
    %c6 = arith.constant 6 : index
    %c0_28 = arith.constant 0 : index
    %c0_29 = arith.constant 0 : index
    %56 = vector.load %arg3[%c6, %c0_28, %c0_29] : memref<9x128x128xbf16, #tpu.memory_space<vmem>>, vector<1x128x128xbf16>
    %57 = vector.shape_cast %56 : vector<1x128x128xbf16> to vector<128x128xbf16>
    %cst_30 = arith.constant dense<0.000000e+00> : vector<256x128xf32>
    %58 = tpu.matmul %55, %57, %cst_30 {dimension_numbers = #tpu.dot_dimension_numbers<[1], [0], [0], [1], [0, 0, 1, 1], [], []>} : vector<256x128xbf16>, vector<128x128xbf16>, vector<256x128xf32> -> vector<256x128xf32>
    %59 = arith.addf %53, %58 : vector<256x128xf32>
    %60 = vector.extract_strided_slice %18 {offsets = [2, 1, 0], sizes = [16, 16, 128], strides = [1, 1, 1]} : vector<18x18x128xbf16> to vector<16x16x128xbf16>
    %61 = vector.shape_cast %60 : vector<16x16x128xbf16> to vector<256x128xbf16>
    %c7 = arith.constant 7 : index
    %c0_31 = arith.constant 0 : index
    %c0_32 = arith.constant 0 : index
    %62 = vector.load %arg3[%c7, %c0_31, %c0_32] : memref<9x128x128xbf16, #tpu.memory_space<vmem>>, vector<1x128x128xbf16>
    %63 = vector.shape_cast %62 : vector<1x128x128xbf16> to vector<128x128xbf16>
    %cst_33 = arith.constant dense<0.000000e+00> : vector<256x128xf32>
    %64 = tpu.matmul %61, %63, %cst_33 {dimension_numbers = #tpu.dot_dimension_numbers<[1], [0], [0], [1], [0, 0, 1, 1], [], []>} : vector<256x128xbf16>, vector<128x128xbf16>, vector<256x128xf32> -> vector<256x128xf32>
    %65 = arith.addf %59, %64 : vector<256x128xf32>
    %66 = vector.extract_strided_slice %18 {offsets = [2, 2, 0], sizes = [16, 16, 128], strides = [1, 1, 1]} : vector<18x18x128xbf16> to vector<16x16x128xbf16>
    %67 = vector.shape_cast %66 : vector<16x16x128xbf16> to vector<256x128xbf16>
    %c8 = arith.constant 8 : index
    %c0_34 = arith.constant 0 : index
    %c0_35 = arith.constant 0 : index
    %68 = vector.load %arg3[%c8, %c0_34, %c0_35] : memref<9x128x128xbf16, #tpu.memory_space<vmem>>, vector<1x128x128xbf16>
    %69 = vector.shape_cast %68 : vector<1x128x128xbf16> to vector<128x128xbf16>
    %cst_36 = arith.constant dense<0.000000e+00> : vector<256x128xf32>
    %70 = tpu.matmul %67, %69, %cst_36 {dimension_numbers = #tpu.dot_dimension_numbers<[1], [0], [0], [1], [0, 0, 1, 1], [], []>} : vector<256x128xbf16>, vector<128x128xbf16>, vector<256x128xf32> -> vector<256x128xf32>
    %71 = arith.addf %65, %70 : vector<256x128xf32>
    %c0_37 = arith.constant 0 : index
    %c0_38 = arith.constant 0 : index
    %72 = vector.load %arg4[%c0_37, %c0_38] : memref<256x128xf32, #tpu.memory_space<vmem>>, vector<256x128xf32>
    tpu.vector_store %arg4[%c0_37, %c0_38], %71 {strides = array<i32>} : memref<256x128xf32, #tpu.memory_space<vmem>>, vector<256x128xf32>,
    %cst_39 = arith.constant dense<0.000000e+00> : vector<128xf32>
    %73 = vector.multi_reduction <add>, %71, %cst_39 [0] : vector<256x128xf32> to vector<128xf32>
    %74 = arith.mulf %71, %71 : vector<256x128xf32>
    %cst_40 = arith.constant dense<0.000000e+00> : vector<128xf32>
    %75 = vector.multi_reduction <add>, %74, %cst_40 [0] : vector<256x128xf32> to vector<128xf32>
    %76 = vector.shape_cast %73 : vector<128xf32> to vector<1x128xf32>
    %77 = vector.shape_cast %75 : vector<128xf32> to vector<1x128xf32>
    %78 = tpu.concatenate %76, %77 in 0 : vector<1x128xf32>, vector<1x128xf32> -> vector<2x128xf32>
    %79 = vector.shape_cast %78 : vector<2x128xf32> to vector<1x2x128xf32>
    %c0_41 = arith.constant 0 : index
    %c0_42 = arith.constant 0 : index
    %c0_43 = arith.constant 0 : index
    %80 = vector.load %arg5[%c0_41, %c0_42, %c0_43] : memref<1x2x128xf32, #tpu.memory_space<vmem>>, vector<1x2x128xf32>
    tpu.vector_store %arg5[%c0_41, %c0_42, %c0_43], %79 {strides = array<i32>} : memref<1x2x128xf32, #tpu.memory_space<vmem>>, vector<1x2x128xf32>,
    %81 = vector.extract_strided_slice %17 {offsets = [1, 1, 0], sizes = [16, 16, 128], strides = [1, 1, 1]} : vector<18x18x128xf32> to vector<16x16x128xf32>
    %82 = vector.shape_cast %81 : vector<16x16x128xf32> to vector<256x128xf32>
    %cst_44 = arith.constant dense<0.000000e+00> : vector<128xf32>
    %83 = vector.multi_reduction <add>, %82, %cst_44 [0] : vector<256x128xf32> to vector<128xf32>
    %84 = arith.mulf %82, %82 : vector<256x128xf32>
    %cst_45 = arith.constant dense<0.000000e+00> : vector<128xf32>
    %85 = vector.multi_reduction <add>, %84, %cst_45 [0] : vector<256x128xf32> to vector<128xf32>
    %86 = vector.shape_cast %83 : vector<128xf32> to vector<1x128xf32>
    %87 = vector.shape_cast %85 : vector<128xf32> to vector<1x128xf32>
    %88 = tpu.concatenate %86, %87 in 0 : vector<1x128xf32>, vector<1x128xf32> -> vector<2x128xf32>
    %89 = vector.shape_cast %88 : vector<2x128xf32> to vector<1x2x128xf32>
    %c0_46 = arith.constant 0 : index
    %c0_47 = arith.constant 0 : index
    %c0_48 = arith.constant 0 : index
    %90 = vector.load %arg6[%c0_46, %c0_47, %c0_48] : memref<1x2x128xf32, #tpu.memory_space<vmem>>, vector<1x2x128xf32>
    tpu.vector_store %arg6[%c0_46, %c0_47, %c0_48], %89 {strides = array<i32>} : memref<1x2x128xf32, #tpu.memory_space<vmem>>, vector<1x2x128xf32>,
    return
  }
  func.func @transform_0(%arg0: i32) -> (i32, i32, i32, i32) {
    %c0_i32 = arith.constant 0 : i32
    %c0_i32_0 = arith.constant 0 : i32
    %c0_i32_1 = arith.constant 0 : i32
    %c0_i32_2 = arith.constant 0 : i32
    return %arg0, %c0_i32, %c0_i32_0, %c0_i32_1 : i32, i32, i32, i32
  }
  func.func @transform_1(%arg0: i32) -> (i32, i32) {
    %c0_i32 = arith.constant 0 : i32
    %c0_i32_0 = arith.constant 0 : i32
    %c0_i32_1 = arith.constant 0 : i32
    return %c0_i32, %c0_i32_0 : i32, i32
  }
  func.func @transform_2(%arg0: i32) -> (i32, i32, i32) {
    %c0_i32 = arith.constant 0 : i32
    %c0_i32_0 = arith.constant 0 : i32
    %c0_i32_1 = arith.constant 0 : i32
    %c0_i32_2 = arith.constant 0 : i32
    return %c0_i32, %c0_i32_0, %c0_i32_1 : i32, i32, i32
  }
  func.func @transform_3(%arg0: i32) -> (i32, i32) {
    %c0_i32 = arith.constant 0 : i32
    %c0_i32_0 = arith.constant 0 : i32
    return %arg0, %c0_i32 : i32, i32
  }
  func.func @transform_4(%arg0: i32) -> (i32, i32, i32) {
    %c0_i32 = arith.constant 0 : i32
    %c0_i32_0 = arith.constant 0 : i32
    %c0_i32_1 = arith.constant 0 : i32
    return %arg0, %c0_i32, %c0_i32_0 : i32, i32, i32
  }
  func.func @transform_5(%arg0: i32) -> (i32, i32, i32) {
    %c0_i32 = arith.constant 0 : i32
    %c0_i32_0 = arith.constant 0 : i32
    %c0_i32_1 = arith.constant 0 : i32
    return %arg0, %c0_i32, %c0_i32_0 : i32, i32, i32
  }
}

module attributes {stable_mosaic.version = 11 : i64} {
  func.func @_act_stats_kernel(%arg0: i32, %arg1: memref<256x128xf32, #tpu.memory_space<vmem>>, %arg2: memref<2x128xf32, #tpu.memory_space<vmem>>, %arg3: memref<1x2x128xf32, #tpu.memory_space<vmem>>) attributes {dimension_semantics = [#tpu.dimension_semantics<parallel>], iteration_bounds = array<i64: 2>, scalar_prefetch = 0 : i64, scratch_operands = 0 : i64, tpu.core_type = #tpu.core_type<tc>, window_params = [{transform_indices = @transform_0, window_bounds = array<i64: 256, 128>}, {pipeline_mode = #tpu.pipeline_mode<synchronous>, transform_indices = @transform_1, window_bounds = array<i64: 2, 128>}, {transform_indices = @transform_2, window_bounds = array<i64: 1, 2, 128>}]} {
    %c0 = arith.constant 0 : index
    %c0_0 = arith.constant 0 : index
    %0 = vector.load %arg1[%c0, %c0_0] : memref<256x128xf32, #tpu.memory_space<vmem>>, vector<256x128xf32>
    %c0_1 = arith.constant 0 : index
    %c0_2 = arith.constant 0 : index
    %1 = vector.load %arg2[%c0_1, %c0_2] : memref<2x128xf32, #tpu.memory_space<vmem>>, vector<1x128xf32>
    %2 = vector.broadcast %1 : vector<1x128xf32> to vector<256x128xf32>
    %3 = arith.mulf %0, %2 : vector<256x128xf32>
    %c1 = arith.constant 1 : index
    %c0_3 = arith.constant 0 : index
    %4 = vector.load %arg2[%c1, %c0_3] : memref<2x128xf32, #tpu.memory_space<vmem>>, vector<1x128xf32>
    %5 = vector.broadcast %4 : vector<1x128xf32> to vector<256x128xf32>
    %6 = arith.addf %3, %5 : vector<256x128xf32>
    %cst = arith.constant 5.000000e-01 : f32
    %7 = vector.broadcast %cst : f32 to vector<256x128xf32>
    %8 = arith.mulf %7, %6 : vector<256x128xf32>
    %cst_4 = arith.constant 0.707106769 : f32
    %9 = vector.broadcast %cst_4 : f32 to vector<256x128xf32>
    %10 = arith.mulf %6, %9 : vector<256x128xf32>
    %11 = math.erf %10 : vector<256x128xf32>
    %cst_5 = arith.constant 1.000000e+00 : f32
    %12 = vector.broadcast %cst_5 : f32 to vector<256x128xf32>
    %13 = arith.addf %12, %11 : vector<256x128xf32>
    %14 = arith.mulf %8, %13 : vector<256x128xf32>
    %cst_6 = arith.constant dense<0.000000e+00> : vector<128xf32>
    %15 = vector.multi_reduction <add>, %14, %cst_6 [0] : vector<256x128xf32> to vector<128xf32>
    %16 = arith.mulf %14, %14 : vector<256x128xf32>
    %cst_7 = arith.constant dense<0.000000e+00> : vector<128xf32>
    %17 = vector.multi_reduction <add>, %16, %cst_7 [0] : vector<256x128xf32> to vector<128xf32>
    %18 = vector.shape_cast %15 : vector<128xf32> to vector<1x128xf32>
    %19 = vector.shape_cast %17 : vector<128xf32> to vector<1x128xf32>
    %20 = tpu.concatenate %18, %19 in 0 : vector<1x128xf32>, vector<1x128xf32> -> vector<2x128xf32>
    %21 = vector.shape_cast %20 : vector<2x128xf32> to vector<1x2x128xf32>
    %c0_8 = arith.constant 0 : index
    %c0_9 = arith.constant 0 : index
    %c0_10 = arith.constant 0 : index
    %22 = vector.load %arg3[%c0_8, %c0_9, %c0_10] : memref<1x2x128xf32, #tpu.memory_space<vmem>>, vector<1x2x128xf32>
    tpu.vector_store %arg3[%c0_8, %c0_9, %c0_10], %21 {strides = array<i32>} : memref<1x2x128xf32, #tpu.memory_space<vmem>>, vector<1x2x128xf32>,
    return
  }
  func.func @transform_0(%arg0: i32) -> (i32, i32) {
    %c0_i32 = arith.constant 0 : i32
    %c0_i32_0 = arith.constant 0 : i32
    return %arg0, %c0_i32 : i32, i32
  }
  func.func @transform_1(%arg0: i32) -> (i32, i32) {
    %c0_i32 = arith.constant 0 : i32
    %c0_i32_0 = arith.constant 0 : i32
    %c0_i32_1 = arith.constant 0 : i32
    return %c0_i32, %c0_i32_0 : i32, i32
  }
  func.func @transform_2(%arg0: i32) -> (i32, i32, i32) {
    %c0_i32 = arith.constant 0 : i32
    %c0_i32_0 = arith.constant 0 : i32
    %c0_i32_1 = arith.constant 0 : i32
    return %arg0, %c0_i32, %c0_i32_0 : i32, i32, i32
  }
}

module attributes {stable_mosaic.version = 11 : i64} {
  func.func @_merge_kernel(%arg0: i32, %arg1: memref<256x128xf32, #tpu.memory_space<vmem>>, %arg2: memref<256x128xf32, #tpu.memory_space<vmem>>, %arg3: memref<256x128xf32, #tpu.memory_space<vmem>>, %arg4: memref<256x128xf32, #tpu.memory_space<vmem>>, %arg5: memref<14x128xf32, #tpu.memory_space<vmem>>, %arg6: memref<128x128xf32, #tpu.memory_space<vmem>>, %arg7: memref<128x128xf32, #tpu.memory_space<vmem>>, %arg8: memref<128x128xf32, #tpu.memory_space<vmem>>, %arg9: memref<256x128xf32, #tpu.memory_space<vmem>>, %arg10: memref<1x2x128xf32, #tpu.memory_space<vmem>>) attributes {dimension_semantics = [#tpu.dimension_semantics<parallel>], iteration_bounds = array<i64: 2>, scalar_prefetch = 0 : i64, scratch_operands = 0 : i64, tpu.core_type = #tpu.core_type<tc>, window_params = [{transform_indices = @transform_0, window_bounds = array<i64: 256, 128>}, {transform_indices = @transform_1, window_bounds = array<i64: 256, 128>}, {transform_indices = @transform_2, window_bounds = array<i64: 256, 128>}, {transform_indices = @transform_3, window_bounds = array<i64: 256, 128>}, {pipeline_mode = #tpu.pipeline_mode<synchronous>, transform_indices = @transform_4, window_bounds = array<i64: 14, 128>}, {pipeline_mode = #tpu.pipeline_mode<synchronous>, transform_indices = @transform_5, window_bounds = array<i64: 128, 128>}, {pipeline_mode = #tpu.pipeline_mode<synchronous>, transform_indices = @transform_6, window_bounds = array<i64: 128, 128>}, {pipeline_mode = #tpu.pipeline_mode<synchronous>, transform_indices = @transform_7, window_bounds = array<i64: 128, 128>}, {transform_indices = @transform_8, window_bounds = array<i64: 256, 128>}, {transform_indices = @transform_9, window_bounds = array<i64: 1, 2, 128>}]} {
    %c0 = arith.constant 0 : index
    %c0_0 = arith.constant 0 : index
    %0 = vector.load %arg5[%c0, %c0_0] : memref<14x128xf32, #tpu.memory_space<vmem>>, vector<14x128xf32>
    %c0_1 = arith.constant 0 : index
    %c0_2 = arith.constant 0 : index
    %1 = vector.load %arg1[%c0_1, %c0_2] : memref<256x128xf32, #tpu.memory_space<vmem>>, vector<256x128xf32>
    %2 = vector.extract_strided_slice %0 {offsets = [0, 0], sizes = [1, 128], strides = [1, 1]} : vector<14x128xf32> to vector<1x128xf32>
    %3 = vector.broadcast %2 : vector<1x128xf32> to vector<256x128xf32>
    %4 = arith.mulf %1, %3 : vector<256x128xf32>
    %5 = vector.extract_strided_slice %0 {offsets = [1, 0], sizes = [1, 128], strides = [1, 1]} : vector<14x128xf32> to vector<1x128xf32>
    %6 = vector.broadcast %5 : vector<1x128xf32> to vector<256x128xf32>
    %7 = arith.addf %4, %6 : vector<256x128xf32>
    %c0_3 = arith.constant 0 : index
    %c0_4 = arith.constant 0 : index
    %8 = vector.load %arg2[%c0_3, %c0_4] : memref<256x128xf32, #tpu.memory_space<vmem>>, vector<256x128xf32>
    %9 = vector.extract_strided_slice %0 {offsets = [2, 0], sizes = [1, 128], strides = [1, 1]} : vector<14x128xf32> to vector<1x128xf32>
    %10 = vector.broadcast %9 : vector<1x128xf32> to vector<256x128xf32>
    %11 = arith.mulf %8, %10 : vector<256x128xf32>
    %12 = vector.extract_strided_slice %0 {offsets = [3, 0], sizes = [1, 128], strides = [1, 1]} : vector<14x128xf32> to vector<1x128xf32>
    %13 = vector.broadcast %12 : vector<1x128xf32> to vector<256x128xf32>
    %14 = arith.addf %11, %13 : vector<256x128xf32>
    %cst = arith.constant 5.000000e-01 : f32
    %15 = vector.broadcast %cst : f32 to vector<256x128xf32>
    %16 = arith.mulf %15, %14 : vector<256x128xf32>
    %cst_5 = arith.constant 0.707106769 : f32
    %17 = vector.broadcast %cst_5 : f32 to vector<256x128xf32>
    %18 = arith.mulf %14, %17 : vector<256x128xf32>
    %19 = math.erf %18 : vector<256x128xf32>
    %cst_6 = arith.constant 1.000000e+00 : f32
    %20 = vector.broadcast %cst_6 : f32 to vector<256x128xf32>
    %21 = arith.addf %20, %19 : vector<256x128xf32>
    %22 = arith.mulf %16, %21 : vector<256x128xf32>
    %23 = vector.extract_strided_slice %0 {offsets = [4, 0], sizes = [1, 128], strides = [1, 1]} : vector<14x128xf32> to vector<1x128xf32>
    %24 = vector.broadcast %23 : vector<1x128xf32> to vector<256x128xf32>
    %25 = arith.mulf %22, %24 : vector<256x128xf32>
    %26 = vector.extract_strided_slice %0 {offsets = [5, 0], sizes = [1, 128], strides = [1, 1]} : vector<14x128xf32> to vector<1x128xf32>
    %27 = vector.broadcast %26 : vector<1x128xf32> to vector<256x128xf32>
    %28 = arith.addf %25, %27 : vector<256x128xf32>
    %c0_7 = arith.constant 0 : index
    %c0_8 = arith.constant 0 : index
    %29 = vector.load %arg6[%c0_7, %c0_8] : memref<128x128xf32, #tpu.memory_space<vmem>>, vector<128x128xf32>
    %cst_9 = arith.constant dense<0.000000e+00> : vector<256x128xf32>
    %30 = tpu.matmul %28, %29, %cst_9 {dimension_numbers = #tpu.dot_dimension_numbers<[1], [0], [0], [1], [0, 0, 1, 1], [], []>} : vector<256x128xf32>, vector<128x128xf32>, vector<256x128xf32> -> vector<256x128xf32>
    %31 = arith.addf %7, %30 : vector<256x128xf32>
    %c0_10 = arith.constant 0 : index
    %c0_11 = arith.constant 0 : index
    %32 = vector.load %arg3[%c0_10, %c0_11] : memref<256x128xf32, #tpu.memory_space<vmem>>, vector<256x128xf32>
    %33 = vector.extract_strided_slice %0 {offsets = [6, 0], sizes = [1, 128], strides = [1, 1]} : vector<14x128xf32> to vector<1x128xf32>
    %34 = vector.broadcast %33 : vector<1x128xf32> to vector<256x128xf32>
    %35 = arith.mulf %32, %34 : vector<256x128xf32>
    %36 = vector.extract_strided_slice %0 {offsets = [7, 0], sizes = [1, 128], strides = [1, 1]} : vector<14x128xf32> to vector<1x128xf32>
    %37 = vector.broadcast %36 : vector<1x128xf32> to vector<256x128xf32>
    %38 = arith.addf %35, %37 : vector<256x128xf32>
    %cst_12 = arith.constant 5.000000e-01 : f32
    %39 = vector.broadcast %cst_12 : f32 to vector<256x128xf32>
    %40 = arith.mulf %39, %38 : vector<256x128xf32>
    %cst_13 = arith.constant 0.707106769 : f32
    %41 = vector.broadcast %cst_13 : f32 to vector<256x128xf32>
    %42 = arith.mulf %38, %41 : vector<256x128xf32>
    %43 = math.erf %42 : vector<256x128xf32>
    %cst_14 = arith.constant 1.000000e+00 : f32
    %44 = vector.broadcast %cst_14 : f32 to vector<256x128xf32>
    %45 = arith.addf %44, %43 : vector<256x128xf32>
    %46 = arith.mulf %40, %45 : vector<256x128xf32>
    %47 = vector.extract_strided_slice %0 {offsets = [8, 0], sizes = [1, 128], strides = [1, 1]} : vector<14x128xf32> to vector<1x128xf32>
    %48 = vector.broadcast %47 : vector<1x128xf32> to vector<256x128xf32>
    %49 = arith.mulf %46, %48 : vector<256x128xf32>
    %50 = vector.extract_strided_slice %0 {offsets = [9, 0], sizes = [1, 128], strides = [1, 1]} : vector<14x128xf32> to vector<1x128xf32>
    %51 = vector.broadcast %50 : vector<1x128xf32> to vector<256x128xf32>
    %52 = arith.addf %49, %51 : vector<256x128xf32>
    %c0_15 = arith.constant 0 : index
    %c0_16 = arith.constant 0 : index
    %53 = vector.load %arg7[%c0_15, %c0_16] : memref<128x128xf32, #tpu.memory_space<vmem>>, vector<128x128xf32>
    %cst_17 = arith.constant dense<0.000000e+00> : vector<256x128xf32>
    %54 = tpu.matmul %52, %53, %cst_17 {dimension_numbers = #tpu.dot_dimension_numbers<[1], [0], [0], [1], [0, 0, 1, 1], [], []>} : vector<256x128xf32>, vector<128x128xf32>, vector<256x128xf32> -> vector<256x128xf32>
    %55 = arith.addf %31, %54 : vector<256x128xf32>
    %c0_18 = arith.constant 0 : index
    %c0_19 = arith.constant 0 : index
    %56 = vector.load %arg4[%c0_18, %c0_19] : memref<256x128xf32, #tpu.memory_space<vmem>>, vector<256x128xf32>
    %57 = vector.extract_strided_slice %0 {offsets = [10, 0], sizes = [1, 128], strides = [1, 1]} : vector<14x128xf32> to vector<1x128xf32>
    %58 = vector.broadcast %57 : vector<1x128xf32> to vector<256x128xf32>
    %59 = arith.mulf %56, %58 : vector<256x128xf32>
    %60 = vector.extract_strided_slice %0 {offsets = [11, 0], sizes = [1, 128], strides = [1, 1]} : vector<14x128xf32> to vector<1x128xf32>
    %61 = vector.broadcast %60 : vector<1x128xf32> to vector<256x128xf32>
    %62 = arith.addf %59, %61 : vector<256x128xf32>
    %cst_20 = arith.constant 5.000000e-01 : f32
    %63 = vector.broadcast %cst_20 : f32 to vector<256x128xf32>
    %64 = arith.mulf %63, %62 : vector<256x128xf32>
    %cst_21 = arith.constant 0.707106769 : f32
    %65 = vector.broadcast %cst_21 : f32 to vector<256x128xf32>
    %66 = arith.mulf %62, %65 : vector<256x128xf32>
    %67 = math.erf %66 : vector<256x128xf32>
    %cst_22 = arith.constant 1.000000e+00 : f32
    %68 = vector.broadcast %cst_22 : f32 to vector<256x128xf32>
    %69 = arith.addf %68, %67 : vector<256x128xf32>
    %70 = arith.mulf %64, %69 : vector<256x128xf32>
    %71 = vector.extract_strided_slice %0 {offsets = [12, 0], sizes = [1, 128], strides = [1, 1]} : vector<14x128xf32> to vector<1x128xf32>
    %72 = vector.broadcast %71 : vector<1x128xf32> to vector<256x128xf32>
    %73 = arith.mulf %70, %72 : vector<256x128xf32>
    %74 = vector.extract_strided_slice %0 {offsets = [13, 0], sizes = [1, 128], strides = [1, 1]} : vector<14x128xf32> to vector<1x128xf32>
    %75 = vector.broadcast %74 : vector<1x128xf32> to vector<256x128xf32>
    %76 = arith.addf %73, %75 : vector<256x128xf32>
    %c0_23 = arith.constant 0 : index
    %c0_24 = arith.constant 0 : index
    %77 = vector.load %arg8[%c0_23, %c0_24] : memref<128x128xf32, #tpu.memory_space<vmem>>, vector<128x128xf32>
    %cst_25 = arith.constant dense<0.000000e+00> : vector<256x128xf32>
    %78 = tpu.matmul %76, %77, %cst_25 {dimension_numbers = #tpu.dot_dimension_numbers<[1], [0], [0], [1], [0, 0, 1, 1], [], []>} : vector<256x128xf32>, vector<128x128xf32>, vector<256x128xf32> -> vector<256x128xf32>
    %79 = arith.addf %55, %78 : vector<256x128xf32>
    %cst_26 = arith.constant 5.000000e-01 : f32
    %80 = vector.broadcast %cst_26 : f32 to vector<256x128xf32>
    %81 = arith.mulf %80, %79 : vector<256x128xf32>
    %cst_27 = arith.constant 0.707106769 : f32
    %82 = vector.broadcast %cst_27 : f32 to vector<256x128xf32>
    %83 = arith.mulf %79, %82 : vector<256x128xf32>
    %84 = math.erf %83 : vector<256x128xf32>
    %cst_28 = arith.constant 1.000000e+00 : f32
    %85 = vector.broadcast %cst_28 : f32 to vector<256x128xf32>
    %86 = arith.addf %85, %84 : vector<256x128xf32>
    %87 = arith.mulf %81, %86 : vector<256x128xf32>
    %c0_29 = arith.constant 0 : index
    %c0_30 = arith.constant 0 : index
    %88 = vector.load %arg9[%c0_29, %c0_30] : memref<256x128xf32, #tpu.memory_space<vmem>>, vector<256x128xf32>
    tpu.vector_store %arg9[%c0_29, %c0_30], %87 {strides = array<i32>} : memref<256x128xf32, #tpu.memory_space<vmem>>, vector<256x128xf32>,
    %cst_31 = arith.constant dense<0.000000e+00> : vector<128xf32>
    %89 = vector.multi_reduction <add>, %87, %cst_31 [0] : vector<256x128xf32> to vector<128xf32>
    %90 = arith.mulf %87, %87 : vector<256x128xf32>
    %cst_32 = arith.constant dense<0.000000e+00> : vector<128xf32>
    %91 = vector.multi_reduction <add>, %90, %cst_32 [0] : vector<256x128xf32> to vector<128xf32>
    %92 = vector.shape_cast %89 : vector<128xf32> to vector<1x128xf32>
    %93 = vector.shape_cast %91 : vector<128xf32> to vector<1x128xf32>
    %94 = tpu.concatenate %92, %93 in 0 : vector<1x128xf32>, vector<1x128xf32> -> vector<2x128xf32>
    %95 = vector.shape_cast %94 : vector<2x128xf32> to vector<1x2x128xf32>
    %c0_33 = arith.constant 0 : index
    %c0_34 = arith.constant 0 : index
    %c0_35 = arith.constant 0 : index
    %96 = vector.load %arg10[%c0_33, %c0_34, %c0_35] : memref<1x2x128xf32, #tpu.memory_space<vmem>>, vector<1x2x128xf32>
    tpu.vector_store %arg10[%c0_33, %c0_34, %c0_35], %95 {strides = array<i32>} : memref<1x2x128xf32, #tpu.memory_space<vmem>>, vector<1x2x128xf32>,
    return
  }
  func.func @transform_0(%arg0: i32) -> (i32, i32) {
    %c0_i32 = arith.constant 0 : i32
    %c0_i32_0 = arith.constant 0 : i32
    return %arg0, %c0_i32 : i32, i32
  }
  func.func @transform_1(%arg0: i32) -> (i32, i32) {
    %c0_i32 = arith.constant 0 : i32
    %c0_i32_0 = arith.constant 0 : i32
    return %arg0, %c0_i32 : i32, i32
  }
  func.func @transform_2(%arg0: i32) -> (i32, i32) {
    %c0_i32 = arith.constant 0 : i32
    %c0_i32_0 = arith.constant 0 : i32
    return %arg0, %c0_i32 : i32, i32
  }
  func.func @transform_3(%arg0: i32) -> (i32, i32) {
    %c0_i32 = arith.constant 0 : i32
    %c0_i32_0 = arith.constant 0 : i32
    return %arg0, %c0_i32 : i32, i32
  }
  func.func @transform_4(%arg0: i32) -> (i32, i32) {
    %c0_i32 = arith.constant 0 : i32
    %c0_i32_0 = arith.constant 0 : i32
    %c0_i32_1 = arith.constant 0 : i32
    return %c0_i32, %c0_i32_0 : i32, i32
  }
  func.func @transform_5(%arg0: i32) -> (i32, i32) {
    %c0_i32 = arith.constant 0 : i32
    %c0_i32_0 = arith.constant 0 : i32
    %c0_i32_1 = arith.constant 0 : i32
    return %c0_i32, %c0_i32_0 : i32, i32
  }
  func.func @transform_6(%arg0: i32) -> (i32, i32) {
    %c0_i32 = arith.constant 0 : i32
    %c0_i32_0 = arith.constant 0 : i32
    %c0_i32_1 = arith.constant 0 : i32
    return %c0_i32, %c0_i32_0 : i32, i32
  }
  func.func @transform_7(%arg0: i32) -> (i32, i32) {
    %c0_i32 = arith.constant 0 : i32
    %c0_i32_0 = arith.constant 0 : i32
    %c0_i32_1 = arith.constant 0 : i32
    return %c0_i32, %c0_i32_0 : i32, i32
  }
  func.func @transform_8(%arg0: i32) -> (i32, i32) {
    %c0_i32 = arith.constant 0 : i32
    %c0_i32_0 = arith.constant 0 : i32
    return %arg0, %c0_i32 : i32, i32
  }
  func.func @transform_9(%arg0: i32) -> (i32, i32, i32) {
    %c0_i32 = arith.constant 0 : i32
    %c0_i32_0 = arith.constant 0 : i32
    %c0_i32_1 = arith.constant 0 : i32
    return %arg0, %c0_i32, %c0_i32_0 : i32, i32, i32
  }
}

module attributes {stable_mosaic.version = 11 : i64} {
  func.func @_affine_kernel(%arg0: i32, %arg1: memref<256x128xf32, #tpu.memory_space<vmem>>, %arg2: memref<2x128xf32, #tpu.memory_space<vmem>>, %arg3: memref<256x128xf32, #tpu.memory_space<vmem>>) attributes {dimension_semantics = [#tpu.dimension_semantics<parallel>], iteration_bounds = array<i64: 2>, scalar_prefetch = 0 : i64, scratch_operands = 0 : i64, tpu.core_type = #tpu.core_type<tc>, window_params = [{transform_indices = @transform_0, window_bounds = array<i64: 256, 128>}, {pipeline_mode = #tpu.pipeline_mode<synchronous>, transform_indices = @transform_1, window_bounds = array<i64: 2, 128>}, {transform_indices = @transform_2, window_bounds = array<i64: 256, 128>}]} {
    %c0 = arith.constant 0 : index
    %c0_0 = arith.constant 0 : index
    %0 = vector.load %arg1[%c0, %c0_0] : memref<256x128xf32, #tpu.memory_space<vmem>>, vector<256x128xf32>
    %c0_1 = arith.constant 0 : index
    %c0_2 = arith.constant 0 : index
    %1 = vector.load %arg2[%c0_1, %c0_2] : memref<2x128xf32, #tpu.memory_space<vmem>>, vector<1x128xf32>
    %2 = vector.broadcast %1 : vector<1x128xf32> to vector<256x128xf32>
    %3 = arith.mulf %0, %2 : vector<256x128xf32>
    %c1 = arith.constant 1 : index
    %c0_3 = arith.constant 0 : index
    %4 = vector.load %arg2[%c1, %c0_3] : memref<2x128xf32, #tpu.memory_space<vmem>>, vector<1x128xf32>
    %5 = vector.broadcast %4 : vector<1x128xf32> to vector<256x128xf32>
    %6 = arith.addf %3, %5 : vector<256x128xf32>
    %c0_4 = arith.constant 0 : index
    %c0_5 = arith.constant 0 : index
    %7 = vector.load %arg3[%c0_4, %c0_5] : memref<256x128xf32, #tpu.memory_space<vmem>>, vector<256x128xf32>
    tpu.vector_store %arg3[%c0_4, %c0_5], %6 {strides = array<i32>} : memref<256x128xf32, #tpu.memory_space<vmem>>, vector<256x128xf32>,
    return
  }
  func.func @transform_0(%arg0: i32) -> (i32, i32) {
    %c0_i32 = arith.constant 0 : i32
    %c0_i32_0 = arith.constant 0 : i32
    return %arg0, %c0_i32 : i32, i32
  }
  func.func @transform_1(%arg0: i32) -> (i32, i32) {
    %c0_i32 = arith.constant 0 : i32
    %c0_i32_0 = arith.constant 0 : i32
    %c0_i32_1 = arith.constant 0 : i32
    return %c0_i32, %c0_i32_0 : i32, i32
  }
  func.func @transform_2(%arg0: i32) -> (i32, i32) {
    %c0_i32 = arith.constant 0 : i32
    %c0_i32_0 = arith.constant 0 : i32
    return %arg0, %c0_i32 : i32, i32
  }
}

</mosaic_0001>

<llo_original>
// kernel: _lambda_.6
$region0: #{_lambda_.6}
  #allocation0 [shape = 'u32[]', space=smem, size = 0x4, offset = 0x4, fixed_abs, tag = 'smem constant byte address 0x4 - core index']
  #allocation1 [shape = 'u32[144,128]{1,0:T(1,128)}', space=vmem, size = 0x12000, scoped, tag = 'internal scratch']
  %s0 = inlined_call_operand.vmem [shape: f32[2,18,18,4], index: 0, kind: input, shape index: {}]
  %s1 = inlined_call_operand.vmem [shape: bf16[9,4,128], index: 1, kind: input, shape index: {}]
  %s2 = inlined_call_operand.vmem [shape: bf16[4,128], index: 2, kind: input, shape index: {}]
  %s3 = inlined_call_operand.vmem [shape: f32[512,128], index: 3, kind: output, shape index: {0}]
  %s4 = inlined_call_operand.vmem [shape: f32[2,2,128], index: 4, kind: output, shape index: {1}]
  %s5 = inlined_call_operand.vmem [shape: f32[512,128], index: 5, kind: output, shape index: {2}]
  %s6 = inlined_call_operand.vmem [shape: f32[2,2,128], index: 6, kind: output, shape index: {3}]
  %7 = xla_tuple %s3, %s4, %s5, %s6
  %s8 = sld [smem:[#allocation0]]
  $region69: #{_lambda_.6} parent=0
    _
  %s10 = ssub.s32 1, %s8
  %s11 = scalar_select 0, %s10, %s8
  loop: start=0, step=1, limit=4
  $region2: #{_lambda_.6} parent=0 // loop_pre_header
    _
  $region3: #{_lambda_.6} parent=0 // loop_header
    %s13 = sphi 0, %s17
    %p14 = scmp.ge.s32.totalorder %s13, 4
    %s23 = sphi 0, %s25
    %s26 = sphi 0, %s23
    %s27 = sphi 0, %s26
    %s43 = sphi 0, %s27
    %s47 = sphi 0, %s47
    %s49 = sphi 0, %s47
    %s50 = sphi 0, %s49
    %s64 = sphi 0, %s50
    %s68 = sphi 0, %s68
    %s70 = sphi 0, %s68
    %s71 = sphi 0, %s70
    %s85 = sphi 0, %s71
    %s91 = sphi 0, %s93
    %s94 = sphi 0, %s91
    %s95 = sphi 0, %s94
    %s111 = sphi 0, %s95
    %s117 = sphi 0, %s119
    %s120 = sphi 0, %s117
    %s121 = sphi 0, %s120
    %s137 = sphi 0, %s121
    %s143 = sphi 0, %s145
    %s146 = sphi 0, %s143
    %s147 = sphi 0, %s146
    %s163 = sphi 0, %s147
    %s169 = sphi 0, %s171
    %s172 = sphi 0, %s169
    %s173 = sphi 0, %s172
    %s189 = sphi 0, %s173
  $region4: #{_lambda_.6} parent=0 // loop_header_branch
    %16 = sbr.rel (%p14) target = $region8
  $region5: #{_lambda_.6} parent=0 // loop_body
    %s18 = ssub.s32 %s13, 1
    %s19 = ssub.s32 %s13, 2
    %s20 = sadd.s32 %s13, 1
    %s21 = ssub.s32 %s13, %s20
    %p22 = scmp.eq.s32.totalorder %s21, 0
    %s24 = sadd.s32 %s23, 1
    %s25 = scalar_select %p22, %s23, %s24
    %p28 = pneg %p22
    %p29 = scmp.eq.s32.totalorder %s13, 1
    %p30 = por %p28, %p29
    %p31 = scmp.ne.s32.totalorder %s23, %s26
    %p32 = scmp.eq.s32.totalorder %s13, 0
    %p33 = por %p31, %p32
    %p34 = scmp.ne.s32.totalorder %s23, %s26
    %p35 = scmp.eq.s32.totalorder %s18, 1
    %p36 = por %p34, %p35
    %p37 = scmp.ne.s32.totalorder %s26, %s27
    %p38 = scmp.eq.s32.totalorder %s18, 0
    %p39 = por %p37, %p38
    %p40 = scmp.ne.s32.totalorder %s26, %s27
    %p41 = scmp.eq.s32.totalorder %s19, 1
    %p42 = por %p40, %p41
    %p44 = scmp.ne.s32.totalorder %s27, %s43
    %p45 = scmp.eq.s32.totalorder %s19, 0
    %p46 = por %p44, %p45
    %s48 = sadd.s32 %s47, 1
    %p51 = scmp.eq.s32.totalorder %s13, 1
    %p52 = scmp.ne.s32.totalorder %s47, %s49
    %p53 = scmp.eq.s32.totalorder %s13, 0
    %p54 = por %p52, %p53
    %p55 = scmp.ne.s32.totalorder %s47, %s49
    %p56 = scmp.eq.s32.totalorder %s18, 1
    %p57 = por %p55, %p56
    %p58 = scmp.ne.s32.totalorder %s49, %s50
    %p59 = scmp.eq.s32.totalorder %s18, 0
    %p60 = por %p58, %p59
    %p61 = scmp.ne.s32.totalorder %s49, %s50
    %p62 = scmp.eq.s32.totalorder %s19, 1
    %p63 = por %p61, %p62
    %p65 = scmp.ne.s32.totalorder %s50, %s64
    %p66 = scmp.eq.s32.totalorder %s19, 0
    %p67 = por %p65, %p66
    %s69 = sadd.s32 %s68, 1
    %p72 = scmp.eq.s32.totalorder %s13, 1
    %p73 = scmp.ne.s32.totalorder %s68, %s70
    %p74 = scmp.eq.s32.totalorder %s13, 0
    %p75 = por %p73, %p74
    %p76 = scmp.ne.s32.totalorder %s68, %s70
    %p77 = scmp.eq.s32.totalorder %s18, 1
    %p78 = por %p76, %p77
    %p79 = scmp.ne.s32.totalorder %s70, %s71
    %p80 = scmp.eq.s32.totalorder %s18, 0
    %p81 = por %p79, %p80
    %p82 = scmp.ne.s32.totalorder %s70, %s71
    %p83 = scmp.eq.s32.totalorder %s19, 1
    %p84 = por %p82, %p83
    %p86 = scmp.ne.s32.totalorder %s71, %s85
    %p87 = scmp.eq.s32.totalorder %s19, 0
    %p88 = por %p86, %p87
    %s89 = ssub.s32 %s13, %s20
    %p90 = scmp.eq.s32.totalorder %s89, 0
    %s92 = sadd.s32 %s91, 1
    %s93 = scalar_select %p90, %s91, %s92
    %p96 = pneg %p90
    %p97 = scmp.eq.s32.totalorder %s13, 1
    %p98 = por %p96, %p97
    %p99 = scmp.ne.s32.totalorder %s91, %s94
    %p100 = scmp.eq.s32.totalorder %s13, 0
    %p101 = por %p99, %p100
    %p102 = scmp.ne.s32.totalorder %s91, %s94
    %p103 = scmp.eq.s32.totalorder %s18, 1
    %p104 = por %p102, %p103
    %p105 = scmp.ne.s32.totalorder %s94, %s95
    %p106 = scmp.eq.s32.totalorder %s18, 0
    %p107 = por %p105, %p106
    %p108 = scmp.ne.s32.totalorder %s94, %s95
    %p109 = scmp.eq.s32.totalorder %s19, 1
    %p110 = por %p108, %p109
    %p112 = scmp.ne.s32.totalorder %s95, %s111
    %p113 = scmp.eq.s32.totalorder %s19, 0
    %p114 = por %p112, %p113
    %s115 = ssub.s32 %s13, %s20
    %p116 = scmp.eq.s32.totalorder %s115, 0
    %s118 = sadd.s32 %s117, 1
    %s119 = scalar_select %p116, %s117, %s118
    %p122 = pneg %p116
    %p123 = scmp.eq.s32.totalorder %s13, 1
    %p124 = por %p122, %p123
    %p125 = scmp.ne.s32.totalorder %s117, %s120
    %p126 = scmp.eq.s32.totalorder %s13, 0
    %p127 = por %p125, %p126
    %p128 = scmp.ne.s32.totalorder %s117, %s120
    %p129 = scmp.eq.s32.totalorder %s18, 1
    %p130 = por %p128, %p129
    %p131 = scmp.ne.s32.totalorder %s120, %s121
    %p132 = scmp.eq.s32.totalorder %s18, 0
    %p133 = por %p131, %p132
    %p134 = scmp.ne.s32.totalorder %s120, %s121
    %p135 = scmp.eq.s32.totalorder %s19, 1
    %p136 = por %p134, %p135
    %p138 = scmp.ne.s32.totalorder %s121, %s137
    %p139 = scmp.eq.s32.totalorder %s19, 0
    %p140 = por %p138, %p139
    %s141 = ssub.s32 %s13, %s20
    %p142 = scmp.eq.s32.totalorder %s141, 0
    %s144 = sadd.s32 %s143, 1
    %s145 = scalar_select %p142, %s143, %s144
    %p148 = pneg %p142
    %p149 = scmp.eq.s32.totalorder %s13, 1
    %p150 = por %p148, %p149
    %p151 = scmp.ne.s32.totalorder %s143, %s146
    %p152 = scmp.eq.s32.totalorder %s13, 0
    %p153 = por %p151, %p152
    %p154 = scmp.ne.s32.totalorder %s143, %s146
    %p155 = scmp.eq.s32.totalorder %s18, 1
    %p156 = por %p154, %p155
    %p157 = scmp.ne.s32.totalorder %s146, %s147
    %p158 = scmp.eq.s32.totalorder %s18, 0
    %p159 = por %p157, %p158
    %p160 = scmp.ne.s32.totalorder %s146, %s147
    %p161 = scmp.eq.s32.totalorder %s19, 1
    %p162 = por %p160, %p161
    %p164 = scmp.ne.s32.totalorder %s147, %s163
    %p165 = scmp.eq.s32.totalorder %s19, 0
    %p166 = por %p164, %p165
    %s167 = ssub.s32 %s13, %s20
    %p168 = scmp.eq.s32.totalorder %s167, 0
    %s170 = sadd.s32 %s169, 1
    %s171 = scalar_select %p168, %s169, %s170
    %p174 = pneg %p168
    %p175 = scmp.eq.s32.totalorder %s13, 1
    %p176 = por %p174, %p175
    %p177 = scmp.ne.s32.totalorder %s169, %s172
    %p178 = scmp.eq.s32.totalorder %s13, 0
    %p179 = por %p177, %p178
    %p180 = scmp.ne.s32.totalorder %s169, %s172
    %p181 = scmp.eq.s32.totalorder %s18, 1
    %p182 = por %p180, %p181
    %p183 = scmp.ne.s32.totalorder %s172, %s173
    %p184 = scmp.eq.s32.totalorder %s18, 0
    %p185 = por %p183, %p184
    %p186 = scmp.ne.s32.totalorder %s172, %s173
    %p187 = scmp.eq.s32.totalorder %s19, 1
    %p188 = por %p186, %p187
    %p190 = scmp.ne.s32.totalorder %s173, %s189
    %p191 = scmp.eq.s32.totalorder %s19, 0
    %p192 = por %p190, %p191
    %p193 = scmp.le.s32.totalorder 1, %s13
    %p194 = scmp.lt.s32.totalorder %s13, 3
    %p195 = pnand %p193, %p194
    %p196 = pneg %p195
    // Predicated region
    $region9: #{_lambda_.6} parent=5 // pred_check
      _
    $region10: #{_lambda_.6} parent=5 // pred_check_branch
      %198 = sbr.rel (%p195) target = $region12
    $region11: #{_lambda_.6} parent=5 // pred_region
      %s199 = ssub.s32 %s13, 1
      // Predicated region
      $region13: #{_lambda_.6} parent=11 // pred_check
        %p200 = pneg %p60
      $region14: #{_lambda_.6} parent=11 // pred_check_branch
        %202 = sbr.rel (%p200) target = $region16
      $region15: #{_lambda_.6} parent=11 // pred_region
        _
      $region16: #{_lambda_.6} parent=11 // pred_fallthru
        _
      // Predicated region
      $region17: #{_lambda_.6} parent=11 // pred_check
        %p203 = pneg %p81
      $region18: #{_lambda_.6} parent=11 // pred_check_branch
        %205 = sbr.rel (%p203) target = $region20
      $region19: #{_lambda_.6} parent=11 // pred_region
        _
      $region20: #{_lambda_.6} parent=11 // pred_fallthru
        _
    $region12: #{_lambda_.6} parent=5 // pred_fallthru
      _
    %p206 = scmp.lt.s32.totalorder %s13, 2
    // Predicated region
    $region21: #{_lambda_.6} parent=5 // pred_check
      %p207 = pneg %p206
    $region22: #{_lambda_.6} parent=5 // pred_check_branch
      %209 = sbr.rel (%p207) target = $region24
    $region23: #{_lambda_.6} parent=5 // pred_region
      // Predicated region
      $region25: #{_lambda_.6} parent=23 // pred_check
        %p210 = pneg %p33
      $region26: #{_lambda_.6} parent=23 // pred_check_branch
        %212 = sbr.rel (%p210) target = $region28
      $region27: #{_lambda_.6} parent=23 // pred_region
        %p213 = scmp.lt.s32.totalorder %s13, 1
        %s214 = scalar_select %p213, %s13, 1
        %s215 = smul.addr %s214, 54
        %s216 = smul.addr %s215, 8
        %s217 = scalar_lea.vmem %s0, %s216
      $region28: #{_lambda_.6} parent=23 // pred_fallthru
        _
    $region24: #{_lambda_.6} parent=5 // pred_fallthru
      _
    %p218 = scmp.le.s32.totalorder 1, %s13
    %p219 = scmp.lt.s32.totalorder %s13, 3
    %p220 = pnand %p218, %p219
    %p221 = pneg %p220
    // Predicated region
    $region29: #{_lambda_.6} parent=5 // pred_check
      _
    $region30: #{_lambda_.6} parent=5 // pred_check_branch
      %223 = sbr.rel (%p220) target = $region32
    $region31: #{_lambda_.6} parent=5 // pred_region
      %s224 = ssub.s32 %s13, 1
      %p225 = scmp.lt.s32.totalorder %s18, 1
      %s226 = scalar_select %p225, %s18, 1
      %s227 = smul.addr %s226, 54
      %s228 = smul.addr %s227, 8
      %s229 = scalar_lea.vmem %s0, %s228
      %p230 = pneg %p39
      %p231 = pneg %p36
      %p232 = pneg %p60
      %p233 = pneg %p57
      %p234 = pneg %p81
      %p235 = pneg %p78
      %p236 = pneg %p107
      %p237 = pneg %p104
      %s238 = smul.u32 32, %s18
      %p239 = scmp.lt.s32.totalorder %s238, 63
      %s240 = scalar_select %p239, %s238, 63
      %s241 = smul.addr %s240, 8
      %s242 = scalar_lea.vmem %s3, %s241
      %p243 = pneg %p133
      %p244 = pneg %p130
      %p245 = scmp.lt.s32.totalorder %s18, 1
      %s246 = scalar_select %p245, %s18, 1
      %s247 = smul.addr %s246, 2
      %s248 = scalar_lea.vmem %s4, %s247
      %p249 = pneg %p159
      %p250 = pneg %p156
      %s251 = smul.u32 32, %s18
      %p252 = scmp.lt.s32.totalorder %s251, 63
      %s253 = scalar_select %p252, %s251, 63
      %s254 = smul.addr %s253, 8
      %s255 = scalar_lea.vmem %s5, %s254
      %p256 = pneg %p185
      %p257 = pneg %p182
      %p258 = scmp.lt.s32.totalorder %s18, 1
      %s259 = scalar_select %p258, %s18, 1
      %s260 = smul.addr %s259, 2
      %s261 = scalar_lea.vmem %s6, %s260
      %p262 = scmp.lt.s32.totalorder %s18, 1
      %s263 = scalar_select %p262, %s18, 1
      %s264 = smul.addr %s263, 54
      %s265 = smul.addr %s264, 8
      %s266 = scalar_lea.vmem %s0, %s265
      %s267 = smul.u32 32, %s18
      %p268 = scmp.lt.s32.totalorder %s267, 63
      %s269 = scalar_select %p268, %s267, 63
      %s270 = smul.addr %s269, 8
      %s271 = scalar_lea.vmem %s3, %s270
      %s272 = smul.u32 32, %s18
      %p273 = scmp.lt.s32.totalorder %s18, 1
      %s274 = scalar_select %p273, %s18, 1
      %s275 = smul.addr %s274, 2
      %s276 = scalar_lea.vmem %s4, %s275
      %s277 = smul.u32 32, %s18
      %p278 = scmp.lt.s32.totalorder %s277, 63
      %s279 = scalar_select %p278, %s277, 63
      %s280 = smul.addr %s279, 8
      %s281 = scalar_lea.vmem %s5, %s280
      %s282 = smul.u32 32, %s18
      %p283 = scmp.lt.s32.totalorder %s18, 1
      %s284 = scalar_select %p283, %s18, 1
      %s285 = smul.addr %s284, 2
      %s286 = scalar_lea.vmem %s6, %s285
      %v288 = vld [vmem:[%s266] sm:$0xff]
      %v289 = vld [vmem:[%s266 + $0x8] sm:$0xff]
      %v290 = vld [vmem:[%s266 + $0x10] sm:$0x3]
      %v291 = vld [vmem:[%s266 + $0x18] sm:$0xff]
      %v292 = vld [vmem:[%s266 + $0x20] sm:$0xff]
      %v293 = vld [vmem:[%s266 + $0x28] sm:$0x3]
      %v294 = vld [vmem:[%s266 + $0x30] sm:$0xff]
      %v295 = vld [vmem:[%s266 + $0x38] sm:$0xff]
      %v296 = vld [vmem:[%s266 + $0x40] sm:$0x3]
      %v297 = vld [vmem:[%s266 + $0x48] sm:$0xff]
      %v298 = vld [vmem:[%s266 + $0x50] sm:$0xff]
      %v299 = vld [vmem:[%s266 + $0x58] sm:$0x3]
      %v300 = vld [vmem:[%s266 + $0x60] sm:$0xff]
      %v301 = vld [vmem:[%s266 + $0x68] sm:$0xff]
      %v302 = vld [vmem:[%s266 + $0x70] sm:$0x3]
      %v303 = vld [vmem:[%s266 + $0x78] sm:$0xff]
      %v304 = vld [vmem:[%s266 + $0x80] sm:$0xff]
      %v305 = vld [vmem:[%s266 + $0x88] sm:$0x3]
      %v306 = vld [vmem:[%s266 + $0x90] sm:$0xff]
      %v307 = vld [vmem:[%s266 + $0x98] sm:$0xff]
      %v308 = vld [vmem:[%s266 + $0xa0] sm:$0x3]
      %v309 = vld [vmem:[%s266 + $0xa8] sm:$0xff]
      %v310 = vld [vmem:[%s266 + $0xb0] sm:$0xff]
      %v311 = vld [vmem:[%s266 + $0xb8] sm:$0x3]
      %v312 = vld [vmem:[%s266 + $0xc0] sm:$0xff]
      %v313 = vld [vmem:[%s266 + $0xc8] sm:$0xff]
      %v314 = vld [vmem:[%s266 + $0xd0] sm:$0x3]
      %v315 = vld [vmem:[%s266 + $0xd8] sm:$0xff]
      %v316 = vld [vmem:[%s266 + $0xe0] sm:$0xff]
      %v317 = vld [vmem:[%s266 + $0xe8] sm:$0x3]
      %v318 = vld [vmem:[%s266 + $0xf0] sm:$0xff]
      %v319 = vld [vmem:[%s266 + $0xf8] sm:$0xff]
      %v320 = vld [vmem:[%s266 + $0x100] sm:$0x3]
      %v321 = vld [vmem:[%s266 + $0x108] sm:$0xff]
      %v322 = vld [vmem:[%s266 + $0x110] sm:$0xff]
      %v323 = vld [vmem:[%s266 + $0x118] sm:$0x3]
      %v324 = vld [vmem:[%s266 + $0x120] sm:$0xff]
      %v325 = vld [vmem:[%s266 + $0x128] sm:$0xff]
      %v326 = vld [vmem:[%s266 + $0x130] sm:$0x3]
      %v327 = vld [vmem:[%s266 + $0x138] sm:$0xff]
      %v328 = vld [vmem:[%s266 + $0x140] sm:$0xff]
      %v329 = vld [vmem:[%s266 + $0x148] sm:$0x3]
      %v330 = vld [vmem:[%s266 + $0x150] sm:$0xff]
      %v331 = vld [vmem:[%s266 + $0x158] sm:$0xff]
      %v332 = vld [vmem:[%s266 + $0x160] sm:$0x3]
      %v333 = vld [vmem:[%s266 + $0x168] sm:$0xff]
      %v334 = vld [vmem:[%s266 + $0x170] sm:$0xff]
      %v335 = vld [vmem:[%s266 + $0x178] sm:$0x3]
      %v336 = vld [vmem:[%s266 + $0x180] sm:$0xff]
      %v337 = vld [vmem:[%s266 + $0x188] sm:$0xff]
      %v338 = vld [vmem:[%s266 + $0x190] sm:$0x3]
      %v339 = vld [vmem:[%s266 + $0x198] sm:$0xff]
      %v340 = vld [vmem:[%s266 + $0x1a0] sm:$0xff]
      %v341 = vld [vmem:[%s266 + $0x1a8] sm:$0x3]
      %v342 = vpack.c.bf16 %v289, %v288
      %v343 = vpack.c.bf16 %v290, %v290
      %v344 = vpack.c.bf16 %v292, %v291
      %v345 = vpack.c.bf16 %v293, %v293
      %v346 = vpack.c.bf16 %v295, %v294
      %v347 = vpack.c.bf16 %v296, %v296
      %v348 = vpack.c.bf16 %v298, %v297
      %v349 = vpack.c.bf16 %v299, %v299
      %v350 = vpack.c.bf16 %v301, %v300
      %v351 = vpack.c.bf16 %v302, %v302
      %v352 = vpack.c.bf16 %v304, %v303
      %v353 = vpack.c.bf16 %v305, %v305
      %v354 = vpack.c.bf16 %v307, %v306
      %v355 = vpack.c.bf16 %v308, %v308
      %v356 = vpack.c.bf16 %v310, %v309
      %v357 = vpack.c.bf16 %v311, %v311
      %v358 = vpack.c.bf16 %v313, %v312
      %v359 = vpack.c.bf16 %v314, %v314
      %v360 = vpack.c.bf16 %v316, %v315
      %v361 = vpack.c.bf16 %v317, %v317
      %v362 = vpack.c.bf16 %v319, %v318
      %v363 = vpack.c.bf16 %v320, %v320
      %v364 = vpack.c.bf16 %v322, %v321
      %v365 = vpack.c.bf16 %v323, %v323
      %v366 = vpack.c.bf16 %v325, %v324
      %v367 = vpack.c.bf16 %v326, %v326
      %v368 = vpack.c.bf16 %v328, %v327
      %v369 = vpack.c.bf16 %v329, %v329
      %v370 = vpack.c.bf16 %v331, %v330
      %v371 = vpack.c.bf16 %v332, %v332
      %v372 = vpack.c.bf16 %v334, %v333
      %v373 = vpack.c.bf16 %v335, %v335
      %v374 = vpack.c.bf16 %v337, %v336
      %v375 = vpack.c.bf16 %v338, %v338
      %v376 = vpack.c.bf16 %v340, %v339
      %v377 = vpack.c.bf16 %v341, %v341
      %v378 = vld [vmem:[%s1] sm:$0x3]
      %vm379 = vsmask.f32 7424
      %v381 = vshrl.u32 %v342, 16
      %v383 = vshll.u32 %v342, 16
      %v385 = vrot.slane %v383, 1
      %v386 = vor.u32 %v381, %v385
      %v388 = vshll.u32 %v343, 16
      %v390 = vrot.slane %v388, 1
      %v391 = vsel %vm379, %v386, %v390
      %v393 = vshrl.u32 %v344, 16
      %v395 = vshll.u32 %v344, 16
      %v397 = vrot.slane %v395, 1
      %v398 = vor.u32 %v393, %v397
      %v400 = vshll.u32 %v345, 16
      %v402 = vrot.slane %v400, 1
      %v403 = vsel %vm379, %v398, %v402
      %v405 = vshrl.u32 %v346, 16
      %v407 = vshll.u32 %v346, 16
      %v409 = vrot.slane %v407, 1
      %v410 = vor.u32 %v405, %v409
      %v412 = vshll.u32 %v347, 16
      %v414 = vrot.slane %v412, 1
      %v415 = vsel %vm379, %v410, %v414
      %v417 = vshrl.u32 %v348, 16
      %v419 = vshll.u32 %v348, 16
      %v421 = vrot.slane %v419, 1
      %v422 = vor.u32 %v417, %v421
      %v424 = vshll.u32 %v349, 16
      %v426 = vrot.slane %v424, 1
      %v427 = vsel %vm379, %v422, %v426
      %v429 = vshrl.u32 %v350, 16
      %v431 = vshll.u32 %v350, 16
      %v433 = vrot.slane %v431, 1
      %v434 = vor.u32 %v429, %v433
      %v436 = vshll.u32 %v351, 16
      %v438 = vrot.slane %v436, 1
      %v439 = vsel %vm379, %v434, %v438
      %v441 = vshrl.u32 %v352, 16
      %v443 = vshll.u32 %v352, 16
      %v445 = vrot.slane %v443, 1
      %v446 = vor.u32 %v441, %v445
      %v448 = vshll.u32 %v353, 16
      %v450 = vrot.slane %v448, 1
      %v451 = vsel %vm379, %v446, %v450
      %v453 = vshrl.u32 %v354, 16
      %v455 = vshll.u32 %v354, 16
      %v457 = vrot.slane %v455, 1
      %v458 = vor.u32 %v453, %v457
      %v460 = vshll.u32 %v355, 16
      %v462 = vrot.slane %v460, 1
      %v463 = vsel %vm379, %v458, %v462
      %v465 = vshrl.u32 %v356, 16
      %v467 = vshll.u32 %v356, 16
      %v469 = vrot.slane %v467, 1
      %v470 = vor.u32 %v465, %v469
      %v472 = vshll.u32 %v357, 16
      %v474 = vrot.slane %v472, 1
      %v475 = vsel %vm379, %v470, %v474
      %v477 = vshrl.u32 %v358, 16
      %v479 = vshll.u32 %v358, 16
      %v481 = vrot.slane %v479, 1
      %v482 = vor.u32 %v477, %v481
      %v484 = vshll.u32 %v359, 16
      %v486 = vrot.slane %v484, 1
      %v487 = vsel %vm379, %v482, %v486
      %v489 = vshrl.u32 %v360, 16
      %v491 = vshll.u32 %v360, 16
      %v493 = vrot.slane %v491, 1
      %v494 = vor.u32 %v489, %v493
      %v496 = vshll.u32 %v361, 16
      %v498 = vrot.slane %v496, 1
      %v499 = vsel %vm379, %v494, %v498
      %v501 = vshrl.u32 %v362, 16
      %v503 = vshll.u32 %v362, 16
      %v505 = vrot.slane %v503, 1
      %v506 = vor.u32 %v501, %v505
      %v508 = vshll.u32 %v363, 16
      %v510 = vrot.slane %v508, 1
      %v511 = vsel %vm379, %v506, %v510
      %v513 = vshrl.u32 %v364, 16
      %v515 = vshll.u32 %v364, 16
      %v517 = vrot.slane %v515, 1
      %v518 = vor.u32 %v513, %v517
      %v520 = vshll.u32 %v365, 16
      %v522 = vrot.slane %v520, 1
      %v523 = vsel %vm379, %v518, %v522
      %v525 = vshrl.u32 %v366, 16
      %v527 = vshll.u32 %v366, 16
      %v529 = vrot.slane %v527, 1
      %v530 = vor.u32 %v525, %v529
      %v532 = vshll.u32 %v367, 16
      %v534 = vrot.slane %v532, 1
      %v535 = vsel %vm379, %v530, %v534
      %v537 = vshrl.u32 %v368, 16
      %v539 = vshll.u32 %v368, 16
      %v541 = vrot.slane %v539, 1
      %v542 = vor.u32 %v537, %v541
      %v544 = vshll.u32 %v369, 16
      %v546 = vrot.slane %v544, 1
      %v547 = vsel %vm379, %v542, %v546
      %v549 = vshrl.u32 %v370, 16
      %v551 = vshll.u32 %v370, 16
      %v553 = vrot.slane %v551, 1
      %v554 = vor.u32 %v549, %v553
      %v556 = vshll.u32 %v371, 16
      %v558 = vrot.slane %v556, 1
      %v559 = vsel %vm379, %v554, %v558
      %v561 = vshrl.u32 %v372, 16
      %v563 = vshll.u32 %v372, 16
      %v565 = vrot.slane %v563, 1
      %v566 = vor.u32 %v561, %v565
      %v568 = vshll.u32 %v373, 16
      %v570 = vrot.slane %v568, 1
      %v571 = vsel %vm379, %v566, %v570
      %s572 = scalar_lea.vmem %s1, 2
      %v573 = vld [vmem:[%s572] sm:$0x3]
      %vm574 = vcmask 31744
      %v576 = vsel %vm574, %v391, 0
      %v579 = vsel %vm574, %v403, 0
      %v582 = vsel %vm574, %v415, 0
      %v585 = vsel %vm574, %v427, 0
      %v588 = vsel %vm574, %v439, 0
      %v591 = vsel %vm574, %v451, 0
      %v594 = vsel %vm574, %v463, 0
      %v597 = vsel %vm574, %v475, 0
      %v600 = vsel %vm574, %v487, 0
      %v603 = vsel %vm574, %v499, 0
      %v606 = vsel %vm574, %v511, 0
      %v609 = vsel %vm574, %v523, 0
      %v612 = vsel %vm574, %v535, 0
      %v615 = vsel %vm574, %v547, 0
      %v618 = vsel %vm574, %v559, 0
      %v621 = vsel %vm574, %v571, 0
      %vm623 = vcmask 1041408
      %v625 = vsel %vm623, %v573, 0
      %627 = vmatprep.subr.bf16.mxu0 0
      %628 = vmatpush1.bf16.msra.mxu0 0
      %629 = vmatprep.subr.bf16.mxu0 0
      %630 = vmatpush1.bf16.msra.mxu0 0
      %631 = vmatprep.subr.bf16.mxu0 0
      %632 = vmatpush1.bf16.msra.mxu0 0
      %633 = vmatprep.subr.bf16.mxu0 0
      %634 = vmatpush1.bf16.msra.mxu0 0
      %635 = vmatprep.subr.bf16.mxu0 0
      %636 = vmatpush1.bf16.msra.mxu0 0
      %637 = vmatprep.subr.bf16.mxu0 0
      %638 = vmatpush1.bf16.msra.mxu0 0
      %639 = vmatprep.subr.bf16.mxu0 0
      %640 = vmatpush1.bf16.msra.mxu0 0
      %641 = vmatprep.subr.bf16.mxu0 0
      %642 = vmatpush1.bf16.msra.mxu0 %v625
      %643 = vmatprep.subr.bf16.mxu0 0
      %644 = vmatpush2.bf16.msra.mxu0 0
      %645 = vmatprep.subr.bf16.mxu0 0
      %646 = vmatpush2.bf16.msra.mxu0 0
      %647 = vmatprep.subr.bf16.mxu0 0
      %648 = vmatpush2.bf16.msra.mxu0 0
      %649 = vmatprep.subr.bf16.mxu0 0
      %650 = vmatpush2.bf16.msra.mxu0 0
      %651 = vmatprep.subr.bf16.mxu0 0
      %652 = vmatpush2.bf16.msra.mxu0 0
      %653 = vmatprep.subr.bf16.mxu0 0
      %654 = vmatpush2.bf16.msra.mxu0 0
      %655 = vmatprep.subr.bf16.mxu0 0
      %656 = vmatpush2.bf16.msra.mxu0 0
      %657 = vmatprep.subr.bf16.mxu0 0
      %658 = vmatpush2.bf16.msra.mxu0 0
      %659 = vmatprep.mubr.bf16.mxu0 0
      %660 = vmatmul.mubr.bf16.gmra.mxu0 %v576
      %v661 = vpop.f32.mrf.mxu0
      %v662 = vadd.f32 0.0, %v661
      %v663 = vpop.f32.mrf.mxu0
      %v664 = vpop.f32.mrf.mxu0
      %v665 = vadd.f32 0.0, %v664
      %v666 = vpop.f32.mrf.mxu0
      %667 = vmatprep.mubr.bf16.mxu0 0
      %668 = vmatmul.mubr.bf16.gmra.mxu0 %v579
      %v669 = vpop.f32.mrf.mxu0
      %v670 = vadd.f32 0.0, %v669
      %v671 = vpop.f32.mrf.mxu0
      %v672 = vpop.f32.mrf.mxu0
      %v673 = vadd.f32 0.0, %v672
      %v674 = vpop.f32.mrf.mxu0
      %675 = vmatprep.mubr.bf16.mxu0 0
      %676 = vmatmul.mubr.bf16.gmra.mxu0 %v582
      %v677 = vpop.f32.mrf.mxu0
      %v678 = vadd.f32 0.0, %v677
      %v679 = vpop.f32.mrf.mxu0
      %v680 = vpop.f32.mrf.mxu0
      %v681 = vadd.f32 0.0, %v680
      %v682 = vpop.f32.mrf.mxu0
      %683 = vmatprep.mubr.bf16.mxu0 0
      %684 = vmatmul.mubr.bf16.gmra.mxu0 %v585
      %v685 = vpop.f32.mrf.mxu0
      %v686 = vadd.f32 0.0, %v685
      %v687 = vpop.f32.mrf.mxu0
      %v688 = vpop.f32.mrf.mxu0
      %v689 = vadd.f32 0.0, %v688
      %v690 = vpop.f32.mrf.mxu0
      %691 = vmatprep.mubr.bf16.mxu0 0
      %692 = vmatmul.mubr.bf16.gmra.mxu0 %v588
      %v693 = vpop.f32.mrf.mxu0
      %v694 = vadd.f32 0.0, %v693
      %v695 = vpop.f32.mrf.mxu0
      %v696 = vpop.f32.mrf.mxu0
      %v697 = vadd.f32 0.0, %v696
      %v698 = vpop.f32.mrf.mxu0
      %699 = vmatprep.mubr.bf16.mxu0 0
      %700 = vmatmul.mubr.bf16.gmra.mxu0 %v591
      %v701 = vpop.f32.mrf.mxu0
      %v702 = vadd.f32 0.0, %v701
      %v703 = vpop.f32.mrf.mxu0
      %v704 = vpop.f32.mrf.mxu0
      %v705 = vadd.f32 0.0, %v704
      %v706 = vpop.f32.mrf.mxu0
      %707 = vmatprep.mubr.bf16.mxu0 0
      %708 = vmatmul.mubr.bf16.gmra.mxu0 %v594
      %v709 = vpop.f32.mrf.mxu0
      %v710 = vadd.f32 0.0, %v709
      %v711 = vpop.f32.mrf.mxu0
      %v712 = vpop.f32.mrf.mxu0
      %v713 = vadd.f32 0.0, %v712
      %v714 = vpop.f32.mrf.mxu0
      %715 = vmatprep.mubr.bf16.mxu0 0
      %716 = vmatmul.mubr.bf16.gmra.mxu0 %v597
      %v717 = vpop.f32.mrf.mxu0
      %v718 = vadd.f32 0.0, %v717
      %v719 = vpop.f32.mrf.mxu0
      %v720 = vpop.f32.mrf.mxu0
      %v721 = vadd.f32 0.0, %v720
      %v722 = vpop.f32.mrf.mxu0
      %723 = vmatprep.mubr.bf16.mxu0 0
      %724 = vmatmul.mubr.bf16.gmra.mxu0 %v600
      %v725 = vpop.f32.mrf.mxu0
      %v726 = vadd.f32 0.0, %v725
      %v727 = vpop.f32.mrf.mxu0
      %v728 = vpop.f32.mrf.mxu0
      %v729 = vadd.f32 0.0, %v728
      %v730 = vpop.f32.mrf.mxu0
      %731 = vmatprep.mubr.bf16.mxu0 0
      %732 = vmatmul.mubr.bf16.gmra.mxu0 %v603
      %v733 = vpop.f32.mrf.mxu0
      %v734 = vadd.f32 0.0, %v733
      %v735 = vpop.f32.mrf.mxu0
      %v736 = vpop.f32.mrf.mxu0
      %v737 = vadd.f32 0.0, %v736
      %v738 = vpop.f32.mrf.mxu0
      %739 = vmatprep.mubr.bf16.mxu0 0
      %740 = vmatmul.mubr.bf16.gmra.mxu0 %v606
      %v741 = vpop.f32.mrf.mxu0
      %v742 = vadd.f32 0.0, %v741
      %v743 = vpop.f32.mrf.mxu0
      %v744 = vpop.f32.mrf.mxu0
      %v745 = vadd.f32 0.0, %v744
      %v746 = vpop.f32.mrf.mxu0
      %747 = vmatprep.mubr.bf16.mxu0 0
      %748 = vmatmul.mubr.bf16.gmra.mxu0 %v609
      %v749 = vpop.f32.mrf.mxu0
      %v750 = vadd.f32 0.0, %v749
      %v751 = vpop.f32.mrf.mxu0
      %v752 = vpop.f32.mrf.mxu0
      %v753 = vadd.f32 0.0, %v752
      %v754 = vpop.f32.mrf.mxu0
      %755 = vmatprep.mubr.bf16.mxu0 0
      %756 = vmatmul.mubr.bf16.gmra.mxu0 %v612
      %v757 = vpop.f32.mrf.mxu0
      %v758 = vadd.f32 0.0, %v757
      %v759 = vpop.f32.mrf.mxu0
      %v760 = vpop.f32.mrf.mxu0
      %v761 = vadd.f32 0.0, %v760
      %v762 = vpop.f32.mrf.mxu0
      %763 = vmatprep.mubr.bf16.mxu0 0
      %764 = vmatmul.mubr.bf16.gmra.mxu0 %v615
      %v765 = vpop.f32.mrf.mxu0
      %v766 = vadd.f32 0.0, %v765
      %v767 = vpop.f32.mrf.mxu0
      %v768 = vpop.f32.mrf.mxu0
      %v769 = vadd.f32 0.0, %v768
      %v770 = vpop.f32.mrf.mxu0
      %771 = vmatprep.mubr.bf16.mxu0 0
      %772 = vmatmul.mubr.bf16.gmra.mxu0 %v618
      %v773 = vpop.f32.mrf.mxu0
      %v774 = vadd.f32 0.0, %v773
      %v775 = vpop.f32.mrf.mxu0
      %v776 = vpop.f32.mrf.mxu0
      %v777 = vadd.f32 0.0, %v776
      %v778 = vpop.f32.mrf.mxu0
      %779 = vmatprep.mubr.bf16.mxu0 0
      %780 = vmatmul.mubr.bf16.gmra.mxu0 %v621
      %v781 = vpop.f32.mrf.mxu0
      %v782 = vadd.f32 0.0, %v781
      %v783 = vpop.f32.mrf.mxu0
      %v784 = vpop.f32.mrf.mxu0
      %v785 = vadd.f32 0.0, %v784
      %v786 = vpop.f32.mrf.mxu0
      %787 = vdwg.mxu0
      %v788 = vsel %vm574, %v342, 0
      %v790 = vsel %vm574, %v344, 0
      %v792 = vsel %vm574, %v346, 0
      %v794 = vsel %vm574, %v348, 0
      %v796 = vsel %vm574, %v350, 0
      %v798 = vsel %vm574, %v352, 0
      %v800 = vsel %vm574, %v354, 0
      %v802 = vsel %vm574, %v356, 0
      %v804 = vsel %vm574, %v358, 0
      %v806 = vsel %vm574, %v360, 0
      %v808 = vsel %vm574, %v362, 0
      %v810 = vsel %vm574, %v364, 0
      %v812 = vsel %vm574, %v366, 0
      %v814 = vsel %vm574, %v368, 0
      %v816 = vsel %vm574, %v370, 0
      %v818 = vsel %vm574, %v372, 0
      %v821 = vsel %vm623, %v378, 0
      %823 = vmatprep.subr.bf16.mxu0 0
      %824 = vmatpush1.bf16.msra.mxu0 0
      %825 = vmatprep.subr.bf16.mxu0 0
      %826 = vmatpush1.bf16.msra.mxu0 0
      %827 = vmatprep.subr.bf16.mxu0 0
      %828 = vmatpush1.bf16.msra.mxu0 0
      %829 = vmatprep.subr.bf16.mxu0 0
      %830 = vmatpush1.bf16.msra.mxu0 0
      %831 = vmatprep.subr.bf16.mxu0 0
      %832 = vmatpush1.bf16.msra.mxu0 0
      %833 = vmatprep.subr.bf16.mxu0 0
      %834 = vmatpush1.bf16.msra.mxu0 0
      %835 = vmatprep.subr.bf16.mxu0 0
      %836 = vmatpush1.bf16.msra.mxu0 0
      %837 = vmatprep.subr.bf16.mxu0 0
      %838 = vmatpush1.bf16.msra.mxu0 %v821
      %839 = vmatprep.subr.bf16.mxu0 0
      %840 = vmatpush2.bf16.msra.mxu0 0
      %841 = vmatprep.subr.bf16.mxu0 0
      %842 = vmatpush2.bf16.msra.mxu0 0
      %843 = vmatprep.subr.bf16.mxu0 0
      %844 = vmatpush2.bf16.msra.mxu0 0
      %845 = vmatprep.subr.bf16.mxu0 0
      %846 = vmatpush2.bf16.msra.mxu0 0
      %847 = vmatprep.subr.bf16.mxu0 0
      %848 = vmatpush2.bf16.msra.mxu0 0
      %849 = vmatprep.subr.bf16.mxu0 0
      %850 = vmatpush2.bf16.msra.mxu0 0
      %851 = vmatprep.subr.bf16.mxu0 0
      %852 = vmatpush2.bf16.msra.mxu0 0
      %853 = vmatprep.subr.bf16.mxu0 0
      %854 = vmatpush2.bf16.msra.mxu0 0
      %855 = vmatprep.mubr.bf16.mxu0 0
      %856 = vmatmul.mubr.bf16.gmra.mxu0 %v788
      %v857 = vpop.f32.mrf.mxu0
      %v858 = vadd.f32 %v662, %v857
      %v859 = vpop.f32.mrf.mxu0
      %v860 = vpop.f32.mrf.mxu0
      %v861 = vadd.f32 %v665, %v860
      %v862 = vpop.f32.mrf.mxu0
      %863 = vmatprep.mubr.bf16.mxu0 0
      %864 = vmatmul.mubr.bf16.gmra.mxu0 %v790
      %v865 = vpop.f32.mrf.mxu0
      %v866 = vadd.f32 %v670, %v865
      %v867 = vpop.f32.mrf.mxu0
      %v868 = vpop.f32.mrf.mxu0
      %v869 = vadd.f32 %v673, %v868
      %v870 = vpop.f32.mrf.mxu0
      %871 = vmatprep.mubr.bf16.mxu0 0
      %872 = vmatmul.mubr.bf16.gmra.mxu0 %v792
      %v873 = vpop.f32.mrf.mxu0
      %v874 = vadd.f32 %v678, %v873
      %v875 = vpop.f32.mrf.mxu0
      %v876 = vpop.f32.mrf.mxu0
      %v877 = vadd.f32 %v681, %v876
      %v878 = vpop.f32.mrf.mxu0
      %879 = vmatprep.mubr.bf16.mxu0 0
      %880 = vmatmul.mubr.bf16.gmra.mxu0 %v794
      %v881 = vpop.f32.mrf.mxu0
      %v882 = vadd.f32 %v686, %v881
      %v883 = vpop.f32.mrf.mxu0
      %v884 = vpop.f32.mrf.mxu0
      %v885 = vadd.f32 %v689, %v884
      %v886 = vpop.f32.mrf.mxu0
      %887 = vmatprep.mubr.bf16.mxu0 0
      %888 = vmatmul.mubr.bf16.gmra.mxu0 %v796
      %v889 = vpop.f32.mrf.mxu0
      %v890 = vadd.f32 %v694, %v889
      %v891 = vpop.f32.mrf.mxu0
      %v892 = vpop.f32.mrf.mxu0
      %v893 = vadd.f32 %v697, %v892
      %v894 = vpop.f32.mrf.mxu0
      %895 = vmatprep.mubr.bf16.mxu0 0
      %896 = vmatmul.mubr.bf16.gmra.mxu0 %v798
      %v897 = vpop.f32.mrf.mxu0
      %v898 = vadd.f32 %v702, %v897
      %v899 = vpop.f32.mrf.mxu0
      %v900 = vpop.f32.mrf.mxu0
      %v901 = vadd.f32 %v705, %v900
      %v902 = vpop.f32.mrf.mxu0
      %903 = vmatprep.mubr.bf16.mxu0 0
      %904 = vmatmul.mubr.bf16.gmra.mxu0 %v800
      %v905 = vpop.f32.mrf.mxu0
      %v906 = vadd.f32 %v710, %v905
      %v907 = vpop.f32.mrf.mxu0
      %v908 = vpop.f32.mrf.mxu0
      %v909 = vadd.f32 %v713, %v908
      %v910 = vpop.f32.mrf.mxu0
      %911 = vmatprep.mubr.bf16.mxu0 0
      %912 = vmatmul.mubr.bf16.gmra.mxu0 %v802
      %v913 = vpop.f32.mrf.mxu0
      %v914 = vadd.f32 %v718, %v913
      %v915 = vpop.f32.mrf.mxu0
      %v916 = vpop.f32.mrf.mxu0
      %v917 = vadd.f32 %v721, %v916
      %v918 = vpop.f32.mrf.mxu0
      %919 = vmatprep.mubr.bf16.mxu0 0
      %920 = vmatmul.mubr.bf16.gmra.mxu0 %v804
      %v921 = vpop.f32.mrf.mxu0
      %v922 = vadd.f32 %v726, %v921
      %v923 = vpop.f32.mrf.mxu0
      %v924 = vpop.f32.mrf.mxu0
      %v925 = vadd.f32 %v729, %v924
      %v926 = vpop.f32.mrf.mxu0
      %927 = vmatprep.mubr.bf16.mxu0 0
      %928 = vmatmul.mubr.bf16.gmra.mxu0 %v806
      %v929 = vpop.f32.mrf.mxu0
      %v930 = vadd.f32 %v734, %v929
      %v931 = vpop.f32.mrf.mxu0
      %v932 = vpop.f32.mrf.mxu0
      %v933 = vadd.f32 %v737, %v932
      %v934 = vpop.f32.mrf.mxu0
      %935 = vmatprep.mubr.bf16.mxu0 0
      %936 = vmatmul.mubr.bf16.gmra.mxu0 %v808
      %v937 = vpop.f32.mrf.mxu0
      %v938 = vadd.f32 %v742, %v937
      %v939 = vpop.f32.mrf.mxu0
      %v940 = vpop.f32.mrf.mxu0
      %v941 = vadd.f32 %v745, %v940
      %v942 = vpop.f32.mrf.mxu0
      %943 = vmatprep.mubr.bf16.mxu0 0
      %944 = vmatmul.mubr.bf16.gmra.mxu0 %v810
      %v945 = vpop.f32.mrf.mxu0
      %v946 = vadd.f32 %v750, %v945
      %v947 = vpop.f32.mrf.mxu0
      %v948 = vpop.f32.mrf.mxu0
      %v949 = vadd.f32 %v753, %v948
      %v950 = vpop.f32.mrf.mxu0
      %951 = vmatprep.mubr.bf16.mxu0 0
      %952 = vmatmul.mubr.bf16.gmra.mxu0 %v812
      %v953 = vpop.f32.mrf.mxu0
      %v954 = vadd.f32 %v758, %v953
      %v955 = vpop.f32.mrf.mxu0
      %v956 = vpop.f32.mrf.mxu0
      %v957 = vadd.f32 %v761, %v956
      %v958 = vpop.f32.mrf.mxu0
      %959 = vmatprep.mubr.bf16.mxu0 0
      %960 = vmatmul.mubr.bf16.gmra.mxu0 %v814
      %v961 = vpop.f32.mrf.mxu0
      %v962 = vadd.f32 %v766, %v961
      %v963 = vpop.f32.mrf.mxu0
      %v964 = vpop.f32.mrf.mxu0
      %v965 = vadd.f32 %v769, %v964
      %v966 = vpop.f32.mrf.mxu0
      %967 = vmatprep.mubr.bf16.mxu0 0
      %968 = vmatmul.mubr.bf16.gmra.mxu0 %v816
      %v969 = vpop.f32.mrf.mxu0
      %v970 = vadd.f32 %v774, %v969
      %v971 = vpop.f32.mrf.mxu0
      %v972 = vpop.f32.mrf.mxu0
      %v973 = vadd.f32 %v777, %v972
      %v974 = vpop.f32.mrf.mxu0
      %975 = vmatprep.mubr.bf16.mxu0 0
      %976 = vmatmul.mubr.bf16.gmra.mxu0 %v818
      %v977 = vpop.f32.mrf.mxu0
      %v978 = vadd.f32 %v782, %v977
      %v979 = vpop.f32.mrf.mxu0
      %v980 = vpop.f32.mrf.mxu0
      %v981 = vadd.f32 %v785, %v980
      %v982 = vpop.f32.mrf.mxu0
      %983 = vdwg.mxu0
      %vm1016 = vcmask 1046528
      %v1017 = vrot.slane %v342, 1
      %v1018 = vrot.slane %v343, 1
      %v1019 = vsel %vm1016, %v1017, %v1018
      %v1020 = vrot.slane %v344, 1
      %v1021 = vrot.slane %v345, 1
      %v1022 = vsel %vm1016, %v1020, %v1021
      %v1023 = vrot.slane %v346, 1
      %v1024 = vrot.slane %v347, 1
      %v1025 = vsel %vm1016, %v1023, %v1024
      %v1026 = vrot.slane %v348, 1
      %v1027 = vrot.slane %v349, 1
      %v1028 = vsel %vm1016, %v1026, %v1027
      %v1029 = vrot.slane %v350, 1
      %v1030 = vrot.slane %v351, 1
      %v1031 = vsel %vm1016, %v1029, %v1030
      %v1032 = vrot.slane %v352, 1
      %v1033 = vrot.slane %v353, 1
      %v1034 = vsel %vm1016, %v1032, %v1033
      %v1035 = vrot.slane %v354, 1
      %v1036 = vrot.slane %v355, 1
      %v1037 = vsel %vm1016, %v1035, %v1036
      %v1038 = vrot.slane %v356, 1
      %v1039 = vrot.slane %v357, 1
      %v1040 = vsel %vm1016, %v1038, %v1039
      %v1041 = vrot.slane %v358, 1
      %v1042 = vrot.slane %v359, 1
      %v1043 = vsel %vm1016, %v1041, %v1042
      %v1044 = vrot.slane %v360, 1
      %v1045 = vrot.slane %v361, 1
      %v1046 = vsel %vm1016, %v1044, %v1045
      %v1047 = vrot.slane %v362, 1
      %v1048 = vrot.slane %v363, 1
      %v1049 = vsel %vm1016, %v1047, %v1048
      %v1050 = vrot.slane %v364, 1
      %v1051 = vrot.slane %v365, 1
      %v1052 = vsel %vm1016, %v1050, %v1051
      %v1053 = vrot.slane %v366, 1
      %v1054 = vrot.slane %v367, 1
      %v1055 = vsel %vm1016, %v1053, %v1054
      %v1056 = vrot.slane %v368, 1
      %v1057 = vrot.slane %v369, 1
      %v1058 = vsel %vm1016, %v1056, %v1057
      %v1059 = vrot.slane %v370, 1
      %v1060 = vrot.slane %v371, 1
      %v1061 = vsel %vm1016, %v1059, %v1060
      %v1062 = vrot.slane %v372, 1
      %v1063 = vrot.slane %v373, 1
      %v1064 = vsel %vm1016, %v1062, %v1063
      %s1065 = scalar_lea.vmem %s1, 4
      %v1066 = vld [vmem:[%s1065] sm:$0x3]
      %v1068 = vsel %vm574, %v1019, 0
      %v1071 = vsel %vm574, %v1022, 0
      %v1074 = vsel %vm574, %v1025, 0
      %v1077 = vsel %vm574, %v1028, 0
      %v1080 = vsel %vm574, %v1031, 0
      %v1083 = vsel %vm574, %v1034, 0
      %v1086 = vsel %vm574, %v1037, 0
      %v1089 = vsel %vm574, %v1040, 0
      %v1092 = vsel %vm574, %v1043, 0
      %v1095 = vsel %vm574, %v1046, 0
      %v1098 = vsel %vm574, %v1049, 0
      %v1101 = vsel %vm574, %v1052, 0
      %v1104 = vsel %vm574, %v1055, 0
      %v1107 = vsel %vm574, %v1058, 0
      %v1110 = vsel %vm574, %v1061, 0
      %v1113 = vsel %vm574, %v1064, 0
      %v1116 = vsel %vm623, %v1066, 0
      %1118 = vmatprep.subr.bf16.mxu0 0
      %1119 = vmatpush1.bf16.msra.mxu0 0
      %1120 = vmatprep.subr.bf16.mxu0 0
      %1121 = vmatpush1.bf16.msra.mxu0 0
      %1122 = vmatprep.subr.bf16.mxu0 0
      %1123 = vmatpush1.bf16.msra.mxu0 0
      %1124 = vmatprep.subr.bf16.mxu0 0
      %1125 = vmatpush1.bf16.msra.mxu0 0
      %1126 = vmatprep.subr.bf16.mxu0 0
      %1127 = vmatpush1.bf16.msra.mxu0 0
      %1128 = vmatprep.subr.bf16.mxu0 0
      %1129 = vmatpush1.bf16.msra.mxu0 0
      %1130 = vmatprep.subr.bf16.mxu0 0
      %1131 = vmatpush1.bf16.msra.mxu0 0
      %1132 = vmatprep.subr.bf16.mxu0 0
      %1133 = vmatpush1.bf16.msra.mxu0 %v1116
      %1134 = vmatprep.subr.bf16.mxu0 0
      %1135 = vmatpush2.bf16.msra.mxu0 0
      %1136 = vmatprep.subr.bf16.mxu0 0
      %1137 = vmatpush2.bf16.msra.mxu0 0
      %1138 = vmatprep.subr.bf16.mxu0 0
      %1139 = vmatpush2.bf16.msra.mxu0 0
      %1140 = vmatprep.subr.bf16.mxu0 0
      %1141 = vmatpush2.bf16.msra.mxu0 0
      %1142 = vmatprep.subr.bf16.mxu0 0
      %1143 = vmatpush2.bf16.msra.mxu0 0
      %1144 = vmatprep.subr.bf16.mxu0 0
      %1145 = vmatpush2.bf16.msra.mxu0 0
      %1146 = vmatprep.subr.bf16.mxu0 0
      %1147 = vmatpush2.bf16.msra.mxu0 0
      %1148 = vmatprep.subr.bf16.mxu0 0
      %1149 = vmatpush2.bf16.msra.mxu0 0
      %1150 = vmatprep.mubr.bf16.mxu0 0
      %1151 = vmatmul.mubr.bf16.gmra.mxu0 %v1068
      %v1152 = vpop.f32.mrf.mxu0
      %v1153 = vadd.f32 0.0, %v1152
      %v1154 = vpop.f32.mrf.mxu0
      %v1155 = vpop.f32.mrf.mxu0
      %v1156 = vadd.f32 0.0, %v1155
      %v1157 = vpop.f32.mrf.mxu0
      %1158 = vmatprep.mubr.bf16.mxu0 0
      %1159 = vmatmul.mubr.bf16.gmra.mxu0 %v1071
      %v1160 = vpop.f32.mrf.mxu0
      %v1161 = vadd.f32 0.0, %v1160
      %v1162 = vpop.f32.mrf.mxu0
      %v1163 = vpop.f32.mrf.mxu0
      %v1164 = vadd.f32 0.0, %v1163
      %v1165 = vpop.f32.mrf.mxu0
      %1166 = vmatprep.mubr.bf16.mxu0 0
      %1167 = vmatmul.mubr.bf16.gmra.mxu0 %v1074
      %v1168 = vpop.f32.mrf.mxu0
      %v1169 = vadd.f32 0.0, %v1168
      %v1170 = vpop.f32.mrf.mxu0
      %v1171 = vpop.f32.mrf.mxu0
      %v1172 = vadd.f32 0.0, %v1171
      %v1173 = vpop.f32.mrf.mxu0
      %1174 = vmatprep.mubr.bf16.mxu0 0
      %1175 = vmatmul.mubr.bf16.gmra.mxu0 %v1077
      %v1176 = vpop.f32.mrf.mxu0
      %v1177 = vadd.f32 0.0, %v1176
      %v1178 = vpop.f32.mrf.mxu0
      %v1179 = vpop.f32.mrf.mxu0
      %v1180 = vadd.f32 0.0, %v1179
      %v1181 = vpop.f32.mrf.mxu0
      %1182 = vmatprep.mubr.bf16.mxu0 0
      %1183 = vmatmul.mubr.bf16.gmra.mxu0 %v1080
      %v1184 = vpop.f32.mrf.mxu0
      %v1185 = vadd.f32 0.0, %v1184
      %v1186 = vpop.f32.mrf.mxu0
      %v1187 = vpop.f32.mrf.mxu0
      %v1188 = vadd.f32 0.0, %v1187
      %v1189 = vpop.f32.mrf.mxu0
      %1190 = vmatprep.mubr.bf16.mxu0 0
      %1191 = vmatmul.mubr.bf16.gmra.mxu0 %v1083
      %v1192 = vpop.f32.mrf.mxu0
      %v1193 = vadd.f32 0.0, %v1192
      %v1194 = vpop.f32.mrf.mxu0
      %v1195 = vpop.f32.mrf.mxu0
      %v1196 = vadd.f32 0.0, %v1195
      %v1197 = vpop.f32.mrf.mxu0
      %1198 = vmatprep.mubr.bf16.mxu0 0
      %1199 = vmatmul.mubr.bf16.gmra.mxu0 %v1086
      %v1200 = vpop.f32.mrf.mxu0
      %v1201 = vadd.f32 0.0, %v1200
      %v1202 = vpop.f32.mrf.mxu0
      %v1203 = vpop.f32.mrf.mxu0
      %v1204 = vadd.f32 0.0, %v1203
      %v1205 = vpop.f32.mrf.mxu0
      %1206 = vmatprep.mubr.bf16.mxu0 0
      %1207 = vmatmul.mubr.bf16.gmra.mxu0 %v1089
      %v1208 = vpop.f32.mrf.mxu0
      %v1209 = vadd.f32 0.0, %v1208
      %v1210 = vpop.f32.mrf.mxu0
      %v1211 = vpop.f32.mrf.mxu0
      %v1212 = vadd.f32 0.0, %v1211
      %v1213 = vpop.f32.mrf.mxu0
      %1214 = vmatprep.mubr.bf16.mxu0 0
      %1215 = vmatmul.mubr.bf16.gmra.mxu0 %v1092
      %v1216 = vpop.f32.mrf.mxu0
      %v1217 = vadd.f32 0.0, %v1216
      %v1218 = vpop.f32.mrf.mxu0
      %v1219 = vpop.f32.mrf.mxu0
      %v1220 = vadd.f32 0.0, %v1219
      %v1221 = vpop.f32.mrf.mxu0
      %1222 = vmatprep.mubr.bf16.mxu0 0
      %1223 = vmatmul.mubr.bf16.gmra.mxu0 %v1095
      %v1224 = vpop.f32.mrf.mxu0
      %v1225 = vadd.f32 0.0, %v1224
      %v1226 = vpop.f32.mrf.mxu0
      %v1227 = vpop.f32.mrf.mxu0
      %v1228 = vadd.f32 0.0, %v1227
      %v1229 = vpop.f32.mrf.mxu0
      %1230 = vmatprep.mubr.bf16.mxu0 0
      %1231 = vmatmul.mubr.bf16.gmra.mxu0 %v1098
      %v1232 = vpop.f32.mrf.mxu0
      %v1233 = vadd.f32 0.0, %v1232
      %v1234 = vpop.f32.mrf.mxu0
      %v1235 = vpop.f32.mrf.mxu0
      %v1236 = vadd.f32 0.0, %v1235
      %v1237 = vpop.f32.mrf.mxu0
      %1238 = vmatprep.mubr.bf16.mxu0 0
      %1239 = vmatmul.mubr.bf16.gmra.mxu0 %v1101
      %v1240 = vpop.f32.mrf.mxu0
      %v1241 = vadd.f32 0.0, %v1240
      %v1242 = vpop.f32.mrf.mxu0
      %v1243 = vpop.f32.mrf.mxu0
      %v1244 = vadd.f32 0.0, %v1243
      %v1245 = vpop.f32.mrf.mxu0
      %1246 = vmatprep.mubr.bf16.mxu0 0
      %1247 = vmatmul.mubr.bf16.gmra.mxu0 %v1104
      %v1248 = vpop.f32.mrf.mxu0
      %v1249 = vadd.f32 0.0, %v1248
      %v1250 = vpop.f32.mrf.mxu0
      %v1251 = vpop.f32.mrf.mxu0
      %v1252 = vadd.f32 0.0, %v1251
      %v1253 = vpop.f32.mrf.mxu0
      %1254 = vmatprep.mubr.bf16.mxu0 0
      %1255 = vmatmul.mubr.bf16.gmra.mxu0 %v1107
      %v1256 = vpop.f32.mrf.mxu0
      %v1257 = vadd.f32 0.0, %v1256
      %v1258 = vpop.f32.mrf.mxu0
      %v1259 = vpop.f32.mrf.mxu0
      %v1260 = vadd.f32 0.0, %v1259
      %v1261 = vpop.f32.mrf.mxu0
      %1262 = vmatprep.mubr.bf16.mxu0 0
      %1263 = vmatmul.mubr.bf16.gmra.mxu0 %v1110
      %v1264 = vpop.f32.mrf.mxu0
      %v1265 = vadd.f32 0.0, %v1264
      %v1266 = vpop.f32.mrf.mxu0
      %v1267 = vpop.f32.mrf.mxu0
      %v1268 = vadd.f32 0.0, %v1267
      %v1269 = vpop.f32.mrf.mxu0
      %1270 = vmatprep.mubr.bf16.mxu0 0
      %1271 = vmatmul.mubr.bf16.gmra.mxu0 %v1113
      %v1272 = vpop.f32.mrf.mxu0
      %v1273 = vadd.f32 0.0, %v1272
      %v1274 = vpop.f32.mrf.mxu0
      %v1275 = vpop.f32.mrf.mxu0
      %v1276 = vadd.f32 0.0, %v1275
      %v1277 = vpop.f32.mrf.mxu0
      %1278 = vdwg.mxu0
      %v1279 = vadd.f32 %v858, %v1153
      %v1280 = vadd.f32 %v861, %v1156
      %v1281 = vadd.f32 %v866, %v1161
      %v1282 = vadd.f32 %v869, %v1164
      %v1283 = vadd.f32 %v874, %v1169
      %v1284 = vadd.f32 %v877, %v1172
      %v1285 = vadd.f32 %v882, %v1177
      %v1286 = vadd.f32 %v885, %v1180
      %v1287 = vadd.f32 %v890, %v1185
      %v1288 = vadd.f32 %v893, %v1188
      %v1289 = vadd.f32 %v898, %v1193
      %v1290 = vadd.f32 %v901, %v1196
      %v1291 = vadd.f32 %v906, %v1201
      %v1292 = vadd.f32 %v909, %v1204
      %v1293 = vadd.f32 %v914, %v1209
      %v1294 = vadd.f32 %v917, %v1212
      %v1295 = vadd.f32 %v922, %v1217
      %v1296 = vadd.f32 %v925, %v1220
      %v1297 = vadd.f32 %v930, %v1225
      %v1298 = vadd.f32 %v933, %v1228
      %v1299 = vadd.f32 %v938, %v1233
      %v1300 = vadd.f32 %v941, %v1236
      %v1301 = vadd.f32 %v946, %v1241
      %v1302 = vadd.f32 %v949, %v1244
      %v1303 = vadd.f32 %v954, %v1249
      %v1304 = vadd.f32 %v957, %v1252
      %v1305 = vadd.f32 %v962, %v1257
      %v1306 = vadd.f32 %v965, %v1260
      %v1307 = vadd.f32 %v970, %v1265
      %v1308 = vadd.f32 %v973, %v1268
      %v1309 = vadd.f32 %v978, %v1273
      %v1310 = vadd.f32 %v981, %v1276
      %s1311 = scalar_lea.vmem %s1, 6
      %v1312 = vld [vmem:[%s1311] sm:$0x3]
      %v1314 = vsel %vm574, %v374, 0
      %v1317 = vsel %vm623, %v1312, 0
      %1319 = vmatprep.subr.bf16.mxu0 0
      %1320 = vmatpush1.bf16.msra.mxu0 0
      %1321 = vmatprep.subr.bf16.mxu0 0
      %1322 = vmatpush1.bf16.msra.mxu0 0
      %1323 = vmatprep.subr.bf16.mxu0 0
      %1324 = vmatpush1.bf16.msra.mxu0 0
      %1325 = vmatprep.subr.bf16.mxu0 0
      %1326 = vmatpush1.bf16.msra.mxu0 0
      %1327 = vmatprep.subr.bf16.mxu0 0
      %1328 = vmatpush1.bf16.msra.mxu0 0
      %1329 = vmatprep.subr.bf16.mxu0 0
      %1330 = vmatpush1.bf16.msra.mxu0 0
      %1331 = vmatprep.subr.bf16.mxu0 0
      %1332 = vmatpush1.bf16.msra.mxu0 0
      %1333 = vmatprep.subr.bf16.mxu0 0
      %1334 = vmatpush1.bf16.msra.mxu0 %v1317
      %1335 = vmatprep.subr.bf16.mxu0 0
      %1336 = vmatpush2.bf16.msra.mxu0 0
      %1337 = vmatprep.subr.bf16.mxu0 0
      %1338 = vmatpush2.bf16.msra.mxu0 0
      %1339 = vmatprep.subr.bf16.mxu0 0
      %1340 = vmatpush2.bf16.msra.mxu0 0
      %1341 = vmatprep.subr.bf16.mxu0 0
      %1342 = vmatpush2.bf16.msra.mxu0 0
      %1343 = vmatprep.subr.bf16.mxu0 0
      %1344 = vmatpush2.bf16.msra.mxu0 0
      %1345 = vmatprep.subr.bf16.mxu0 0
      %1346 = vmatpush2.bf16.msra.mxu0 0
      %1347 = vmatprep.subr.bf16.mxu0 0
      %1348 = vmatpush2.bf16.msra.mxu0 0
      %1349 = vmatprep.subr.bf16.mxu0 0
      %1350 = vmatpush2.bf16.msra.mxu0 0
      %1351 = vmatprep.mubr.bf16.mxu0 0
      %1352 = vmatmul.mubr.bf16.gmra.mxu0 %v790
      %v1353 = vpop.f32.mrf.mxu0
      %v1354 = vadd.f32 0.0, %v1353
      %v1355 = vpop.f32.mrf.mxu0
      %v1356 = vpop.f32.mrf.mxu0
      %v1357 = vadd.f32 0.0, %v1356
      %v1358 = vpop.f32.mrf.mxu0
      %1359 = vmatprep.mubr.bf16.mxu0 0
      %1360 = vmatmul.mubr.bf16.gmra.mxu0 %v792
      %v1361 = vpop.f32.mrf.mxu0
      %v1362 = vadd.f32 0.0, %v1361
      %v1363 = vpop.f32.mrf.mxu0
      %v1364 = vpop.f32.mrf.mxu0
      %v1365 = vadd.f32 0.0, %v1364
      %v1366 = vpop.f32.mrf.mxu0
      %1367 = vmatprep.mubr.bf16.mxu0 0
      %1368 = vmatmul.mubr.bf16.gmra.mxu0 %v794
      %v1369 = vpop.f32.mrf.mxu0
      %v1370 = vadd.f32 0.0, %v1369
      %v1371 = vpop.f32.mrf.mxu0
      %v1372 = vpop.f32.mrf.mxu0
      %v1373 = vadd.f32 0.0, %v1372
      %v1374 = vpop.f32.mrf.mxu0
      %1375 = vmatprep.mubr.bf16.mxu0 0
      %1376 = vmatmul.mubr.bf16.gmra.mxu0 %v796
      %v1377 = vpop.f32.mrf.mxu0
      %v1378 = vadd.f32 0.0, %v1377
      %v1379 = vpop.f32.mrf.mxu0
      %v1380 = vpop.f32.mrf.mxu0
      %v1381 = vadd.f32 0.0, %v1380
      %v1382 = vpop.f32.mrf.mxu0
      %1383 = vmatprep.mubr.bf16.mxu0 0
      %1384 = vmatmul.mubr.bf16.gmra.mxu0 %v798
      %v1385 = vpop.f32.mrf.mxu0
      %v1386 = vadd.f32 0.0, %v1385
      %v1387 = vpop.f32.mrf.mxu0
      %v1388 = vpop.f32.mrf.mxu0
      %v1389 = vadd.f32 0.0, %v1388
      %v1390 = vpop.f32.mrf.mxu0
      %1391 = vmatprep.mubr.bf16.mxu0 0
      %1392 = vmatmul.mubr.bf16.gmra.mxu0 %v800
      %v1393 = vpop.f32.mrf.mxu0
      %v1394 = vadd.f32 0.0, %v1393
      %v1395 = vpop.f32.mrf.mxu0
      %v1396 = vpop.f32.mrf.mxu0
      %v1397 = vadd.f32 0.0, %v1396
      %v1398 = vpop.f32.mrf.mxu0
      %1399 = vmatprep.mubr.bf16.mxu0 0
      %1400 = vmatmul.mubr.bf16.gmra.mxu0 %v802
      %v1401 = vpop.f32.mrf.mxu0
      %v1402 = vadd.f32 0.0, %v1401
      %v1403 = vpop.f32.mrf.mxu0
      %v1404 = vpop.f32.mrf.mxu0
      %v1405 = vadd.f32 0.0, %v1404
      %v1406 = vpop.f32.mrf.mxu0
      %1407 = vmatprep.mubr.bf16.mxu0 0
      %1408 = vmatmul.mubr.bf16.gmra.mxu0 %v804
      %v1409 = vpop.f32.mrf.mxu0
      %v1410 = vadd.f32 0.0, %v1409
      %v1411 = vpop.f32.mrf.mxu0
      %v1412 = vpop.f32.mrf.mxu0
      %v1413 = vadd.f32 0.0, %v1412
      %v1414 = vpop.f32.mrf.mxu0
      %1415 = vmatprep.mubr.bf16.mxu0 0
      %1416 = vmatmul.mubr.bf16.gmra.mxu0 %v806
      %v1417 = vpop.f32.mrf.mxu0
      %v1418 = vadd.f32 0.0, %v1417
      %v1419 = vpop.f32.mrf.mxu0
      %v1420 = vpop.f32.mrf.mxu0
      %v1421 = vadd.f32 0.0, %v1420
      %v1422 = vpop.f32.mrf.mxu0
      %1423 = vmatprep.mubr.bf16.mxu0 0
      %1424 = vmatmul.mubr.bf16.gmra.mxu0 %v808
      %v1425 = vpop.f32.mrf.mxu0
      %v1426 = vadd.f32 0.0, %v1425
      %v1427 = vpop.f32.mrf.mxu0
      %v1428 = vpop.f32.mrf.mxu0
      %v1429 = vadd.f32 0.0, %v1428
      %v1430 = vpop.f32.mrf.mxu0
      %1431 = vmatprep.mubr.bf16.mxu0 0
      %1432 = vmatmul.mubr.bf16.gmra.mxu0 %v810
      %v1433 = vpop.f32.mrf.mxu0
      %v1434 = vadd.f32 0.0, %v1433
      %v1435 = vpop.f32.mrf.mxu0
      %v1436 = vpop.f32.mrf.mxu0
      %v1437 = vadd.f32 0.0, %v1436
      %v1438 = vpop.f32.mrf.mxu0
      %1439 = vmatprep.mubr.bf16.mxu0 0
      %1440 = vmatmul.mubr.bf16.gmra.mxu0 %v812
      %v1441 = vpop.f32.mrf.mxu0
      %v1442 = vadd.f32 0.0, %v1441
      %v1443 = vpop.f32.mrf.mxu0
      %v1444 = vpop.f32.mrf.mxu0
      %v1445 = vadd.f32 0.0, %v1444
      %v1446 = vpop.f32.mrf.mxu0
      %1447 = vmatprep.mubr.bf16.mxu0 0
      %1448 = vmatmul.mubr.bf16.gmra.mxu0 %v814
      %v1449 = vpop.f32.mrf.mxu0
      %v1450 = vadd.f32 0.0, %v1449
      %v1451 = vpop.f32.mrf.mxu0
      %v1452 = vpop.f32.mrf.mxu0
      %v1453 = vadd.f32 0.0, %v1452
      %v1454 = vpop.f32.mrf.mxu0
      %1455 = vmatprep.mubr.bf16.mxu0 0
      %1456 = vmatmul.mubr.bf16.gmra.mxu0 %v816
      %v1457 = vpop.f32.mrf.mxu0
      %v1458 = vadd.f32 0.0, %v1457
      %v1459 = vpop.f32.mrf.mxu0
      %v1460 = vpop.f32.mrf.mxu0
      %v1461 = vadd.f32 0.0, %v1460
      %v1462 = vpop.f32.mrf.mxu0
      %1463 = vmatprep.mubr.bf16.mxu0 0
      %1464 = vmatmul.mubr.bf16.gmra.mxu0 %v818
      %v1465 = vpop.f32.mrf.mxu0
      %v1466 = vadd.f32 0.0, %v1465
      %v1467 = vpop.f32.mrf.mxu0
      %v1468 = vpop.f32.mrf.mxu0
      %v1469 = vadd.f32 0.0, %v1468
      %v1470 = vpop.f32.mrf.mxu0
      %1471 = vmatprep.mubr.bf16.mxu0 0
      %1472 = vmatmul.mubr.bf16.gmra.mxu0 %v1314
      %v1473 = vpop.f32.mrf.mxu0
      %v1474 = vadd.f32 0.0, %v1473
      %v1475 = vpop.f32.mrf.mxu0
      %v1476 = vpop.f32.mrf.mxu0
      %v1477 = vadd.f32 0.0, %v1476
      %v1478 = vpop.f32.mrf.mxu0
      %1479 = vdwg.mxu0
      %v1480 = vadd.f32 %v1279, %v1354
      %v1481 = vadd.f32 %v1280, %v1357
      %v1482 = vadd.f32 %v1281, %v1362
      %v1483 = vadd.f32 %v1282, %v1365
      %v1484 = vadd.f32 %v1283, %v1370
      %v1485 = vadd.f32 %v1284, %v1373
      %v1486 = vadd.f32 %v1285, %v1378
      %v1487 = vadd.f32 %v1286, %v1381
      %v1488 = vadd.f32 %v1287, %v1386
      %v1489 = vadd.f32 %v1288, %v1389
      %v1490 = vadd.f32 %v1289, %v1394
      %v1491 = vadd.f32 %v1290, %v1397
      %v1492 = vadd.f32 %v1291, %v1402
      %v1493 = vadd.f32 %v1292, %v1405
      %v1494 = vadd.f32 %v1293, %v1410
      %v1495 = vadd.f32 %v1294, %v1413
      %v1496 = vadd.f32 %v1295, %v1418
      %v1497 = vadd.f32 %v1296, %v1421
      %v1498 = vadd.f32 %v1297, %v1426
      %v1499 = vadd.f32 %v1298, %v1429
      %v1500 = vadd.f32 %v1299, %v1434
      %v1501 = vadd.f32 %v1300, %v1437
      %v1502 = vadd.f32 %v1301, %v1442
      %v1503 = vadd.f32 %v1302, %v1445
      %v1504 = vadd.f32 %v1303, %v1450
      %v1505 = vadd.f32 %v1304, %v1453
      %v1506 = vadd.f32 %v1305, %v1458
      %v1507 = vadd.f32 %v1306, %v1461
      %v1508 = vadd.f32 %v1307, %v1466
      %v1509 = vadd.f32 %v1308, %v1469
      %v1510 = vadd.f32 %v1309, %v1474
      %v1511 = vadd.f32 %v1310, %v1477
      %v1512 = vshrl.u32 %v374, 16
      %v1514 = vshll.u32 %v374, 16
      %v1516 = vrot.slane %v1514, 1
      %v1517 = vor.u32 %v1512, %v1516
      %v1519 = vshll.u32 %v375, 16
      %v1521 = vrot.slane %v1519, 1
      %v1522 = vsel %vm379, %v1517, %v1521
      %s1523 = scalar_lea.vmem %s1, 8
      %v1524 = vld [vmem:[%s1523] sm:$0x3]
      %v1526 = vsel %vm574, %v1522, 0
      %v1529 = vsel %vm623, %v1524, 0
      %1531 = vmatprep.subr.bf16.mxu0 0
      %1532 = vmatpush1.bf16.msra.mxu0 0
      %1533 = vmatprep.subr.bf16.mxu0 0
      %1534 = vmatpush1.bf16.msra.mxu0 0
      %1535 = vmatprep.subr.bf16.mxu0 0
      %1536 = vmatpush1.bf16.msra.mxu0 0
      %1537 = vmatprep.subr.bf16.mxu0 0
      %1538 = vmatpush1.bf16.msra.mxu0 0
      %1539 = vmatprep.subr.bf16.mxu0 0
      %1540 = vmatpush1.bf16.msra.mxu0 0
      %1541 = vmatprep.subr.bf16.mxu0 0
      %1542 = vmatpush1.bf16.msra.mxu0 0
      %1543 = vmatprep.subr.bf16.mxu0 0
      %1544 = vmatpush1.bf16.msra.mxu0 0
      %1545 = vmatprep.subr.bf16.mxu0 0
      %1546 = vmatpush1.bf16.msra.mxu0 %v1529
      %1547 = vmatprep.subr.bf16.mxu0 0
      %1548 = vmatpush2.bf16.msra.mxu0 0
      %1549 = vmatprep.subr.bf16.mxu0 0
      %1550 = vmatpush2.bf16.msra.mxu0 0
      %1551 = vmatprep.subr.bf16.mxu0 0
      %1552 = vmatpush2.bf16.msra.mxu0 0
      %1553 = vmatprep.subr.bf16.mxu0 0
      %1554 = vmatpush2.bf16.msra.mxu0 0
      %1555 = vmatprep.subr.bf16.mxu0 0
      %1556 = vmatpush2.bf16.msra.mxu0 0
      %1557 = vmatprep.subr.bf16.mxu0 0
      %1558 = vmatpush2.bf16.msra.mxu0 0
      %1559 = vmatprep.subr.bf16.mxu0 0
      %1560 = vmatpush2.bf16.msra.mxu0 0
      %1561 = vmatprep.subr.bf16.mxu0 0
      %1562 = vmatpush2.bf16.msra.mxu0 0
      %1563 = vmatprep.mubr.bf16.mxu0 0
      %1564 = vmatmul.mubr.bf16.gmra.mxu0 %v579
      %v1565 = vpop.f32.mrf.mxu0
      %v1566 = vadd.f32 0.0, %v1565
      %v1567 = vpop.f32.mrf.mxu0
      %v1568 = vpop.f32.mrf.mxu0
      %v1569 = vadd.f32 0.0, %v1568
      %v1570 = vpop.f32.mrf.mxu0
      %1571 = vmatprep.mubr.bf16.mxu0 0
      %1572 = vmatmul.mubr.bf16.gmra.mxu0 %v582
      %v1573 = vpop.f32.mrf.mxu0
      %v1574 = vadd.f32 0.0, %v1573
      %v1575 = vpop.f32.mrf.mxu0
      %v1576 = vpop.f32.mrf.mxu0
      %v1577 = vadd.f32 0.0, %v1576
      %v1578 = vpop.f32.mrf.mxu0
      %1579 = vmatprep.mubr.bf16.mxu0 0
      %1580 = vmatmul.mubr.bf16.gmra.mxu0 %v585
      %v1581 = vpop.f32.mrf.mxu0
      %v1582 = vadd.f32 0.0, %v1581
      %v1583 = vpop.f32.mrf.mxu0
      %v1584 = vpop.f32.mrf.mxu0
      %v1585 = vadd.f32 0.0, %v1584
      %v1586 = vpop.f32.mrf.mxu0
      %1587 = vmatprep.mubr.bf16.mxu0 0
      %1588 = vmatmul.mubr.bf16.gmra.mxu0 %v588
      %v1589 = vpop.f32.mrf.mxu0
      %v1590 = vadd.f32 0.0, %v1589
      %v1591 = vpop.f32.mrf.mxu0
      %v1592 = vpop.f32.mrf.mxu0
      %v1593 = vadd.f32 0.0, %v1592
      %v1594 = vpop.f32.mrf.mxu0
      %1595 = vmatprep.mubr.bf16.mxu0 0
      %1596 = vmatmul.mubr.bf16.gmra.mxu0 %v591
      %v1597 = vpop.f32.mrf.mxu0
      %v1598 = vadd.f32 0.0, %v1597
      %v1599 = vpop.f32.mrf.mxu0
      %v1600 = vpop.f32.mrf.mxu0
      %v1601 = vadd.f32 0.0, %v1600
      %v1602 = vpop.f32.mrf.mxu0
      %1603 = vmatprep.mubr.bf16.mxu0 0
      %1604 = vmatmul.mubr.bf16.gmra.mxu0 %v594
      %v1605 = vpop.f32.mrf.mxu0
      %v1606 = vadd.f32 0.0, %v1605
      %v1607 = vpop.f32.mrf.mxu0
      %v1608 = vpop.f32.mrf.mxu0
      %v1609 = vadd.f32 0.0, %v1608
      %v1610 = vpop.f32.mrf.mxu0
      %1611 = vmatprep.mubr.bf16.mxu0 0
      %1612 = vmatmul.mubr.bf16.gmra.mxu0 %v597
      %v1613 = vpop.f32.mrf.mxu0
      %v1614 = vadd.f32 0.0, %v1613
      %v1615 = vpop.f32.mrf.mxu0
      %v1616 = vpop.f32.mrf.mxu0
      %v1617 = vadd.f32 0.0, %v1616
      %v1618 = vpop.f32.mrf.mxu0
      %1619 = vmatprep.mubr.bf16.mxu0 0
      %1620 = vmatmul.mubr.bf16.gmra.mxu0 %v600
      %v1621 = vpop.f32.mrf.mxu0
      %v1622 = vadd.f32 0.0, %v1621
      %v1623 = vpop.f32.mrf.mxu0
      %v1624 = vpop.f32.mrf.mxu0
      %v1625 = vadd.f32 0.0, %v1624
      %v1626 = vpop.f32.mrf.mxu0
      %1627 = vmatprep.mubr.bf16.mxu0 0
      %1628 = vmatmul.mubr.bf16.gmra.mxu0 %v603
      %v1629 = vpop.f32.mrf.mxu0
      %v1630 = vadd.f32 0.0, %v1629
      %v1631 = vpop.f32.mrf.mxu0
      %v1632 = vpop.f32.mrf.mxu0
      %v1633 = vadd.f32 0.0, %v1632
      %v1634 = vpop.f32.mrf.mxu0
      %1635 = vmatprep.mubr.bf16.mxu0 0
      %1636 = vmatmul.mubr.bf16.gmra.mxu0 %v606
      %v1637 = vpop.f32.mrf.mxu0
      %v1638 = vadd.f32 0.0, %v1637
      %v1639 = vpop.f32.mrf.mxu0
      %v1640 = vpop.f32.mrf.mxu0
      %v1641 = vadd.f32 0.0, %v1640
      %v1642 = vpop.f32.mrf.mxu0
      %1643 = vmatprep.mubr.bf16.mxu0 0
      %1644 = vmatmul.mubr.bf16.gmra.mxu0 %v609
      %v1645 = vpop.f32.mrf.mxu0
      %v1646 = vadd.f32 0.0, %v1645
      %v1647 = vpop.f32.mrf.mxu0
      %v1648 = vpop.f32.mrf.mxu0
      %v1649 = vadd.f32 0.0, %v1648
      %v1650 = vpop.f32.mrf.mxu0
      %1651 = vmatprep.mubr.bf16.mxu0 0
      %1652 = vmatmul.mubr.bf16.gmra.mxu0 %v612
      %v1653 = vpop.f32.mrf.mxu0
      %v1654 = vadd.f32 0.0, %v1653
      %v1655 = vpop.f32.mrf.mxu0
      %v1656 = vpop.f32.mrf.mxu0
      %v1657 = vadd.f32 0.0, %v1656
      %v1658 = vpop.f32.mrf.mxu0
      %1659 = vmatprep.mubr.bf16.mxu0 0
      %1660 = vmatmul.mubr.bf16.gmra.mxu0 %v615
      %v1661 = vpop.f32.mrf.mxu0
      %v1662 = vadd.f32 0.0, %v1661
      %v1663 = vpop.f32.mrf.mxu0
      %v1664 = vpop.f32.mrf.mxu0
      %v1665 = vadd.f32 0.0, %v1664
      %v1666 = vpop.f32.mrf.mxu0
      %1667 = vmatprep.mubr.bf16.mxu0 0
      %1668 = vmatmul.mubr.bf16.gmra.mxu0 %v618
      %v1669 = vpop.f32.mrf.mxu0
      %v1670 = vadd.f32 0.0, %v1669
      %v1671 = vpop.f32.mrf.mxu0
      %v1672 = vpop.f32.mrf.mxu0
      %v1673 = vadd.f32 0.0, %v1672
      %v1674 = vpop.f32.mrf.mxu0
      %1675 = vmatprep.mubr.bf16.mxu0 0
      %1676 = vmatmul.mubr.bf16.gmra.mxu0 %v621
      %v1677 = vpop.f32.mrf.mxu0
      %v1678 = vadd.f32 0.0, %v1677
      %v1679 = vpop.f32.mrf.mxu0
      %v1680 = vpop.f32.mrf.mxu0
      %v1681 = vadd.f32 0.0, %v1680
      %v1682 = vpop.f32.mrf.mxu0
      %1683 = vmatprep.mubr.bf16.mxu0 0
      %1684 = vmatmul.mubr.bf16.gmra.mxu0 %v1526
      %v1685 = vpop.f32.mrf.mxu0
      %v1686 = vadd.f32 0.0, %v1685
      %v1687 = vpop.f32.mrf.mxu0
      %v1688 = vpop.f32.mrf.mxu0
      %v1689 = vadd.f32 0.0, %v1688
      %v1690 = vpop.f32.mrf.mxu0
      %1691 = vdwg.mxu0
      %v1692 = vadd.f32 %v1480, %v1566
      %v1693 = vadd.f32 %v1481, %v1569
      %v1694 = vadd.f32 %v1482, %v1574
      %v1695 = vadd.f32 %v1483, %v1577
      %v1696 = vadd.f32 %v1484, %v1582
      %v1697 = vadd.f32 %v1485, %v1585
      %v1698 = vadd.f32 %v1486, %v1590
      %v1699 = vadd.f32 %v1487, %v1593
      %v1700 = vadd.f32 %v1488, %v1598
      %v1701 = vadd.f32 %v1489, %v1601
      %v1702 = vadd.f32 %v1490, %v1606
      %v1703 = vadd.f32 %v1491, %v1609
      %v1704 = vadd.f32 %v1492, %v1614
      %v1705 = vadd.f32 %v1493, %v1617
      %v1706 = vadd.f32 %v1494, %v1622
      %v1707 = vadd.f32 %v1495, %v1625
      %v1708 = vadd.f32 %v1496, %v1630
      %v1709 = vadd.f32 %v1497, %v1633
      %v1710 = vadd.f32 %v1498, %v1638
      %v1711 = vadd.f32 %v1499, %v1641
      %v1712 = vadd.f32 %v1500, %v1646
      %v1713 = vadd.f32 %v1501, %v1649
      %v1714 = vadd.f32 %v1502, %v1654
      %v1715 = vadd.f32 %v1503, %v1657
      %v1716 = vadd.f32 %v1504, %v1662
      %v1717 = vadd.f32 %v1505, %v1665
      %v1718 = vadd.f32 %v1506, %v1670
      %v1719 = vadd.f32 %v1507, %v1673
      %v1720 = vadd.f32 %v1508, %v1678
      %v1721 = vadd.f32 %v1509, %v1681
      %v1722 = vadd.f32 %v1510, %v1686
      %v1723 = vadd.f32 %v1511, %v1689
      %v1726 = vrot.slane %v374, 1
      %v1727 = vrot.slane %v375, 1
      %v1728 = vsel %vm1016, %v1726, %v1727
      %s1729 = scalar_lea.vmem %s1, 10
      %v1730 = vld [vmem:[%s1729] sm:$0x3]
      %v1732 = vsel %vm574, %v1728, 0
      %v1735 = vsel %vm623, %v1730, 0
      %1737 = vmatprep.subr.bf16.mxu0 0
      %1738 = vmatpush1.bf16.msra.mxu0 0
      %1739 = vmatprep.subr.bf16.mxu0 0
      %1740 = vmatpush1.bf16.msra.mxu0 0
      %1741 = vmatprep.subr.bf16.mxu0 0
      %1742 = vmatpush1.bf16.msra.mxu0 0
      %1743 = vmatprep.subr.bf16.mxu0 0
      %1744 = vmatpush1.bf16.msra.mxu0 0
      %1745 = vmatprep.subr.bf16.mxu0 0
      %1746 = vmatpush1.bf16.msra.mxu0 0
      %1747 = vmatprep.subr.bf16.mxu0 0
      %1748 = vmatpush1.bf16.msra.mxu0 0
      %1749 = vmatprep.subr.bf16.mxu0 0
      %1750 = vmatpush1.bf16.msra.mxu0 0
      %1751 = vmatprep.subr.bf16.mxu0 0
      %1752 = vmatpush1.bf16.msra.mxu0 %v1735
      %1753 = vmatprep.subr.bf16.mxu0 0
      %1754 = vmatpush2.bf16.msra.mxu0 0
      %1755 = vmatprep.subr.bf16.mxu0 0
      %1756 = vmatpush2.bf16.msra.mxu0 0
      %1757 = vmatprep.subr.bf16.mxu0 0
      %1758 = vmatpush2.bf16.msra.mxu0 0
      %1759 = vmatprep.subr.bf16.mxu0 0
      %1760 = vmatpush2.bf16.msra.mxu0 0
      %1761 = vmatprep.subr.bf16.mxu0 0
      %1762 = vmatpush2.bf16.msra.mxu0 0
      %1763 = vmatprep.subr.bf16.mxu0 0
      %1764 = vmatpush2.bf16.msra.mxu0 0
      %1765 = vmatprep.subr.bf16.mxu0 0
      %1766 = vmatpush2.bf16.msra.mxu0 0
      %1767 = vmatprep.subr.bf16.mxu0 0
      %1768 = vmatpush2.bf16.msra.mxu0 0
      %1769 = vmatprep.mubr.bf16.mxu0 0
      %1770 = vmatmul.mubr.bf16.gmra.mxu0 %v1071
      %v1771 = vpop.f32.mrf.mxu0
      %v1772 = vadd.f32 0.0, %v1771
      %v1773 = vpop.f32.mrf.mxu0
      %v1774 = vpop.f32.mrf.mxu0
      %v1775 = vadd.f32 0.0, %v1774
      %v1776 = vpop.f32.mrf.mxu0
      %1777 = vmatprep.mubr.bf16.mxu0 0
      %1778 = vmatmul.mubr.bf16.gmra.mxu0 %v1074
      %v1779 = vpop.f32.mrf.mxu0
      %v1780 = vadd.f32 0.0, %v1779
      %v1781 = vpop.f32.mrf.mxu0
      %v1782 = vpop.f32.mrf.mxu0
      %v1783 = vadd.f32 0.0, %v1782
      %v1784 = vpop.f32.mrf.mxu0
      %1785 = vmatprep.mubr.bf16.mxu0 0
      %1786 = vmatmul.mubr.bf16.gmra.mxu0 %v1077
      %v1787 = vpop.f32.mrf.mxu0
      %v1788 = vadd.f32 0.0, %v1787
      %v1789 = vpop.f32.mrf.mxu0
      %v1790 = vpop.f32.mrf.mxu0
      %v1791 = vadd.f32 0.0, %v1790
      %v1792 = vpop.f32.mrf.mxu0
      %1793 = vmatprep.mubr.bf16.mxu0 0
      %1794 = vmatmul.mubr.bf16.gmra.mxu0 %v1080
      %v1795 = vpop.f32.mrf.mxu0
      %v1796 = vadd.f32 0.0, %v1795
      %v1797 = vpop.f32.mrf.mxu0
      %v1798 = vpop.f32.mrf.mxu0
      %v1799 = vadd.f32 0.0, %v1798
      %v1800 = vpop.f32.mrf.mxu0
      %1801 = vmatprep.mubr.bf16.mxu0 0
      %1802 = vmatmul.mubr.bf16.gmra.mxu0 %v1083
      %v1803 = vpop.f32.mrf.mxu0
      %v1804 = vadd.f32 0.0, %v1803
      %v1805 = vpop.f32.mrf.mxu0
      %v1806 = vpop.f32.mrf.mxu0
      %v1807 = vadd.f32 0.0, %v1806
      %v1808 = vpop.f32.mrf.mxu0
      %1809 = vmatprep.mubr.bf16.mxu0 0
      %1810 = vmatmul.mubr.bf16.gmra.mxu0 %v1086
      %v1811 = vpop.f32.mrf.mxu0
      %v1812 = vadd.f32 0.0, %v1811
      %v1813 = vpop.f32.mrf.mxu0
      %v1814 = vpop.f32.mrf.mxu0
      %v1815 = vadd.f32 0.0, %v1814
      %v1816 = vpop.f32.mrf.mxu0
      %1817 = vmatprep.mubr.bf16.mxu0 0
      %1818 = vmatmul.mubr.bf16.gmra.mxu0 %v1089
      %v1819 = vpop.f32.mrf.mxu0
      %v1820 = vadd.f32 0.0, %v1819
      %v1821 = vpop.f32.mrf.mxu0
      %v1822 = vpop.f32.mrf.mxu0
      %v1823 = vadd.f32 0.0, %v1822
      %v1824 = vpop.f32.mrf.mxu0
      %1825 = vmatprep.mubr.bf16.mxu0 0
      %1826 = vmatmul.mubr.bf16.gmra.mxu0 %v1092
      %v1827 = vpop.f32.mrf.mxu0
      %v1828 = vadd.f32 0.0, %v1827
      %v1829 = vpop.f32.mrf.mxu0
      %v1830 = vpop.f32.mrf.mxu0
      %v1831 = vadd.f32 0.0, %v1830
      %v1832 = vpop.f32.mrf.mxu0
      %1833 = vmatprep.mubr.bf16.mxu0 0
      %1834 = vmatmul.mubr.bf16.gmra.mxu0 %v1095
      %v1835 = vpop.f32.mrf.mxu0
      %v1836 = vadd.f32 0.0, %v1835
      %v1837 = vpop.f32.mrf.mxu0
      %v1838 = vpop.f32.mrf.mxu0
      %v1839 = vadd.f32 0.0, %v1838
      %v1840 = vpop.f32.mrf.mxu0
      %1841 = vmatprep.mubr.bf16.mxu0 0
      %1842 = vmatmul.mubr.bf16.gmra.mxu0 %v1098
      %v1843 = vpop.f32.mrf.mxu0
      %v1844 = vadd.f32 0.0, %v1843
      %v1845 = vpop.f32.mrf.mxu0
      %v1846 = vpop.f32.mrf.mxu0
      %v1847 = vadd.f32 0.0, %v1846
      %v1848 = vpop.f32.mrf.mxu0
      %1849 = vmatprep.mubr.bf16.mxu0 0
      %1850 = vmatmul.mubr.bf16.gmra.mxu0 %v1101
      %v1851 = vpop.f32.mrf.mxu0
      %v1852 = vadd.f32 0.0, %v1851
      %v1853 = vpop.f32.mrf.mxu0
      %v1854 = vpop.f32.mrf.mxu0
      %v1855 = vadd.f32 0.0, %v1854
      %v1856 = vpop.f32.mrf.mxu0
      %1857 = vmatprep.mubr.bf16.mxu0 0
      %1858 = vmatmul.mubr.bf16.gmra.mxu0 %v1104
      %v1859 = vpop.f32.mrf.mxu0
      %v1860 = vadd.f32 0.0, %v1859
      %v1861 = vpop.f32.mrf.mxu0
      %v1862 = vpop.f32.mrf.mxu0
      %v1863 = vadd.f32 0.0, %v1862
      %v1864 = vpop.f32.mrf.mxu0
      %1865 = vmatprep.mubr.bf16.mxu0 0
      %1866 = vmatmul.mubr.bf16.gmra.mxu0 %v1107
      %v1867 = vpop.f32.mrf.mxu0
      %v1868 = vadd.f32 0.0, %v1867
      %v1869 = vpop.f32.mrf.mxu0
      %v1870 = vpop.f32.mrf.mxu0
      %v1871 = vadd.f32 0.0, %v1870
      %v1872 = vpop.f32.mrf.mxu0
      %1873 = vmatprep.mubr.bf16.mxu0 0
      %1874 = vmatmul.mubr.bf16.gmra.mxu0 %v1110
      %v1875 = vpop.f32.mrf.mxu0
      %v1876 = vadd.f32 0.0, %v1875
      %v1877 = vpop.f32.mrf.mxu0
      %v1878 = vpop.f32.mrf.mxu0
      %v1879 = vadd.f32 0.0, %v1878
      %v1880 = vpop.f32.mrf.mxu0
      %1881 = vmatprep.mubr.bf16.mxu0 0
      %1882 = vmatmul.mubr.bf16.gmra.mxu0 %v1113
      %v1883 = vpop.f32.mrf.mxu0
      %v1884 = vadd.f32 0.0, %v1883
      %v1885 = vpop.f32.mrf.mxu0
      %v1886 = vpop.f32.mrf.mxu0
      %v1887 = vadd.f32 0.0, %v1886
      %v1888 = vpop.f32.mrf.mxu0
      %1889 = vmatprep.mubr.bf16.mxu0 0
      %1890 = vmatmul.mubr.bf16.gmra.mxu0 %v1732
      %v1891 = vpop.f32.mrf.mxu0
      %v1892 = vadd.f32 0.0, %v1891
      %v1893 = vpop.f32.mrf.mxu0
      %v1894 = vpop.f32.mrf.mxu0
      %v1895 = vadd.f32 0.0, %v1894
      %v1896 = vpop.f32.mrf.mxu0
      %1897 = vdwg.mxu0
      %v1898 = vadd.f32 %v1692, %v1772
      %v1899 = vadd.f32 %v1693, %v1775
      %v1900 = vadd.f32 %v1694, %v1780
      %v1901 = vadd.f32 %v1695, %v1783
      %v1902 = vadd.f32 %v1696, %v1788
      %v1903 = vadd.f32 %v1697, %v1791
      %v1904 = vadd.f32 %v1698, %v1796
      %v1905 = vadd.f32 %v1699, %v1799
      %v1906 = vadd.f32 %v1700, %v1804
      %v1907 = vadd.f32 %v1701, %v1807
      %v1908 = vadd.f32 %v1702, %v1812
      %v1909 = vadd.f32 %v1703, %v1815
      %v1910 = vadd.f32 %v1704, %v1820
      %v1911 = vadd.f32 %v1705, %v1823
      %v1912 = vadd.f32 %v1706, %v1828
      %v1913 = vadd.f32 %v1707, %v1831
      %v1914 = vadd.f32 %v1708, %v1836
      %v1915 = vadd.f32 %v1709, %v1839
      %v1916 = vadd.f32 %v1710, %v1844
      %v1917 = vadd.f32 %v1711, %v1847
      %v1918 = vadd.f32 %v1712, %v1852
      %v1919 = vadd.f32 %v1713, %v1855
      %v1920 = vadd.f32 %v1714, %v1860
      %v1921 = vadd.f32 %v1715, %v1863
      %v1922 = vadd.f32 %v1716, %v1868
      %v1923 = vadd.f32 %v1717, %v1871
      %v1924 = vadd.f32 %v1718, %v1876
      %v1925 = vadd.f32 %v1719, %v1879
      %v1926 = vadd.f32 %v1720, %v1884
      %v1927 = vadd.f32 %v1721, %v1887
      %v1928 = vadd.f32 %v1722, %v1892
      %v1929 = vadd.f32 %v1723, %v1895
      %s1930 = scalar_lea.vmem %s1, 12
      %v1931 = vld [vmem:[%s1930] sm:$0x3]
      %v1933 = vsel %vm574, %v376, 0
      %v1936 = vsel %vm623, %v1931, 0
      %1938 = vmatprep.subr.bf16.mxu0 0
      %1939 = vmatpush1.bf16.msra.mxu0 0
      %1940 = vmatprep.subr.bf16.mxu0 0
      %1941 = vmatpush1.bf16.msra.mxu0 0
      %1942 = vmatprep.subr.bf16.mxu0 0
      %1943 = vmatpush1.bf16.msra.mxu0 0
      %1944 = vmatprep.subr.bf16.mxu0 0
      %1945 = vmatpush1.bf16.msra.mxu0 0
      %1946 = vmatprep.subr.bf16.mxu0 0
      %1947 = vmatpush1.bf16.msra.mxu0 0
      %1948 = vmatprep.subr.bf16.mxu0 0
      %1949 = vmatpush1.bf16.msra.mxu0 0
      %1950 = vmatprep.subr.bf16.mxu0 0
      %1951 = vmatpush1.bf16.msra.mxu0 0
      %1952 = vmatprep.subr.bf16.mxu0 0
      %1953 = vmatpush1.bf16.msra.mxu0 %v1936
      %1954 = vmatprep.subr.bf16.mxu0 0
      %1955 = vmatpush2.bf16.msra.mxu0 0
      %1956 = vmatprep.subr.bf16.mxu0 0
      %1957 = vmatpush2.bf16.msra.mxu0 0
      %1958 = vmatprep.subr.bf16.mxu0 0
      %1959 = vmatpush2.bf16.msra.mxu0 0
      %1960 = vmatprep.subr.bf16.mxu0 0
      %1961 = vmatpush2.bf16.msra.mxu0 0
      %1962 = vmatprep.subr.bf16.mxu0 0
      %1963 = vmatpush2.bf16.msra.mxu0 0
      %1964 = vmatprep.subr.bf16.mxu0 0
      %1965 = vmatpush2.bf16.msra.mxu0 0
      %1966 = vmatprep.subr.bf16.mxu0 0
      %1967 = vmatpush2.bf16.msra.mxu0 0
      %1968 = vmatprep.subr.bf16.mxu0 0
      %1969 = vmatpush2.bf16.msra.mxu0 0
      %1970 = vmatprep.mubr.bf16.mxu0 0
      %1971 = vmatmul.mubr.bf16.gmra.mxu0 %v792
      %v1972 = vpop.f32.mrf.mxu0
      %v1973 = vadd.f32 0.0, %v1972
      %v1974 = vpop.f32.mrf.mxu0
      %v1975 = vpop.f32.mrf.mxu0
      %v1976 = vadd.f32 0.0, %v1975
      %v1977 = vpop.f32.mrf.mxu0
      %1978 = vmatprep.mubr.bf16.mxu0 0
      %1979 = vmatmul.mubr.bf16.gmra.mxu0 %v794
      %v1980 = vpop.f32.mrf.mxu0
      %v1981 = vadd.f32 0.0, %v1980
      %v1982 = vpop.f32.mrf.mxu0
      %v1983 = vpop.f32.mrf.mxu0
      %v1984 = vadd.f32 0.0, %v1983
      %v1985 = vpop.f32.mrf.mxu0
      %1986 = vmatprep.mubr.bf16.mxu0 0
      %1987 = vmatmul.mubr.bf16.gmra.mxu0 %v796
      %v1988 = vpop.f32.mrf.mxu0
      %v1989 = vadd.f32 0.0, %v1988
      %v1990 = vpop.f32.mrf.mxu0
      %v1991 = vpop.f32.mrf.mxu0
      %v1992 = vadd.f32 0.0, %v1991
      %v1993 = vpop.f32.mrf.mxu0
      %1994 = vmatprep.mubr.bf16.mxu0 0
      %1995 = vmatmul.mubr.bf16.gmra.mxu0 %v798
      %v1996 = vpop.f32.mrf.mxu0
      %v1997 = vadd.f32 0.0, %v1996
      %v1998 = vpop.f32.mrf.mxu0
      %v1999 = vpop.f32.mrf.mxu0
      %v2000 = vadd.f32 0.0, %v1999
      %v2001 = vpop.f32.mrf.mxu0
      %2002 = vmatprep.mubr.bf16.mxu0 0
      %2003 = vmatmul.mubr.bf16.gmra.mxu0 %v800
      %v2004 = vpop.f32.mrf.mxu0
      %v2005 = vadd.f32 0.0, %v2004
      %v2006 = vpop.f32.mrf.mxu0
      %v2007 = vpop.f32.mrf.mxu0
      %v2008 = vadd.f32 0.0, %v2007
      %v2009 = vpop.f32.mrf.mxu0
      %2010 = vmatprep.mubr.bf16.mxu0 0
      %2011 = vmatmul.mubr.bf16.gmra.mxu0 %v802
      %v2012 = vpop.f32.mrf.mxu0
      %v2013 = vadd.f32 0.0, %v2012
      %v2014 = vpop.f32.mrf.mxu0
      %v2015 = vpop.f32.mrf.mxu0
      %v2016 = vadd.f32 0.0, %v2015
      %v2017 = vpop.f32.mrf.mxu0
      %2018 = vmatprep.mubr.bf16.mxu0 0
      %2019 = vmatmul.mubr.bf16.gmra.mxu0 %v804
      %v2020 = vpop.f32.mrf.mxu0
      %v2021 = vadd.f32 0.0, %v2020
      %v2022 = vpop.f32.mrf.mxu0
      %v2023 = vpop.f32.mrf.mxu0
      %v2024 = vadd.f32 0.0, %v2023
      %v2025 = vpop.f32.mrf.mxu0
      %2026 = vmatprep.mubr.bf16.mxu0 0
      %2027 = vmatmul.mubr.bf16.gmra.mxu0 %v806
      %v2028 = vpop.f32.mrf.mxu0
      %v2029 = vadd.f32 0.0, %v2028
      %v2030 = vpop.f32.mrf.mxu0
      %v2031 = vpop.f32.mrf.mxu0
      %v2032 = vadd.f32 0.0, %v2031
      %v2033 = vpop.f32.mrf.mxu0
      %2034 = vmatprep.mubr.bf16.mxu0 0
      %2035 = vmatmul.mubr.bf16.gmra.mxu0 %v808
      %v2036 = vpop.f32.mrf.mxu0
      %v2037 = vadd.f32 0.0, %v2036
      %v2038 = vpop.f32.mrf.mxu0
      %v2039 = vpop.f32.mrf.mxu0
      %v2040 = vadd.f32 0.0, %v2039
      %v2041 = vpop.f32.mrf.mxu0
      %2042 = vmatprep.mubr.bf16.mxu0 0
      %2043 = vmatmul.mubr.bf16.gmra.mxu0 %v810
      %v2044 = vpop.f32.mrf.mxu0
      %v2045 = vadd.f32 0.0, %v2044
      %v2046 = vpop.f32.mrf.mxu0
      %v2047 = vpop.f32.mrf.mxu0
      %v2048 = vadd.f32 0.0, %v2047
      %v2049 = vpop.f32.mrf.mxu0
      %2050 = vmatprep.mubr.bf16.mxu0 0
      %2051 = vmatmul.mubr.bf16.gmra.mxu0 %v812
      %v2052 = vpop.f32.mrf.mxu0
      %v2053 = vadd.f32 0.0, %v2052
      %v2054 = vpop.f32.mrf.mxu0
      %v2055 = vpop.f32.mrf.mxu0
      %v2056 = vadd.f32 0.0, %v2055
      %v2057 = vpop.f32.mrf.mxu0
      %2058 = vmatprep.mubr.bf16.mxu0 0
      %2059 = vmatmul.mubr.bf16.gmra.mxu0 %v814
      %v2060 = vpop.f32.mrf.mxu0
      %v2061 = vadd.f32 0.0, %v2060
      %v2062 = vpop.f32.mrf.mxu0
      %v2063 = vpop.f32.mrf.mxu0
      %v2064 = vadd.f32 0.0, %v2063
      %v2065 = vpop.f32.mrf.mxu0
      %2066 = vmatprep.mubr.bf16.mxu0 0
      %2067 = vmatmul.mubr.bf16.gmra.mxu0 %v816
      %v2068 = vpop.f32.mrf.mxu0
      %v2069 = vadd.f32 0.0, %v2068
      %v2070 = vpop.f32.mrf.mxu0
      %v2071 = vpop.f32.mrf.mxu0
      %v2072 = vadd.f32 0.0, %v2071
      %v2073 = vpop.f32.mrf.mxu0
      %2074 = vmatprep.mubr.bf16.mxu0 0
      %2075 = vmatmul.mubr.bf16.gmra.mxu0 %v818
      %v2076 = vpop.f32.mrf.mxu0
      %v2077 = vadd.f32 0.0, %v2076
      %v2078 = vpop.f32.mrf.mxu0
      %v2079 = vpop.f32.mrf.mxu0
      %v2080 = vadd.f32 0.0, %v2079
      %v2081 = vpop.f32.mrf.mxu0
      %2082 = vmatprep.mubr.bf16.mxu0 0
      %2083 = vmatmul.mubr.bf16.gmra.mxu0 %v1314
      %v2084 = vpop.f32.mrf.mxu0
      %v2085 = vadd.f32 0.0, %v2084
      %v2086 = vpop.f32.mrf.mxu0
      %v2087 = vpop.f32.mrf.mxu0
      %v2088 = vadd.f32 0.0, %v2087
      %v2089 = vpop.f32.mrf.mxu0
      %2090 = vmatprep.mubr.bf16.mxu0 0
      %2091 = vmatmul.mubr.bf16.gmra.mxu0 %v1933
      %v2092 = vpop.f32.mrf.mxu0
      %v2093 = vadd.f32 0.0, %v2092
      %v2094 = vpop.f32.mrf.mxu0
      %v2095 = vpop.f32.mrf.mxu0
      %v2096 = vadd.f32 0.0, %v2095
      %v2097 = vpop.f32.mrf.mxu0
      %2098 = vdwg.mxu0
      %v2099 = vadd.f32 %v1898, %v1973
      %v2100 = vadd.f32 %v1899, %v1976
      %v2101 = vadd.f32 %v1900, %v1981
      %v2102 = vadd.f32 %v1901, %v1984
      %v2103 = vadd.f32 %v1902, %v1989
      %v2104 = vadd.f32 %v1903, %v1992
      %v2105 = vadd.f32 %v1904, %v1997
      %v2106 = vadd.f32 %v1905, %v2000
      %v2107 = vadd.f32 %v1906, %v2005
      %v2108 = vadd.f32 %v1907, %v2008
      %v2109 = vadd.f32 %v1908, %v2013
      %v2110 = vadd.f32 %v1909, %v2016
      %v2111 = vadd.f32 %v1910, %v2021
      %v2112 = vadd.f32 %v1911, %v2024
      %v2113 = vadd.f32 %v1912, %v2029
      %v2114 = vadd.f32 %v1913, %v2032
      %v2115 = vadd.f32 %v1914, %v2037
      %v2116 = vadd.f32 %v1915, %v2040
      %v2117 = vadd.f32 %v1916, %v2045
      %v2118 = vadd.f32 %v1917, %v2048
      %v2119 = vadd.f32 %v1918, %v2053
      %v2120 = vadd.f32 %v1919, %v2056
      %v2121 = vadd.f32 %v1920, %v2061
      %v2122 = vadd.f32 %v1921, %v2064
      %v2123 = vadd.f32 %v1922, %v2069
      %v2124 = vadd.f32 %v1923, %v2072
      %v2125 = vadd.f32 %v1924, %v2077
      %v2126 = vadd.f32 %v1925, %v2080
      %v2127 = vadd.f32 %v1926, %v2085
      %v2128 = vadd.f32 %v1927, %v2088
      %v2129 = vadd.f32 %v1928, %v2093
      %v2130 = vadd.f32 %v1929, %v2096
      %v2131 = vshrl.u32 %v376, 16
      %v2133 = vshll.u32 %v376, 16
      %v2135 = vrot.slane %v2133, 1
      %v2136 = vor.u32 %v2131, %v2135
      %v2138 = vshll.u32 %v377, 16
      %v2140 = vrot.slane %v2138, 1
      %v2141 = vsel %vm379, %v2136, %v2140
      %s2142 = scalar_lea.vmem %s1, 14
      %v2143 = vld [vmem:[%s2142] sm:$0x3]
      %v2145 = vsel %vm574, %v2141, 0
      %v2148 = vsel %vm623, %v2143, 0
      %2150 = vmatprep.subr.bf16.mxu0 0
      %2151 = vmatpush1.bf16.msra.mxu0 0
      %2152 = vmatprep.subr.bf16.mxu0 0
      %2153 = vmatpush1.bf16.msra.mxu0 0
      %2154 = vmatprep.subr.bf16.mxu0 0
      %2155 = vmatpush1.bf16.msra.mxu0 0
      %2156 = vmatprep.subr.bf16.mxu0 0
      %2157 = vmatpush1.bf16.msra.mxu0 0
      %2158 = vmatprep.subr.bf16.mxu0 0
      %2159 = vmatpush1.bf16.msra.mxu0 0
      %2160 = vmatprep.subr.bf16.mxu0 0
      %2161 = vmatpush1.bf16.msra.mxu0 0
      %2162 = vmatprep.subr.bf16.mxu0 0
      %2163 = vmatpush1.bf16.msra.mxu0 0
      %2164 = vmatprep.subr.bf16.mxu0 0
      %2165 = vmatpush1.bf16.msra.mxu0 %v2148
      %2166 = vmatprep.subr.bf16.mxu0 0
      %2167 = vmatpush2.bf16.msra.mxu0 0
      %2168 = vmatprep.subr.bf16.mxu0 0
      %2169 = vmatpush2.bf16.msra.mxu0 0
      %2170 = vmatprep.subr.bf16.mxu0 0
      %2171 = vmatpush2.bf16.msra.mxu0 0
      %2172 = vmatprep.subr.bf16.mxu0 0
      %2173 = vmatpush2.bf16.msra.mxu0 0
      %2174 = vmatprep.subr.bf16.mxu0 0
      %2175 = vmatpush2.bf16.msra.mxu0 0
      %2176 = vmatprep.subr.bf16.mxu0 0
      %2177 = vmatpush2.bf16.msra.mxu0 0
      %2178 = vmatprep.subr.bf16.mxu0 0
      %2179 = vmatpush2.bf16.msra.mxu0 0
      %2180 = vmatprep.subr.bf16.mxu0 0
      %2181 = vmatpush2.bf16.msra.mxu0 0
      %2182 = vmatprep.mubr.bf16.mxu0 0
      %2183 = vmatmul.mubr.bf16.gmra.mxu0 %v582
      %v2184 = vpop.f32.mrf.mxu0
      %v2185 = vadd.f32 0.0, %v2184
      %v2186 = vpop.f32.mrf.mxu0
      %v2187 = vpop.f32.mrf.mxu0
      %v2188 = vadd.f32 0.0, %v2187
      %v2189 = vpop.f32.mrf.mxu0
      %2190 = vmatprep.mubr.bf16.mxu0 0
      %2191 = vmatmul.mubr.bf16.gmra.mxu0 %v585
      %v2192 = vpop.f32.mrf.mxu0
      %v2193 = vadd.f32 0.0, %v2192
      %v2194 = vpop.f32.mrf.mxu0
      %v2195 = vpop.f32.mrf.mxu0
      %v2196 = vadd.f32 0.0, %v2195
      %v2197 = vpop.f32.mrf.mxu0
      %2198 = vmatprep.mubr.bf16.mxu0 0
      %2199 = vmatmul.mubr.bf16.gmra.mxu0 %v588
      %v2200 = vpop.f32.mrf.mxu0
      %v2201 = vadd.f32 0.0, %v2200
      %v2202 = vpop.f32.mrf.mxu0
      %v2203 = vpop.f32.mrf.mxu0
      %v2204 = vadd.f32 0.0, %v2203
      %v2205 = vpop.f32.mrf.mxu0
      %2206 = vmatprep.mubr.bf16.mxu0 0
      %2207 = vmatmul.mubr.bf16.gmra.mxu0 %v591
      %v2208 = vpop.f32.mrf.mxu0
      %v2209 = vadd.f32 0.0, %v2208
      %v2210 = vpop.f32.mrf.mxu0
      %v2211 = vpop.f32.mrf.mxu0
      %v2212 = vadd.f32 0.0, %v2211
      %v2213 = vpop.f32.mrf.mxu0
      %2214 = vmatprep.mubr.bf16.mxu0 0
      %2215 = vmatmul.mubr.bf16.gmra.mxu0 %v594
      %v2216 = vpop.f32.mrf.mxu0
      %v2217 = vadd.f32 0.0, %v2216
      %v2218 = vpop.f32.mrf.mxu0
      %v2219 = vpop.f32.mrf.mxu0
      %v2220 = vadd.f32 0.0, %v2219
      %v2221 = vpop.f32.mrf.mxu0
      %2222 = vmatprep.mubr.bf16.mxu0 0
      %2223 = vmatmul.mubr.bf16.gmra.mxu0 %v597
      %v2224 = vpop.f32.mrf.mxu0
      %v2225 = vadd.f32 0.0, %v2224
      %v2226 = vpop.f32.mrf.mxu0
      %v2227 = vpop.f32.mrf.mxu0
      %v2228 = vadd.f32 0.0, %v2227
      %v2229 = vpop.f32.mrf.mxu0
      %2230 = vmatprep.mubr.bf16.mxu0 0
      %2231 = vmatmul.mubr.bf16.gmra.mxu0 %v600
      %v2232 = vpop.f32.mrf.mxu0
      %v2233 = vadd.f32 0.0, %v2232
      %v2234 = vpop.f32.mrf.mxu0
      %v2235 = vpop.f32.mrf.mxu0
      %v2236 = vadd.f32 0.0, %v2235
      %v2237 = vpop.f32.mrf.mxu0
      %2238 = vmatprep.mubr.bf16.mxu0 0
      %2239 = vmatmul.mubr.bf16.gmra.mxu0 %v603
      %v2240 = vpop.f32.mrf.mxu0
      %v2241 = vadd.f32 0.0, %v2240
      %v2242 = vpop.f32.mrf.mxu0
      %v2243 = vpop.f32.mrf.mxu0
      %v2244 = vadd.f32 0.0, %v2243
      %v2245 = vpop.f32.mrf.mxu0
      %2246 = vmatprep.mubr.bf16.mxu0 0
      %2247 = vmatmul.mubr.bf16.gmra.mxu0 %v606
      %v2248 = vpop.f32.mrf.mxu0
      %v2249 = vadd.f32 0.0, %v2248
      %v2250 = vpop.f32.mrf.mxu0
      %v2251 = vpop.f32.mrf.mxu0
      %v2252 = vadd.f32 0.0, %v2251
      %v2253 = vpop.f32.mrf.mxu0
      %2254 = vmatprep.mubr.bf16.mxu0 0
      %2255 = vmatmul.mubr.bf16.gmra.mxu0 %v609
      %v2256 = vpop.f32.mrf.mxu0
      %v2257 = vadd.f32 0.0, %v2256
      %v2258 = vpop.f32.mrf.mxu0
      %v2259 = vpop.f32.mrf.mxu0
      %v2260 = vadd.f32 0.0, %v2259
      %v2261 = vpop.f32.mrf.mxu0
      %2262 = vmatprep.mubr.bf16.mxu0 0
      %2263 = vmatmul.mubr.bf16.gmra.mxu0 %v612
      %v2264 = vpop.f32.mrf.mxu0
      %v2265 = vadd.f32 0.0, %v2264
      %v2266 = vpop.f32.mrf.mxu0
      %v2267 = vpop.f32.mrf.mxu0
      %v2268 = vadd.f32 0.0, %v2267
      %v2269 = vpop.f32.mrf.mxu0
      %2270 = vmatprep.mubr.bf16.mxu0 0
      %2271 = vmatmul.mubr.bf16.gmra.mxu0 %v615
      %v2272 = vpop.f32.mrf.mxu0
      %v2273 = vadd.f32 0.0, %v2272
      %v2274 = vpop.f32.mrf.mxu0
      %v2275 = vpop.f32.mrf.mxu0
      %v2276 = vadd.f32 0.0, %v2275
      %v2277 = vpop.f32.mrf.mxu0
      %2278 = vmatprep.mubr.bf16.mxu0 0
      %2279 = vmatmul.mubr.bf16.gmra.mxu0 %v618
      %v2280 = vpop.f32.mrf.mxu0
      %v2281 = vadd.f32 0.0, %v2280
      %v2282 = vpop.f32.mrf.mxu0
      %v2283 = vpop.f32.mrf.mxu0
      %v2284 = vadd.f32 0.0, %v2283
      %v2285 = vpop.f32.mrf.mxu0
      %2286 = vmatprep.mubr.bf16.mxu0 0
      %2287 = vmatmul.mubr.bf16.gmra.mxu0 %v621
      %v2288 = vpop.f32.mrf.mxu0
      %v2289 = vadd.f32 0.0, %v2288
      %v2290 = vpop.f32.mrf.mxu0
      %v2291 = vpop.f32.mrf.mxu0
      %v2292 = vadd.f32 0.0, %v2291
      %v2293 = vpop.f32.mrf.mxu0
      %2294 = vmatprep.mubr.bf16.mxu0 0
      %2295 = vmatmul.mubr.bf16.gmra.mxu0 %v1526
      %v2296 = vpop.f32.mrf.mxu0
      %v2297 = vadd.f32 0.0, %v2296
      %v2298 = vpop.f32.mrf.mxu0
      %v2299 = vpop.f32.mrf.mxu0
      %v2300 = vadd.f32 0.0, %v2299
      %v2301 = vpop.f32.mrf.mxu0
      %2302 = vmatprep.mubr.bf16.mxu0 0
      %2303 = vmatmul.mubr.bf16.gmra.mxu0 %v2145
      %v2304 = vpop.f32.mrf.mxu0
      %v2305 = vadd.f32 0.0, %v2304
      %v2306 = vpop.f32.mrf.mxu0
      %v2307 = vpop.f32.mrf.mxu0
      %v2308 = vadd.f32 0.0, %v2307
      %v2309 = vpop.f32.mrf.mxu0
      %2310 = vdwg.mxu0
      %v2311 = vadd.f32 %v2099, %v2185
      %v2312 = vadd.f32 %v2100, %v2188
      %v2313 = vadd.f32 %v2101, %v2193
      %v2314 = vadd.f32 %v2102, %v2196
      %v2315 = vadd.f32 %v2103, %v2201
      %v2316 = vadd.f32 %v2104, %v2204
      %v2317 = vadd.f32 %v2105, %v2209
      %v2318 = vadd.f32 %v2106, %v2212
      %v2319 = vadd.f32 %v2107, %v2217
      %v2320 = vadd.f32 %v2108, %v2220
      %v2321 = vadd.f32 %v2109, %v2225
      %v2322 = vadd.f32 %v2110, %v2228
      %v2323 = vadd.f32 %v2111, %v2233
      %v2324 = vadd.f32 %v2112, %v2236
      %v2325 = vadd.f32 %v2113, %v2241
      %v2326 = vadd.f32 %v2114, %v2244
      %v2327 = vadd.f32 %v2115, %v2249
      %v2328 = vadd.f32 %v2116, %v2252
      %v2329 = vadd.f32 %v2117, %v2257
      %v2330 = vadd.f32 %v2118, %v2260
      %v2331 = vadd.f32 %v2119, %v2265
      %v2332 = vadd.f32 %v2120, %v2268
      %v2333 = vadd.f32 %v2121, %v2273
      %v2334 = vadd.f32 %v2122, %v2276
      %v2335 = vadd.f32 %v2123, %v2281
      %v2336 = vadd.f32 %v2124, %v2284
      %v2337 = vadd.f32 %v2125, %v2289
      %v2338 = vadd.f32 %v2126, %v2292
      %v2339 = vadd.f32 %v2127, %v2297
      %v2340 = vadd.f32 %v2128, %v2300
      %v2341 = vadd.f32 %v2129, %v2305
      %v2342 = vadd.f32 %v2130, %v2308
      %v2345 = vrot.slane %v376, 1
      %v2346 = vrot.slane %v377, 1
      %v2347 = vsel %vm1016, %v2345, %v2346
      %s2348 = scalar_lea.vmem %s1, 16
      %v2349 = vld [vmem:[%s2348] sm:$0x3]
      %v2351 = vsel %vm574, %v2347, 0
      %v2354 = vsel %vm623, %v2349, 0
      %2356 = vmatprep.subr.bf16.mxu0 0
      %2357 = vmatpush1.bf16.msra.mxu0 0
      %2358 = vmatprep.subr.bf16.mxu0 0
      %2359 = vmatpush1.bf16.msra.mxu0 0
      %2360 = vmatprep.subr.bf16.mxu0 0
      %2361 = vmatpush1.bf16.msra.mxu0 0
      %2362 = vmatprep.subr.bf16.mxu0 0
      %2363 = vmatpush1.bf16.msra.mxu0 0
      %2364 = vmatprep.subr.bf16.mxu0 0
      %2365 = vmatpush1.bf16.msra.mxu0 0
      %2366 = vmatprep.subr.bf16.mxu0 0
      %2367 = vmatpush1.bf16.msra.mxu0 0
      %2368 = vmatprep.subr.bf16.mxu0 0
      %2369 = vmatpush1.bf16.msra.mxu0 0
      %2370 = vmatprep.subr.bf16.mxu0 0
      %2371 = vmatpush1.bf16.msra.mxu0 %v2354
      %2372 = vmatprep.subr.bf16.mxu0 0
      %2373 = vmatpush2.bf16.msra.mxu0 0
      %2374 = vmatprep.subr.bf16.mxu0 0
      %2375 = vmatpush2.bf16.msra.mxu0 0
      %2376 = vmatprep.subr.bf16.mxu0 0
      %2377 = vmatpush2.bf16.msra.mxu0 0
      %2378 = vmatprep.subr.bf16.mxu0 0
      %2379 = vmatpush2.bf16.msra.mxu0 0
      %2380 = vmatprep.subr.bf16.mxu0 0
      %2381 = vmatpush2.bf16.msra.mxu0 0
      %2382 = vmatprep.subr.bf16.mxu0 0
      %2383 = vmatpush2.bf16.msra.mxu0 0
      %2384 = vmatprep.subr.bf16.mxu0 0
      %2385 = vmatpush2.bf16.msra.mxu0 0
      %2386 = vmatprep.subr.bf16.mxu0 0
      %2387 = vmatpush2.bf16.msra.mxu0 0
      %2388 = vmatprep.mubr.bf16.mxu0 0
      %2389 = vmatmul.mubr.bf16.gmra.mxu0 %v1074
      %v2390 = vpop.f32.mrf.mxu0
      %v2391 = vadd.f32 0.0, %v2390
      %v2392 = vpop.f32.mrf.mxu0
      %v2393 = vpop.f32.mrf.mxu0
      %v2394 = vadd.f32 0.0, %v2393
      %v2395 = vpop.f32.mrf.mxu0
      %2396 = vmatprep.mubr.bf16.mxu0 0
      %2397 = vmatmul.mubr.bf16.gmra.mxu0 %v1077
      %v2398 = vpop.f32.mrf.mxu0
      %v2399 = vadd.f32 0.0, %v2398
      %v2400 = vpop.f32.mrf.mxu0
      %v2401 = vpop.f32.mrf.mxu0
      %v2402 = vadd.f32 0.0, %v2401
      %v2403 = vpop.f32.mrf.mxu0
      %2404 = vmatprep.mubr.bf16.mxu0 0
      %2405 = vmatmul.mubr.bf16.gmra.mxu0 %v1080
      %v2406 = vpop.f32.mrf.mxu0
      %v2407 = vadd.f32 0.0, %v2406
      %v2408 = vpop.f32.mrf.mxu0
      %v2409 = vpop.f32.mrf.mxu0
      %v2410 = vadd.f32 0.0, %v2409
      %v2411 = vpop.f32.mrf.mxu0
      %2412 = vmatprep.mubr.bf16.mxu0 0
      %2413 = vmatmul.mubr.bf16.gmra.mxu0 %v1083
      %v2414 = vpop.f32.mrf.mxu0
      %v2415 = vadd.f32 0.0, %v2414
      %v2416 = vpop.f32.mrf.mxu0
      %v2417 = vpop.f32.mrf.mxu0
      %v2418 = vadd.f32 0.0, %v2417
      %v2419 = vpop.f32.mrf.mxu0
      %2420 = vmatprep.mubr.bf16.mxu0 0
      %2421 = vmatmul.mubr.bf16.gmra.mxu0 %v1086
      %v2422 = vpop.f32.mrf.mxu0
      %v2423 = vadd.f32 0.0, %v2422
      %v2424 = vpop.f32.mrf.mxu0
      %v2425 = vpop.f32.mrf.mxu0
      %v2426 = vadd.f32 0.0, %v2425
      %v2427 = vpop.f32.mrf.mxu0
      %2428 = vmatprep.mubr.bf16.mxu0 0
      %2429 = vmatmul.mubr.bf16.gmra.mxu0 %v1089
      %v2430 = vpop.f32.mrf.mxu0
      %v2431 = vadd.f32 0.0, %v2430
      %v2432 = vpop.f32.mrf.mxu0
      %v2433 = vpop.f32.mrf.mxu0
      %v2434 = vadd.f32 0.0, %v2433
      %v2435 = vpop.f32.mrf.mxu0
      %2436 = vmatprep.mubr.bf16.mxu0 0
      %2437 = vmatmul.mubr.bf16.gmra.mxu0 %v1092
      %v2438 = vpop.f32.mrf.mxu0
      %v2439 = vadd.f32 0.0, %v2438
      %v2440 = vpop.f32.mrf.mxu0
      %v2441 = vpop.f32.mrf.mxu0
      %v2442 = vadd.f32 0.0, %v2441
      %v2443 = vpop.f32.mrf.mxu0
      %2444 = vmatprep.mubr.bf16.mxu0 0
      %2445 = vmatmul.mubr.bf16.gmra.mxu0 %v1095
      %v2446 = vpop.f32.mrf.mxu0
      %v2447 = vadd.f32 0.0, %v2446
      %v2448 = vpop.f32.mrf.mxu0
      %v2449 = vpop.f32.mrf.mxu0
      %v2450 = vadd.f32 0.0, %v2449
      %v2451 = vpop.f32.mrf.mxu0
      %2452 = vmatprep.mubr.bf16.mxu0 0
      %2453 = vmatmul.mubr.bf16.gmra.mxu0 %v1098
      %v2454 = vpop.f32.mrf.mxu0
      %v2455 = vadd.f32 0.0, %v2454
      %v2456 = vpop.f32.mrf.mxu0
      %v2457 = vpop.f32.mrf.mxu0
      %v2458 = vadd.f32 0.0, %v2457
      %v2459 = vpop.f32.mrf.mxu0
      %2460 = vmatprep.mubr.bf16.mxu0 0
      %2461 = vmatmul.mubr.bf16.gmra.mxu0 %v1101
      %v2462 = vpop.f32.mrf.mxu0
      %v2463 = vadd.f32 0.0, %v2462
      %v2464 = vpop.f32.mrf.mxu0
      %v2465 = vpop.f32.mrf.mxu0
      %v2466 = vadd.f32 0.0, %v2465
      %v2467 = vpop.f32.mrf.mxu0
      %2468 = vmatprep.mubr.bf16.mxu0 0
      %2469 = vmatmul.mubr.bf16.gmra.mxu0 %v1104
      %v2470 = vpop.f32.mrf.mxu0
      %v2471 = vadd.f32 0.0, %v2470
      %v2472 = vpop.f32.mrf.mxu0
      %v2473 = vpop.f32.mrf.mxu0
      %v2474 = vadd.f32 0.0, %v2473
      %v2475 = vpop.f32.mrf.mxu0
      %2476 = vmatprep.mubr.bf16.mxu0 0
      %2477 = vmatmul.mubr.bf16.gmra.mxu0 %v1107
      %v2478 = vpop.f32.mrf.mxu0
      %v2479 = vadd.f32 0.0, %v2478
      %v2480 = vpop.f32.mrf.mxu0
      %v2481 = vpop.f32.mrf.mxu0
      %v2482 = vadd.f32 0.0, %v2481
      %v2483 = vpop.f32.mrf.mxu0
      %2484 = vmatprep.mubr.bf16.mxu0 0
      %2485 = vmatmul.mubr.bf16.gmra.mxu0 %v1110
      %v2486 = vpop.f32.mrf.mxu0
      %v2487 = vadd.f32 0.0, %v2486
      %v2488 = vpop.f32.mrf.mxu0
      %v2489 = vpop.f32.mrf.mxu0
      %v2490 = vadd.f32 0.0, %v2489
      %v2491 = vpop.f32.mrf.mxu0
      %2492 = vmatprep.mubr.bf16.mxu0 0
      %2493 = vmatmul.mubr.bf16.gmra.mxu0 %v1113
      %v2494 = vpop.f32.mrf.mxu0
      %v2495 = vadd.f32 0.0, %v2494
      %v2496 = vpop.f32.mrf.mxu0
      %v2497 = vpop.f32.mrf.mxu0
      %v2498 = vadd.f32 0.0, %v2497
      %v2499 = vpop.f32.mrf.mxu0
      %2500 = vmatprep.mubr.bf16.mxu0 0
      %2501 = vmatmul.mubr.bf16.gmra.mxu0 %v1732
      %v2502 = vpop.f32.mrf.mxu0
      %v2503 = vadd.f32 0.0, %v2502
      %v2504 = vpop.f32.mrf.mxu0
      %v2505 = vpop.f32.mrf.mxu0
      %v2506 = vadd.f32 0.0, %v2505
      %v2507 = vpop.f32.mrf.mxu0
      %2508 = vmatprep.mubr.bf16.mxu0 0
      %2509 = vmatmul.mubr.bf16.gmra.mxu0 %v2351
      %v2510 = vpop.f32.mrf.mxu0
      %v2511 = vadd.f32 0.0, %v2510
      %v2512 = vpop.f32.mrf.mxu0
      %v2513 = vpop.f32.mrf.mxu0
      %v2514 = vadd.f32 0.0, %v2513
      %v2515 = vpop.f32.mrf.mxu0
      %2516 = vdwg.mxu0
      %v2517 = vadd.f32 %v2311, %v2391
      %v2518 = vadd.f32 %v2312, %v2394
      %v2519 = vadd.f32 %v2313, %v2399
      %v2520 = vadd.f32 %v2314, %v2402
      %v2521 = vadd.f32 %v2315, %v2407
      %v2522 = vadd.f32 %v2316, %v2410
      %v2523 = vadd.f32 %v2317, %v2415
      %v2524 = vadd.f32 %v2318, %v2418
      %v2525 = vadd.f32 %v2319, %v2423
      %v2526 = vadd.f32 %v2320, %v2426
      %v2527 = vadd.f32 %v2321, %v2431
      %v2528 = vadd.f32 %v2322, %v2434
      %v2529 = vadd.f32 %v2323, %v2439
      %v2530 = vadd.f32 %v2324, %v2442
      %v2531 = vadd.f32 %v2325, %v2447
      %v2532 = vadd.f32 %v2326, %v2450
      %v2533 = vadd.f32 %v2327, %v2455
      %v2534 = vadd.f32 %v2328, %v2458
      %v2535 = vadd.f32 %v2329, %v2463
      %v2536 = vadd.f32 %v2330, %v2466
      %v2537 = vadd.f32 %v2331, %v2471
      %v2538 = vadd.f32 %v2332, %v2474
      %v2539 = vadd.f32 %v2333, %v2479
      %v2540 = vadd.f32 %v2334, %v2482
      %v2541 = vadd.f32 %v2335, %v2487
      %v2542 = vadd.f32 %v2336, %v2490
      %v2543 = vadd.f32 %v2337, %v2495
      %v2544 = vadd.f32 %v2338, %v2498
      %v2545 = vadd.f32 %v2339, %v2503
      %v2546 = vadd.f32 %v2340, %v2506
      %v2547 = vadd.f32 %v2341, %v2511
      %v2548 = vadd.f32 %v2342, %v2514
      %2549 = vst [vmem:[%s271] sm:$0xff] %v2517
      %2550 = vst [vmem:[%s271 + $0x8] sm:$0xff] %v2518
      %2551 = vst [vmem:[%s271 + $0x10] sm:$0xff] %v2519
      %2552 = vst [vmem:[%s271 + $0x18] sm:$0xff] %v2520
      %2553 = vst [vmem:[%s271 + $0x20] sm:$0xff] %v2521
      %2554 = vst [vmem:[%s271 + $0x28] sm:$0xff] %v2522
      %2555 = vst [vmem:[%s271 + $0x30] sm:$0xff] %v2523
      %2556 = vst [vmem:[%s271 + $0x38] sm:$0xff] %v2524
      %2557 = vst [vmem:[%s271 + $0x40] sm:$0xff] %v2525
      %2558 = vst [vmem:[%s271 + $0x48] sm:$0xff] %v2526
      %2559 = vst [vmem:[%s271 + $0x50] sm:$0xff] %v2527
      %2560 = vst [vmem:[%s271 + $0x58] sm:$0xff] %v2528
      %2561 = vst [vmem:[%s271 + $0x60] sm:$0xff] %v2529
      %2562 = vst [vmem:[%s271 + $0x68] sm:$0xff] %v2530
      %2563 = vst [vmem:[%s271 + $0x70] sm:$0xff] %v2531
      %2564 = vst [vmem:[%s271 + $0x78] sm:$0xff] %v2532
      %2565 = vst [vmem:[%s271 + $0x80] sm:$0xff] %v2533
      %2566 = vst [vmem:[%s271 + $0x88] sm:$0xff] %v2534
      %2567 = vst [vmem:[%s271 + $0x90] sm:$0xff] %v2535
      %2568 = vst [vmem:[%s271 + $0x98] sm:$0xff] %v2536
      %2569 = vst [vmem:[%s271 + $0xa0] sm:$0xff] %v2537
      %2570 = vst [vmem:[%s271 + $0xa8] sm:$0xff] %v2538
      %2571 = vst [vmem:[%s271 + $0xb0] sm:$0xff] %v2539
      %2572 = vst [vmem:[%s271 + $0xb8] sm:$0xff] %v2540
      %2573 = vst [vmem:[%s271 + $0xc0] sm:$0xff] %v2541
      %2574 = vst [vmem:[%s271 + $0xc8] sm:$0xff] %v2542
      %2575 = vst [vmem:[%s271 + $0xd0] sm:$0xff] %v2543
      %2576 = vst [vmem:[%s271 + $0xd8] sm:$0xff] %v2544
      %2577 = vst [vmem:[%s271 + $0xe0] sm:$0xff] %v2545
      %2578 = vst [vmem:[%s271 + $0xe8] sm:$0xff] %v2546
      %2579 = vst [vmem:[%s271 + $0xf0] sm:$0xff] %v2547
      %2580 = vst [vmem:[%s271 + $0xf8] sm:$0xff] %v2548
      %v2581 = vadd.f32 %v2517, %v2518
      %v2582 = vadd.f32 %v2581, %v2519
      %v2583 = vadd.f32 %v2582, %v2520
      %v2584 = vadd.f32 %v2583, %v2521
      %v2585 = vadd.f32 %v2584, %v2522
      %v2586 = vadd.f32 %v2585, %v2523
      %v2587 = vadd.f32 %v2586, %v2524
      %v2588 = vadd.f32 %v2587, %v2525
      %v2589 = vadd.f32 %v2588, %v2526
      %v2590 = vadd.f32 %v2589, %v2527
      %v2591 = vadd.f32 %v2590, %v2528
      %v2592 = vadd.f32 %v2591, %v2529
      %v2593 = vadd.f32 %v2592, %v2530
      %v2594 = vadd.f32 %v2593, %v2531
      %v2595 = vadd.f32 %v2594, %v2532
      %v2596 = vadd.f32 %v2595, %v2533
      %v2597 = vadd.f32 %v2596, %v2534
      %v2598 = vadd.f32 %v2597, %v2535
      %v2599 = vadd.f32 %v2598, %v2536
      %v2600 = vadd.f32 %v2599, %v2537
      %v2601 = vadd.f32 %v2600, %v2538
      %v2602 = vadd.f32 %v2601, %v2539
      %v2603 = vadd.f32 %v2602, %v2540
      %v2604 = vadd.f32 %v2603, %v2541
      %v2605 = vadd.f32 %v2604, %v2542
      %v2606 = vadd.f32 %v2605, %v2543
      %v2607 = vadd.f32 %v2606, %v2544
      %v2608 = vadd.f32 %v2607, %v2545
      %v2609 = vadd.f32 %v2608, %v2546
      %v2610 = vadd.f32 %v2609, %v2547
      %v2611 = vadd.f32 %v2610, %v2548
      %v2612 = vrot.slane %v2611, 4
      %v2613 = vadd.f32 %v2611, %v2612
      %v2614 = vrot.slane %v2613, 2
      %v2615 = vadd.f32 %v2613, %v2614
      %v2616 = vrot.slane %v2615, 1
      %v2617 = vadd.f32 %v2615, %v2616
      %v2618 = vmul.f32 %v2517, %v2517
      %v2619 = vmul.f32 %v2518, %v2518
      %v2620 = vmul.f32 %v2519, %v2519
      %v2621 = vmul.f32 %v2520, %v2520
      %v2622 = vmul.f32 %v2521, %v2521
      %v2623 = vmul.f32 %v2522, %v2522
      %v2624 = vmul.f32 %v2523, %v2523
      %v2625 = vmul.f32 %v2524, %v2524
      %v2626 = vmul.f32 %v2525, %v2525
      %v2627 = vmul.f32 %v2526, %v2526
      %v2628 = vmul.f32 %v2527, %v2527
      %v2629 = vmul.f32 %v2528, %v2528
      %v2630 = vmul.f32 %v2529, %v2529
      %v2631 = vmul.f32 %v2530, %v2530
      %v2632 = vmul.f32 %v2531, %v2531
      %v2633 = vmul.f32 %v2532, %v2532
      %v2634 = vmul.f32 %v2533, %v2533
      %v2635 = vmul.f32 %v2534, %v2534
      %v2636 = vmul.f32 %v2535, %v2535
      %v2637 = vmul.f32 %v2536, %v2536
      %v2638 = vmul.f32 %v2537, %v2537
      %v2639 = vmul.f32 %v2538, %v2538
      %v2640 = vmul.f32 %v2539, %v2539
      %v2641 = vmul.f32 %v2540, %v2540
      %v2642 = vmul.f32 %v2541, %v2541
      %v2643 = vmul.f32 %v2542, %v2542
      %v2644 = vmul.f32 %v2543, %v2543
      %v2645 = vmul.f32 %v2544, %v2544
      %v2646 = vmul.f32 %v2545, %v2545
      %v2647 = vmul.f32 %v2546, %v2546
      %v2648 = vmul.f32 %v2547, %v2547
      %v2649 = vmul.f32 %v2548, %v2548
      %v2650 = vadd.f32 %v2618, %v2619
      %v2651 = vadd.f32 %v2650, %v2620
      %v2652 = vadd.f32 %v2651, %v2621
      %v2653 = vadd.f32 %v2652, %v2622
      %v2654 = vadd.f32 %v2653, %v2623
      %v2655 = vadd.f32 %v2654, %v2624
      %v2656 = vadd.f32 %v2655, %v2625
      %v2657 = vadd.f32 %v2656, %v2626
      %v2658 = vadd.f32 %v2657, %v2627
      %v2659 = vadd.f32 %v2658, %v2628
      %v2660 = vadd.f32 %v2659, %v2629
      %v2661 = vadd.f32 %v2660, %v2630
      %v2662 = vadd.f32 %v2661, %v2631
      %v2663 = vadd.f32 %v2662, %v2632
      %v2664 = vadd.f32 %v2663, %v2633
      %v2665 = vadd.f32 %v2664, %v2634
      %v2666 = vadd.f32 %v2665, %v2635
      %v2667 = vadd.f32 %v2666, %v2636
      %v2668 = vadd.f32 %v2667, %v2637
      %v2669 = vadd.f32 %v2668, %v2638
      %v2670 = vadd.f32 %v2669, %v2639
      %v2671 = vadd.f32 %v2670, %v2640
      %v2672 = vadd.f32 %v2671, %v2641
      %v2673 = vadd.f32 %v2672, %v2642
      %v2674 = vadd.f32 %v2673, %v2643
      %v2675 = vadd.f32 %v2674, %v2644
      %v2676 = vadd.f32 %v2675, %v2645
      %v2677 = vadd.f32 %v2676, %v2646
      %v2678 = vadd.f32 %v2677, %v2647
      %v2679 = vadd.f32 %v2678, %v2648
      %v2680 = vadd.f32 %v2679, %v2649
      %v2681 = vrot.slane %v2680, 4
      %v2682 = vadd.f32 %v2680, %v2681
      %v2683 = vrot.slane %v2682, 2
      %v2684 = vadd.f32 %v2682, %v2683
      %v2685 = vrot.slane %v2684, 1
      %v2686 = vadd.f32 %v2684, %v2685
      %vm2687 = vcmask 1040384
      %v2688 = vsel %vm2687, %v2617, %v2686
      %2689 = vst [vmem:[%s276] sm:$0x3] %v2688
      %v2690 = vld [vmem:[%s2] sm:$0x3]
      %v2692 = vsel %vm623, %v2690, 0
      %2694 = vmatprep.subr.bf16.mxu0 0
      %2695 = vmatpush1.bf16.msra.mxu0 0
      %2696 = vmatprep.subr.bf16.mxu0 0
      %2697 = vmatpush1.bf16.msra.mxu0 0
      %2698 = vmatprep.subr.bf16.mxu0 0
      %2699 = vmatpush1.bf16.msra.mxu0 0
      %2700 = vmatprep.subr.bf16.mxu0 0
      %2701 = vmatpush1.bf16.msra.mxu0 0
      %2702 = vmatprep.subr.bf16.mxu0 0
      %2703 = vmatpush1.bf16.msra.mxu0 0
      %2704 = vmatprep.subr.bf16.mxu0 0
      %2705 = vmatpush1.bf16.msra.mxu0 0
      %2706 = vmatprep.subr.bf16.mxu0 0
      %2707 = vmatpush1.bf16.msra.mxu0 0
      %2708 = vmatprep.subr.bf16.mxu0 0
      %2709 = vmatpush1.bf16.msra.mxu0 %v2692
      %2710 = vmatprep.subr.bf16.mxu0 0
      %2711 = vmatpush2.bf16.msra.mxu0 0
      %2712 = vmatprep.subr.bf16.mxu0 0
      %2713 = vmatpush2.bf16.msra.mxu0 0
      %2714 = vmatprep.subr.bf16.mxu0 0
      %2715 = vmatpush2.bf16.msra.mxu0 0
      %2716 = vmatprep.subr.bf16.mxu0 0
      %2717 = vmatpush2.bf16.msra.mxu0 0
      %2718 = vmatprep.subr.bf16.mxu0 0
      %2719 = vmatpush2.bf16.msra.mxu0 0
      %2720 = vmatprep.subr.bf16.mxu0 0
      %2721 = vmatpush2.bf16.msra.mxu0 0
      %2722 = vmatprep.subr.bf16.mxu0 0
      %2723 = vmatpush2.bf16.msra.mxu0 0
      %2724 = vmatprep.subr.bf16.mxu0 0
      %2725 = vmatpush2.bf16.msra.mxu0 0
      %2726 = vmatprep.mubr.bf16.mxu0 0
      %2727 = vmatmul.mubr.bf16.gmra.mxu0 %v579
      %v2728 = vpop.f32.mrf.mxu0
      %v2729 = vadd.f32 0.0, %v2728
      %v2730 = vpop.f32.mrf.mxu0
      %v2731 = vpop.f32.mrf.mxu0
      %v2732 = vadd.f32 0.0, %v2731
      %v2733 = vpop.f32.mrf.mxu0
      %2734 = vmatprep.mubr.bf16.mxu0 0
      %2735 = vmatmul.mubr.bf16.gmra.mxu0 %v582
      %v2736 = vpop.f32.mrf.mxu0
      %v2737 = vadd.f32 0.0, %v2736
      %v2738 = vpop.f32.mrf.mxu0
      %v2739 = vpop.f32.mrf.mxu0
      %v2740 = vadd.f32 0.0, %v2739
      %v2741 = vpop.f32.mrf.mxu0
      %2742 = vmatprep.mubr.bf16.mxu0 0
      %2743 = vmatmul.mubr.bf16.gmra.mxu0 %v585
      %v2744 = vpop.f32.mrf.mxu0
      %v2745 = vadd.f32 0.0, %v2744
      %v2746 = vpop.f32.mrf.mxu0
      %v2747 = vpop.f32.mrf.mxu0
      %v2748 = vadd.f32 0.0, %v2747
      %v2749 = vpop.f32.mrf.mxu0
      %2750 = vmatprep.mubr.bf16.mxu0 0
      %2751 = vmatmul.mubr.bf16.gmra.mxu0 %v588
      %v2752 = vpop.f32.mrf.mxu0
      %v2753 = vadd.f32 0.0, %v2752
      %v2754 = vpop.f32.mrf.mxu0
      %v2755 = vpop.f32.mrf.mxu0
      %v2756 = vadd.f32 0.0, %v2755
      %v2757 = vpop.f32.mrf.mxu0
      %2758 = vmatprep.mubr.bf16.mxu0 0
      %2759 = vmatmul.mubr.bf16.gmra.mxu0 %v591
      %v2760 = vpop.f32.mrf.mxu0
      %v2761 = vadd.f32 0.0, %v2760
      %v2762 = vpop.f32.mrf.mxu0
      %v2763 = vpop.f32.mrf.mxu0
      %v2764 = vadd.f32 0.0, %v2763
      %v2765 = vpop.f32.mrf.mxu0
      %2766 = vmatprep.mubr.bf16.mxu0 0
      %2767 = vmatmul.mubr.bf16.gmra.mxu0 %v594
      %v2768 = vpop.f32.mrf.mxu0
      %v2769 = vadd.f32 0.0, %v2768
      %v2770 = vpop.f32.mrf.mxu0
      %v2771 = vpop.f32.mrf.mxu0
      %v2772 = vadd.f32 0.0, %v2771
      %v2773 = vpop.f32.mrf.mxu0
      %2774 = vmatprep.mubr.bf16.mxu0 0
      %2775 = vmatmul.mubr.bf16.gmra.mxu0 %v597
      %v2776 = vpop.f32.mrf.mxu0
      %v2777 = vadd.f32 0.0, %v2776
      %v2778 = vpop.f32.mrf.mxu0
      %v2779 = vpop.f32.mrf.mxu0
      %v2780 = vadd.f32 0.0, %v2779
      %v2781 = vpop.f32.mrf.mxu0
      %2782 = vmatprep.mubr.bf16.mxu0 0
      %2783 = vmatmul.mubr.bf16.gmra.mxu0 %v600
      %v2784 = vpop.f32.mrf.mxu0
      %v2785 = vadd.f32 0.0, %v2784
      %v2786 = vpop.f32.mrf.mxu0
      %v2787 = vpop.f32.mrf.mxu0
      %v2788 = vadd.f32 0.0, %v2787
      %v2789 = vpop.f32.mrf.mxu0
      %2790 = vmatprep.mubr.bf16.mxu0 0
      %2791 = vmatmul.mubr.bf16.gmra.mxu0 %v603
      %v2792 = vpop.f32.mrf.mxu0
      %v2793 = vadd.f32 0.0, %v2792
      %v2794 = vpop.f32.mrf.mxu0
      %v2795 = vpop.f32.mrf.mxu0
      %v2796 = vadd.f32 0.0, %v2795
      %v2797 = vpop.f32.mrf.mxu0
      %2798 = vmatprep.mubr.bf16.mxu0 0
      %2799 = vmatmul.mubr.bf16.gmra.mxu0 %v606
      %v2800 = vpop.f32.mrf.mxu0
      %v2801 = vadd.f32 0.0, %v2800
      %v2802 = vpop.f32.mrf.mxu0
      %v2803 = vpop.f32.mrf.mxu0
      %v2804 = vadd.f32 0.0, %v2803
      %v2805 = vpop.f32.mrf.mxu0
      %2806 = vmatprep.mubr.bf16.mxu0 0
      %2807 = vmatmul.mubr.bf16.gmra.mxu0 %v609
      %v2808 = vpop.f32.mrf.mxu0
      %v2809 = vadd.f32 0.0, %v2808
      %v2810 = vpop.f32.mrf.mxu0
      %v2811 = vpop.f32.mrf.mxu0
      %v2812 = vadd.f32 0.0, %v2811
      %v2813 = vpop.f32.mrf.mxu0
      %2814 = vmatprep.mubr.bf16.mxu0 0
      %2815 = vmatmul.mubr.bf16.gmra.mxu0 %v612
      %v2816 = vpop.f32.mrf.mxu0
      %v2817 = vadd.f32 0.0, %v2816
      %v2818 = vpop.f32.mrf.mxu0
      %v2819 = vpop.f32.mrf.mxu0
      %v2820 = vadd.f32 0.0, %v2819
      %v2821 = vpop.f32.mrf.mxu0
      %2822 = vmatprep.mubr.bf16.mxu0 0
      %2823 = vmatmul.mubr.bf16.gmra.mxu0 %v615
      %v2824 = vpop.f32.mrf.mxu0
      %v2825 = vadd.f32 0.0, %v2824
      %v2826 = vpop.f32.mrf.mxu0
      %v2827 = vpop.f32.mrf.mxu0
      %v2828 = vadd.f32 0.0, %v2827
      %v2829 = vpop.f32.mrf.mxu0
      %2830 = vmatprep.mubr.bf16.mxu0 0
      %2831 = vmatmul.mubr.bf16.gmra.mxu0 %v618
      %v2832 = vpop.f32.mrf.mxu0
      %v2833 = vadd.f32 0.0, %v2832
      %v2834 = vpop.f32.mrf.mxu0
      %v2835 = vpop.f32.mrf.mxu0
      %v2836 = vadd.f32 0.0, %v2835
      %v2837 = vpop.f32.mrf.mxu0
      %2838 = vmatprep.mubr.bf16.mxu0 0
      %2839 = vmatmul.mubr.bf16.gmra.mxu0 %v621
      %v2840 = vpop.f32.mrf.mxu0
      %v2841 = vadd.f32 0.0, %v2840
      %v2842 = vpop.f32.mrf.mxu0
      %v2843 = vpop.f32.mrf.mxu0
      %v2844 = vadd.f32 0.0, %v2843
      %v2845 = vpop.f32.mrf.mxu0
      %2846 = vmatprep.mubr.bf16.mxu0 0
      %2847 = vmatmul.mubr.bf16.gmra.mxu0 %v1526
      %v2848 = vpop.f32.mrf.mxu0
      %v2849 = vadd.f32 0.0, %v2848
      %v2850 = vpop.f32.mrf.mxu0
      %v2851 = vpop.f32.mrf.mxu0
      %v2852 = vadd.f32 0.0, %v2851
      %v2853 = vpop.f32.mrf.mxu0
      %2854 = vdwg.mxu0
      %2855 = vst [vmem:[%s281] sm:$0xff] %v2729
      %2856 = vst [vmem:[%s281 + $0x8] sm:$0xff] %v2732
      %2857 = vst [vmem:[%s281 + $0x10] sm:$0xff] %v2737
      %2858 = vst [vmem:[%s281 + $0x18] sm:$0xff] %v2740
      %2859 = vst [vmem:[%s281 + $0x20] sm:$0xff] %v2745
      %2860 = vst [vmem:[%s281 + $0x28] sm:$0xff] %v2748
      %2861 = vst [vmem:[%s281 + $0x30] sm:$0xff] %v2753
      %2862 = vst [vmem:[%s281 + $0x38] sm:$0xff] %v2756
      %2863 = vst [vmem:[%s281 + $0x40] sm:$0xff] %v2761
      %2864 = vst [vmem:[%s281 + $0x48] sm:$0xff] %v2764
      %2865 = vst [vmem:[%s281 + $0x50] sm:$0xff] %v2769
      %2866 = vst [vmem:[%s281 + $0x58] sm:$0xff] %v2772
      %2867 = vst [vmem:[%s281 + $0x60] sm:$0xff] %v2777
      %2868 = vst [vmem:[%s281 + $0x68] sm:$0xff] %v2780
      %2869 = vst [vmem:[%s281 + $0x70] sm:$0xff] %v2785
      %2870 = vst [vmem:[%s281 + $0x78] sm:$0xff] %v2788
      %2871 = vst [vmem:[%s281 + $0x80] sm:$0xff] %v2793
      %2872 = vst [vmem:[%s281 + $0x88] sm:$0xff] %v2796
      %2873 = vst [vmem:[%s281 + $0x90] sm:$0xff] %v2801
      %2874 = vst [vmem:[%s281 + $0x98] sm:$0xff] %v2804
      %2875 = vst [vmem:[%s281 + $0xa0] sm:$0xff] %v2809
      %2876 = vst [vmem:[%s281 + $0xa8] sm:$0xff] %v2812
      %2877 = vst [vmem:[%s281 + $0xb0] sm:$0xff] %v2817
      %2878 = vst [vmem:[%s281 + $0xb8] sm:$0xff] %v2820
      %2879 = vst [vmem:[%s281 + $0xc0] sm:$0xff] %v2825
      %2880 = vst [vmem:[%s281 + $0xc8] sm:$0xff] %v2828
      %2881 = vst [vmem:[%s281 + $0xd0] sm:$0xff] %v2833
      %2882 = vst [vmem:[%s281 + $0xd8] sm:$0xff] %v2836
      %2883 = vst [vmem:[%s281 + $0xe0] sm:$0xff] %v2841
      %2884 = vst [vmem:[%s281 + $0xe8] sm:$0xff] %v2844
      %2885 = vst [vmem:[%s281 + $0xf0] sm:$0xff] %v2849
      %2886 = vst [vmem:[%s281 + $0xf8] sm:$0xff] %v2852
      %v2887 = vadd.f32 %v2729, %v2732
      %v2888 = vadd.f32 %v2887, %v2737
      %v2889 = vadd.f32 %v2888, %v2740
      %v2890 = vadd.f32 %v2889, %v2745
      %v2891 = vadd.f32 %v2890, %v2748
      %v2892 = vadd.f32 %v2891, %v2753
      %v2893 = vadd.f32 %v2892, %v2756
      %v2894 = vadd.f32 %v2893, %v2761
      %v2895 = vadd.f32 %v2894, %v2764
      %v2896 = vadd.f32 %v2895, %v2769
      %v2897 = vadd.f32 %v2896, %v2772
      %v2898 = vadd.f32 %v2897, %v2777
      %v2899 = vadd.f32 %v2898, %v2780
      %v2900 = vadd.f32 %v2899, %v2785
      %v2901 = vadd.f32 %v2900, %v2788
      %v2902 = vadd.f32 %v2901, %v2793
      %v2903 = vadd.f32 %v2902, %v2796
      %v2904 = vadd.f32 %v2903, %v2801
      %v2905 = vadd.f32 %v2904, %v2804
      %v2906 = vadd.f32 %v2905, %v2809
      %v2907 = vadd.f32 %v2906, %v2812
      %v2908 = vadd.f32 %v2907, %v2817
      %v2909 = vadd.f32 %v2908, %v2820
      %v2910 = vadd.f32 %v2909, %v2825
      %v2911 = vadd.f32 %v2910, %v2828
      %v2912 = vadd.f32 %v2911, %v2833
      %v2913 = vadd.f32 %v2912, %v2836
      %v2914 = vadd.f32 %v2913, %v2841
      %v2915 = vadd.f32 %v2914, %v2844
      %v2916 = vadd.f32 %v2915, %v2849
      %v2917 = vadd.f32 %v2916, %v2852
      %v2918 = vrot.slane %v2917, 4
      %v2919 = vadd.f32 %v2917, %v2918
      %v2920 = vrot.slane %v2919, 2
      %v2921 = vadd.f32 %v2919, %v2920
      %v2922 = vrot.slane %v2921, 1
      %v2923 = vadd.f32 %v2921, %v2922
      %v2924 = vmul.f32 %v2729, %v2729
      %v2925 = vmul.f32 %v2732, %v2732
      %v2926 = vmul.f32 %v2737, %v2737
      %v2927 = vmul.f32 %v2740, %v2740
      %v2928 = vmul.f32 %v2745, %v2745
      %v2929 = vmul.f32 %v2748, %v2748
      %v2930 = vmul.f32 %v2753, %v2753
      %v2931 = vmul.f32 %v2756, %v2756
      %v2932 = vmul.f32 %v2761, %v2761
      %v2933 = vmul.f32 %v2764, %v2764
      %v2934 = vmul.f32 %v2769, %v2769
      %v2935 = vmul.f32 %v2772, %v2772
      %v2936 = vmul.f32 %v2777, %v2777
      %v2937 = vmul.f32 %v2780, %v2780
      %v2938 = vmul.f32 %v2785, %v2785
      %v2939 = vmul.f32 %v2788, %v2788
      %v2940 = vmul.f32 %v2793, %v2793
      %v2941 = vmul.f32 %v2796, %v2796
      %v2942 = vmul.f32 %v2801, %v2801
      %v2943 = vmul.f32 %v2804, %v2804
      %v2944 = vmul.f32 %v2809, %v2809
      %v2945 = vmul.f32 %v2812, %v2812
      %v2946 = vmul.f32 %v2817, %v2817
      %v2947 = vmul.f32 %v2820, %v2820
      %v2948 = vmul.f32 %v2825, %v2825
      %v2949 = vmul.f32 %v2828, %v2828
      %v2950 = vmul.f32 %v2833, %v2833
      %v2951 = vmul.f32 %v2836, %v2836
      %v2952 = vmul.f32 %v2841, %v2841
      %v2953 = vmul.f32 %v2844, %v2844
      %v2954 = vmul.f32 %v2849, %v2849
      %v2955 = vmul.f32 %v2852, %v2852
      %v2956 = vadd.f32 %v2924, %v2925
      %v2957 = vadd.f32 %v2956, %v2926
      %v2958 = vadd.f32 %v2957, %v2927
      %v2959 = vadd.f32 %v2958, %v2928
      %v2960 = vadd.f32 %v2959, %v2929
      %v2961 = vadd.f32 %v2960, %v2930
      %v2962 = vadd.f32 %v2961, %v2931
      %v2963 = vadd.f32 %v2962, %v2932
      %v2964 = vadd.f32 %v2963, %v2933
      %v2965 = vadd.f32 %v2964, %v2934
      %v2966 = vadd.f32 %v2965, %v2935
      %v2967 = vadd.f32 %v2966, %v2936
      %v2968 = vadd.f32 %v2967, %v2937
      %v2969 = vadd.f32 %v2968, %v2938
      %v2970 = vadd.f32 %v2969, %v2939
      %v2971 = vadd.f32 %v2970, %v2940
      %v2972 = vadd.f32 %v2971, %v2941
      %v2973 = vadd.f32 %v2972, %v2942
      %v2974 = vadd.f32 %v2973, %v2943
      %v2975 = vadd.f32 %v2974, %v2944
      %v2976 = vadd.f32 %v2975, %v2945
      %v2977 = vadd.f32 %v2976, %v2946
      %v2978 = vadd.f32 %v2977, %v2947
      %v2979 = vadd.f32 %v2978, %v2948
      %v2980 = vadd.f32 %v2979, %v2949
      %v2981 = vadd.f32 %v2980, %v2950
      %v2982 = vadd.f32 %v2981, %v2951
      %v2983 = vadd.f32 %v2982, %v2952
      %v2984 = vadd.f32 %v2983, %v2953
      %v2985 = vadd.f32 %v2984, %v2954
      %v2986 = vadd.f32 %v2985, %v2955
      %v2987 = vrot.slane %v2986, 4
      %v2988 = vadd.f32 %v2986, %v2987
      %v2989 = vrot.slane %v2988, 2
      %v2990 = vadd.f32 %v2988, %v2989
      %v2991 = vrot.slane %v2990, 1
      %v2992 = vadd.f32 %v2990, %v2991
      %v2993 = vsel %vm2687, %v2923, %v2992
      %2994 = vst [vmem:[%s286] sm:$0x3] %v2993
      %s2995 = smul.u32 32, %s18
      %p2996 = scmp.lt.s32.totalorder %s2995, 63
      %s2997 = scalar_select %p2996, %s2995, 63
      %s2998 = smul.addr %s2997, 8
      %s2999 = scalar_lea.vmem %s3, %s2998
      %p3000 = scmp.lt.s32.totalorder %s18, 1
      %s3001 = scalar_select %p3000, %s18, 1
      %s3002 = smul.addr %s3001, 2
      %s3003 = scalar_lea.vmem %s4, %s3002
      %s3004 = smul.u32 32, %s18
      %p3005 = scmp.lt.s32.totalorder %s3004, 63
      %s3006 = scalar_select %p3005, %s3004, 63
      %s3007 = smul.addr %s3006, 8
      %s3008 = scalar_lea.vmem %s5, %s3007
      %p3009 = scmp.lt.s32.totalorder %s18, 1
      %s3010 = scalar_select %p3009, %s18, 1
      %s3011 = smul.addr %s3010, 2
      %s3012 = scalar_lea.vmem %s6, %s3011
      // Predicated region
      $region33: #{_lambda_.6} parent=31 // pred_check
        %p3013 = pneg %p104
      $region34: #{_lambda_.6} parent=31 // pred_check_branch
        %3015 = sbr.rel (%p3013) target = $region36
      $region35: #{_lambda_.6} parent=31 // pred_region
        %s3016 = smul.u32 32, %s18
      $region36: #{_lambda_.6} parent=31 // pred_fallthru
        _
      // Predicated region
      $region37: #{_lambda_.6} parent=31 // pred_check
        %p3017 = pneg %p130
      $region38: #{_lambda_.6} parent=31 // pred_check_branch
        %3019 = sbr.rel (%p3017) target = $region40
      $region39: #{_lambda_.6} parent=31 // pred_region
        _
      $region40: #{_lambda_.6} parent=31 // pred_fallthru
        _
      // Predicated region
      $region41: #{_lambda_.6} parent=31 // pred_check
        %p3020 = pneg %p156
      $region42: #{_lambda_.6} parent=31 // pred_check_branch
        %3022 = sbr.rel (%p3020) target = $region44
      $region43: #{_lambda_.6} parent=31 // pred_region
        %s3023 = smul.u32 32, %s18
      $region44: #{_lambda_.6} parent=31 // pred_fallthru
        _
      // Predicated region
      $region45: #{_lambda_.6} parent=31 // pred_check
        %p3024 = pneg %p182
      $region46: #{_lambda_.6} parent=31 // pred_check_branch
        %3026 = sbr.rel (%p3024) target = $region48
      $region47: #{_lambda_.6} parent=31 // pred_region
        _
      $region48: #{_lambda_.6} parent=31 // pred_fallthru
        _
    $region32: #{_lambda_.6} parent=5 // pred_fallthru
      _
    %p3027 = scmp.le.s32.totalorder 2, %s13
    // Predicated region
    $region49: #{_lambda_.6} parent=5 // pred_check
      %p3028 = pneg %p3027
    $region50: #{_lambda_.6} parent=5 // pred_check_branch
      %3030 = sbr.rel (%p3028) target = $region52
    $region51: #{_lambda_.6} parent=5 // pred_region
      %s3031 = ssub.s32 %s13, 2
      // Predicated region
      $region53: #{_lambda_.6} parent=51 // pred_check
        %p3032 = pneg %p110
      $region54: #{_lambda_.6} parent=51 // pred_check_branch
        %3034 = sbr.rel (%p3032) target = $region56
      $region55: #{_lambda_.6} parent=51 // pred_region
        %s3035 = smul.u32 32, %s19
        %p3036 = scmp.lt.s32.totalorder %s3035, 63
        %s3037 = scalar_select %p3036, %s3035, 63
        %s3038 = smul.addr %s3037, 8
        %s3039 = scalar_lea.vmem %s3, %s3038
      $region56: #{_lambda_.6} parent=51 // pred_fallthru
        _
      // Predicated region
      $region57: #{_lambda_.6} parent=51 // pred_check
        %p3040 = pneg %p136
      $region58: #{_lambda_.6} parent=51 // pred_check_branch
        %3042 = sbr.rel (%p3040) target = $region60
      $region59: #{_lambda_.6} parent=51 // pred_region
        %p3043 = scmp.lt.s32.totalorder %s19, 1
        %s3044 = scalar_select %p3043, %s19, 1
        %s3045 = smul.addr %s3044, 2
        %s3046 = scalar_lea.vmem %s4, %s3045
      $region60: #{_lambda_.6} parent=51 // pred_fallthru
        _
      // Predicated region
      $region61: #{_lambda_.6} parent=51 // pred_check
        %p3047 = pneg %p162
      $region62: #{_lambda_.6} parent=51 // pred_check_branch
        %3049 = sbr.rel (%p3047) target = $region64
      $region63: #{_lambda_.6} parent=51 // pred_region
        %s3050 = smul.u32 32, %s19
        %p3051 = scmp.lt.s32.totalorder %s3050, 63
        %s3052 = scalar_select %p3051, %s3050, 63
        %s3053 = smul.addr %s3052, 8
        %s3054 = scalar_lea.vmem %s5, %s3053
      $region64: #{_lambda_.6} parent=51 // pred_fallthru
        _
      // Predicated region
      $region65: #{_lambda_.6} parent=51 // pred_check
        %p3055 = pneg %p188
      $region66: #{_lambda_.6} parent=51 // pred_check_branch
        %3057 = sbr.rel (%p3055) target = $region68
      $region67: #{_lambda_.6} parent=51 // pred_region
        %p3058 = scmp.lt.s32.totalorder %s19, 1
        %s3059 = scalar_select %p3058, %s19, 1
        %s3060 = smul.addr %s3059, 2
        %s3061 = scalar_lea.vmem %s6, %s3060
      $region68: #{_lambda_.6} parent=51 // pred_fallthru
        _
    $region52: #{_lambda_.6} parent=5 // pred_fallthru
      _
  $region6: #{_lambda_.6} parent=0 // loop_footer
    %s17 = sadd.s32 1, %s13
  $region7: #{_lambda_.6} parent=0 // loop_footer_branch
    %12 = sbr.rel target = $region3
  $region8: #{_lambda_.6} parent=0 // loop_exit
    _

// kernel: _lambda_.9
$region0: #{_lambda_.9}
  #allocation0 [shape = 'u32[]', space=smem, size = 0x4, offset = 0x4, fixed_abs, tag = 'smem constant byte address 0x4 - core index']
  #allocation1 [shape = 'u32[144,128]{1,0:T(1,128)}', space=vmem, size = 0x12000, scoped, tag = 'internal scratch']
  %s0 = inlined_call_operand.vmem [shape: f32[512,128], index: 0, kind: input, shape index: {}]
  %s1 = inlined_call_operand.vmem [shape: f32[2,128], index: 1, kind: input, shape index: {}]
  %s2 = inlined_call_operand.vmem [shape: f32[2,2,128], index: 2, kind: output, shape index: {}]
  %s3 = sld [smem:[#allocation0]]
  $region41: #{_lambda_.9} parent=0
    _
  %s5 = ssub.s32 1, %s3
  %s6 = scalar_select 0, %s5, %s3
  loop: start=0, step=1, limit=4
  $region2: #{_lambda_.9} parent=0 // loop_pre_header
    _
  $region3: #{_lambda_.9} parent=0 // loop_header
    %s8 = sphi 0, %s12
    %p9 = scmp.ge.s32.totalorder %s8, 4
    %s18 = sphi 0, %s20
    %s21 = sphi 0, %s18
    %s22 = sphi 0, %s21
    %s38 = sphi 0, %s22
    %s42 = sphi 0, %s42
    %s44 = sphi 0, %s42
    %s45 = sphi 0, %s44
    %s59 = sphi 0, %s45
    %s65 = sphi 0, %s67
    %s68 = sphi 0, %s65
    %s69 = sphi 0, %s68
    %s85 = sphi 0, %s69
  $region4: #{_lambda_.9} parent=0 // loop_header_branch
    %11 = sbr.rel (%p9) target = $region8
  $region5: #{_lambda_.9} parent=0 // loop_body
    %s13 = ssub.s32 %s8, 1
    %s14 = ssub.s32 %s8, 2
    %s15 = sadd.s32 %s8, 1
    %s16 = ssub.s32 %s8, %s15
    %p17 = scmp.eq.s32.totalorder %s16, 0
    %s19 = sadd.s32 %s18, 1
    %s20 = scalar_select %p17, %s18, %s19
    %p23 = pneg %p17
    %p24 = scmp.eq.s32.totalorder %s8, 1
    %p25 = por %p23, %p24
    %p26 = scmp.ne.s32.totalorder %s18, %s21
    %p27 = scmp.eq.s32.totalorder %s8, 0
    %p28 = por %p26, %p27
    %p29 = scmp.ne.s32.totalorder %s18, %s21
    %p30 = scmp.eq.s32.totalorder %s13, 1
    %p31 = por %p29, %p30
    %p32 = scmp.ne.s32.totalorder %s21, %s22
    %p33 = scmp.eq.s32.totalorder %s13, 0
    %p34 = por %p32, %p33
    %p35 = scmp.ne.s32.totalorder %s21, %s22
    %p36 = scmp.eq.s32.totalorder %s14, 1
    %p37 = por %p35, %p36
    %p39 = scmp.ne.s32.totalorder %s22, %s38
    %p40 = scmp.eq.s32.totalorder %s14, 0
    %p41 = por %p39, %p40
    %s43 = sadd.s32 %s42, 1
    %p46 = scmp.eq.s32.totalorder %s8, 1
    %p47 = scmp.ne.s32.totalorder %s42, %s44
    %p48 = scmp.eq.s32.totalorder %s8, 0
    %p49 = por %p47, %p48
    %p50 = scmp.ne.s32.totalorder %s42, %s44
    %p51 = scmp.eq.s32.totalorder %s13, 1
    %p52 = por %p50, %p51
    %p53 = scmp.ne.s32.totalorder %s44, %s45
    %p54 = scmp.eq.s32.totalorder %s13, 0
    %p55 = por %p53, %p54
    %p56 = scmp.ne.s32.totalorder %s44, %s45
    %p57 = scmp.eq.s32.totalorder %s14, 1
    %p58 = por %p56, %p57
    %p60 = scmp.ne.s32.totalorder %s45, %s59
    %p61 = scmp.eq.s32.totalorder %s14, 0
    %p62 = por %p60, %p61
    %s63 = ssub.s32 %s8, %s15
    %p64 = scmp.eq.s32.totalorder %s63, 0
    %s66 = sadd.s32 %s65, 1
    %s67 = scalar_select %p64, %s65, %s66
    %p70 = pneg %p64
    %p71 = scmp.eq.s32.totalorder %s8, 1
    %p72 = por %p70, %p71
    %p73 = scmp.ne.s32.totalorder %s65, %s68
    %p74 = scmp.eq.s32.totalorder %s8, 0
    %p75 = por %p73, %p74
    %p76 = scmp.ne.s32.totalorder %s65, %s68
    %p77 = scmp.eq.s32.totalorder %s13, 1
    %p78 = por %p76, %p77
    %p79 = scmp.ne.s32.totalorder %s68, %s69
    %p80 = scmp.eq.s32.totalorder %s13, 0
    %p81 = por %p79, %p80
    %p82 = scmp.ne.s32.totalorder %s68, %s69
    %p83 = scmp.eq.s32.totalorder %s14, 1
    %p84 = por %p82, %p83
    %p86 = scmp.ne.s32.totalorder %s69, %s85
    %p87 = scmp.eq.s32.totalorder %s14, 0
    %p88 = por %p86, %p87
    %p89 = scmp.le.s32.totalorder 1, %s8
    %p90 = scmp.lt.s32.totalorder %s8, 3
    %p91 = pnand %p89, %p90
    %p92 = pneg %p91
    // Predicated region
    $region9: #{_lambda_.9} parent=5 // pred_check
      _
    $region10: #{_lambda_.9} parent=5 // pred_check_branch
      %94 = sbr.rel (%p91) target = $region12
    $region11: #{_lambda_.9} parent=5 // pred_region
      %s95 = ssub.s32 %s8, 1
      // Predicated region
      $region13: #{_lambda_.9} parent=11 // pred_check
        %p96 = pneg %p55
      $region14: #{_lambda_.9} parent=11 // pred_check_branch
        %98 = sbr.rel (%p96) target = $region16
      $region15: #{_lambda_.9} parent=11 // pred_region
        _
      $region16: #{_lambda_.9} parent=11 // pred_fallthru
        _
    $region12: #{_lambda_.9} parent=5 // pred_fallthru
      _
    %p99 = scmp.lt.s32.totalorder %s8, 2
    // Predicated region
    $region17: #{_lambda_.9} parent=5 // pred_check
      %p100 = pneg %p99
    $region18: #{_lambda_.9} parent=5 // pred_check_branch
      %102 = sbr.rel (%p100) target = $region20
    $region19: #{_lambda_.9} parent=5 // pred_region
      // Predicated region
      $region21: #{_lambda_.9} parent=19 // pred_check
        %p103 = pneg %p28
      $region22: #{_lambda_.9} parent=19 // pred_check_branch
        %105 = sbr.rel (%p103) target = $region24
      $region23: #{_lambda_.9} parent=19 // pred_region
        %s106 = smul.u32 32, %s8
        %p107 = scmp.lt.s32.totalorder %s106, 63
        %s108 = scalar_select %p107, %s106, 63
        %s109 = smul.addr %s108, 8
        %s110 = scalar_lea.vmem %s0, %s109
        %s111 = smul.u32 32, %s8
      $region24: #{_lambda_.9} parent=19 // pred_fallthru
        _
    $region20: #{_lambda_.9} parent=5 // pred_fallthru
      _
    %p112 = scmp.le.s32.totalorder 1, %s8
    %p113 = scmp.lt.s32.totalorder %s8, 3
    %p114 = pnand %p112, %p113
    %p115 = pneg %p114
    // Predicated region
    $region25: #{_lambda_.9} parent=5 // pred_check
      _
    $region26: #{_lambda_.9} parent=5 // pred_check_branch
      %117 = sbr.rel (%p114) target = $region28
    $region27: #{_lambda_.9} parent=5 // pred_region
      %s118 = ssub.s32 %s8, 1
      %s119 = smul.u32 32, %s13
      %p120 = scmp.lt.s32.totalorder %s119, 63
      %s121 = scalar_select %p120, %s119, 63
      %s122 = smul.addr %s121, 8
      %s123 = scalar_lea.vmem %s0, %s122
      %p124 = pneg %p34
      %p125 = pneg %p31
      %p126 = pneg %p55
      %p127 = pneg %p52
      %p128 = pneg %p81
      %p129 = pneg %p78
      %p130 = scmp.lt.s32.totalorder %s13, 1
      %s131 = scalar_select %p130, %s13, 1
      %s132 = smul.addr %s131, 2
      %s133 = scalar_lea.vmem %s2, %s132
      %s134 = smul.u32 32, %s13
      %p135 = scmp.lt.s32.totalorder %s134, 63
      %s136 = scalar_select %p135, %s134, 63
      %s137 = smul.addr %s136, 8
      %s138 = scalar_lea.vmem %s0, %s137
      %s139 = smul.u32 32, %s13
      %p140 = scmp.lt.s32.totalorder %s13, 1
      %s141 = scalar_select %p140, %s13, 1
      %s142 = smul.addr %s141, 2
      %s143 = scalar_lea.vmem %s2, %s142
      %v144 = vld [vmem:[%s138] sm:$0xff]
      %v145 = vld [vmem:[%s138 + $0x8] sm:$0xff]
      %v146 = vld [vmem:[%s138 + $0x10] sm:$0xff]
      %v147 = vld [vmem:[%s138 + $0x18] sm:$0xff]
      %v148 = vld [vmem:[%s138 + $0x20] sm:$0xff]
      %v149 = vld [vmem:[%s138 + $0x28] sm:$0xff]
      %v150 = vld [vmem:[%s138 + $0x30] sm:$0xff]
      %v151 = vld [vmem:[%s138 + $0x38] sm:$0xff]
      %v152 = vld [vmem:[%s138 + $0x40] sm:$0xff]
      %v153 = vld [vmem:[%s138 + $0x48] sm:$0xff]
      %v154 = vld [vmem:[%s138 + $0x50] sm:$0xff]
      %v155 = vld [vmem:[%s138 + $0x58] sm:$0xff]
      %v156 = vld [vmem:[%s138 + $0x60] sm:$0xff]
      %v157 = vld [vmem:[%s138 + $0x68] sm:$0xff]
      %v158 = vld [vmem:[%s138 + $0x70] sm:$0xff]
      %v159 = vld [vmem:[%s138 + $0x78] sm:$0xff]
      %v160 = vld [vmem:[%s138 + $0x80] sm:$0xff]
      %v161 = vld [vmem:[%s138 + $0x88] sm:$0xff]
      %v162 = vld [vmem:[%s138 + $0x90] sm:$0xff]
      %v163 = vld [vmem:[%s138 + $0x98] sm:$0xff]
      %v164 = vld [vmem:[%s138 + $0xa0] sm:$0xff]
      %v165 = vld [vmem:[%s138 + $0xa8] sm:$0xff]
      %v166 = vld [vmem:[%s138 + $0xb0] sm:$0xff]
      %v167 = vld [vmem:[%s138 + $0xb8] sm:$0xff]
      %v168 = vld [vmem:[%s138 + $0xc0] sm:$0xff]
      %v169 = vld [vmem:[%s138 + $0xc8] sm:$0xff]
      %v170 = vld [vmem:[%s138 + $0xd0] sm:$0xff]
      %v171 = vld [vmem:[%s138 + $0xd8] sm:$0xff]
      %v172 = vld [vmem:[%s138 + $0xe0] sm:$0xff]
      %v173 = vld [vmem:[%s138 + $0xe8] sm:$0xff]
      %v174 = vld [vmem:[%s138 + $0xf0] sm:$0xff]
      %v175 = vld [vmem:[%s138 + $0xf8] sm:$0xff]
      %v176 = vld [vmem:[%s1] sm:$0x1]
      %v177 = vlaneseq
      %v178 = vshrl.u32 %v177, 7
      %v179 = vsub.s32 0, %v178
      %v180 = vrot.slane %v176, %v179
      %v181 = vmul.f32 %v144, %v180
      %v182 = vmul.f32 %v145, %v180
      %v183 = vmul.f32 %v146, %v180
      %v184 = vmul.f32 %v147, %v180
      %v185 = vmul.f32 %v148, %v180
      %v186 = vmul.f32 %v149, %v180
      %v187 = vmul.f32 %v150, %v180
      %v188 = vmul.f32 %v151, %v180
      %v189 = vmul.f32 %v152, %v180
      %v190 = vmul.f32 %v153, %v180
      %v191 = vmul.f32 %v154, %v180
      %v192 = vmul.f32 %v155, %v180
      %v193 = vmul.f32 %v156, %v180
      %v194 = vmul.f32 %v157, %v180
      %v195 = vmul.f32 %v158, %v180
      %v196 = vmul.f32 %v159, %v180
      %v197 = vmul.f32 %v160, %v180
      %v198 = vmul.f32 %v161, %v180
      %v199 = vmul.f32 %v162, %v180
      %v200 = vmul.f32 %v163, %v180
      %v201 = vmul.f32 %v164, %v180
      %v202 = vmul.f32 %v165, %v180
      %v203 = vmul.f32 %v166, %v180
      %v204 = vmul.f32 %v167, %v180
      %v205 = vmul.f32 %v168, %v180
      %v206 = vmul.f32 %v169, %v180
      %v207 = vmul.f32 %v170, %v180
      %v208 = vmul.f32 %v171, %v180
      %v209 = vmul.f32 %v172, %v180
      %v210 = vmul.f32 %v173, %v180
      %v211 = vmul.f32 %v174, %v180
      %v212 = vmul.f32 %v175, %v180
      %v213 = vld [vmem:[%s1 + $0x1] sm:$0x1]
      %v214 = vlaneseq
      %v215 = vshrl.u32 %v214, 7
      %v216 = vsub.s32 0, %v215
      %v217 = vrot.slane %v213, %v216
      %v218 = vadd.f32 %v181, %v217
      %v219 = vadd.f32 %v182, %v217
      %v220 = vadd.f32 %v183, %v217
      %v221 = vadd.f32 %v184, %v217
      %v222 = vadd.f32 %v185, %v217
      %v223 = vadd.f32 %v186, %v217
      %v224 = vadd.f32 %v187, %v217
      %v225 = vadd.f32 %v188, %v217
      %v226 = vadd.f32 %v189, %v217
      %v227 = vadd.f32 %v190, %v217
      %v228 = vadd.f32 %v191, %v217
      %v229 = vadd.f32 %v192, %v217
      %v230 = vadd.f32 %v193, %v217
      %v231 = vadd.f32 %v194, %v217
      %v232 = vadd.f32 %v195, %v217
      %v233 = vadd.f32 %v196, %v217
      %v234 = vadd.f32 %v197, %v217
      %v235 = vadd.f32 %v198, %v217
      %v236 = vadd.f32 %v199, %v217
      %v237 = vadd.f32 %v200, %v217
      %v238 = vadd.f32 %v201, %v217
      %v239 = vadd.f32 %v202, %v217
      %v240 = vadd.f32 %v203, %v217
      %v241 = vadd.f32 %v204, %v217
      %v242 = vadd.f32 %v205, %v217
      %v243 = vadd.f32 %v206, %v217
      %v244 = vadd.f32 %v207, %v217
      %v245 = vadd.f32 %v208, %v217
      %v246 = vadd.f32 %v209, %v217
      %v247 = vadd.f32 %v210, %v217
      %v248 = vadd.f32 %v211, %v217
      %v249 = vadd.f32 %v212, %v217
      %v250 = vmul.f32 %v218, 0.5
      %v251 = vmul.f32 %v219, 0.5
      %v252 = vmul.f32 %v220, 0.5
      %v253 = vmul.f32 %v221, 0.5
      %v254 = vmul.f32 %v222, 0.5
      %v255 = vmul.f32 %v223, 0.5
      %v256 = vmul.f32 %v224, 0.5
      %v257 = vmul.f32 %v225, 0.5
      %v258 = vmul.f32 %v226, 0.5
      %v259 = vmul.f32 %v227, 0.5
      %v260 = vmul.f32 %v228, 0.5
      %v261 = vmul.f32 %v229, 0.5
      %v262 = vmul.f32 %v230, 0.5
      %v263 = vmul.f32 %v231, 0.5
      %v264 = vmul.f32 %v232, 0.5
      %v265 = vmul.f32 %v233, 0.5
      %v266 = vmul.f32 %v234, 0.5
      %v267 = vmul.f32 %v235, 0.5
      %v268 = vmul.f32 %v236, 0.5
      %v269 = vmul.f32 %v237, 0.5
      %v270 = vmul.f32 %v238, 0.5
      %v271 = vmul.f32 %v239, 0.5
      %v272 = vmul.f32 %v240, 0.5
      %v273 = vmul.f32 %v241, 0.5
      %v274 = vmul.f32 %v242, 0.5
      %v275 = vmul.f32 %v243, 0.5
      %v276 = vmul.f32 %v244, 0.5
      %v277 = vmul.f32 %v245, 0.5
      %v278 = vmul.f32 %v246, 0.5
      %v279 = vmul.f32 %v247, 0.5
      %v280 = vmul.f32 %v248, 0.5
      %v281 = vmul.f32 %v249, 0.5
      %v282 = vmul.f32 %v218, 0.70710677
      %v283 = vmul.f32 %v219, 0.70710677
      %v284 = vmul.f32 %v220, 0.70710677
      %v285 = vmul.f32 %v221, 0.70710677
      %v286 = vmul.f32 %v222, 0.70710677
      %v287 = vmul.f32 %v223, 0.70710677
      %v288 = vmul.f32 %v224, 0.70710677
      %v289 = vmul.f32 %v225, 0.70710677
      %v290 = vmul.f32 %v226, 0.70710677
      %v291 = vmul.f32 %v227, 0.70710677
      %v292 = vmul.f32 %v228, 0.70710677
      %v293 = vmul.f32 %v229, 0.70710677
      %v294 = vmul.f32 %v230, 0.70710677
      %v295 = vmul.f32 %v231, 0.70710677
      %v296 = vmul.f32 %v232, 0.70710677
      %v297 = vmul.f32 %v233, 0.70710677
      %v298 = vmul.f32 %v234, 0.70710677
      %v299 = vmul.f32 %v235, 0.70710677
      %v300 = vmul.f32 %v236, 0.70710677
      %v301 = vmul.f32 %v237, 0.70710677
      %v302 = vmul.f32 %v238, 0.70710677
      %v303 = vmul.f32 %v239, 0.70710677
      %v304 = vmul.f32 %v240, 0.70710677
      %v305 = vmul.f32 %v241, 0.70710677
      %v306 = vmul.f32 %v242, 0.70710677
      %v307 = vmul.f32 %v243, 0.70710677
      %v308 = vmul.f32 %v244, 0.70710677
      %v309 = vmul.f32 %v245, 0.70710677
      %v310 = vmul.f32 %v246, 0.70710677
      %v311 = vmul.f32 %v247, 0.70710677
      %v312 = vmul.f32 %v248, 0.70710677
      %v313 = vmul.f32 %v249, 0.70710677
      %v314 = verf.f32.pop %v282
      %v315 = verf.f32.pop %v283
      %v316 = verf.f32.pop %v284
      %v317 = verf.f32.pop %v285
      %v318 = verf.f32.pop %v286
      %v319 = verf.f32.pop %v287
      %v320 = verf.f32.pop %v288
      %v321 = verf.f32.pop %v289
      %v322 = verf.f32.pop %v290
      %v323 = verf.f32.pop %v291
      %v324 = verf.f32.pop %v292
      %v325 = verf.f32.pop %v293
      %v326 = verf.f32.pop %v294
      %v327 = verf.f32.pop %v295
      %v328 = verf.f32.pop %v296
      %v329 = verf.f32.pop %v297
      %v330 = verf.f32.pop %v298
      %v331 = verf.f32.pop %v299
      %v332 = verf.f32.pop %v300
      %v333 = verf.f32.pop %v301
      %v334 = verf.f32.pop %v302
      %v335 = verf.f32.pop %v303
      %v336 = verf.f32.pop %v304
      %v337 = verf.f32.pop %v305
      %v338 = verf.f32.pop %v306
      %v339 = verf.f32.pop %v307
      %v340 = verf.f32.pop %v308
      %v341 = verf.f32.pop %v309
      %v342 = verf.f32.pop %v310
      %v343 = verf.f32.pop %v311
      %v344 = verf.f32.pop %v312
      %v345 = verf.f32.pop %v313
      %v346 = vadd.f32 %v314, 1.0
      %v347 = vadd.f32 %v315, 1.0
      %v348 = vadd.f32 %v316, 1.0
      %v349 = vadd.f32 %v317, 1.0
      %v350 = vadd.f32 %v318, 1.0
      %v351 = vadd.f32 %v319, 1.0
      %v352 = vadd.f32 %v320, 1.0
      %v353 = vadd.f32 %v321, 1.0
      %v354 = vadd.f32 %v322, 1.0
      %v355 = vadd.f32 %v323, 1.0
      %v356 = vadd.f32 %v324, 1.0
      %v357 = vadd.f32 %v325, 1.0
      %v358 = vadd.f32 %v326, 1.0
      %v359 = vadd.f32 %v327, 1.0
      %v360 = vadd.f32 %v328, 1.0
      %v361 = vadd.f32 %v329, 1.0
      %v362 = vadd.f32 %v330, 1.0
      %v363 = vadd.f32 %v331, 1.0
      %v364 = vadd.f32 %v332, 1.0
      %v365 = vadd.f32 %v333, 1.0
      %v366 = vadd.f32 %v334, 1.0
      %v367 = vadd.f32 %v335, 1.0
      %v368 = vadd.f32 %v336, 1.0
      %v369 = vadd.f32 %v337, 1.0
      %v370 = vadd.f32 %v338, 1.0
      %v371 = vadd.f32 %v339, 1.0
      %v372 = vadd.f32 %v340, 1.0
      %v373 = vadd.f32 %v341, 1.0
      %v374 = vadd.f32 %v342, 1.0
      %v375 = vadd.f32 %v343, 1.0
      %v376 = vadd.f32 %v344, 1.0
      %v377 = vadd.f32 %v345, 1.0
      %v378 = vmul.f32 %v250, %v346
      %v379 = vmul.f32 %v251, %v347
      %v380 = vmul.f32 %v252, %v348
      %v381 = vmul.f32 %v253, %v349
      %v382 = vmul.f32 %v254, %v350
      %v383 = vmul.f32 %v255, %v351
      %v384 = vmul.f32 %v256, %v352
      %v385 = vmul.f32 %v257, %v353
      %v386 = vmul.f32 %v258, %v354
      %v387 = vmul.f32 %v259, %v355
      %v388 = vmul.f32 %v260, %v356
      %v389 = vmul.f32 %v261, %v357
      %v390 = vmul.f32 %v262, %v358
      %v391 = vmul.f32 %v263, %v359
      %v392 = vmul.f32 %v264, %v360
      %v393 = vmul.f32 %v265, %v361
      %v394 = vmul.f32 %v266, %v362
      %v395 = vmul.f32 %v267, %v363
      %v396 = vmul.f32 %v268, %v364
      %v397 = vmul.f32 %v269, %v365
      %v398 = vmul.f32 %v270, %v366
      %v399 = vmul.f32 %v271, %v367
      %v400 = vmul.f32 %v272, %v368
      %v401 = vmul.f32 %v273, %v369
      %v402 = vmul.f32 %v274, %v370
      %v403 = vmul.f32 %v275, %v371
      %v404 = vmul.f32 %v276, %v372
      %v405 = vmul.f32 %v277, %v373
      %v406 = vmul.f32 %v278, %v374
      %v407 = vmul.f32 %v279, %v375
      %v408 = vmul.f32 %v280, %v376
      %v409 = vmul.f32 %v281, %v377
      %v410 = vadd.f32 %v378, %v379
      %v411 = vadd.f32 %v410, %v380
      %v412 = vadd.f32 %v411, %v381
      %v413 = vadd.f32 %v412, %v382
      %v414 = vadd.f32 %v413, %v383
      %v415 = vadd.f32 %v414, %v384
      %v416 = vadd.f32 %v415, %v385
      %v417 = vadd.f32 %v416, %v386
      %v418 = vadd.f32 %v417, %v387
      %v419 = vadd.f32 %v418, %v388
      %v420 = vadd.f32 %v419, %v389
      %v421 = vadd.f32 %v420, %v390
      %v422 = vadd.f32 %v421, %v391
      %v423 = vadd.f32 %v422, %v392
      %v424 = vadd.f32 %v423, %v393
      %v425 = vadd.f32 %v424, %v394
      %v426 = vadd.f32 %v425, %v395
      %v427 = vadd.f32 %v426, %v396
      %v428 = vadd.f32 %v427, %v397
      %v429 = vadd.f32 %v428, %v398
      %v430 = vadd.f32 %v429, %v399
      %v431 = vadd.f32 %v430, %v400
      %v432 = vadd.f32 %v431, %v401
      %v433 = vadd.f32 %v432, %v402
      %v434 = vadd.f32 %v433, %v403
      %v435 = vadd.f32 %v434, %v404
      %v436 = vadd.f32 %v435, %v405
      %v437 = vadd.f32 %v436, %v406
      %v438 = vadd.f32 %v437, %v407
      %v439 = vadd.f32 %v438, %v408
      %v440 = vadd.f32 %v439, %v409
      %v441 = vrot.slane %v440, 4
      %v442 = vadd.f32 %v440, %v441
      %v443 = vrot.slane %v442, 2
      %v444 = vadd.f32 %v442, %v443
      %v445 = vrot.slane %v444, 1
      %v446 = vadd.f32 %v444, %v445
      %v447 = vmul.f32 %v378, %v378
      %v448 = vmul.f32 %v379, %v379
      %v449 = vmul.f32 %v380, %v380
      %v450 = vmul.f32 %v381, %v381
      %v451 = vmul.f32 %v382, %v382
      %v452 = vmul.f32 %v383, %v383
      %v453 = vmul.f32 %v384, %v384
      %v454 = vmul.f32 %v385, %v385
      %v455 = vmul.f32 %v386, %v386
      %v456 = vmul.f32 %v387, %v387
      %v457 = vmul.f32 %v388, %v388
      %v458 = vmul.f32 %v389, %v389
      %v459 = vmul.f32 %v390, %v390
      %v460 = vmul.f32 %v391, %v391
      %v461 = vmul.f32 %v392, %v392
      %v462 = vmul.f32 %v393, %v393
      %v463 = vmul.f32 %v394, %v394
      %v464 = vmul.f32 %v395, %v395
      %v465 = vmul.f32 %v396, %v396
      %v466 = vmul.f32 %v397, %v397
      %v467 = vmul.f32 %v398, %v398
      %v468 = vmul.f32 %v399, %v399
      %v469 = vmul.f32 %v400, %v400
      %v470 = vmul.f32 %v401, %v401
      %v471 = vmul.f32 %v402, %v402
      %v472 = vmul.f32 %v403, %v403
      %v473 = vmul.f32 %v404, %v404
      %v474 = vmul.f32 %v405, %v405
      %v475 = vmul.f32 %v406, %v406
      %v476 = vmul.f32 %v407, %v407
      %v477 = vmul.f32 %v408, %v408
      %v478 = vmul.f32 %v409, %v409
      %v479 = vadd.f32 %v447, %v448
      %v480 = vadd.f32 %v479, %v449
      %v481 = vadd.f32 %v480, %v450
      %v482 = vadd.f32 %v481, %v451
      %v483 = vadd.f32 %v482, %v452
      %v484 = vadd.f32 %v483, %v453
      %v485 = vadd.f32 %v484, %v454
      %v486 = vadd.f32 %v485, %v455
      %v487 = vadd.f32 %v486, %v456
      %v488 = vadd.f32 %v487, %v457
      %v489 = vadd.f32 %v488, %v458
      %v490 = vadd.f32 %v489, %v459
      %v491 = vadd.f32 %v490, %v460
      %v492 = vadd.f32 %v491, %v461
      %v493 = vadd.f32 %v492, %v462
      %v494 = vadd.f32 %v493, %v463
      %v495 = vadd.f32 %v494, %v464
      %v496 = vadd.f32 %v495, %v465
      %v497 = vadd.f32 %v496, %v466
      %v498 = vadd.f32 %v497, %v467
      %v499 = vadd.f32 %v498, %v468
      %v500 = vadd.f32 %v499, %v469
      %v501 = vadd.f32 %v500, %v470
      %v502 = vadd.f32 %v501, %v471
      %v503 = vadd.f32 %v502, %v472
      %v504 = vadd.f32 %v503, %v473
      %v505 = vadd.f32 %v504, %v474
      %v506 = vadd.f32 %v505, %v475
      %v507 = vadd.f32 %v506, %v476
      %v508 = vadd.f32 %v507, %v477
      %v509 = vadd.f32 %v508, %v478
      %v510 = vrot.slane %v509, 4
      %v511 = vadd.f32 %v509, %v510
      %v512 = vrot.slane %v511, 2
      %v513 = vadd.f32 %v511, %v512
      %v514 = vrot.slane %v513, 1
      %v515 = vadd.f32 %v513, %v514
      %vm516 = vcmask 1040384
      %v517 = vsel %vm516, %v446, %v515
      %518 = vst [vmem:[%s143] sm:$0x3] %v517
      %p519 = scmp.lt.s32.totalorder %s13, 1
      %s520 = scalar_select %p519, %s13, 1
      %s521 = smul.addr %s520, 2
      %s522 = scalar_lea.vmem %s2, %s521
      // Predicated region
      $region29: #{_lambda_.9} parent=27 // pred_check
        %p523 = pneg %p78
      $region30: #{_lambda_.9} parent=27 // pred_check_branch
        %525 = sbr.rel (%p523) target = $region32
      $region31: #{_lambda_.9} parent=27 // pred_region
        _
      $region32: #{_lambda_.9} parent=27 // pred_fallthru
        _
    $region28: #{_lambda_.9} parent=5 // pred_fallthru
      _
    %p526 = scmp.le.s32.totalorder 2, %s8
    // Predicated region
    $region33: #{_lambda_.9} parent=5 // pred_check
      %p527 = pneg %p526
    $region34: #{_lambda_.9} parent=5 // pred_check_branch
      %529 = sbr.rel (%p527) target = $region36
    $region35: #{_lambda_.9} parent=5 // pred_region
      %s530 = ssub.s32 %s8, 2
      // Predicated region
      $region37: #{_lambda_.9} parent=35 // pred_check
        %p531 = pneg %p84
      $region38: #{_lambda_.9} parent=35 // pred_check_branch
        %533 = sbr.rel (%p531) target = $region40
      $region39: #{_lambda_.9} parent=35 // pred_region
        %p534 = scmp.lt.s32.totalorder %s14, 1
        %s535 = scalar_select %p534, %s14, 1
        %s536 = smul.addr %s535, 2
        %s537 = scalar_lea.vmem %s2, %s536
      $region40: #{_lambda_.9} parent=35 // pred_fallthru
        _
    $region36: #{_lambda_.9} parent=5 // pred_fallthru
      _
  $region6: #{_lambda_.9} parent=0 // loop_footer
    %s12 = sadd.s32 1, %s8
  $region7: #{_lambda_.9} parent=0 // loop_footer_branch
    %7 = sbr.rel target = $region3
  $region8: #{_lambda_.9} parent=0 // loop_exit
    _

// kernel: _lambda_.7
$region0: #{_lambda_.7}
  #allocation0 [shape = 'u32[]', space=smem, size = 0x4, offset = 0x4, fixed_abs, tag = 'smem constant byte address 0x4 - core index']
  #allocation1 [shape = 'u32[144,128]{1,0:T(1,128)}', space=vmem, size = 0x12000, scoped, tag = 'internal scratch']
  %s0 = inlined_call_operand.vmem [shape: f32[2,18,18,128], index: 0, kind: input, shape index: {}]
  %s1 = inlined_call_operand.vmem [shape: f32[2,128], index: 1, kind: input, shape index: {}]
  %s2 = inlined_call_operand.vmem [shape: bf16[9,128,128], index: 2, kind: input, shape index: {}]
  %s3 = inlined_call_operand.vmem [shape: f32[512,128], index: 3, kind: output, shape index: {0}]
  %s4 = inlined_call_operand.vmem [shape: f32[2,2,128], index: 4, kind: output, shape index: {1}]
  %s5 = inlined_call_operand.vmem [shape: f32[2,2,128], index: 5, kind: output, shape index: {2}]
  %6 = xla_tuple %s3, %s4, %s5
  %s7 = sld [smem:[#allocation0]]
  $region61: #{_lambda_.7} parent=0
    _
  %s9 = ssub.s32 1, %s7
  %s10 = scalar_select 0, %s9, %s7
  loop: start=0, step=1, limit=4
  $region2: #{_lambda_.7} parent=0 // loop_pre_header
    _
  $region3: #{_lambda_.7} parent=0 // loop_header
    %s12 = sphi 0, %s16
    %p13 = scmp.ge.s32.totalorder %s12, 4
    %s22 = sphi 0, %s24
    %s25 = sphi 0, %s22
    %s26 = sphi 0, %s25
    %s42 = sphi 0, %s26
    %s46 = sphi 0, %s46
    %s48 = sphi 0, %s46
    %s49 = sphi 0, %s48
    %s63 = sphi 0, %s49
    %s67 = sphi 0, %s67
    %s69 = sphi 0, %s67
    %s70 = sphi 0, %s69
    %s84 = sphi 0, %s70
    %s90 = sphi 0, %s92
    %s93 = sphi 0, %s90
    %s94 = sphi 0, %s93
    %s110 = sphi 0, %s94
    %s116 = sphi 0, %s118
    %s119 = sphi 0, %s116
    %s120 = sphi 0, %s119
    %s136 = sphi 0, %s120
    %s142 = sphi 0, %s144
    %s145 = sphi 0, %s142
    %s146 = sphi 0, %s145
    %s162 = sphi 0, %s146
  $region4: #{_lambda_.7} parent=0 // loop_header_branch
    %15 = sbr.rel (%p13) target = $region8
  $region5: #{_lambda_.7} parent=0 // loop_body
    %s17 = ssub.s32 %s12, 1
    %s18 = ssub.s32 %s12, 2
    %s19 = sadd.s32 %s12, 1
    %s20 = ssub.s32 %s12, %s19
    %p21 = scmp.eq.s32.totalorder %s20, 0
    %s23 = sadd.s32 %s22, 1
    %s24 = scalar_select %p21, %s22, %s23
    %p27 = pneg %p21
    %p28 = scmp.eq.s32.totalorder %s12, 1
    %p29 = por %p27, %p28
    %p30 = scmp.ne.s32.totalorder %s22, %s25
    %p31 = scmp.eq.s32.totalorder %s12, 0
    %p32 = por %p30, %p31
    %p33 = scmp.ne.s32.totalorder %s22, %s25
    %p34 = scmp.eq.s32.totalorder %s17, 1
    %p35 = por %p33, %p34
    %p36 = scmp.ne.s32.totalorder %s25, %s26
    %p37 = scmp.eq.s32.totalorder %s17, 0
    %p38 = por %p36, %p37
    %p39 = scmp.ne.s32.totalorder %s25, %s26
    %p40 = scmp.eq.s32.totalorder %s18, 1
    %p41 = por %p39, %p40
    %p43 = scmp.ne.s32.totalorder %s26, %s42
    %p44 = scmp.eq.s32.totalorder %s18, 0
    %p45 = por %p43, %p44
    %s47 = sadd.s32 %s46, 1
    %p50 = scmp.eq.s32.totalorder %s12, 1
    %p51 = scmp.ne.s32.totalorder %s46, %s48
    %p52 = scmp.eq.s32.totalorder %s12, 0
    %p53 = por %p51, %p52
    %p54 = scmp.ne.s32.totalorder %s46, %s48
    %p55 = scmp.eq.s32.totalorder %s17, 1
    %p56 = por %p54, %p55
    %p57 = scmp.ne.s32.totalorder %s48, %s49
    %p58 = scmp.eq.s32.totalorder %s17, 0
    %p59 = por %p57, %p58
    %p60 = scmp.ne.s32.totalorder %s48, %s49
    %p61 = scmp.eq.s32.totalorder %s18, 1
    %p62 = por %p60, %p61
    %p64 = scmp.ne.s32.totalorder %s49, %s63
    %p65 = scmp.eq.s32.totalorder %s18, 0
    %p66 = por %p64, %p65
    %s68 = sadd.s32 %s67, 1
    %p71 = scmp.eq.s32.totalorder %s12, 1
    %p72 = scmp.ne.s32.totalorder %s67, %s69
    %p73 = scmp.eq.s32.totalorder %s12, 0
    %p74 = por %p72, %p73
    %p75 = scmp.ne.s32.totalorder %s67, %s69
    %p76 = scmp.eq.s32.totalorder %s17, 1
    %p77 = por %p75, %p76
    %p78 = scmp.ne.s32.totalorder %s69, %s70
    %p79 = scmp.eq.s32.totalorder %s17, 0
    %p80 = por %p78, %p79
    %p81 = scmp.ne.s32.totalorder %s69, %s70
    %p82 = scmp.eq.s32.totalorder %s18, 1
    %p83 = por %p81, %p82
    %p85 = scmp.ne.s32.totalorder %s70, %s84
    %p86 = scmp.eq.s32.totalorder %s18, 0
    %p87 = por %p85, %p86
    %s88 = ssub.s32 %s12, %s19
    %p89 = scmp.eq.s32.totalorder %s88, 0
    %s91 = sadd.s32 %s90, 1
    %s92 = scalar_select %p89, %s90, %s91
    %p95 = pneg %p89
    %p96 = scmp.eq.s32.totalorder %s12, 1
    %p97 = por %p95, %p96
    %p98 = scmp.ne.s32.totalorder %s90, %s93
    %p99 = scmp.eq.s32.totalorder %s12, 0
    %p100 = por %p98, %p99
    %p101 = scmp.ne.s32.totalorder %s90, %s93
    %p102 = scmp.eq.s32.totalorder %s17, 1
    %p103 = por %p101, %p102
    %p104 = scmp.ne.s32.totalorder %s93, %s94
    %p105 = scmp.eq.s32.totalorder %s17, 0
    %p106 = por %p104, %p105
    %p107 = scmp.ne.s32.totalorder %s93, %s94
    %p108 = scmp.eq.s32.totalorder %s18, 1
    %p109 = por %p107, %p108
    %p111 = scmp.ne.s32.totalorder %s94, %s110
    %p112 = scmp.eq.s32.totalorder %s18, 0
    %p113 = por %p111, %p112
    %s114 = ssub.s32 %s12, %s19
    %p115 = scmp.eq.s32.totalorder %s114, 0
    %s117 = sadd.s32 %s116, 1
    %s118 = scalar_select %p115, %s116, %s117
    %p121 = pneg %p115
    %p122 = scmp.eq.s32.totalorder %s12, 1
    %p123 = por %p121, %p122
    %p124 = scmp.ne.s32.totalorder %s116, %s119
    %p125 = scmp.eq.s32.totalorder %s12, 0
    %p126 = por %p124, %p125
    %p127 = scmp.ne.s32.totalorder %s116, %s119
    %p128 = scmp.eq.s32.totalorder %s17, 1
    %p129 = por %p127, %p128
    %p130 = scmp.ne.s32.totalorder %s119, %s120
    %p131 = scmp.eq.s32.totalorder %s17, 0
    %p132 = por %p130, %p131
    %p133 = scmp.ne.s32.totalorder %s119, %s120
    %p134 = scmp.eq.s32.totalorder %s18, 1
    %p135 = por %p133, %p134
    %p137 = scmp.ne.s32.totalorder %s120, %s136
    %p138 = scmp.eq.s32.totalorder %s18, 0
    %p139 = por %p137, %p138
    %s140 = ssub.s32 %s12, %s19
    %p141 = scmp.eq.s32.totalorder %s140, 0
    %s143 = sadd.s32 %s142, 1
    %s144 = scalar_select %p141, %s142, %s143
    %p147 = pneg %p141
    %p148 = scmp.eq.s32.totalorder %s12, 1
    %p149 = por %p147, %p148
    %p150 = scmp.ne.s32.totalorder %s142, %s145
    %p151 = scmp.eq.s32.totalorder %s12, 0
    %p152 = por %p150, %p151
    %p153 = scmp.ne.s32.totalorder %s142, %s145
    %p154 = scmp.eq.s32.totalorder %s17, 1
    %p155 = por %p153, %p154
    %p156 = scmp.ne.s32.totalorder %s145, %s146
    %p157 = scmp.eq.s32.totalorder %s17, 0
    %p158 = por %p156, %p157
    %p159 = scmp.ne.s32.totalorder %s145, %s146
    %p160 = scmp.eq.s32.totalorder %s18, 1
    %p161 = por %p159, %p160
    %p163 = scmp.ne.s32.totalorder %s146, %s162
    %p164 = scmp.eq.s32.totalorder %s18, 0
    %p165 = por %p163, %p164
    %p166 = scmp.le.s32.totalorder 1, %s12
    %p167 = scmp.lt.s32.totalorder %s12, 3
    %p168 = pnand %p166, %p167
    %p169 = pneg %p168
    // Predicated region
    $region9: #{_lambda_.7} parent=5 // pred_check
      _
    $region10: #{_lambda_.7} parent=5 // pred_check_branch
      %171 = sbr.rel (%p168) target = $region12
    $region11: #{_lambda_.7} parent=5 // pred_region
      %s172 = ssub.s32 %s12, 1
      // Predicated region
      $region13: #{_lambda_.7} parent=11 // pred_check
        %p173 = pneg %p59
      $region14: #{_lambda_.7} parent=11 // pred_check_branch
        %175 = sbr.rel (%p173) target = $region16
      $region15: #{_lambda_.7} parent=11 // pred_region
        _
      $region16: #{_lambda_.7} parent=11 // pred_fallthru
        _
      // Predicated region
      $region17: #{_lambda_.7} parent=11 // pred_check
        %p176 = pneg %p80
      $region18: #{_lambda_.7} parent=11 // pred_check_branch
        %178 = sbr.rel (%p176) target = $region20
      $region19: #{_lambda_.7} parent=11 // pred_region
        _
      $region20: #{_lambda_.7} parent=11 // pred_fallthru
        _
    $region12: #{_lambda_.7} parent=5 // pred_fallthru
      _
    %p179 = scmp.lt.s32.totalorder %s12, 2
    // Predicated region
    $region21: #{_lambda_.7} parent=5 // pred_check
      %p180 = pneg %p179
    $region22: #{_lambda_.7} parent=5 // pred_check_branch
      %182 = sbr.rel (%p180) target = $region24
    $region23: #{_lambda_.7} parent=5 // pred_region
      // Predicated region
      $region25: #{_lambda_.7} parent=23 // pred_check
        %p183 = pneg %p32
      $region26: #{_lambda_.7} parent=23 // pred_check_branch
        %185 = sbr.rel (%p183) target = $region28
      $region27: #{_lambda_.7} parent=23 // pred_region
        %p186 = scmp.lt.s32.totalorder %s12, 1
        %s187 = scalar_select %p186, %s12, 1
        %s188 = smul.addr %s187, 54
        %s189 = smul.addr %s188, 8
        %s190 = scalar_lea.vmem %s0, %s189
      $region28: #{_lambda_.7} parent=23 // pred_fallthru
        _
    $region24: #{_lambda_.7} parent=5 // pred_fallthru
      _
    %p191 = scmp.le.s32.totalorder 1, %s12
    %p192 = scmp.lt.s32.totalorder %s12, 3
    %p193 = pnand %p191, %p192
    %p194 = pneg %p193
    // Predicated region
    $region29: #{_lambda_.7} parent=5 // pred_check
      _
    $region30: #{_lambda_.7} parent=5 // pred_check_branch
      %196 = sbr.rel (%p193) target = $region32
    $region31: #{_lambda_.7} parent=5 // pred_region
      %s197 = ssub.s32 %s12, 1
      %p198 = scmp.lt.s32.totalorder %s17, 1
      %s199 = scalar_select %p198, %s17, 1
      %s200 = smul.addr %s199, 54
      %s201 = smul.addr %s200, 8
      %s202 = scalar_lea.vmem %s0, %s201
      %p203 = pneg %p38
      %p204 = pneg %p35
      %p205 = pneg %p59
      %p206 = pneg %p56
      %p207 = pneg %p80
      %p208 = pneg %p77
      %p209 = pneg %p106
      %p210 = pneg %p103
      %s211 = smul.u32 32, %s17
      %p212 = scmp.lt.s32.totalorder %s211, 63
      %s213 = scalar_select %p212, %s211, 63
      %s214 = smul.addr %s213, 8
      %s215 = scalar_lea.vmem %s3, %s214
      %p216 = pneg %p132
      %p217 = pneg %p129
      %p218 = scmp.lt.s32.totalorder %s17, 1
      %s219 = scalar_select %p218, %s17, 1
      %s220 = smul.addr %s219, 2
      %s221 = scalar_lea.vmem %s4, %s220
      %p222 = pneg %p158
      %p223 = pneg %p155
      %p224 = scmp.lt.s32.totalorder %s17, 1
      %s225 = scalar_select %p224, %s17, 1
      %s226 = smul.addr %s225, 2
      %s227 = scalar_lea.vmem %s5, %s226
      %p228 = scmp.lt.s32.totalorder %s17, 1
      %s229 = scalar_select %p228, %s17, 1
      %s230 = smul.addr %s229, 54
      %s231 = smul.addr %s230, 8
      %s232 = scalar_lea.vmem %s0, %s231
      %s233 = smul.u32 32, %s17
      %p234 = scmp.lt.s32.totalorder %s233, 63
      %s235 = scalar_select %p234, %s233, 63
      %s236 = smul.addr %s235, 8
      %s237 = scalar_lea.vmem %s3, %s236
      %s238 = smul.u32 32, %s17
      %p239 = scmp.lt.s32.totalorder %s17, 1
      %s240 = scalar_select %p239, %s17, 1
      %s241 = smul.addr %s240, 2
      %s242 = scalar_lea.vmem %s4, %s241
      %p243 = scmp.lt.s32.totalorder %s17, 1
      %s244 = scalar_select %p243, %s17, 1
      %s245 = smul.addr %s244, 2
      %s246 = scalar_lea.vmem %s5, %s245
      %v248 = vld [vmem:[%s232] sm:$0xff]
      %v249 = vld [vmem:[%s232 + $0x8] sm:$0xff]
      %v250 = vld [vmem:[%s232 + $0x10] sm:$0x3]
      %v251 = vld [vmem:[%s232 + $0x18] sm:$0xff]
      %v252 = vld [vmem:[%s232 + $0x20] sm:$0xff]
      %v253 = vld [vmem:[%s232 + $0x28] sm:$0x3]
      %v254 = vld [vmem:[%s232 + $0x30] sm:$0xff]
      %v255 = vld [vmem:[%s232 + $0x38] sm:$0xff]
      %v256 = vld [vmem:[%s232 + $0x40] sm:$0x3]
      %v257 = vld [vmem:[%s232 + $0x48] sm:$0xff]
      %v258 = vld [vmem:[%s232 + $0x50] sm:$0xff]
      %v259 = vld [vmem:[%s232 + $0x58] sm:$0x3]
      %v260 = vld [vmem:[%s232 + $0x60] sm:$0xff]
      %v261 = vld [vmem:[%s232 + $0x68] sm:$0xff]
      %v262 = vld [vmem:[%s232 + $0x70] sm:$0x3]
      %v263 = vld [vmem:[%s232 + $0x78] sm:$0xff]
      %v264 = vld [vmem:[%s232 + $0x80] sm:$0xff]
      %v265 = vld [vmem:[%s232 + $0x88] sm:$0x3]
      %v266 = vld [vmem:[%s232 + $0x90] sm:$0xff]
      %v267 = vld [vmem:[%s232 + $0x98] sm:$0xff]
      %v268 = vld [vmem:[%s232 + $0xa0] sm:$0x3]
      %v269 = vld [vmem:[%s232 + $0xa8] sm:$0xff]
      %v270 = vld [vmem:[%s232 + $0xb0] sm:$0xff]
      %v271 = vld [vmem:[%s232 + $0xb8] sm:$0x3]
      %v272 = vld [vmem:[%s232 + $0xc0] sm:$0xff]
      %v273 = vld [vmem:[%s232 + $0xc8] sm:$0xff]
      %v274 = vld [vmem:[%s232 + $0xd0] sm:$0x3]
      %v275 = vld [vmem:[%s232 + $0xd8] sm:$0xff]
      %v276 = vld [vmem:[%s232 + $0xe0] sm:$0xff]
      %v277 = vld [vmem:[%s232 + $0xe8] sm:$0x3]
      %v278 = vld [vmem:[%s232 + $0xf0] sm:$0xff]
      %v279 = vld [vmem:[%s232 + $0xf8] sm:$0xff]
      %v280 = vld [vmem:[%s232 + $0x100] sm:$0x3]
      %v281 = vld [vmem:[%s232 + $0x108] sm:$0xff]
      %v282 = vld [vmem:[%s232 + $0x110] sm:$0xff]
      %v283 = vld [vmem:[%s232 + $0x118] sm:$0x3]
      %v284 = vld [vmem:[%s232 + $0x120] sm:$0xff]
      %v285 = vld [vmem:[%s232 + $0x128] sm:$0xff]
      %v286 = vld [vmem:[%s232 + $0x130] sm:$0x3]
      %v287 = vld [vmem:[%s232 + $0x138] sm:$0xff]
      %v288 = vld [vmem:[%s232 + $0x140] sm:$0xff]
      %v289 = vld [vmem:[%s232 + $0x148] sm:$0x3]
      %v290 = vld [vmem:[%s232 + $0x150] sm:$0xff]
      %v291 = vld [vmem:[%s232 + $0x158] sm:$0xff]
      %v292 = vld [vmem:[%s232 + $0x160] sm:$0x3]
      %v293 = vld [vmem:[%s232 + $0x168] sm:$0xff]
      %v294 = vld [vmem:[%s232 + $0x170] sm:$0xff]
      %v295 = vld [vmem:[%s232 + $0x178] sm:$0x3]
      %v296 = vld [vmem:[%s232 + $0x180] sm:$0xff]
      %v297 = vld [vmem:[%s232 + $0x188] sm:$0xff]
      %v298 = vld [vmem:[%s232 + $0x190] sm:$0x3]
      %v299 = vld [vmem:[%s232 + $0x198] sm:$0xff]
      %v300 = vld [vmem:[%s232 + $0x1a0] sm:$0xff]
      %v301 = vld [vmem:[%s232 + $0x1a8] sm:$0x3]
      %v302 = vld [vmem:[%s1] sm:$0x1]
      %v303 = vlaneseq
      %v304 = vshrl.u32 %v303, 7
      %v305 = vsub.s32 0, %v304
      %v306 = vrot.slane %v302, %v305
      %v307 = vmul.f32 %v248, %v306
      %v308 = vmul.f32 %v249, %v306
      %v309 = vmul.f32 %v250, %v306
      %v310 = vmul.f32 %v251, %v306
      %v311 = vmul.f32 %v252, %v306
      %v312 = vmul.f32 %v253, %v306
      %v313 = vmul.f32 %v254, %v306
      %v314 = vmul.f32 %v255, %v306
      %v315 = vmul.f32 %v256, %v306
      %v316 = vmul.f32 %v257, %v306
      %v317 = vmul.f32 %v258, %v306
      %v318 = vmul.f32 %v259, %v306
      %v319 = vmul.f32 %v260, %v306
      %v320 = vmul.f32 %v261, %v306
      %v321 = vmul.f32 %v262, %v306
      %v322 = vmul.f32 %v263, %v306
      %v323 = vmul.f32 %v264, %v306
      %v324 = vmul.f32 %v265, %v306
      %v325 = vmul.f32 %v266, %v306
      %v326 = vmul.f32 %v267, %v306
      %v327 = vmul.f32 %v268, %v306
      %v328 = vmul.f32 %v269, %v306
      %v329 = vmul.f32 %v270, %v306
      %v330 = vmul.f32 %v271, %v306
      %v331 = vmul.f32 %v272, %v306
      %v332 = vmul.f32 %v273, %v306
      %v333 = vmul.f32 %v274, %v306
      %v334 = vmul.f32 %v275, %v306
      %v335 = vmul.f32 %v276, %v306
      %v336 = vmul.f32 %v277, %v306
      %v337 = vmul.f32 %v278, %v306
      %v338 = vmul.f32 %v279, %v306
      %v339 = vmul.f32 %v280, %v306
      %v340 = vmul.f32 %v281, %v306
      %v341 = vmul.f32 %v282, %v306
      %v342 = vmul.f32 %v283, %v306
      %v343 = vmul.f32 %v284, %v306
      %v344 = vmul.f32 %v285, %v306
      %v345 = vmul.f32 %v286, %v306
      %v346 = vmul.f32 %v287, %v306
      %v347 = vmul.f32 %v288, %v306
      %v348 = vmul.f32 %v289, %v306
      %v349 = vmul.f32 %v290, %v306
      %v350 = vmul.f32 %v291, %v306
      %v351 = vmul.f32 %v292, %v306
      %v352 = vmul.f32 %v293, %v306
      %v353 = vmul.f32 %v294, %v306
      %v354 = vmul.f32 %v295, %v306
      %v355 = vmul.f32 %v296, %v306
      %v356 = vmul.f32 %v297, %v306
      %v357 = vmul.f32 %v298, %v306
      %v358 = vmul.f32 %v299, %v306
      %v359 = vmul.f32 %v300, %v306
      %v360 = vmul.f32 %v301, %v306
      %v361 = vld [vmem:[%s1 + $0x1] sm:$0x1]
      %v362 = vlaneseq
      %v363 = vshrl.u32 %v362, 7
      %v364 = vsub.s32 0, %v363
      %v365 = vrot.slane %v361, %v364
      %v366 = vadd.f32 %v307, %v365
      %v367 = vadd.f32 %v308, %v365
      %v368 = vadd.f32 %v309, %v365
      %v369 = vadd.f32 %v310, %v365
      %v370 = vadd.f32 %v311, %v365
      %v371 = vadd.f32 %v312, %v365
      %v372 = vadd.f32 %v313, %v365
      %v373 = vadd.f32 %v314, %v365
      %v374 = vadd.f32 %v315, %v365
      %v375 = vadd.f32 %v316, %v365
      %v376 = vadd.f32 %v317, %v365
      %v377 = vadd.f32 %v318, %v365
      %v378 = vadd.f32 %v319, %v365
      %v379 = vadd.f32 %v320, %v365
      %v380 = vadd.f32 %v321, %v365
      %v381 = vadd.f32 %v322, %v365
      %v382 = vadd.f32 %v323, %v365
      %v383 = vadd.f32 %v324, %v365
      %v384 = vadd.f32 %v325, %v365
      %v385 = vadd.f32 %v326, %v365
      %v386 = vadd.f32 %v327, %v365
      %v387 = vadd.f32 %v328, %v365
      %v388 = vadd.f32 %v329, %v365
      %v389 = vadd.f32 %v330, %v365
      %v390 = vadd.f32 %v331, %v365
      %v391 = vadd.f32 %v332, %v365
      %v392 = vadd.f32 %v333, %v365
      %v393 = vadd.f32 %v334, %v365
      %v394 = vadd.f32 %v335, %v365
      %v395 = vadd.f32 %v336, %v365
      %v396 = vadd.f32 %v337, %v365
      %v397 = vadd.f32 %v338, %v365
      %v398 = vadd.f32 %v339, %v365
      %v399 = vadd.f32 %v340, %v365
      %v400 = vadd.f32 %v341, %v365
      %v401 = vadd.f32 %v342, %v365
      %v402 = vadd.f32 %v343, %v365
      %v403 = vadd.f32 %v344, %v365
      %v404 = vadd.f32 %v345, %v365
      %v405 = vadd.f32 %v346, %v365
      %v406 = vadd.f32 %v347, %v365
      %v407 = vadd.f32 %v348, %v365
      %v408 = vadd.f32 %v349, %v365
      %v409 = vadd.f32 %v350, %v365
      %v410 = vadd.f32 %v351, %v365
      %v411 = vadd.f32 %v352, %v365
      %v412 = vadd.f32 %v353, %v365
      %v413 = vadd.f32 %v354, %v365
      %v414 = vadd.f32 %v355, %v365
      %v415 = vadd.f32 %v356, %v365
      %v416 = vadd.f32 %v357, %v365
      %v417 = vadd.f32 %v358, %v365
      %v418 = vadd.f32 %v359, %v365
      %v419 = vadd.f32 %v360, %v365
      %v420 = vmul.f32 %v366, 0.5
      %v421 = vmul.f32 %v367, 0.5
      %v422 = vmul.f32 %v368, 0.5
      %v423 = vmul.f32 %v369, 0.5
      %v424 = vmul.f32 %v370, 0.5
      %v425 = vmul.f32 %v371, 0.5
      %v426 = vmul.f32 %v372, 0.5
      %v427 = vmul.f32 %v373, 0.5
      %v428 = vmul.f32 %v374, 0.5
      %v429 = vmul.f32 %v375, 0.5
      %v430 = vmul.f32 %v376, 0.5
      %v431 = vmul.f32 %v377, 0.5
      %v432 = vmul.f32 %v378, 0.5
      %v433 = vmul.f32 %v379, 0.5
      %v434 = vmul.f32 %v380, 0.5
      %v435 = vmul.f32 %v381, 0.5
      %v436 = vmul.f32 %v382, 0.5
      %v437 = vmul.f32 %v383, 0.5
      %v438 = vmul.f32 %v384, 0.5
      %v439 = vmul.f32 %v385, 0.5
      %v440 = vmul.f32 %v386, 0.5
      %v441 = vmul.f32 %v387, 0.5
      %v442 = vmul.f32 %v388, 0.5
      %v443 = vmul.f32 %v389, 0.5
      %v444 = vmul.f32 %v390, 0.5
      %v445 = vmul.f32 %v391, 0.5
      %v446 = vmul.f32 %v392, 0.5
      %v447 = vmul.f32 %v393, 0.5
      %v448 = vmul.f32 %v394, 0.5
      %v449 = vmul.f32 %v395, 0.5
      %v450 = vmul.f32 %v396, 0.5
      %v451 = vmul.f32 %v397, 0.5
      %v452 = vmul.f32 %v398, 0.5
      %v453 = vmul.f32 %v399, 0.5
      %v454 = vmul.f32 %v400, 0.5
      %v455 = vmul.f32 %v401, 0.5
      %v456 = vmul.f32 %v402, 0.5
      %v457 = vmul.f32 %v403, 0.5
      %v458 = vmul.f32 %v404, 0.5
      %v459 = vmul.f32 %v405, 0.5
      %v460 = vmul.f32 %v406, 0.5
      %v461 = vmul.f32 %v407, 0.5
      %v462 = vmul.f32 %v408, 0.5
      %v463 = vmul.f32 %v409, 0.5
      %v464 = vmul.f32 %v410, 0.5
      %v465 = vmul.f32 %v411, 0.5
      %v466 = vmul.f32 %v412, 0.5
      %v467 = vmul.f32 %v413, 0.5
      %v468 = vmul.f32 %v414, 0.5
      %v469 = vmul.f32 %v415, 0.5
      %v470 = vmul.f32 %v416, 0.5
      %v471 = vmul.f32 %v417, 0.5
      %v472 = vmul.f32 %v418, 0.5
      %v473 = vmul.f32 %v419, 0.5
      %v474 = vmul.f32 %v366, 0.70710677
      %v475 = vmul.f32 %v367, 0.70710677
      %v476 = vmul.f32 %v368, 0.70710677
      %v477 = vmul.f32 %v369, 0.70710677
      %v478 = vmul.f32 %v370, 0.70710677
      %v479 = vmul.f32 %v371, 0.70710677
      %v480 = vmul.f32 %v372, 0.70710677
      %v481 = vmul.f32 %v373, 0.70710677
      %v482 = vmul.f32 %v374, 0.70710677
      %v483 = vmul.f32 %v375, 0.70710677
      %v484 = vmul.f32 %v376, 0.70710677
      %v485 = vmul.f32 %v377, 0.70710677
      %v486 = vmul.f32 %v378, 0.70710677
      %v487 = vmul.f32 %v379, 0.70710677
      %v488 = vmul.f32 %v380, 0.70710677
      %v489 = vmul.f32 %v381, 0.70710677
      %v490 = vmul.f32 %v382, 0.70710677
      %v491 = vmul.f32 %v383, 0.70710677
      %v492 = vmul.f32 %v384, 0.70710677
      %v493 = vmul.f32 %v385, 0.70710677
      %v494 = vmul.f32 %v386, 0.70710677
      %v495 = vmul.f32 %v387, 0.70710677
      %v496 = vmul.f32 %v388, 0.70710677
      %v497 = vmul.f32 %v389, 0.70710677
      %v498 = vmul.f32 %v390, 0.70710677
      %v499 = vmul.f32 %v391, 0.70710677
      %v500 = vmul.f32 %v392, 0.70710677
      %v501 = vmul.f32 %v393, 0.70710677
      %v502 = vmul.f32 %v394, 0.70710677
      %v503 = vmul.f32 %v395, 0.70710677
      %v504 = vmul.f32 %v396, 0.70710677
      %v505 = vmul.f32 %v397, 0.70710677
      %v506 = vmul.f32 %v398, 0.70710677
      %v507 = vmul.f32 %v399, 0.70710677
      %v508 = vmul.f32 %v400, 0.70710677
      %v509 = vmul.f32 %v401, 0.70710677
      %v510 = vmul.f32 %v402, 0.70710677
      %v511 = vmul.f32 %v403, 0.70710677
      %v512 = vmul.f32 %v404, 0.70710677
      %v513 = vmul.f32 %v405, 0.70710677
      %v514 = vmul.f32 %v406, 0.70710677
      %v515 = vmul.f32 %v407, 0.70710677
      %v516 = vmul.f32 %v408, 0.70710677
      %v517 = vmul.f32 %v409, 0.70710677
      %v518 = vmul.f32 %v410, 0.70710677
      %v519 = vmul.f32 %v411, 0.70710677
      %v520 = vmul.f32 %v412, 0.70710677
      %v521 = vmul.f32 %v413, 0.70710677
      %v522 = vmul.f32 %v414, 0.70710677
      %v523 = vmul.f32 %v415, 0.70710677
      %v524 = vmul.f32 %v416, 0.70710677
      %v525 = vmul.f32 %v417, 0.70710677
      %v526 = vmul.f32 %v418, 0.70710677
      %v527 = vmul.f32 %v419, 0.70710677
      %v528 = verf.f32.pop %v474
      %v529 = verf.f32.pop %v475
      %v530 = verf.f32.pop %v476
      %v531 = verf.f32.pop %v477
      %v532 = verf.f32.pop %v478
      %v533 = verf.f32.pop %v479
      %v534 = verf.f32.pop %v480
      %v535 = verf.f32.pop %v481
      %v536 = verf.f32.pop %v482
      %v537 = verf.f32.pop %v483
      %v538 = verf.f32.pop %v484
      %v539 = verf.f32.pop %v485
      %v540 = verf.f32.pop %v486
      %v541 = verf.f32.pop %v487
      %v542 = verf.f32.pop %v488
      %v543 = verf.f32.pop %v489
      %v544 = verf.f32.pop %v490
      %v545 = verf.f32.pop %v491
      %v546 = verf.f32.pop %v492
      %v547 = verf.f32.pop %v493
      %v548 = verf.f32.pop %v494
      %v549 = verf.f32.pop %v495
      %v550 = verf.f32.pop %v496
      %v551 = verf.f32.pop %v497
      %v552 = verf.f32.pop %v498
      %v553 = verf.f32.pop %v499
      %v554 = verf.f32.pop %v500
      %v555 = verf.f32.pop %v501
      %v556 = verf.f32.pop %v502
      %v557 = verf.f32.pop %v503
      %v558 = verf.f32.pop %v504
      %v559 = verf.f32.pop %v505
      %v560 = verf.f32.pop %v506
      %v561 = verf.f32.pop %v507
      %v562 = verf.f32.pop %v508
      %v563 = verf.f32.pop %v509
      %v564 = verf.f32.pop %v510
      %v565 = verf.f32.pop %v511
      %v566 = verf.f32.pop %v512
      %v567 = verf.f32.pop %v513
      %v568 = verf.f32.pop %v514
      %v569 = verf.f32.pop %v515
      %v570 = verf.f32.pop %v516
      %v571 = verf.f32.pop %v517
      %v572 = verf.f32.pop %v518
      %v573 = verf.f32.pop %v519
      %v574 = verf.f32.pop %v520
      %v575 = verf.f32.pop %v521
      %v576 = verf.f32.pop %v522
      %v577 = verf.f32.pop %v523
      %v578 = verf.f32.pop %v524
      %v579 = verf.f32.pop %v525
      %v580 = verf.f32.pop %v526
      %v581 = verf.f32.pop %v527
      %v582 = vadd.f32 %v528, 1.0
      %v583 = vadd.f32 %v529, 1.0
      %v584 = vadd.f32 %v530, 1.0
      %v585 = vadd.f32 %v531, 1.0
      %v586 = vadd.f32 %v532, 1.0
      %v587 = vadd.f32 %v533, 1.0
      %v588 = vadd.f32 %v534, 1.0
      %v589 = vadd.f32 %v535, 1.0
      %v590 = vadd.f32 %v536, 1.0
      %v591 = vadd.f32 %v537, 1.0
      %v592 = vadd.f32 %v538, 1.0
      %v593 = vadd.f32 %v539, 1.0
      %v594 = vadd.f32 %v540, 1.0
      %v595 = vadd.f32 %v541, 1.0
      %v596 = vadd.f32 %v542, 1.0
      %v597 = vadd.f32 %v543, 1.0
      %v598 = vadd.f32 %v544, 1.0
      %v599 = vadd.f32 %v545, 1.0
      %v600 = vadd.f32 %v546, 1.0
      %v601 = vadd.f32 %v547, 1.0
      %v602 = vadd.f32 %v548, 1.0
      %v603 = vadd.f32 %v549, 1.0
      %v604 = vadd.f32 %v550, 1.0
      %v605 = vadd.f32 %v551, 1.0
      %v606 = vadd.f32 %v552, 1.0
      %v607 = vadd.f32 %v553, 1.0
      %v608 = vadd.f32 %v554, 1.0
      %v609 = vadd.f32 %v555, 1.0
      %v610 = vadd.f32 %v556, 1.0
      %v611 = vadd.f32 %v557, 1.0
      %v612 = vadd.f32 %v558, 1.0
      %v613 = vadd.f32 %v559, 1.0
      %v614 = vadd.f32 %v560, 1.0
      %v615 = vadd.f32 %v561, 1.0
      %v616 = vadd.f32 %v562, 1.0
      %v617 = vadd.f32 %v563, 1.0
      %v618 = vadd.f32 %v564, 1.0
      %v619 = vadd.f32 %v565, 1.0
      %v620 = vadd.f32 %v566, 1.0
      %v621 = vadd.f32 %v567, 1.0
      %v622 = vadd.f32 %v568, 1.0
      %v623 = vadd.f32 %v569, 1.0
      %v624 = vadd.f32 %v570, 1.0
      %v625 = vadd.f32 %v571, 1.0
      %v626 = vadd.f32 %v572, 1.0
      %v627 = vadd.f32 %v573, 1.0
      %v628 = vadd.f32 %v574, 1.0
      %v629 = vadd.f32 %v575, 1.0
      %v630 = vadd.f32 %v576, 1.0
      %v631 = vadd.f32 %v577, 1.0
      %v632 = vadd.f32 %v578, 1.0
      %v633 = vadd.f32 %v579, 1.0
      %v634 = vadd.f32 %v580, 1.0
      %v635 = vadd.f32 %v581, 1.0
      %v636 = vmul.f32 %v420, %v582
      %v637 = vmul.f32 %v421, %v583
      %v638 = vmul.f32 %v422, %v584
      %v639 = vmul.f32 %v423, %v585
      %v640 = vmul.f32 %v424, %v586
      %v641 = vmul.f32 %v425, %v587
      %v642 = vmul.f32 %v426, %v588
      %v643 = vmul.f32 %v427, %v589
      %v644 = vmul.f32 %v428, %v590
      %v645 = vmul.f32 %v429, %v591
      %v646 = vmul.f32 %v430, %v592
      %v647 = vmul.f32 %v431, %v593
      %v648 = vmul.f32 %v432, %v594
      %v649 = vmul.f32 %v433, %v595
      %v650 = vmul.f32 %v434, %v596
      %v651 = vmul.f32 %v435, %v597
      %v652 = vmul.f32 %v436, %v598
      %v653 = vmul.f32 %v437, %v599
      %v654 = vmul.f32 %v438, %v600
      %v655 = vmul.f32 %v439, %v601
      %v656 = vmul.f32 %v440, %v602
      %v657 = vmul.f32 %v441, %v603
      %v658 = vmul.f32 %v442, %v604
      %v659 = vmul.f32 %v443, %v605
      %v660 = vmul.f32 %v444, %v606
      %v661 = vmul.f32 %v445, %v607
      %v662 = vmul.f32 %v446, %v608
      %v663 = vmul.f32 %v447, %v609
      %v664 = vmul.f32 %v448, %v610
      %v665 = vmul.f32 %v449, %v611
      %v666 = vmul.f32 %v450, %v612
      %v667 = vmul.f32 %v451, %v613
      %v668 = vmul.f32 %v452, %v614
      %v669 = vmul.f32 %v453, %v615
      %v670 = vmul.f32 %v454, %v616
      %v671 = vmul.f32 %v455, %v617
      %v672 = vmul.f32 %v456, %v618
      %v673 = vmul.f32 %v457, %v619
      %v674 = vmul.f32 %v458, %v620
      %v675 = vmul.f32 %v459, %v621
      %v676 = vmul.f32 %v460, %v622
      %v677 = vmul.f32 %v461, %v623
      %v678 = vmul.f32 %v462, %v624
      %v679 = vmul.f32 %v463, %v625
      %v680 = vmul.f32 %v464, %v626
      %v681 = vmul.f32 %v465, %v627
      %v682 = vmul.f32 %v466, %v628
      %v683 = vmul.f32 %v467, %v629
      %v684 = vmul.f32 %v468, %v630
      %v685 = vmul.f32 %v469, %v631
      %v686 = vmul.f32 %v470, %v632
      %v687 = vmul.f32 %v471, %v633
      %v688 = vmul.f32 %v472, %v634
      %v689 = vmul.f32 %v473, %v635
      %v690 = vpack.c.bf16 %v637, %v636
      %v691 = vpack.c.bf16 %v638, %v638
      %v692 = vpack.c.bf16 %v640, %v639
      %v693 = vpack.c.bf16 %v641, %v641
      %v694 = vpack.c.bf16 %v643, %v642
      %v695 = vpack.c.bf16 %v644, %v644
      %v696 = vpack.c.bf16 %v646, %v645
      %v697 = vpack.c.bf16 %v647, %v647
      %v698 = vpack.c.bf16 %v649, %v648
      %v699 = vpack.c.bf16 %v650, %v650
      %v700 = vpack.c.bf16 %v652, %v651
      %v701 = vpack.c.bf16 %v653, %v653
      %v702 = vpack.c.bf16 %v655, %v654
      %v703 = vpack.c.bf16 %v656, %v656
      %v704 = vpack.c.bf16 %v658, %v657
      %v705 = vpack.c.bf16 %v659, %v659
      %v706 = vpack.c.bf16 %v661, %v660
      %v707 = vpack.c.bf16 %v662, %v662
      %v708 = vpack.c.bf16 %v664, %v663
      %v709 = vpack.c.bf16 %v665, %v665
      %v710 = vpack.c.bf16 %v667, %v666
      %v711 = vpack.c.bf16 %v668, %v668
      %v712 = vpack.c.bf16 %v670, %v669
      %v713 = vpack.c.bf16 %v671, %v671
      %v714 = vpack.c.bf16 %v673, %v672
      %v715 = vpack.c.bf16 %v674, %v674
      %v716 = vpack.c.bf16 %v676, %v675
      %v717 = vpack.c.bf16 %v677, %v677
      %v718 = vpack.c.bf16 %v679, %v678
      %v719 = vpack.c.bf16 %v680, %v680
      %v720 = vpack.c.bf16 %v682, %v681
      %v721 = vpack.c.bf16 %v683, %v683
      %v722 = vpack.c.bf16 %v685, %v684
      %v723 = vpack.c.bf16 %v686, %v686
      %v724 = vpack.c.bf16 %v688, %v687
      %v725 = vpack.c.bf16 %v689, %v689
      %v726 = vld [vmem:[%s2] sm:$0xf]
      %v727 = vld [vmem:[%s2 + $0x4] sm:$0xf]
      %v728 = vld [vmem:[%s2 + $0x8] sm:$0xf]
      %v729 = vld [vmem:[%s2 + $0xc] sm:$0xf]
      %v730 = vld [vmem:[%s2 + $0x10] sm:$0xf]
      %v731 = vld [vmem:[%s2 + $0x14] sm:$0xf]
      %v732 = vld [vmem:[%s2 + $0x18] sm:$0xf]
      %v733 = vld [vmem:[%s2 + $0x1c] sm:$0xf]
      %v734 = vld [vmem:[%s2 + $0x20] sm:$0xf]
      %v735 = vld [vmem:[%s2 + $0x24] sm:$0xf]
      %v736 = vld [vmem:[%s2 + $0x28] sm:$0xf]
      %v737 = vld [vmem:[%s2 + $0x2c] sm:$0xf]
      %v738 = vld [vmem:[%s2 + $0x30] sm:$0xf]
      %v739 = vld [vmem:[%s2 + $0x34] sm:$0xf]
      %v740 = vld [vmem:[%s2 + $0x38] sm:$0xf]
      %v741 = vld [vmem:[%s2 + $0x3c] sm:$0xf]
      %vm742 = vsmask.f32 7424
      %v744 = vshrl.u32 %v690, 16
      %v746 = vshll.u32 %v690, 16
      %v748 = vrot.slane %v746, 1
      %v749 = vor.u32 %v744, %v748
      %v751 = vshll.u32 %v691, 16
      %v753 = vrot.slane %v751, 1
      %v754 = vsel %vm742, %v749, %v753
      %v756 = vshrl.u32 %v692, 16
      %v758 = vshll.u32 %v692, 16
      %v760 = vrot.slane %v758, 1
      %v761 = vor.u32 %v756, %v760
      %v763 = vshll.u32 %v693, 16
      %v765 = vrot.slane %v763, 1
      %v766 = vsel %vm742, %v761, %v765
      %v768 = vshrl.u32 %v694, 16
      %v770 = vshll.u32 %v694, 16
      %v772 = vrot.slane %v770, 1
      %v773 = vor.u32 %v768, %v772
      %v775 = vshll.u32 %v695, 16
      %v777 = vrot.slane %v775, 1
      %v778 = vsel %vm742, %v773, %v777
      %v780 = vshrl.u32 %v696, 16
      %v782 = vshll.u32 %v696, 16
      %v784 = vrot.slane %v782, 1
      %v785 = vor.u32 %v780, %v784
      %v787 = vshll.u32 %v697, 16
      %v789 = vrot.slane %v787, 1
      %v790 = vsel %vm742, %v785, %v789
      %v792 = vshrl.u32 %v698, 16
      %v794 = vshll.u32 %v698, 16
      %v796 = vrot.slane %v794, 1
      %v797 = vor.u32 %v792, %v796
      %v799 = vshll.u32 %v699, 16
      %v801 = vrot.slane %v799, 1
      %v802 = vsel %vm742, %v797, %v801
      %v804 = vshrl.u32 %v700, 16
      %v806 = vshll.u32 %v700, 16
      %v808 = vrot.slane %v806, 1
      %v809 = vor.u32 %v804, %v808
      %v811 = vshll.u32 %v701, 16
      %v813 = vrot.slane %v811, 1
      %v814 = vsel %vm742, %v809, %v813
      %v816 = vshrl.u32 %v702, 16
      %v818 = vshll.u32 %v702, 16
      %v820 = vrot.slane %v818, 1
      %v821 = vor.u32 %v816, %v820
      %v823 = vshll.u32 %v703, 16
      %v825 = vrot.slane %v823, 1
      %v826 = vsel %vm742, %v821, %v825
      %v828 = vshrl.u32 %v704, 16
      %v830 = vshll.u32 %v704, 16
      %v832 = vrot.slane %v830, 1
      %v833 = vor.u32 %v828, %v832
      %v835 = vshll.u32 %v705, 16
      %v837 = vrot.slane %v835, 1
      %v838 = vsel %vm742, %v833, %v837
      %v840 = vshrl.u32 %v706, 16
      %v842 = vshll.u32 %v706, 16
      %v844 = vrot.slane %v842, 1
      %v845 = vor.u32 %v840, %v844
      %v847 = vshll.u32 %v707, 16
      %v849 = vrot.slane %v847, 1
      %v850 = vsel %vm742, %v845, %v849
      %v852 = vshrl.u32 %v708, 16
      %v854 = vshll.u32 %v708, 16
      %v856 = vrot.slane %v854, 1
      %v857 = vor.u32 %v852, %v856
      %v859 = vshll.u32 %v709, 16
      %v861 = vrot.slane %v859, 1
      %v862 = vsel %vm742, %v857, %v861
      %v864 = vshrl.u32 %v710, 16
      %v866 = vshll.u32 %v710, 16
      %v868 = vrot.slane %v866, 1
      %v869 = vor.u32 %v864, %v868
      %v871 = vshll.u32 %v711, 16
      %v873 = vrot.slane %v871, 1
      %v874 = vsel %vm742, %v869, %v873
      %v876 = vshrl.u32 %v712, 16
      %v878 = vshll.u32 %v712, 16
      %v880 = vrot.slane %v878, 1
      %v881 = vor.u32 %v876, %v880
      %v883 = vshll.u32 %v713, 16
      %v885 = vrot.slane %v883, 1
      %v886 = vsel %vm742, %v881, %v885
      %v888 = vshrl.u32 %v714, 16
      %v890 = vshll.u32 %v714, 16
      %v892 = vrot.slane %v890, 1
      %v893 = vor.u32 %v888, %v892
      %v895 = vshll.u32 %v715, 16
      %v897 = vrot.slane %v895, 1
      %v898 = vsel %vm742, %v893, %v897
      %v900 = vshrl.u32 %v716, 16
      %v902 = vshll.u32 %v716, 16
      %v904 = vrot.slane %v902, 1
      %v905 = vor.u32 %v900, %v904
      %v907 = vshll.u32 %v717, 16
      %v909 = vrot.slane %v907, 1
      %v910 = vsel %vm742, %v905, %v909
      %v912 = vshrl.u32 %v718, 16
      %v914 = vshll.u32 %v718, 16
      %v916 = vrot.slane %v914, 1
      %v917 = vor.u32 %v912, %v916
      %v919 = vshll.u32 %v719, 16
      %v921 = vrot.slane %v919, 1
      %v922 = vsel %vm742, %v917, %v921
      %v924 = vshrl.u32 %v720, 16
      %v926 = vshll.u32 %v720, 16
      %v928 = vrot.slane %v926, 1
      %v929 = vor.u32 %v924, %v928
      %v931 = vshll.u32 %v721, 16
      %v933 = vrot.slane %v931, 1
      %v934 = vsel %vm742, %v929, %v933
      %s951 = scalar_lea.vmem %s2, 64
      %v952 = vld [vmem:[%s951] sm:$0xf]
      %v953 = vld [vmem:[%s951 + $0x4] sm:$0xf]
      %v954 = vld [vmem:[%s951 + $0x8] sm:$0xf]
      %v955 = vld [vmem:[%s951 + $0xc] sm:$0xf]
      %v956 = vld [vmem:[%s951 + $0x10] sm:$0xf]
      %v957 = vld [vmem:[%s951 + $0x14] sm:$0xf]
      %v958 = vld [vmem:[%s951 + $0x18] sm:$0xf]
      %v959 = vld [vmem:[%s951 + $0x1c] sm:$0xf]
      %v960 = vld [vmem:[%s951 + $0x20] sm:$0xf]
      %v961 = vld [vmem:[%s951 + $0x24] sm:$0xf]
      %v962 = vld [vmem:[%s951 + $0x28] sm:$0xf]
      %v963 = vld [vmem:[%s951 + $0x2c] sm:$0xf]
      %v964 = vld [vmem:[%s951 + $0x30] sm:$0xf]
      %v965 = vld [vmem:[%s951 + $0x34] sm:$0xf]
      %v966 = vld [vmem:[%s951 + $0x38] sm:$0xf]
      %v967 = vld [vmem:[%s951 + $0x3c] sm:$0xf]
      %v984 = vunpack.c.l.b16 %v952
      %v985 = vunpack.c.l.b16 %v953
      %v986 = vunpack.c.l.b16 %v954
      %v987 = vunpack.c.l.b16 %v955
      %v988 = vunpack.c.l.b16 %v956
      %v989 = vunpack.c.l.b16 %v957
      %v990 = vunpack.c.l.b16 %v958
      %v991 = vunpack.c.l.b16 %v959
      %v992 = vunpack.c.l.b16 %v960
      %v993 = vunpack.c.l.b16 %v961
      %v994 = vunpack.c.l.b16 %v962
      %v995 = vunpack.c.l.b16 %v963
      %v996 = vunpack.c.l.b16 %v964
      %v997 = vunpack.c.l.b16 %v965
      %v998 = vunpack.c.l.b16 %v966
      %v999 = vunpack.c.l.b16 %v967
      %v1000 = vpack.c.b16 %v985, %v984
      %v1001 = vpack.c.b16 %v987, %v986
      %v1002 = vpack.c.b16 %v989, %v988
      %v1003 = vpack.c.b16 %v991, %v990
      %v1004 = vpack.c.b16 %v993, %v992
      %v1005 = vpack.c.b16 %v995, %v994
      %v1006 = vpack.c.b16 %v997, %v996
      %v1007 = vpack.c.b16 %v999, %v998
      %1016 = vmatprep.subr.bf16.mxu0 0
      %1017 = vmatpush1.bf16.msra.mxu0 %v1007
      %1018 = vmatprep.subr.bf16.mxu0 0
      %1019 = vmatpush1.bf16.msra.mxu0 %v1006
      %1020 = vmatprep.subr.bf16.mxu0 0
      %1021 = vmatpush1.bf16.msra.mxu0 %v1005
      %1022 = vmatprep.subr.bf16.mxu0 0
      %1023 = vmatpush1.bf16.msra.mxu0 %v1004
      %1024 = vmatprep.subr.bf16.mxu0 0
      %1025 = vmatpush1.bf16.msra.mxu0 %v1003
      %1026 = vmatprep.subr.bf16.mxu0 0
      %1027 = vmatpush1.bf16.msra.mxu0 %v1002
      %1028 = vmatprep.subr.bf16.mxu0 0
      %1029 = vmatpush1.bf16.msra.mxu0 %v1001
      %1030 = vmatprep.subr.bf16.mxu0 0
      %1031 = vmatpush1.bf16.msra.mxu0 %v1000
      %1032 = vmatprep.subr.bf16.mxu0 0
      %1033 = vmatpush2.bf16.msra.mxu0 0
      %1034 = vmatprep.subr.bf16.mxu0 0
      %1035 = vmatpush2.bf16.msra.mxu0 0
      %1036 = vmatprep.subr.bf16.mxu0 0
      %1037 = vmatpush2.bf16.msra.mxu0 0
      %1038 = vmatprep.subr.bf16.mxu0 0
      %1039 = vmatpush2.bf16.msra.mxu0 0
      %1040 = vmatprep.subr.bf16.mxu0 0
      %1041 = vmatpush2.bf16.msra.mxu0 0
      %1042 = vmatprep.subr.bf16.mxu0 0
      %1043 = vmatpush2.bf16.msra.mxu0 0
      %1044 = vmatprep.subr.bf16.mxu0 0
      %1045 = vmatpush2.bf16.msra.mxu0 0
      %1046 = vmatprep.subr.bf16.mxu0 0
      %1047 = vmatpush2.bf16.msra.mxu0 0
      %1048 = vmatprep.mubr.bf16.mxu0 0
      %1049 = vmatmul.mubr.bf16.gmra.mxu0 %v754
      %v1050 = vpop.f32.mrf.mxu0
      %v1051 = vadd.f32 0.0, %v1050
      %v1052 = vpop.f32.mrf.mxu0
      %v1053 = vpop.f32.mrf.mxu0
      %v1054 = vadd.f32 0.0, %v1053
      %v1055 = vpop.f32.mrf.mxu0
      %1056 = vmatprep.mubr.bf16.mxu0 0
      %1057 = vmatmul.mubr.bf16.gmra.mxu0 %v766
      %v1058 = vpop.f32.mrf.mxu0
      %v1059 = vadd.f32 0.0, %v1058
      %v1060 = vpop.f32.mrf.mxu0
      %v1061 = vpop.f32.mrf.mxu0
      %v1062 = vadd.f32 0.0, %v1061
      %v1063 = vpop.f32.mrf.mxu0
      %1064 = vmatprep.mubr.bf16.mxu0 0
      %1065 = vmatmul.mubr.bf16.gmra.mxu0 %v778
      %v1066 = vpop.f32.mrf.mxu0
      %v1067 = vadd.f32 0.0, %v1066
      %v1068 = vpop.f32.mrf.mxu0
      %v1069 = vpop.f32.mrf.mxu0
      %v1070 = vadd.f32 0.0, %v1069
      %v1071 = vpop.f32.mrf.mxu0
      %1072 = vmatprep.mubr.bf16.mxu0 0
      %1073 = vmatmul.mubr.bf16.gmra.mxu0 %v790
      %v1074 = vpop.f32.mrf.mxu0
      %v1075 = vadd.f32 0.0, %v1074
      %v1076 = vpop.f32.mrf.mxu0
      %v1077 = vpop.f32.mrf.mxu0
      %v1078 = vadd.f32 0.0, %v1077
      %v1079 = vpop.f32.mrf.mxu0
      %1080 = vmatprep.mubr.bf16.mxu0 0
      %1081 = vmatmul.mubr.bf16.gmra.mxu0 %v802
      %v1082 = vpop.f32.mrf.mxu0
      %v1083 = vadd.f32 0.0, %v1082
      %v1084 = vpop.f32.mrf.mxu0
      %v1085 = vpop.f32.mrf.mxu0
      %v1086 = vadd.f32 0.0, %v1085
      %v1087 = vpop.f32.mrf.mxu0
      %1088 = vmatprep.mubr.bf16.mxu0 0
      %1089 = vmatmul.mubr.bf16.gmra.mxu0 %v814
      %v1090 = vpop.f32.mrf.mxu0
      %v1091 = vadd.f32 0.0, %v1090
      %v1092 = vpop.f32.mrf.mxu0
      %v1093 = vpop.f32.mrf.mxu0
      %v1094 = vadd.f32 0.0, %v1093
      %v1095 = vpop.f32.mrf.mxu0
      %1096 = vmatprep.mubr.bf16.mxu0 0
      %1097 = vmatmul.mubr.bf16.gmra.mxu0 %v826
      %v1098 = vpop.f32.mrf.mxu0
      %v1099 = vadd.f32 0.0, %v1098
      %v1100 = vpop.f32.mrf.mxu0
      %v1101 = vpop.f32.mrf.mxu0
      %v1102 = vadd.f32 0.0, %v1101
      %v1103 = vpop.f32.mrf.mxu0
      %1104 = vmatprep.mubr.bf16.mxu0 0
      %1105 = vmatmul.mubr.bf16.gmra.mxu0 %v838
      %v1106 = vpop.f32.mrf.mxu0
      %v1107 = vadd.f32 0.0, %v1106
      %v1108 = vpop.f32.mrf.mxu0
      %v1109 = vpop.f32.mrf.mxu0
      %v1110 = vadd.f32 0.0, %v1109
      %v1111 = vpop.f32.mrf.mxu0
      %1112 = vmatprep.mubr.bf16.mxu0 0
      %1113 = vmatmul.mubr.bf16.gmra.mxu0 %v850
      %v1114 = vpop.f32.mrf.mxu0
      %v1115 = vadd.f32 0.0, %v1114
      %v1116 = vpop.f32.mrf.mxu0
      %v1117 = vpop.f32.mrf.mxu0
      %v1118 = vadd.f32 0.0, %v1117
      %v1119 = vpop.f32.mrf.mxu0
      %1120 = vmatprep.mubr.bf16.mxu0 0
      %1121 = vmatmul.mubr.bf16.gmra.mxu0 %v862
      %v1122 = vpop.f32.mrf.mxu0
      %v1123 = vadd.f32 0.0, %v1122
      %v1124 = vpop.f32.mrf.mxu0
      %v1125 = vpop.f32.mrf.mxu0
      %v1126 = vadd.f32 0.0, %v1125
      %v1127 = vpop.f32.mrf.mxu0
      %1128 = vmatprep.mubr.bf16.mxu0 0
      %1129 = vmatmul.mubr.bf16.gmra.mxu0 %v874
      %v1130 = vpop.f32.mrf.mxu0
      %v1131 = vadd.f32 0.0, %v1130
      %v1132 = vpop.f32.mrf.mxu0
      %v1133 = vpop.f32.mrf.mxu0
      %v1134 = vadd.f32 0.0, %v1133
      %v1135 = vpop.f32.mrf.mxu0
      %1136 = vmatprep.mubr.bf16.mxu0 0
      %1137 = vmatmul.mubr.bf16.gmra.mxu0 %v886
      %v1138 = vpop.f32.mrf.mxu0
      %v1139 = vadd.f32 0.0, %v1138
      %v1140 = vpop.f32.mrf.mxu0
      %v1141 = vpop.f32.mrf.mxu0
      %v1142 = vadd.f32 0.0, %v1141
      %v1143 = vpop.f32.mrf.mxu0
      %1144 = vmatprep.mubr.bf16.mxu0 0
      %1145 = vmatmul.mubr.bf16.gmra.mxu0 %v898
      %v1146 = vpop.f32.mrf.mxu0
      %v1147 = vadd.f32 0.0, %v1146
      %v1148 = vpop.f32.mrf.mxu0
      %v1149 = vpop.f32.mrf.mxu0
      %v1150 = vadd.f32 0.0, %v1149
      %v1151 = vpop.f32.mrf.mxu0
      %1152 = vmatprep.mubr.bf16.mxu0 0
      %1153 = vmatmul.mubr.bf16.gmra.mxu0 %v910
      %v1154 = vpop.f32.mrf.mxu0
      %v1155 = vadd.f32 0.0, %v1154
      %v1156 = vpop.f32.mrf.mxu0
      %v1157 = vpop.f32.mrf.mxu0
      %v1158 = vadd.f32 0.0, %v1157
      %v1159 = vpop.f32.mrf.mxu0
      %1160 = vmatprep.mubr.bf16.mxu0 0
      %1161 = vmatmul.mubr.bf16.gmra.mxu0 %v922
      %v1162 = vpop.f32.mrf.mxu0
      %v1163 = vadd.f32 0.0, %v1162
      %v1164 = vpop.f32.mrf.mxu0
      %v1165 = vpop.f32.mrf.mxu0
      %v1166 = vadd.f32 0.0, %v1165
      %v1167 = vpop.f32.mrf.mxu0
      %1168 = vmatprep.mubr.bf16.mxu0 0
      %1169 = vmatmul.mubr.bf16.gmra.mxu0 %v934
      %v1170 = vpop.f32.mrf.mxu0
      %v1171 = vadd.f32 0.0, %v1170
      %v1172 = vpop.f32.mrf.mxu0
      %v1173 = vpop.f32.mrf.mxu0
      %v1174 = vadd.f32 0.0, %v1173
      %v1175 = vpop.f32.mrf.mxu0
      %1176 = vdwg.mxu0
      %v1193 = vunpack.c.l.b16 %v726
      %v1194 = vunpack.c.l.b16 %v727
      %v1195 = vunpack.c.l.b16 %v728
      %v1196 = vunpack.c.l.b16 %v729
      %v1197 = vunpack.c.l.b16 %v730
      %v1198 = vunpack.c.l.b16 %v731
      %v1199 = vunpack.c.l.b16 %v732
      %v1200 = vunpack.c.l.b16 %v733
      %v1201 = vunpack.c.l.b16 %v734
      %v1202 = vunpack.c.l.b16 %v735
      %v1203 = vunpack.c.l.b16 %v736
      %v1204 = vunpack.c.l.b16 %v737
      %v1205 = vunpack.c.l.b16 %v738
      %v1206 = vunpack.c.l.b16 %v739
      %v1207 = vunpack.c.l.b16 %v740
      %v1208 = vunpack.c.l.b16 %v741
      %v1209 = vpack.c.b16 %v1194, %v1193
      %v1210 = vpack.c.b16 %v1196, %v1195
      %v1211 = vpack.c.b16 %v1198, %v1197
      %v1212 = vpack.c.b16 %v1200, %v1199
      %v1213 = vpack.c.b16 %v1202, %v1201
      %v1214 = vpack.c.b16 %v1204, %v1203
      %v1215 = vpack.c.b16 %v1206, %v1205
      %v1216 = vpack.c.b16 %v1208, %v1207
      %1225 = vmatprep.subr.bf16.mxu0 0
      %1226 = vmatpush1.bf16.msra.mxu0 %v1216
      %1227 = vmatprep.subr.bf16.mxu0 0
      %1228 = vmatpush1.bf16.msra.mxu0 %v1215
      %1229 = vmatprep.subr.bf16.mxu0 0
      %1230 = vmatpush1.bf16.msra.mxu0 %v1214
      %1231 = vmatprep.subr.bf16.mxu0 0
      %1232 = vmatpush1.bf16.msra.mxu0 %v1213
      %1233 = vmatprep.subr.bf16.mxu0 0
      %1234 = vmatpush1.bf16.msra.mxu0 %v1212
      %1235 = vmatprep.subr.bf16.mxu0 0
      %1236 = vmatpush1.bf16.msra.mxu0 %v1211
      %1237 = vmatprep.subr.bf16.mxu0 0
      %1238 = vmatpush1.bf16.msra.mxu0 %v1210
      %1239 = vmatprep.subr.bf16.mxu0 0
      %1240 = vmatpush1.bf16.msra.mxu0 %v1209
      %1241 = vmatprep.subr.bf16.mxu0 0
      %1242 = vmatpush2.bf16.msra.mxu0 0
      %1243 = vmatprep.subr.bf16.mxu0 0
      %1244 = vmatpush2.bf16.msra.mxu0 0
      %1245 = vmatprep.subr.bf16.mxu0 0
      %1246 = vmatpush2.bf16.msra.mxu0 0
      %1247 = vmatprep.subr.bf16.mxu0 0
      %1248 = vmatpush2.bf16.msra.mxu0 0
      %1249 = vmatprep.subr.bf16.mxu0 0
      %1250 = vmatpush2.bf16.msra.mxu0 0
      %1251 = vmatprep.subr.bf16.mxu0 0
      %1252 = vmatpush2.bf16.msra.mxu0 0
      %1253 = vmatprep.subr.bf16.mxu0 0
      %1254 = vmatpush2.bf16.msra.mxu0 0
      %1255 = vmatprep.subr.bf16.mxu0 0
      %1256 = vmatpush2.bf16.msra.mxu0 0
      %1257 = vmatprep.mubr.bf16.mxu0 0
      %1258 = vmatmul.mubr.bf16.gmra.mxu0 %v690
      %v1259 = vpop.f32.mrf.mxu0
      %v1260 = vadd.f32 %v1051, %v1259
      %v1261 = vpop.f32.mrf.mxu0
      %v1262 = vpop.f32.mrf.mxu0
      %v1263 = vadd.f32 %v1054, %v1262
      %v1264 = vpop.f32.mrf.mxu0
      %1265 = vmatprep.mubr.bf16.mxu0 0
      %1266 = vmatmul.mubr.bf16.gmra.mxu0 %v692
      %v1267 = vpop.f32.mrf.mxu0
      %v1268 = vadd.f32 %v1059, %v1267
      %v1269 = vpop.f32.mrf.mxu0
      %v1270 = vpop.f32.mrf.mxu0
      %v1271 = vadd.f32 %v1062, %v1270
      %v1272 = vpop.f32.mrf.mxu0
      %1273 = vmatprep.mubr.bf16.mxu0 0
      %1274 = vmatmul.mubr.bf16.gmra.mxu0 %v694
      %v1275 = vpop.f32.mrf.mxu0
      %v1276 = vadd.f32 %v1067, %v1275
      %v1277 = vpop.f32.mrf.mxu0
      %v1278 = vpop.f32.mrf.mxu0
      %v1279 = vadd.f32 %v1070, %v1278
      %v1280 = vpop.f32.mrf.mxu0
      %1281 = vmatprep.mubr.bf16.mxu0 0
      %1282 = vmatmul.mubr.bf16.gmra.mxu0 %v696
      %v1283 = vpop.f32.mrf.mxu0
      %v1284 = vadd.f32 %v1075, %v1283
      %v1285 = vpop.f32.mrf.mxu0
      %v1286 = vpop.f32.mrf.mxu0
      %v1287 = vadd.f32 %v1078, %v1286
      %v1288 = vpop.f32.mrf.mxu0
      %1289 = vmatprep.mubr.bf16.mxu0 0
      %1290 = vmatmul.mubr.bf16.gmra.mxu0 %v698
      %v1291 = vpop.f32.mrf.mxu0
      %v1292 = vadd.f32 %v1083, %v1291
      %v1293 = vpop.f32.mrf.mxu0
      %v1294 = vpop.f32.mrf.mxu0
      %v1295 = vadd.f32 %v1086, %v1294
      %v1296 = vpop.f32.mrf.mxu0
      %1297 = vmatprep.mubr.bf16.mxu0 0
      %1298 = vmatmul.mubr.bf16.gmra.mxu0 %v700
      %v1299 = vpop.f32.mrf.mxu0
      %v1300 = vadd.f32 %v1091, %v1299
      %v1301 = vpop.f32.mrf.mxu0
      %v1302 = vpop.f32.mrf.mxu0
      %v1303 = vadd.f32 %v1094, %v1302
      %v1304 = vpop.f32.mrf.mxu0
      %1305 = vmatprep.mubr.bf16.mxu0 0
      %1306 = vmatmul.mubr.bf16.gmra.mxu0 %v702
      %v1307 = vpop.f32.mrf.mxu0
      %v1308 = vadd.f32 %v1099, %v1307
      %v1309 = vpop.f32.mrf.mxu0
      %v1310 = vpop.f32.mrf.mxu0
      %v1311 = vadd.f32 %v1102, %v1310
      %v1312 = vpop.f32.mrf.mxu0
      %1313 = vmatprep.mubr.bf16.mxu0 0
      %1314 = vmatmul.mubr.bf16.gmra.mxu0 %v704
      %v1315 = vpop.f32.mrf.mxu0
      %v1316 = vadd.f32 %v1107, %v1315
      %v1317 = vpop.f32.mrf.mxu0
      %v1318 = vpop.f32.mrf.mxu0
      %v1319 = vadd.f32 %v1110, %v1318
      %v1320 = vpop.f32.mrf.mxu0
      %1321 = vmatprep.mubr.bf16.mxu0 0
      %1322 = vmatmul.mubr.bf16.gmra.mxu0 %v706
      %v1323 = vpop.f32.mrf.mxu0
      %v1324 = vadd.f32 %v1115, %v1323
      %v1325 = vpop.f32.mrf.mxu0
      %v1326 = vpop.f32.mrf.mxu0
      %v1327 = vadd.f32 %v1118, %v1326
      %v1328 = vpop.f32.mrf.mxu0
      %1329 = vmatprep.mubr.bf16.mxu0 0
      %1330 = vmatmul.mubr.bf16.gmra.mxu0 %v708
      %v1331 = vpop.f32.mrf.mxu0
      %v1332 = vadd.f32 %v1123, %v1331
      %v1333 = vpop.f32.mrf.mxu0
      %v1334 = vpop.f32.mrf.mxu0
      %v1335 = vadd.f32 %v1126, %v1334
      %v1336 = vpop.f32.mrf.mxu0
      %1337 = vmatprep.mubr.bf16.mxu0 0
      %1338 = vmatmul.mubr.bf16.gmra.mxu0 %v710
      %v1339 = vpop.f32.mrf.mxu0
      %v1340 = vadd.f32 %v1131, %v1339
      %v1341 = vpop.f32.mrf.mxu0
      %v1342 = vpop.f32.mrf.mxu0
      %v1343 = vadd.f32 %v1134, %v1342
      %v1344 = vpop.f32.mrf.mxu0
      %1345 = vmatprep.mubr.bf16.mxu0 0
      %1346 = vmatmul.mubr.bf16.gmra.mxu0 %v712
      %v1347 = vpop.f32.mrf.mxu0
      %v1348 = vadd.f32 %v1139, %v1347
      %v1349 = vpop.f32.mrf.mxu0
      %v1350 = vpop.f32.mrf.mxu0
      %v1351 = vadd.f32 %v1142, %v1350
      %v1352 = vpop.f32.mrf.mxu0
      %1353 = vmatprep.mubr.bf16.mxu0 0
      %1354 = vmatmul.mubr.bf16.gmra.mxu0 %v714
      %v1355 = vpop.f32.mrf.mxu0
      %v1356 = vadd.f32 %v1147, %v1355
      %v1357 = vpop.f32.mrf.mxu0
      %v1358 = vpop.f32.mrf.mxu0
      %v1359 = vadd.f32 %v1150, %v1358
      %v1360 = vpop.f32.mrf.mxu0
      %1361 = vmatprep.mubr.bf16.mxu0 0
      %1362 = vmatmul.mubr.bf16.gmra.mxu0 %v716
      %v1363 = vpop.f32.mrf.mxu0
      %v1364 = vadd.f32 %v1155, %v1363
      %v1365 = vpop.f32.mrf.mxu0
      %v1366 = vpop.f32.mrf.mxu0
      %v1367 = vadd.f32 %v1158, %v1366
      %v1368 = vpop.f32.mrf.mxu0
      %1369 = vmatprep.mubr.bf16.mxu0 0
      %1370 = vmatmul.mubr.bf16.gmra.mxu0 %v718
      %v1371 = vpop.f32.mrf.mxu0
      %v1372 = vadd.f32 %v1163, %v1371
      %v1373 = vpop.f32.mrf.mxu0
      %v1374 = vpop.f32.mrf.mxu0
      %v1375 = vadd.f32 %v1166, %v1374
      %v1376 = vpop.f32.mrf.mxu0
      %1377 = vmatprep.mubr.bf16.mxu0 0
      %1378 = vmatmul.mubr.bf16.gmra.mxu0 %v720
      %v1379 = vpop.f32.mrf.mxu0
      %v1380 = vadd.f32 %v1171, %v1379
      %v1381 = vpop.f32.mrf.mxu0
      %v1382 = vpop.f32.mrf.mxu0
      %v1383 = vadd.f32 %v1174, %v1382
      %v1384 = vpop.f32.mrf.mxu0
      %1385 = vdwg.mxu0
      %vm1418 = vcmask 1046528
      %v1419 = vrot.slane %v690, 1
      %v1420 = vrot.slane %v691, 1
      %v1421 = vsel %vm1418, %v1419, %v1420
      %v1422 = vrot.slane %v692, 1
      %v1423 = vrot.slane %v693, 1
      %v1424 = vsel %vm1418, %v1422, %v1423
      %v1425 = vrot.slane %v694, 1
      %v1426 = vrot.slane %v695, 1
      %v1427 = vsel %vm1418, %v1425, %v1426
      %v1428 = vrot.slane %v696, 1
      %v1429 = vrot.slane %v697, 1
      %v1430 = vsel %vm1418, %v1428, %v1429
      %v1431 = vrot.slane %v698, 1
      %v1432 = vrot.slane %v699, 1
      %v1433 = vsel %vm1418, %v1431, %v1432
      %v1434 = vrot.slane %v700, 1
      %v1435 = vrot.slane %v701, 1
      %v1436 = vsel %vm1418, %v1434, %v1435
      %v1437 = vrot.slane %v702, 1
      %v1438 = vrot.slane %v703, 1
      %v1439 = vsel %vm1418, %v1437, %v1438
      %v1440 = vrot.slane %v704, 1
      %v1441 = vrot.slane %v705, 1
      %v1442 = vsel %vm1418, %v1440, %v1441
      %v1443 = vrot.slane %v706, 1
      %v1444 = vrot.slane %v707, 1
      %v1445 = vsel %vm1418, %v1443, %v1444
      %v1446 = vrot.slane %v708, 1
      %v1447 = vrot.slane %v709, 1
      %v1448 = vsel %vm1418, %v1446, %v1447
      %v1449 = vrot.slane %v710, 1
      %v1450 = vrot.slane %v711, 1
      %v1451 = vsel %vm1418, %v1449, %v1450
      %v1452 = vrot.slane %v712, 1
      %v1453 = vrot.slane %v713, 1
      %v1454 = vsel %vm1418, %v1452, %v1453
      %v1455 = vrot.slane %v714, 1
      %v1456 = vrot.slane %v715, 1
      %v1457 = vsel %vm1418, %v1455, %v1456
      %v1458 = vrot.slane %v716, 1
      %v1459 = vrot.slane %v717, 1
      %v1460 = vsel %vm1418, %v1458, %v1459
      %v1461 = vrot.slane %v718, 1
      %v1462 = vrot.slane %v719, 1
      %v1463 = vsel %vm1418, %v1461, %v1462
      %v1464 = vrot.slane %v720, 1
      %v1465 = vrot.slane %v721, 1
      %v1466 = vsel %vm1418, %v1464, %v1465
      %s1483 = scalar_lea.vmem %s2, 128
      %v1484 = vld [vmem:[%s1483] sm:$0xf]
      %v1485 = vld [vmem:[%s1483 + $0x4] sm:$0xf]
      %v1486 = vld [vmem:[%s1483 + $0x8] sm:$0xf]
      %v1487 = vld [vmem:[%s1483 + $0xc] sm:$0xf]
      %v1488 = vld [vmem:[%s1483 + $0x10] sm:$0xf]
      %v1489 = vld [vmem:[%s1483 + $0x14] sm:$0xf]
      %v1490 = vld [vmem:[%s1483 + $0x18] sm:$0xf]
      %v1491 = vld [vmem:[%s1483 + $0x1c] sm:$0xf]
      %v1492 = vld [vmem:[%s1483 + $0x20] sm:$0xf]
      %v1493 = vld [vmem:[%s1483 + $0x24] sm:$0xf]
      %v1494 = vld [vmem:[%s1483 + $0x28] sm:$0xf]
      %v1495 = vld [vmem:[%s1483 + $0x2c] sm:$0xf]
      %v1496 = vld [vmem:[%s1483 + $0x30] sm:$0xf]
      %v1497 = vld [vmem:[%s1483 + $0x34] sm:$0xf]
      %v1498 = vld [vmem:[%s1483 + $0x38] sm:$0xf]
      %v1499 = vld [vmem:[%s1483 + $0x3c] sm:$0xf]
      %v1516 = vunpack.c.l.b16 %v1484
      %v1517 = vunpack.c.l.b16 %v1485
      %v1518 = vunpack.c.l.b16 %v1486
      %v1519 = vunpack.c.l.b16 %v1487
      %v1520 = vunpack.c.l.b16 %v1488
      %v1521 = vunpack.c.l.b16 %v1489
      %v1522 = vunpack.c.l.b16 %v1490
      %v1523 = vunpack.c.l.b16 %v1491
      %v1524 = vunpack.c.l.b16 %v1492
      %v1525 = vunpack.c.l.b16 %v1493
      %v1526 = vunpack.c.l.b16 %v1494
      %v1527 = vunpack.c.l.b16 %v1495
      %v1528 = vunpack.c.l.b16 %v1496
      %v1529 = vunpack.c.l.b16 %v1497
      %v1530 = vunpack.c.l.b16 %v1498
      %v1531 = vunpack.c.l.b16 %v1499
      %v1532 = vpack.c.b16 %v1517, %v1516
      %v1533 = vpack.c.b16 %v1519, %v1518
      %v1534 = vpack.c.b16 %v1521, %v1520
      %v1535 = vpack.c.b16 %v1523, %v1522
      %v1536 = vpack.c.b16 %v1525, %v1524
      %v1537 = vpack.c.b16 %v1527, %v1526
      %v1538 = vpack.c.b16 %v1529, %v1528
      %v1539 = vpack.c.b16 %v1531, %v1530
      %1548 = vmatprep.subr.bf16.mxu0 0
      %1549 = vmatpush1.bf16.msra.mxu0 %v1539
      %1550 = vmatprep.subr.bf16.mxu0 0
      %1551 = vmatpush1.bf16.msra.mxu0 %v1538
      %1552 = vmatprep.subr.bf16.mxu0 0
      %1553 = vmatpush1.bf16.msra.mxu0 %v1537
      %1554 = vmatprep.subr.bf16.mxu0 0
      %1555 = vmatpush1.bf16.msra.mxu0 %v1536
      %1556 = vmatprep.subr.bf16.mxu0 0
      %1557 = vmatpush1.bf16.msra.mxu0 %v1535
      %1558 = vmatprep.subr.bf16.mxu0 0
      %1559 = vmatpush1.bf16.msra.mxu0 %v1534
      %1560 = vmatprep.subr.bf16.mxu0 0
      %1561 = vmatpush1.bf16.msra.mxu0 %v1533
      %1562 = vmatprep.subr.bf16.mxu0 0
      %1563 = vmatpush1.bf16.msra.mxu0 %v1532
      %1564 = vmatprep.subr.bf16.mxu0 0
      %1565 = vmatpush2.bf16.msra.mxu0 0
      %1566 = vmatprep.subr.bf16.mxu0 0
      %1567 = vmatpush2.bf16.msra.mxu0 0
      %1568 = vmatprep.subr.bf16.mxu0 0
      %1569 = vmatpush2.bf16.msra.mxu0 0
      %1570 = vmatprep.subr.bf16.mxu0 0
      %1571 = vmatpush2.bf16.msra.mxu0 0
      %1572 = vmatprep.subr.bf16.mxu0 0
      %1573 = vmatpush2.bf16.msra.mxu0 0
      %1574 = vmatprep.subr.bf16.mxu0 0
      %1575 = vmatpush2.bf16.msra.mxu0 0
      %1576 = vmatprep.subr.bf16.mxu0 0
      %1577 = vmatpush2.bf16.msra.mxu0 0
      %1578 = vmatprep.subr.bf16.mxu0 0
      %1579 = vmatpush2.bf16.msra.mxu0 0
      %1580 = vmatprep.mubr.bf16.mxu0 0
      %1581 = vmatmul.mubr.bf16.gmra.mxu0 %v1421
      %v1582 = vpop.f32.mrf.mxu0
      %v1583 = vadd.f32 0.0, %v1582
      %v1584 = vpop.f32.mrf.mxu0
      %v1585 = vpop.f32.mrf.mxu0
      %v1586 = vadd.f32 0.0, %v1585
      %v1587 = vpop.f32.mrf.mxu0
      %1588 = vmatprep.mubr.bf16.mxu0 0
      %1589 = vmatmul.mubr.bf16.gmra.mxu0 %v1424
      %v1590 = vpop.f32.mrf.mxu0
      %v1591 = vadd.f32 0.0, %v1590
      %v1592 = vpop.f32.mrf.mxu0
      %v1593 = vpop.f32.mrf.mxu0
      %v1594 = vadd.f32 0.0, %v1593
      %v1595 = vpop.f32.mrf.mxu0
      %1596 = vmatprep.mubr.bf16.mxu0 0
      %1597 = vmatmul.mubr.bf16.gmra.mxu0 %v1427
      %v1598 = vpop.f32.mrf.mxu0
      %v1599 = vadd.f32 0.0, %v1598
      %v1600 = vpop.f32.mrf.mxu0
      %v1601 = vpop.f32.mrf.mxu0
      %v1602 = vadd.f32 0.0, %v1601
      %v1603 = vpop.f32.mrf.mxu0
      %1604 = vmatprep.mubr.bf16.mxu0 0
      %1605 = vmatmul.mubr.bf16.gmra.mxu0 %v1430
      %v1606 = vpop.f32.mrf.mxu0
      %v1607 = vadd.f32 0.0, %v1606
      %v1608 = vpop.f32.mrf.mxu0
      %v1609 = vpop.f32.mrf.mxu0
      %v1610 = vadd.f32 0.0, %v1609
      %v1611 = vpop.f32.mrf.mxu0
      %1612 = vmatprep.mubr.bf16.mxu0 0
      %1613 = vmatmul.mubr.bf16.gmra.mxu0 %v1433
      %v1614 = vpop.f32.mrf.mxu0
      %v1615 = vadd.f32 0.0, %v1614
      %v1616 = vpop.f32.mrf.mxu0
      %v1617 = vpop.f32.mrf.mxu0
      %v1618 = vadd.f32 0.0, %v1617
      %v1619 = vpop.f32.mrf.mxu0
      %1620 = vmatprep.mubr.bf16.mxu0 0
      %1621 = vmatmul.mubr.bf16.gmra.mxu0 %v1436
      %v1622 = vpop.f32.mrf.mxu0
      %v1623 = vadd.f32 0.0, %v1622
      %v1624 = vpop.f32.mrf.mxu0
      %v1625 = vpop.f32.mrf.mxu0
      %v1626 = vadd.f32 0.0, %v1625
      %v1627 = vpop.f32.mrf.mxu0
      %1628 = vmatprep.mubr.bf16.mxu0 0
      %1629 = vmatmul.mubr.bf16.gmra.mxu0 %v1439
      %v1630 = vpop.f32.mrf.mxu0
      %v1631 = vadd.f32 0.0, %v1630
      %v1632 = vpop.f32.mrf.mxu0
      %v1633 = vpop.f32.mrf.mxu0
      %v1634 = vadd.f32 0.0, %v1633
      %v1635 = vpop.f32.mrf.mxu0
      %1636 = vmatprep.mubr.bf16.mxu0 0
      %1637 = vmatmul.mubr.bf16.gmra.mxu0 %v1442
      %v1638 = vpop.f32.mrf.mxu0
      %v1639 = vadd.f32 0.0, %v1638
      %v1640 = vpop.f32.mrf.mxu0
      %v1641 = vpop.f32.mrf.mxu0
      %v1642 = vadd.f32 0.0, %v1641
      %v1643 = vpop.f32.mrf.mxu0
      %1644 = vmatprep.mubr.bf16.mxu0 0
      %1645 = vmatmul.mubr.bf16.gmra.mxu0 %v1445
      %v1646 = vpop.f32.mrf.mxu0
      %v1647 = vadd.f32 0.0, %v1646
      %v1648 = vpop.f32.mrf.mxu0
      %v1649 = vpop.f32.mrf.mxu0
      %v1650 = vadd.f32 0.0, %v1649
      %v1651 = vpop.f32.mrf.mxu0
      %1652 = vmatprep.mubr.bf16.mxu0 0
      %1653 = vmatmul.mubr.bf16.gmra.mxu0 %v1448
      %v1654 = vpop.f32.mrf.mxu0
      %v1655 = vadd.f32 0.0, %v1654
      %v1656 = vpop.f32.mrf.mxu0
      %v1657 = vpop.f32.mrf.mxu0
      %v1658 = vadd.f32 0.0, %v1657
      %v1659 = vpop.f32.mrf.mxu0
      %1660 = vmatprep.mubr.bf16.mxu0 0
      %1661 = vmatmul.mubr.bf16.gmra.mxu0 %v1451
      %v1662 = vpop.f32.mrf.mxu0
      %v1663 = vadd.f32 0.0, %v1662
      %v1664 = vpop.f32.mrf.mxu0
      %v1665 = vpop.f32.mrf.mxu0
      %v1666 = vadd.f32 0.0, %v1665
      %v1667 = vpop.f32.mrf.mxu0
      %1668 = vmatprep.mubr.bf16.mxu0 0
      %1669 = vmatmul.mubr.bf16.gmra.mxu0 %v1454
      %v1670 = vpop.f32.mrf.mxu0
      %v1671 = vadd.f32 0.0, %v1670
      %v1672 = vpop.f32.mrf.mxu0
      %v1673 = vpop.f32.mrf.mxu0
      %v1674 = vadd.f32 0.0, %v1673
      %v1675 = vpop.f32.mrf.mxu0
      %1676 = vmatprep.mubr.bf16.mxu0 0
      %1677 = vmatmul.mubr.bf16.gmra.mxu0 %v1457
      %v1678 = vpop.f32.mrf.mxu0
      %v1679 = vadd.f32 0.0, %v1678
      %v1680 = vpop.f32.mrf.mxu0
      %v1681 = vpop.f32.mrf.mxu0
      %v1682 = vadd.f32 0.0, %v1681
      %v1683 = vpop.f32.mrf.mxu0
      %1684 = vmatprep.mubr.bf16.mxu0 0
      %1685 = vmatmul.mubr.bf16.gmra.mxu0 %v1460
      %v1686 = vpop.f32.mrf.mxu0
      %v1687 = vadd.f32 0.0, %v1686
      %v1688 = vpop.f32.mrf.mxu0
      %v1689 = vpop.f32.mrf.mxu0
      %v1690 = vadd.f32 0.0, %v1689
      %v1691 = vpop.f32.mrf.mxu0
      %1692 = vmatprep.mubr.bf16.mxu0 0
      %1693 = vmatmul.mubr.bf16.gmra.mxu0 %v1463
      %v1694 = vpop.f32.mrf.mxu0
      %v1695 = vadd.f32 0.0, %v1694
      %v1696 = vpop.f32.mrf.mxu0
      %v1697 = vpop.f32.mrf.mxu0
      %v1698 = vadd.f32 0.0, %v1697
      %v1699 = vpop.f32.mrf.mxu0
      %1700 = vmatprep.mubr.bf16.mxu0 0
      %1701 = vmatmul.mubr.bf16.gmra.mxu0 %v1466
      %v1702 = vpop.f32.mrf.mxu0
      %v1703 = vadd.f32 0.0, %v1702
      %v1704 = vpop.f32.mrf.mxu0
      %v1705 = vpop.f32.mrf.mxu0
      %v1706 = vadd.f32 0.0, %v1705
      %v1707 = vpop.f32.mrf.mxu0
      %1708 = vdwg.mxu0
      %v1709 = vadd.f32 %v1260, %v1583
      %v1710 = vadd.f32 %v1263, %v1586
      %v1711 = vadd.f32 %v1268, %v1591
      %v1712 = vadd.f32 %v1271, %v1594
      %v1713 = vadd.f32 %v1276, %v1599
      %v1714 = vadd.f32 %v1279, %v1602
      %v1715 = vadd.f32 %v1284, %v1607
      %v1716 = vadd.f32 %v1287, %v1610
      %v1717 = vadd.f32 %v1292, %v1615
      %v1718 = vadd.f32 %v1295, %v1618
      %v1719 = vadd.f32 %v1300, %v1623
      %v1720 = vadd.f32 %v1303, %v1626
      %v1721 = vadd.f32 %v1308, %v1631
      %v1722 = vadd.f32 %v1311, %v1634
      %v1723 = vadd.f32 %v1316, %v1639
      %v1724 = vadd.f32 %v1319, %v1642
      %v1725 = vadd.f32 %v1324, %v1647
      %v1726 = vadd.f32 %v1327, %v1650
      %v1727 = vadd.f32 %v1332, %v1655
      %v1728 = vadd.f32 %v1335, %v1658
      %v1729 = vadd.f32 %v1340, %v1663
      %v1730 = vadd.f32 %v1343, %v1666
      %v1731 = vadd.f32 %v1348, %v1671
      %v1732 = vadd.f32 %v1351, %v1674
      %v1733 = vadd.f32 %v1356, %v1679
      %v1734 = vadd.f32 %v1359, %v1682
      %v1735 = vadd.f32 %v1364, %v1687
      %v1736 = vadd.f32 %v1367, %v1690
      %v1737 = vadd.f32 %v1372, %v1695
      %v1738 = vadd.f32 %v1375, %v1698
      %v1739 = vadd.f32 %v1380, %v1703
      %v1740 = vadd.f32 %v1383, %v1706
      %s1741 = scalar_lea.vmem %s2, 192
      %v1742 = vld [vmem:[%s1741] sm:$0xf]
      %v1743 = vld [vmem:[%s1741 + $0x4] sm:$0xf]
      %v1744 = vld [vmem:[%s1741 + $0x8] sm:$0xf]
      %v1745 = vld [vmem:[%s1741 + $0xc] sm:$0xf]
      %v1746 = vld [vmem:[%s1741 + $0x10] sm:$0xf]
      %v1747 = vld [vmem:[%s1741 + $0x14] sm:$0xf]
      %v1748 = vld [vmem:[%s1741 + $0x18] sm:$0xf]
      %v1749 = vld [vmem:[%s1741 + $0x1c] sm:$0xf]
      %v1750 = vld [vmem:[%s1741 + $0x20] sm:$0xf]
      %v1751 = vld [vmem:[%s1741 + $0x24] sm:$0xf]
      %v1752 = vld [vmem:[%s1741 + $0x28] sm:$0xf]
      %v1753 = vld [vmem:[%s1741 + $0x2c] sm:$0xf]
      %v1754 = vld [vmem:[%s1741 + $0x30] sm:$0xf]
      %v1755 = vld [vmem:[%s1741 + $0x34] sm:$0xf]
      %v1756 = vld [vmem:[%s1741 + $0x38] sm:$0xf]
      %v1757 = vld [vmem:[%s1741 + $0x3c] sm:$0xf]
      %v1774 = vunpack.c.l.b16 %v1742
      %v1775 = vunpack.c.l.b16 %v1743
      %v1776 = vunpack.c.l.b16 %v1744
      %v1777 = vunpack.c.l.b16 %v1745
      %v1778 = vunpack.c.l.b16 %v1746
      %v1779 = vunpack.c.l.b16 %v1747
      %v1780 = vunpack.c.l.b16 %v1748
      %v1781 = vunpack.c.l.b16 %v1749
      %v1782 = vunpack.c.l.b16 %v1750
      %v1783 = vunpack.c.l.b16 %v1751
      %v1784 = vunpack.c.l.b16 %v1752
      %v1785 = vunpack.c.l.b16 %v1753
      %v1786 = vunpack.c.l.b16 %v1754
      %v1787 = vunpack.c.l.b16 %v1755
      %v1788 = vunpack.c.l.b16 %v1756
      %v1789 = vunpack.c.l.b16 %v1757
      %v1790 = vpack.c.b16 %v1775, %v1774
      %v1791 = vpack.c.b16 %v1777, %v1776
      %v1792 = vpack.c.b16 %v1779, %v1778
      %v1793 = vpack.c.b16 %v1781, %v1780
      %v1794 = vpack.c.b16 %v1783, %v1782
      %v1795 = vpack.c.b16 %v1785, %v1784
      %v1796 = vpack.c.b16 %v1787, %v1786
      %v1797 = vpack.c.b16 %v1789, %v1788
      %1806 = vmatprep.subr.bf16.mxu0 0
      %1807 = vmatpush1.bf16.msra.mxu0 %v1797
      %1808 = vmatprep.subr.bf16.mxu0 0
      %1809 = vmatpush1.bf16.msra.mxu0 %v1796
      %1810 = vmatprep.subr.bf16.mxu0 0
      %1811 = vmatpush1.bf16.msra.mxu0 %v1795
      %1812 = vmatprep.subr.bf16.mxu0 0
      %1813 = vmatpush1.bf16.msra.mxu0 %v1794
      %1814 = vmatprep.subr.bf16.mxu0 0
      %1815 = vmatpush1.bf16.msra.mxu0 %v1793
      %1816 = vmatprep.subr.bf16.mxu0 0
      %1817 = vmatpush1.bf16.msra.mxu0 %v1792
      %1818 = vmatprep.subr.bf16.mxu0 0
      %1819 = vmatpush1.bf16.msra.mxu0 %v1791
      %1820 = vmatprep.subr.bf16.mxu0 0
      %1821 = vmatpush1.bf16.msra.mxu0 %v1790
      %1822 = vmatprep.subr.bf16.mxu0 0
      %1823 = vmatpush2.bf16.msra.mxu0 0
      %1824 = vmatprep.subr.bf16.mxu0 0
      %1825 = vmatpush2.bf16.msra.mxu0 0
      %1826 = vmatprep.subr.bf16.mxu0 0
      %1827 = vmatpush2.bf16.msra.mxu0 0
      %1828 = vmatprep.subr.bf16.mxu0 0
      %1829 = vmatpush2.bf16.msra.mxu0 0
      %1830 = vmatprep.subr.bf16.mxu0 0
      %1831 = vmatpush2.bf16.msra.mxu0 0
      %1832 = vmatprep.subr.bf16.mxu0 0
      %1833 = vmatpush2.bf16.msra.mxu0 0
      %1834 = vmatprep.subr.bf16.mxu0 0
      %1835 = vmatpush2.bf16.msra.mxu0 0
      %1836 = vmatprep.subr.bf16.mxu0 0
      %1837 = vmatpush2.bf16.msra.mxu0 0
      %1838 = vmatprep.mubr.bf16.mxu0 0
      %1839 = vmatmul.mubr.bf16.gmra.mxu0 %v692
      %v1840 = vpop.f32.mrf.mxu0
      %v1841 = vadd.f32 0.0, %v1840
      %v1842 = vpop.f32.mrf.mxu0
      %v1843 = vpop.f32.mrf.mxu0
      %v1844 = vadd.f32 0.0, %v1843
      %v1845 = vpop.f32.mrf.mxu0
      %1846 = vmatprep.mubr.bf16.mxu0 0
      %1847 = vmatmul.mubr.bf16.gmra.mxu0 %v694
      %v1848 = vpop.f32.mrf.mxu0
      %v1849 = vadd.f32 0.0, %v1848
      %v1850 = vpop.f32.mrf.mxu0
      %v1851 = vpop.f32.mrf.mxu0
      %v1852 = vadd.f32 0.0, %v1851
      %v1853 = vpop.f32.mrf.mxu0
      %1854 = vmatprep.mubr.bf16.mxu0 0
      %1855 = vmatmul.mubr.bf16.gmra.mxu0 %v696
      %v1856 = vpop.f32.mrf.mxu0
      %v1857 = vadd.f32 0.0, %v1856
      %v1858 = vpop.f32.mrf.mxu0
      %v1859 = vpop.f32.mrf.mxu0
      %v1860 = vadd.f32 0.0, %v1859
      %v1861 = vpop.f32.mrf.mxu0
      %1862 = vmatprep.mubr.bf16.mxu0 0
      %1863 = vmatmul.mubr.bf16.gmra.mxu0 %v698
      %v1864 = vpop.f32.mrf.mxu0
      %v1865 = vadd.f32 0.0, %v1864
      %v1866 = vpop.f32.mrf.mxu0
      %v1867 = vpop.f32.mrf.mxu0
      %v1868 = vadd.f32 0.0, %v1867
      %v1869 = vpop.f32.mrf.mxu0
      %1870 = vmatprep.mubr.bf16.mxu0 0
      %1871 = vmatmul.mubr.bf16.gmra.mxu0 %v700
      %v1872 = vpop.f32.mrf.mxu0
      %v1873 = vadd.f32 0.0, %v1872
      %v1874 = vpop.f32.mrf.mxu0
      %v1875 = vpop.f32.mrf.mxu0
      %v1876 = vadd.f32 0.0, %v1875
      %v1877 = vpop.f32.mrf.mxu0
      %1878 = vmatprep.mubr.bf16.mxu0 0
      %1879 = vmatmul.mubr.bf16.gmra.mxu0 %v702
      %v1880 = vpop.f32.mrf.mxu0
      %v1881 = vadd.f32 0.0, %v1880
      %v1882 = vpop.f32.mrf.mxu0
      %v1883 = vpop.f32.mrf.mxu0
      %v1884 = vadd.f32 0.0, %v1883
      %v1885 = vpop.f32.mrf.mxu0
      %1886 = vmatprep.mubr.bf16.mxu0 0
      %1887 = vmatmul.mubr.bf16.gmra.mxu0 %v704
      %v1888 = vpop.f32.mrf.mxu0
      %v1889 = vadd.f32 0.0, %v1888
      %v1890 = vpop.f32.mrf.mxu0
      %v1891 = vpop.f32.mrf.mxu0
      %v1892 = vadd.f32 0.0, %v1891
      %v1893 = vpop.f32.mrf.mxu0
      %1894 = vmatprep.mubr.bf16.mxu0 0
      %1895 = vmatmul.mubr.bf16.gmra.mxu0 %v706
      %v1896 = vpop.f32.mrf.mxu0
      %v1897 = vadd.f32 0.0, %v1896
      %v1898 = vpop.f32.mrf.mxu0
      %v1899 = vpop.f32.mrf.mxu0
      %v1900 = vadd.f32 0.0, %v1899
      %v1901 = vpop.f32.mrf.mxu0
      %1902 = vmatprep.mubr.bf16.mxu0 0
      %1903 = vmatmul.mubr.bf16.gmra.mxu0 %v708
      %v1904 = vpop.f32.mrf.mxu0
      %v1905 = vadd.f32 0.0, %v1904
      %v1906 = vpop.f32.mrf.mxu0
      %v1907 = vpop.f32.mrf.mxu0
      %v1908 = vadd.f32 0.0, %v1907
      %v1909 = vpop.f32.mrf.mxu0
      %1910 = vmatprep.mubr.bf16.mxu0 0
      %1911 = vmatmul.mubr.bf16.gmra.mxu0 %v710
      %v1912 = vpop.f32.mrf.mxu0
      %v1913 = vadd.f32 0.0, %v1912
      %v1914 = vpop.f32.mrf.mxu0
      %v1915 = vpop.f32.mrf.mxu0
      %v1916 = vadd.f32 0.0, %v1915
      %v1917 = vpop.f32.mrf.mxu0
      %1918 = vmatprep.mubr.bf16.mxu0 0
      %1919 = vmatmul.mubr.bf16.gmra.mxu0 %v712
      %v1920 = vpop.f32.mrf.mxu0
      %v1921 = vadd.f32 0.0, %v1920
      %v1922 = vpop.f32.mrf.mxu0
      %v1923 = vpop.f32.mrf.mxu0
      %v1924 = vadd.f32 0.0, %v1923
      %v1925 = vpop.f32.mrf.mxu0
      %1926 = vmatprep.mubr.bf16.mxu0 0
      %1927 = vmatmul.mubr.bf16.gmra.mxu0 %v714
      %v1928 = vpop.f32.mrf.mxu0
      %v1929 = vadd.f32 0.0, %v1928
      %v1930 = vpop.f32.mrf.mxu0
      %v1931 = vpop.f32.mrf.mxu0
      %v1932 = vadd.f32 0.0, %v1931
      %v1933 = vpop.f32.mrf.mxu0
      %1934 = vmatprep.mubr.bf16.mxu0 0
      %1935 = vmatmul.mubr.bf16.gmra.mxu0 %v716
      %v1936 = vpop.f32.mrf.mxu0
      %v1937 = vadd.f32 0.0, %v1936
      %v1938 = vpop.f32.mrf.mxu0
      %v1939 = vpop.f32.mrf.mxu0
      %v1940 = vadd.f32 0.0, %v1939
      %v1941 = vpop.f32.mrf.mxu0
      %1942 = vmatprep.mubr.bf16.mxu0 0
      %1943 = vmatmul.mubr.bf16.gmra.mxu0 %v718
      %v1944 = vpop.f32.mrf.mxu0
      %v1945 = vadd.f32 0.0, %v1944
      %v1946 = vpop.f32.mrf.mxu0
      %v1947 = vpop.f32.mrf.mxu0
      %v1948 = vadd.f32 0.0, %v1947
      %v1949 = vpop.f32.mrf.mxu0
      %1950 = vmatprep.mubr.bf16.mxu0 0
      %1951 = vmatmul.mubr.bf16.gmra.mxu0 %v720
      %v1952 = vpop.f32.mrf.mxu0
      %v1953 = vadd.f32 0.0, %v1952
      %v1954 = vpop.f32.mrf.mxu0
      %v1955 = vpop.f32.mrf.mxu0
      %v1956 = vadd.f32 0.0, %v1955
      %v1957 = vpop.f32.mrf.mxu0
      %1958 = vmatprep.mubr.bf16.mxu0 0
      %1959 = vmatmul.mubr.bf16.gmra.mxu0 %v722
      %v1960 = vpop.f32.mrf.mxu0
      %v1961 = vadd.f32 0.0, %v1960
      %v1962 = vpop.f32.mrf.mxu0
      %v1963 = vpop.f32.mrf.mxu0
      %v1964 = vadd.f32 0.0, %v1963
      %v1965 = vpop.f32.mrf.mxu0
      %1966 = vdwg.mxu0
      %v1967 = vadd.f32 %v1709, %v1841
      %v1968 = vadd.f32 %v1710, %v1844
      %v1969 = vadd.f32 %v1711, %v1849
      %v1970 = vadd.f32 %v1712, %v1852
      %v1971 = vadd.f32 %v1713, %v1857
      %v1972 = vadd.f32 %v1714, %v1860
      %v1973 = vadd.f32 %v1715, %v1865
      %v1974 = vadd.f32 %v1716, %v1868
      %v1975 = vadd.f32 %v1717, %v1873
      %v1976 = vadd.f32 %v1718, %v1876
      %v1977 = vadd.f32 %v1719, %v1881
      %v1978 = vadd.f32 %v1720, %v1884
      %v1979 = vadd.f32 %v1721, %v1889
      %v1980 = vadd.f32 %v1722, %v1892
      %v1981 = vadd.f32 %v1723, %v1897
      %v1982 = vadd.f32 %v1724, %v1900
      %v1983 = vadd.f32 %v1725, %v1905
      %v1984 = vadd.f32 %v1726, %v1908
      %v1985 = vadd.f32 %v1727, %v1913
      %v1986 = vadd.f32 %v1728, %v1916
      %v1987 = vadd.f32 %v1729, %v1921
      %v1988 = vadd.f32 %v1730, %v1924
      %v1989 = vadd.f32 %v1731, %v1929
      %v1990 = vadd.f32 %v1732, %v1932
      %v1991 = vadd.f32 %v1733, %v1937
      %v1992 = vadd.f32 %v1734, %v1940
      %v1993 = vadd.f32 %v1735, %v1945
      %v1994 = vadd.f32 %v1736, %v1948
      %v1995 = vadd.f32 %v1737, %v1953
      %v1996 = vadd.f32 %v1738, %v1956
      %v1997 = vadd.f32 %v1739, %v1961
      %v1998 = vadd.f32 %v1740, %v1964
      %v2000 = vshrl.u32 %v722, 16
      %v2002 = vshll.u32 %v722, 16
      %v2004 = vrot.slane %v2002, 1
      %v2005 = vor.u32 %v2000, %v2004
      %v2007 = vshll.u32 %v723, 16
      %v2009 = vrot.slane %v2007, 1
      %v2010 = vsel %vm742, %v2005, %v2009
      %s2012 = scalar_lea.vmem %s2, 256
      %v2013 = vld [vmem:[%s2012] sm:$0xf]
      %v2014 = vld [vmem:[%s2012 + $0x4] sm:$0xf]
      %v2015 = vld [vmem:[%s2012 + $0x8] sm:$0xf]
      %v2016 = vld [vmem:[%s2012 + $0xc] sm:$0xf]
      %v2017 = vld [vmem:[%s2012 + $0x10] sm:$0xf]
      %v2018 = vld [vmem:[%s2012 + $0x14] sm:$0xf]
      %v2019 = vld [vmem:[%s2012 + $0x18] sm:$0xf]
      %v2020 = vld [vmem:[%s2012 + $0x1c] sm:$0xf]
      %v2021 = vld [vmem:[%s2012 + $0x20] sm:$0xf]
      %v2022 = vld [vmem:[%s2012 + $0x24] sm:$0xf]
      %v2023 = vld [vmem:[%s2012 + $0x28] sm:$0xf]
      %v2024 = vld [vmem:[%s2012 + $0x2c] sm:$0xf]
      %v2025 = vld [vmem:[%s2012 + $0x30] sm:$0xf]
      %v2026 = vld [vmem:[%s2012 + $0x34] sm:$0xf]
      %v2027 = vld [vmem:[%s2012 + $0x38] sm:$0xf]
      %v2028 = vld [vmem:[%s2012 + $0x3c] sm:$0xf]
      %v2045 = vunpack.c.l.b16 %v2013
      %v2046 = vunpack.c.l.b16 %v2014
      %v2047 = vunpack.c.l.b16 %v2015
      %v2048 = vunpack.c.l.b16 %v2016
      %v2049 = vunpack.c.l.b16 %v2017
      %v2050 = vunpack.c.l.b16 %v2018
      %v2051 = vunpack.c.l.b16 %v2019
      %v2052 = vunpack.c.l.b16 %v2020
      %v2053 = vunpack.c.l.b16 %v2021
      %v2054 = vunpack.c.l.b16 %v2022
      %v2055 = vunpack.c.l.b16 %v2023
      %v2056 = vunpack.c.l.b16 %v2024
      %v2057 = vunpack.c.l.b16 %v2025
      %v2058 = vunpack.c.l.b16 %v2026
      %v2059 = vunpack.c.l.b16 %v2027
      %v2060 = vunpack.c.l.b16 %v2028
      %v2061 = vpack.c.b16 %v2046, %v2045
      %v2062 = vpack.c.b16 %v2048, %v2047
      %v2063 = vpack.c.b16 %v2050, %v2049
      %v2064 = vpack.c.b16 %v2052, %v2051
      %v2065 = vpack.c.b16 %v2054, %v2053
      %v2066 = vpack.c.b16 %v2056, %v2055
      %v2067 = vpack.c.b16 %v2058, %v2057
      %v2068 = vpack.c.b16 %v2060, %v2059
      %2077 = vmatprep.subr.bf16.mxu0 0
      %2078 = vmatpush1.bf16.msra.mxu0 %v2068
      %2079 = vmatprep.subr.bf16.mxu0 0
      %2080 = vmatpush1.bf16.msra.mxu0 %v2067
      %2081 = vmatprep.subr.bf16.mxu0 0
      %2082 = vmatpush1.bf16.msra.mxu0 %v2066
      %2083 = vmatprep.subr.bf16.mxu0 0
      %2084 = vmatpush1.bf16.msra.mxu0 %v2065
      %2085 = vmatprep.subr.bf16.mxu0 0
      %2086 = vmatpush1.bf16.msra.mxu0 %v2064
      %2087 = vmatprep.subr.bf16.mxu0 0
      %2088 = vmatpush1.bf16.msra.mxu0 %v2063
      %2089 = vmatprep.subr.bf16.mxu0 0
      %2090 = vmatpush1.bf16.msra.mxu0 %v2062
      %2091 = vmatprep.subr.bf16.mxu0 0
      %2092 = vmatpush1.bf16.msra.mxu0 %v2061
      %2093 = vmatprep.subr.bf16.mxu0 0
      %2094 = vmatpush2.bf16.msra.mxu0 0
      %2095 = vmatprep.subr.bf16.mxu0 0
      %2096 = vmatpush2.bf16.msra.mxu0 0
      %2097 = vmatprep.subr.bf16.mxu0 0
      %2098 = vmatpush2.bf16.msra.mxu0 0
      %2099 = vmatprep.subr.bf16.mxu0 0
      %2100 = vmatpush2.bf16.msra.mxu0 0
      %2101 = vmatprep.subr.bf16.mxu0 0
      %2102 = vmatpush2.bf16.msra.mxu0 0
      %2103 = vmatprep.subr.bf16.mxu0 0
      %2104 = vmatpush2.bf16.msra.mxu0 0
      %2105 = vmatprep.subr.bf16.mxu0 0
      %2106 = vmatpush2.bf16.msra.mxu0 0
      %2107 = vmatprep.subr.bf16.mxu0 0
      %2108 = vmatpush2.bf16.msra.mxu0 0
      %2109 = vmatprep.mubr.bf16.mxu0 0
      %2110 = vmatmul.mubr.bf16.gmra.mxu0 %v766
      %v2111 = vpop.f32.mrf.mxu0
      %v2112 = vadd.f32 0.0, %v2111
      %v2113 = vpop.f32.mrf.mxu0
      %v2114 = vpop.f32.mrf.mxu0
      %v2115 = vadd.f32 0.0, %v2114
      %v2116 = vpop.f32.mrf.mxu0
      %2117 = vmatprep.mubr.bf16.mxu0 0
      %2118 = vmatmul.mubr.bf16.gmra.mxu0 %v778
      %v2119 = vpop.f32.mrf.mxu0
      %v2120 = vadd.f32 0.0, %v2119
      %v2121 = vpop.f32.mrf.mxu0
      %v2122 = vpop.f32.mrf.mxu0
      %v2123 = vadd.f32 0.0, %v2122
      %v2124 = vpop.f32.mrf.mxu0
      %2125 = vmatprep.mubr.bf16.mxu0 0
      %2126 = vmatmul.mubr.bf16.gmra.mxu0 %v790
      %v2127 = vpop.f32.mrf.mxu0
      %v2128 = vadd.f32 0.0, %v2127
      %v2129 = vpop.f32.mrf.mxu0
      %v2130 = vpop.f32.mrf.mxu0
      %v2131 = vadd.f32 0.0, %v2130
      %v2132 = vpop.f32.mrf.mxu0
      %2133 = vmatprep.mubr.bf16.mxu0 0
      %2134 = vmatmul.mubr.bf16.gmra.mxu0 %v802
      %v2135 = vpop.f32.mrf.mxu0
      %v2136 = vadd.f32 0.0, %v2135
      %v2137 = vpop.f32.mrf.mxu0
      %v2138 = vpop.f32.mrf.mxu0
      %v2139 = vadd.f32 0.0, %v2138
      %v2140 = vpop.f32.mrf.mxu0
      %2141 = vmatprep.mubr.bf16.mxu0 0
      %2142 = vmatmul.mubr.bf16.gmra.mxu0 %v814
      %v2143 = vpop.f32.mrf.mxu0
      %v2144 = vadd.f32 0.0, %v2143
      %v2145 = vpop.f32.mrf.mxu0
      %v2146 = vpop.f32.mrf.mxu0
      %v2147 = vadd.f32 0.0, %v2146
      %v2148 = vpop.f32.mrf.mxu0
      %2149 = vmatprep.mubr.bf16.mxu0 0
      %2150 = vmatmul.mubr.bf16.gmra.mxu0 %v826
      %v2151 = vpop.f32.mrf.mxu0
      %v2152 = vadd.f32 0.0, %v2151
      %v2153 = vpop.f32.mrf.mxu0
      %v2154 = vpop.f32.mrf.mxu0
      %v2155 = vadd.f32 0.0, %v2154
      %v2156 = vpop.f32.mrf.mxu0
      %2157 = vmatprep.mubr.bf16.mxu0 0
      %2158 = vmatmul.mubr.bf16.gmra.mxu0 %v838
      %v2159 = vpop.f32.mrf.mxu0
      %v2160 = vadd.f32 0.0, %v2159
      %v2161 = vpop.f32.mrf.mxu0
      %v2162 = vpop.f32.mrf.mxu0
      %v2163 = vadd.f32 0.0, %v2162
      %v2164 = vpop.f32.mrf.mxu0
      %2165 = vmatprep.mubr.bf16.mxu0 0
      %2166 = vmatmul.mubr.bf16.gmra.mxu0 %v850
      %v2167 = vpop.f32.mrf.mxu0
      %v2168 = vadd.f32 0.0, %v2167
      %v2169 = vpop.f32.mrf.mxu0
      %v2170 = vpop.f32.mrf.mxu0
      %v2171 = vadd.f32 0.0, %v2170
      %v2172 = vpop.f32.mrf.mxu0
      %2173 = vmatprep.mubr.bf16.mxu0 0
      %2174 = vmatmul.mubr.bf16.gmra.mxu0 %v862
      %v2175 = vpop.f32.mrf.mxu0
      %v2176 = vadd.f32 0.0, %v2175
      %v2177 = vpop.f32.mrf.mxu0
      %v2178 = vpop.f32.mrf.mxu0
      %v2179 = vadd.f32 0.0, %v2178
      %v2180 = vpop.f32.mrf.mxu0
      %2181 = vmatprep.mubr.bf16.mxu0 0
      %2182 = vmatmul.mubr.bf16.gmra.mxu0 %v874
      %v2183 = vpop.f32.mrf.mxu0
      %v2184 = vadd.f32 0.0, %v2183
      %v2185 = vpop.f32.mrf.mxu0
      %v2186 = vpop.f32.mrf.mxu0
      %v2187 = vadd.f32 0.0, %v2186
      %v2188 = vpop.f32.mrf.mxu0
      %2189 = vmatprep.mubr.bf16.mxu0 0
      %2190 = vmatmul.mubr.bf16.gmra.mxu0 %v886
      %v2191 = vpop.f32.mrf.mxu0
      %v2192 = vadd.f32 0.0, %v2191
      %v2193 = vpop.f32.mrf.mxu0
      %v2194 = vpop.f32.mrf.mxu0
      %v2195 = vadd.f32 0.0, %v2194
      %v2196 = vpop.f32.mrf.mxu0
      %2197 = vmatprep.mubr.bf16.mxu0 0
      %2198 = vmatmul.mubr.bf16.gmra.mxu0 %v898
      %v2199 = vpop.f32.mrf.mxu0
      %v2200 = vadd.f32 0.0, %v2199
      %v2201 = vpop.f32.mrf.mxu0
      %v2202 = vpop.f32.mrf.mxu0
      %v2203 = vadd.f32 0.0, %v2202
      %v2204 = vpop.f32.mrf.mxu0
      %2205 = vmatprep.mubr.bf16.mxu0 0
      %2206 = vmatmul.mubr.bf16.gmra.mxu0 %v910
      %v2207 = vpop.f32.mrf.mxu0
      %v2208 = vadd.f32 0.0, %v2207
      %v2209 = vpop.f32.mrf.mxu0
      %v2210 = vpop.f32.mrf.mxu0
      %v2211 = vadd.f32 0.0, %v2210
      %v2212 = vpop.f32.mrf.mxu0
      %2213 = vmatprep.mubr.bf16.mxu0 0
      %2214 = vmatmul.mubr.bf16.gmra.mxu0 %v922
      %v2215 = vpop.f32.mrf.mxu0
      %v2216 = vadd.f32 0.0, %v2215
      %v2217 = vpop.f32.mrf.mxu0
      %v2218 = vpop.f32.mrf.mxu0
      %v2219 = vadd.f32 0.0, %v2218
      %v2220 = vpop.f32.mrf.mxu0
      %2221 = vmatprep.mubr.bf16.mxu0 0
      %2222 = vmatmul.mubr.bf16.gmra.mxu0 %v934
      %v2223 = vpop.f32.mrf.mxu0
      %v2224 = vadd.f32 0.0, %v2223
      %v2225 = vpop.f32.mrf.mxu0
      %v2226 = vpop.f32.mrf.mxu0
      %v2227 = vadd.f32 0.0, %v2226
      %v2228 = vpop.f32.mrf.mxu0
      %2229 = vmatprep.mubr.bf16.mxu0 0
      %2230 = vmatmul.mubr.bf16.gmra.mxu0 %v2010
      %v2231 = vpop.f32.mrf.mxu0
      %v2232 = vadd.f32 0.0, %v2231
      %v2233 = vpop.f32.mrf.mxu0
      %v2234 = vpop.f32.mrf.mxu0
      %v2235 = vadd.f32 0.0, %v2234
      %v2236 = vpop.f32.mrf.mxu0
      %2237 = vdwg.mxu0
      %v2238 = vadd.f32 %v1967, %v2112
      %v2239 = vadd.f32 %v1968, %v2115
      %v2240 = vadd.f32 %v1969, %v2120
      %v2241 = vadd.f32 %v1970, %v2123
      %v2242 = vadd.f32 %v1971, %v2128
      %v2243 = vadd.f32 %v1972, %v2131
      %v2244 = vadd.f32 %v1973, %v2136
      %v2245 = vadd.f32 %v1974, %v2139
      %v2246 = vadd.f32 %v1975, %v2144
      %v2247 = vadd.f32 %v1976, %v2147
      %v2248 = vadd.f32 %v1977, %v2152
      %v2249 = vadd.f32 %v1978, %v2155
      %v2250 = vadd.f32 %v1979, %v2160
      %v2251 = vadd.f32 %v1980, %v2163
      %v2252 = vadd.f32 %v1981, %v2168
      %v2253 = vadd.f32 %v1982, %v2171
      %v2254 = vadd.f32 %v1983, %v2176
      %v2255 = vadd.f32 %v1984, %v2179
      %v2256 = vadd.f32 %v1985, %v2184
      %v2257 = vadd.f32 %v1986, %v2187
      %v2258 = vadd.f32 %v1987, %v2192
      %v2259 = vadd.f32 %v1988, %v2195
      %v2260 = vadd.f32 %v1989, %v2200
      %v2261 = vadd.f32 %v1990, %v2203
      %v2262 = vadd.f32 %v1991, %v2208
      %v2263 = vadd.f32 %v1992, %v2211
      %v2264 = vadd.f32 %v1993, %v2216
      %v2265 = vadd.f32 %v1994, %v2219
      %v2266 = vadd.f32 %v1995, %v2224
      %v2267 = vadd.f32 %v1996, %v2227
      %v2268 = vadd.f32 %v1997, %v2232
      %v2269 = vadd.f32 %v1998, %v2235
      %v2272 = vrot.slane %v722, 1
      %v2273 = vrot.slane %v723, 1
      %v2274 = vsel %vm1418, %v2272, %v2273
      %s2276 = scalar_lea.vmem %s2, 320
      %v2277 = vld [vmem:[%s2276] sm:$0xf]
      %v2278 = vld [vmem:[%s2276 + $0x4] sm:$0xf]
      %v2279 = vld [vmem:[%s2276 + $0x8] sm:$0xf]
      %v2280 = vld [vmem:[%s2276 + $0xc] sm:$0xf]
      %v2281 = vld [vmem:[%s2276 + $0x10] sm:$0xf]
      %v2282 = vld [vmem:[%s2276 + $0x14] sm:$0xf]
      %v2283 = vld [vmem:[%s2276 + $0x18] sm:$0xf]
      %v2284 = vld [vmem:[%s2276 + $0x1c] sm:$0xf]
      %v2285 = vld [vmem:[%s2276 + $0x20] sm:$0xf]
      %v2286 = vld [vmem:[%s2276 + $0x24] sm:$0xf]
      %v2287 = vld [vmem:[%s2276 + $0x28] sm:$0xf]
      %v2288 = vld [vmem:[%s2276 + $0x2c] sm:$0xf]
      %v2289 = vld [vmem:[%s2276 + $0x30] sm:$0xf]
      %v2290 = vld [vmem:[%s2276 + $0x34] sm:$0xf]
      %v2291 = vld [vmem:[%s2276 + $0x38] sm:$0xf]
      %v2292 = vld [vmem:[%s2276 + $0x3c] sm:$0xf]
      %v2309 = vunpack.c.l.b16 %v2277
      %v2310 = vunpack.c.l.b16 %v2278
      %v2311 = vunpack.c.l.b16 %v2279
      %v2312 = vunpack.c.l.b16 %v2280
      %v2313 = vunpack.c.l.b16 %v2281
      %v2314 = vunpack.c.l.b16 %v2282
      %v2315 = vunpack.c.l.b16 %v2283
      %v2316 = vunpack.c.l.b16 %v2284
      %v2317 = vunpack.c.l.b16 %v2285
      %v2318 = vunpack.c.l.b16 %v2286
      %v2319 = vunpack.c.l.b16 %v2287
      %v2320 = vunpack.c.l.b16 %v2288
      %v2321 = vunpack.c.l.b16 %v2289
      %v2322 = vunpack.c.l.b16 %v2290
      %v2323 = vunpack.c.l.b16 %v2291
      %v2324 = vunpack.c.l.b16 %v2292
      %v2325 = vpack.c.b16 %v2310, %v2309
      %v2326 = vpack.c.b16 %v2312, %v2311
      %v2327 = vpack.c.b16 %v2314, %v2313
      %v2328 = vpack.c.b16 %v2316, %v2315
      %v2329 = vpack.c.b16 %v2318, %v2317
      %v2330 = vpack.c.b16 %v2320, %v2319
      %v2331 = vpack.c.b16 %v2322, %v2321
      %v2332 = vpack.c.b16 %v2324, %v2323
      %2341 = vmatprep.subr.bf16.mxu0 0
      %2342 = vmatpush1.bf16.msra.mxu0 %v2332
      %2343 = vmatprep.subr.bf16.mxu0 0
      %2344 = vmatpush1.bf16.msra.mxu0 %v2331
      %2345 = vmatprep.subr.bf16.mxu0 0
      %2346 = vmatpush1.bf16.msra.mxu0 %v2330
      %2347 = vmatprep.subr.bf16.mxu0 0
      %2348 = vmatpush1.bf16.msra.mxu0 %v2329
      %2349 = vmatprep.subr.bf16.mxu0 0
      %2350 = vmatpush1.bf16.msra.mxu0 %v2328
      %2351 = vmatprep.subr.bf16.mxu0 0
      %2352 = vmatpush1.bf16.msra.mxu0 %v2327
      %2353 = vmatprep.subr.bf16.mxu0 0
      %2354 = vmatpush1.bf16.msra.mxu0 %v2326
      %2355 = vmatprep.subr.bf16.mxu0 0
      %2356 = vmatpush1.bf16.msra.mxu0 %v2325
      %2357 = vmatprep.subr.bf16.mxu0 0
      %2358 = vmatpush2.bf16.msra.mxu0 0
      %2359 = vmatprep.subr.bf16.mxu0 0
      %2360 = vmatpush2.bf16.msra.mxu0 0
      %2361 = vmatprep.subr.bf16.mxu0 0
      %2362 = vmatpush2.bf16.msra.mxu0 0
      %2363 = vmatprep.subr.bf16.mxu0 0
      %2364 = vmatpush2.bf16.msra.mxu0 0
      %2365 = vmatprep.subr.bf16.mxu0 0
      %2366 = vmatpush2.bf16.msra.mxu0 0
      %2367 = vmatprep.subr.bf16.mxu0 0
      %2368 = vmatpush2.bf16.msra.mxu0 0
      %2369 = vmatprep.subr.bf16.mxu0 0
      %2370 = vmatpush2.bf16.msra.mxu0 0
      %2371 = vmatprep.subr.bf16.mxu0 0
      %2372 = vmatpush2.bf16.msra.mxu0 0
      %2373 = vmatprep.mubr.bf16.mxu0 0
      %2374 = vmatmul.mubr.bf16.gmra.mxu0 %v1424
      %v2375 = vpop.f32.mrf.mxu0
      %v2376 = vadd.f32 0.0, %v2375
      %v2377 = vpop.f32.mrf.mxu0
      %v2378 = vpop.f32.mrf.mxu0
      %v2379 = vadd.f32 0.0, %v2378
      %v2380 = vpop.f32.mrf.mxu0
      %2381 = vmatprep.mubr.bf16.mxu0 0
      %2382 = vmatmul.mubr.bf16.gmra.mxu0 %v1427
      %v2383 = vpop.f32.mrf.mxu0
      %v2384 = vadd.f32 0.0, %v2383
      %v2385 = vpop.f32.mrf.mxu0
      %v2386 = vpop.f32.mrf.mxu0
      %v2387 = vadd.f32 0.0, %v2386
      %v2388 = vpop.f32.mrf.mxu0
      %2389 = vmatprep.mubr.bf16.mxu0 0
      %2390 = vmatmul.mubr.bf16.gmra.mxu0 %v1430
      %v2391 = vpop.f32.mrf.mxu0
      %v2392 = vadd.f32 0.0, %v2391
      %v2393 = vpop.f32.mrf.mxu0
      %v2394 = vpop.f32.mrf.mxu0
      %v2395 = vadd.f32 0.0, %v2394
      %v2396 = vpop.f32.mrf.mxu0
      %2397 = vmatprep.mubr.bf16.mxu0 0
      %2398 = vmatmul.mubr.bf16.gmra.mxu0 %v1433
      %v2399 = vpop.f32.mrf.mxu0
      %v2400 = vadd.f32 0.0, %v2399
      %v2401 = vpop.f32.mrf.mxu0
      %v2402 = vpop.f32.mrf.mxu0
      %v2403 = vadd.f32 0.0, %v2402
      %v2404 = vpop.f32.mrf.mxu0
      %2405 = vmatprep.mubr.bf16.mxu0 0
      %2406 = vmatmul.mubr.bf16.gmra.mxu0 %v1436
      %v2407 = vpop.f32.mrf.mxu0
      %v2408 = vadd.f32 0.0, %v2407
      %v2409 = vpop.f32.mrf.mxu0
      %v2410 = vpop.f32.mrf.mxu0
      %v2411 = vadd.f32 0.0, %v2410
      %v2412 = vpop.f32.mrf.mxu0
      %2413 = vmatprep.mubr.bf16.mxu0 0
      %2414 = vmatmul.mubr.bf16.gmra.mxu0 %v1439
      %v2415 = vpop.f32.mrf.mxu0
      %v2416 = vadd.f32 0.0, %v2415
      %v2417 = vpop.f32.mrf.mxu0
      %v2418 = vpop.f32.mrf.mxu0
      %v2419 = vadd.f32 0.0, %v2418
      %v2420 = vpop.f32.mrf.mxu0
      %2421 = vmatprep.mubr.bf16.mxu0 0
      %2422 = vmatmul.mubr.bf16.gmra.mxu0 %v1442
      %v2423 = vpop.f32.mrf.mxu0
      %v2424 = vadd.f32 0.0, %v2423
      %v2425 = vpop.f32.mrf.mxu0
      %v2426 = vpop.f32.mrf.mxu0
      %v2427 = vadd.f32 0.0, %v2426
      %v2428 = vpop.f32.mrf.mxu0
      %2429 = vmatprep.mubr.bf16.mxu0 0
      %2430 = vmatmul.mubr.bf16.gmra.mxu0 %v1445
      %v2431 = vpop.f32.mrf.mxu0
      %v2432 = vadd.f32 0.0, %v2431
      %v2433 = vpop.f32.mrf.mxu0
      %v2434 = vpop.f32.mrf.mxu0
      %v2435 = vadd.f32 0.0, %v2434
      %v2436 = vpop.f32.mrf.mxu0
      %2437 = vmatprep.mubr.bf16.mxu0 0
      %2438 = vmatmul.mubr.bf16.gmra.mxu0 %v1448
      %v2439 = vpop.f32.mrf.mxu0
      %v2440 = vadd.f32 0.0, %v2439
      %v2441 = vpop.f32.mrf.mxu0
      %v2442 = vpop.f32.mrf.mxu0
      %v2443 = vadd.f32 0.0, %v2442
      %v2444 = vpop.f32.mrf.mxu0
      %2445 = vmatprep.mubr.bf16.mxu0 0
      %2446 = vmatmul.mubr.bf16.gmra.mxu0 %v1451
      %v2447 = vpop.f32.mrf.mxu0
      %v2448 = vadd.f32 0.0, %v2447
      %v2449 = vpop.f32.mrf.mxu0
      %v2450 = vpop.f32.mrf.mxu0
      %v2451 = vadd.f32 0.0, %v2450
      %v2452 = vpop.f32.mrf.mxu0
      %2453 = vmatprep.mubr.bf16.mxu0 0
      %2454 = vmatmul.mubr.bf16.gmra.mxu0 %v1454
      %v2455 = vpop.f32.mrf.mxu0
      %v2456 = vadd.f32 0.0, %v2455
      %v2457 = vpop.f32.mrf.mxu0
      %v2458 = vpop.f32.mrf.mxu0
      %v2459 = vadd.f32 0.0, %v2458
      %v2460 = vpop.f32.mrf.mxu0
      %2461 = vmatprep.mubr.bf16.mxu0 0
      %2462 = vmatmul.mubr.bf16.gmra.mxu0 %v1457
      %v2463 = vpop.f32.mrf.mxu0
      %v2464 = vadd.f32 0.0, %v2463
      %v2465 = vpop.f32.mrf.mxu0
      %v2466 = vpop.f32.mrf.mxu0
      %v2467 = vadd.f32 0.0, %v2466
      %v2468 = vpop.f32.mrf.mxu0
      %2469 = vmatprep.mubr.bf16.mxu0 0
      %2470 = vmatmul.mubr.bf16.gmra.mxu0 %v1460
      %v2471 = vpop.f32.mrf.mxu0
      %v2472 = vadd.f32 0.0, %v2471
      %v2473 = vpop.f32.mrf.mxu0
      %v2474 = vpop.f32.mrf.mxu0
      %v2475 = vadd.f32 0.0, %v2474
      %v2476 = vpop.f32.mrf.mxu0
      %2477 = vmatprep.mubr.bf16.mxu0 0
      %2478 = vmatmul.mubr.bf16.gmra.mxu0 %v1463
      %v2479 = vpop.f32.mrf.mxu0
      %v2480 = vadd.f32 0.0, %v2479
      %v2481 = vpop.f32.mrf.mxu0
      %v2482 = vpop.f32.mrf.mxu0
      %v2483 = vadd.f32 0.0, %v2482
      %v2484 = vpop.f32.mrf.mxu0
      %2485 = vmatprep.mubr.bf16.mxu0 0
      %2486 = vmatmul.mubr.bf16.gmra.mxu0 %v1466
      %v2487 = vpop.f32.mrf.mxu0
      %v2488 = vadd.f32 0.0, %v2487
      %v2489 = vpop.f32.mrf.mxu0
      %v2490 = vpop.f32.mrf.mxu0
      %v2491 = vadd.f32 0.0, %v2490
      %v2492 = vpop.f32.mrf.mxu0
      %2493 = vmatprep.mubr.bf16.mxu0 0
      %2494 = vmatmul.mubr.bf16.gmra.mxu0 %v2274
      %v2495 = vpop.f32.mrf.mxu0
      %v2496 = vadd.f32 0.0, %v2495
      %v2497 = vpop.f32.mrf.mxu0
      %v2498 = vpop.f32.mrf.mxu0
      %v2499 = vadd.f32 0.0, %v2498
      %v2500 = vpop.f32.mrf.mxu0
      %2501 = vdwg.mxu0
      %v2502 = vadd.f32 %v2238, %v2376
      %v2503 = vadd.f32 %v2239, %v2379
      %v2504 = vadd.f32 %v2240, %v2384
      %v2505 = vadd.f32 %v2241, %v2387
      %v2506 = vadd.f32 %v2242, %v2392
      %v2507 = vadd.f32 %v2243, %v2395
      %v2508 = vadd.f32 %v2244, %v2400
      %v2509 = vadd.f32 %v2245, %v2403
      %v2510 = vadd.f32 %v2246, %v2408
      %v2511 = vadd.f32 %v2247, %v2411
      %v2512 = vadd.f32 %v2248, %v2416
      %v2513 = vadd.f32 %v2249, %v2419
      %v2514 = vadd.f32 %v2250, %v2424
      %v2515 = vadd.f32 %v2251, %v2427
      %v2516 = vadd.f32 %v2252, %v2432
      %v2517 = vadd.f32 %v2253, %v2435
      %v2518 = vadd.f32 %v2254, %v2440
      %v2519 = vadd.f32 %v2255, %v2443
      %v2520 = vadd.f32 %v2256, %v2448
      %v2521 = vadd.f32 %v2257, %v2451
      %v2522 = vadd.f32 %v2258, %v2456
      %v2523 = vadd.f32 %v2259, %v2459
      %v2524 = vadd.f32 %v2260, %v2464
      %v2525 = vadd.f32 %v2261, %v2467
      %v2526 = vadd.f32 %v2262, %v2472
      %v2527 = vadd.f32 %v2263, %v2475
      %v2528 = vadd.f32 %v2264, %v2480
      %v2529 = vadd.f32 %v2265, %v2483
      %v2530 = vadd.f32 %v2266, %v2488
      %v2531 = vadd.f32 %v2267, %v2491
      %v2532 = vadd.f32 %v2268, %v2496
      %v2533 = vadd.f32 %v2269, %v2499
      %s2534 = scalar_lea.vmem %s2, 384
      %v2535 = vld [vmem:[%s2534] sm:$0xf]
      %v2536 = vld [vmem:[%s2534 + $0x4] sm:$0xf]
      %v2537 = vld [vmem:[%s2534 + $0x8] sm:$0xf]
      %v2538 = vld [vmem:[%s2534 + $0xc] sm:$0xf]
      %v2539 = vld [vmem:[%s2534 + $0x10] sm:$0xf]
      %v2540 = vld [vmem:[%s2534 + $0x14] sm:$0xf]
      %v2541 = vld [vmem:[%s2534 + $0x18] sm:$0xf]
      %v2542 = vld [vmem:[%s2534 + $0x1c] sm:$0xf]
      %v2543 = vld [vmem:[%s2534 + $0x20] sm:$0xf]
      %v2544 = vld [vmem:[%s2534 + $0x24] sm:$0xf]
      %v2545 = vld [vmem:[%s2534 + $0x28] sm:$0xf]
      %v2546 = vld [vmem:[%s2534 + $0x2c] sm:$0xf]
      %v2547 = vld [vmem:[%s2534 + $0x30] sm:$0xf]
      %v2548 = vld [vmem:[%s2534 + $0x34] sm:$0xf]
      %v2549 = vld [vmem:[%s2534 + $0x38] sm:$0xf]
      %v2550 = vld [vmem:[%s2534 + $0x3c] sm:$0xf]
      %v2567 = vunpack.c.l.b16 %v2535
      %v2568 = vunpack.c.l.b16 %v2536
      %v2569 = vunpack.c.l.b16 %v2537
      %v2570 = vunpack.c.l.b16 %v2538
      %v2571 = vunpack.c.l.b16 %v2539
      %v2572 = vunpack.c.l.b16 %v2540
      %v2573 = vunpack.c.l.b16 %v2541
      %v2574 = vunpack.c.l.b16 %v2542
      %v2575 = vunpack.c.l.b16 %v2543
      %v2576 = vunpack.c.l.b16 %v2544
      %v2577 = vunpack.c.l.b16 %v2545
      %v2578 = vunpack.c.l.b16 %v2546
      %v2579 = vunpack.c.l.b16 %v2547
      %v2580 = vunpack.c.l.b16 %v2548
      %v2581 = vunpack.c.l.b16 %v2549
      %v2582 = vunpack.c.l.b16 %v2550
      %v2583 = vpack.c.b16 %v2568, %v2567
      %v2584 = vpack.c.b16 %v2570, %v2569
      %v2585 = vpack.c.b16 %v2572, %v2571
      %v2586 = vpack.c.b16 %v2574, %v2573
      %v2587 = vpack.c.b16 %v2576, %v2575
      %v2588 = vpack.c.b16 %v2578, %v2577
      %v2589 = vpack.c.b16 %v2580, %v2579
      %v2590 = vpack.c.b16 %v2582, %v2581
      %2599 = vmatprep.subr.bf16.mxu0 0
      %2600 = vmatpush1.bf16.msra.mxu0 %v2590
      %2601 = vmatprep.subr.bf16.mxu0 0
      %2602 = vmatpush1.bf16.msra.mxu0 %v2589
      %2603 = vmatprep.subr.bf16.mxu0 0
      %2604 = vmatpush1.bf16.msra.mxu0 %v2588
      %2605 = vmatprep.subr.bf16.mxu0 0
      %2606 = vmatpush1.bf16.msra.mxu0 %v2587
      %2607 = vmatprep.subr.bf16.mxu0 0
      %2608 = vmatpush1.bf16.msra.mxu0 %v2586
      %2609 = vmatprep.subr.bf16.mxu0 0
      %2610 = vmatpush1.bf16.msra.mxu0 %v2585
      %2611 = vmatprep.subr.bf16.mxu0 0
      %2612 = vmatpush1.bf16.msra.mxu0 %v2584
      %2613 = vmatprep.subr.bf16.mxu0 0
      %2614 = vmatpush1.bf16.msra.mxu0 %v2583
      %2615 = vmatprep.subr.bf16.mxu0 0
      %2616 = vmatpush2.bf16.msra.mxu0 0
      %2617 = vmatprep.subr.bf16.mxu0 0
      %2618 = vmatpush2.bf16.msra.mxu0 0
      %2619 = vmatprep.subr.bf16.mxu0 0
      %2620 = vmatpush2.bf16.msra.mxu0 0
      %2621 = vmatprep.subr.bf16.mxu0 0
      %2622 = vmatpush2.bf16.msra.mxu0 0
      %2623 = vmatprep.subr.bf16.mxu0 0
      %2624 = vmatpush2.bf16.msra.mxu0 0
      %2625 = vmatprep.subr.bf16.mxu0 0
      %2626 = vmatpush2.bf16.msra.mxu0 0
      %2627 = vmatprep.subr.bf16.mxu0 0
      %2628 = vmatpush2.bf16.msra.mxu0 0
      %2629 = vmatprep.subr.bf16.mxu0 0
      %2630 = vmatpush2.bf16.msra.mxu0 0
      %2631 = vmatprep.mubr.bf16.mxu0 0
      %2632 = vmatmul.mubr.bf16.gmra.mxu0 %v694
      %v2633 = vpop.f32.mrf.mxu0
      %v2634 = vadd.f32 0.0, %v2633
      %v2635 = vpop.f32.mrf.mxu0
      %v2636 = vpop.f32.mrf.mxu0
      %v2637 = vadd.f32 0.0, %v2636
      %v2638 = vpop.f32.mrf.mxu0
      %2639 = vmatprep.mubr.bf16.mxu0 0
      %2640 = vmatmul.mubr.bf16.gmra.mxu0 %v696
      %v2641 = vpop.f32.mrf.mxu0
      %v2642 = vadd.f32 0.0, %v2641
      %v2643 = vpop.f32.mrf.mxu0
      %v2644 = vpop.f32.mrf.mxu0
      %v2645 = vadd.f32 0.0, %v2644
      %v2646 = vpop.f32.mrf.mxu0
      %2647 = vmatprep.mubr.bf16.mxu0 0
      %2648 = vmatmul.mubr.bf16.gmra.mxu0 %v698
      %v2649 = vpop.f32.mrf.mxu0
      %v2650 = vadd.f32 0.0, %v2649
      %v2651 = vpop.f32.mrf.mxu0
      %v2652 = vpop.f32.mrf.mxu0
      %v2653 = vadd.f32 0.0, %v2652
      %v2654 = vpop.f32.mrf.mxu0
      %2655 = vmatprep.mubr.bf16.mxu0 0
      %2656 = vmatmul.mubr.bf16.gmra.mxu0 %v700
      %v2657 = vpop.f32.mrf.mxu0
      %v2658 = vadd.f32 0.0, %v2657
      %v2659 = vpop.f32.mrf.mxu0
      %v2660 = vpop.f32.mrf.mxu0
      %v2661 = vadd.f32 0.0, %v2660
      %v2662 = vpop.f32.mrf.mxu0
      %2663 = vmatprep.mubr.bf16.mxu0 0
      %2664 = vmatmul.mubr.bf16.gmra.mxu0 %v702
      %v2665 = vpop.f32.mrf.mxu0
      %v2666 = vadd.f32 0.0, %v2665
      %v2667 = vpop.f32.mrf.mxu0
      %v2668 = vpop.f32.mrf.mxu0
      %v2669 = vadd.f32 0.0, %v2668
      %v2670 = vpop.f32.mrf.mxu0
      %2671 = vmatprep.mubr.bf16.mxu0 0
      %2672 = vmatmul.mubr.bf16.gmra.mxu0 %v704
      %v2673 = vpop.f32.mrf.mxu0
      %v2674 = vadd.f32 0.0, %v2673
      %v2675 = vpop.f32.mrf.mxu0
      %v2676 = vpop.f32.mrf.mxu0
      %v2677 = vadd.f32 0.0, %v2676
      %v2678 = vpop.f32.mrf.mxu0
      %2679 = vmatprep.mubr.bf16.mxu0 0
      %2680 = vmatmul.mubr.bf16.gmra.mxu0 %v706
      %v2681 = vpop.f32.mrf.mxu0
      %v2682 = vadd.f32 0.0, %v2681
      %v2683 = vpop.f32.mrf.mxu0
      %v2684 = vpop.f32.mrf.mxu0
      %v2685 = vadd.f32 0.0, %v2684
      %v2686 = vpop.f32.mrf.mxu0
      %2687 = vmatprep.mubr.bf16.mxu0 0
      %2688 = vmatmul.mubr.bf16.gmra.mxu0 %v708
      %v2689 = vpop.f32.mrf.mxu0
      %v2690 = vadd.f32 0.0, %v2689
      %v2691 = vpop.f32.mrf.mxu0
      %v2692 = vpop.f32.mrf.mxu0
      %v2693 = vadd.f32 0.0, %v2692
      %v2694 = vpop.f32.mrf.mxu0
      %2695 = vmatprep.mubr.bf16.mxu0 0
      %2696 = vmatmul.mubr.bf16.gmra.mxu0 %v710
      %v2697 = vpop.f32.mrf.mxu0
      %v2698 = vadd.f32 0.0, %v2697
      %v2699 = vpop.f32.mrf.mxu0
      %v2700 = vpop.f32.mrf.mxu0
      %v2701 = vadd.f32 0.0, %v2700
      %v2702 = vpop.f32.mrf.mxu0
      %2703 = vmatprep.mubr.bf16.mxu0 0
      %2704 = vmatmul.mubr.bf16.gmra.mxu0 %v712
      %v2705 = vpop.f32.mrf.mxu0
      %v2706 = vadd.f32 0.0, %v2705
      %v2707 = vpop.f32.mrf.mxu0
      %v2708 = vpop.f32.mrf.mxu0
      %v2709 = vadd.f32 0.0, %v2708
      %v2710 = vpop.f32.mrf.mxu0
      %2711 = vmatprep.mubr.bf16.mxu0 0
      %2712 = vmatmul.mubr.bf16.gmra.mxu0 %v714
      %v2713 = vpop.f32.mrf.mxu0
      %v2714 = vadd.f32 0.0, %v2713
      %v2715 = vpop.f32.mrf.mxu0
      %v2716 = vpop.f32.mrf.mxu0
      %v2717 = vadd.f32 0.0, %v2716
      %v2718 = vpop.f32.mrf.mxu0
      %2719 = vmatprep.mubr.bf16.mxu0 0
      %2720 = vmatmul.mubr.bf16.gmra.mxu0 %v716
      %v2721 = vpop.f32.mrf.mxu0
      %v2722 = vadd.f32 0.0, %v2721
      %v2723 = vpop.f32.mrf.mxu0
      %v2724 = vpop.f32.mrf.mxu0
      %v2725 = vadd.f32 0.0, %v2724
      %v2726 = vpop.f32.mrf.mxu0
      %2727 = vmatprep.mubr.bf16.mxu0 0
      %2728 = vmatmul.mubr.bf16.gmra.mxu0 %v718
      %v2729 = vpop.f32.mrf.mxu0
      %v2730 = vadd.f32 0.0, %v2729
      %v2731 = vpop.f32.mrf.mxu0
      %v2732 = vpop.f32.mrf.mxu0
      %v2733 = vadd.f32 0.0, %v2732
      %v2734 = vpop.f32.mrf.mxu0
      %2735 = vmatprep.mubr.bf16.mxu0 0
      %2736 = vmatmul.mubr.bf16.gmra.mxu0 %v720
      %v2737 = vpop.f32.mrf.mxu0
      %v2738 = vadd.f32 0.0, %v2737
      %v2739 = vpop.f32.mrf.mxu0
      %v2740 = vpop.f32.mrf.mxu0
      %v2741 = vadd.f32 0.0, %v2740
      %v2742 = vpop.f32.mrf.mxu0
      %2743 = vmatprep.mubr.bf16.mxu0 0
      %2744 = vmatmul.mubr.bf16.gmra.mxu0 %v722
      %v2745 = vpop.f32.mrf.mxu0
      %v2746 = vadd.f32 0.0, %v2745
      %v2747 = vpop.f32.mrf.mxu0
      %v2748 = vpop.f32.mrf.mxu0
      %v2749 = vadd.f32 0.0, %v2748
      %v2750 = vpop.f32.mrf.mxu0
      %2751 = vmatprep.mubr.bf16.mxu0 0
      %2752 = vmatmul.mubr.bf16.gmra.mxu0 %v724
      %v2753 = vpop.f32.mrf.mxu0
      %v2754 = vadd.f32 0.0, %v2753
      %v2755 = vpop.f32.mrf.mxu0
      %v2756 = vpop.f32.mrf.mxu0
      %v2757 = vadd.f32 0.0, %v2756
      %v2758 = vpop.f32.mrf.mxu0
      %2759 = vdwg.mxu0
      %v2760 = vadd.f32 %v2502, %v2634
      %v2761 = vadd.f32 %v2503, %v2637
      %v2762 = vadd.f32 %v2504, %v2642
      %v2763 = vadd.f32 %v2505, %v2645
      %v2764 = vadd.f32 %v2506, %v2650
      %v2765 = vadd.f32 %v2507, %v2653
      %v2766 = vadd.f32 %v2508, %v2658
      %v2767 = vadd.f32 %v2509, %v2661
      %v2768 = vadd.f32 %v2510, %v2666
      %v2769 = vadd.f32 %v2511, %v2669
      %v2770 = vadd.f32 %v2512, %v2674
      %v2771 = vadd.f32 %v2513, %v2677
      %v2772 = vadd.f32 %v2514, %v2682
      %v2773 = vadd.f32 %v2515, %v2685
      %v2774 = vadd.f32 %v2516, %v2690
      %v2775 = vadd.f32 %v2517, %v2693
      %v2776 = vadd.f32 %v2518, %v2698
      %v2777 = vadd.f32 %v2519, %v2701
      %v2778 = vadd.f32 %v2520, %v2706
      %v2779 = vadd.f32 %v2521, %v2709
      %v2780 = vadd.f32 %v2522, %v2714
      %v2781 = vadd.f32 %v2523, %v2717
      %v2782 = vadd.f32 %v2524, %v2722
      %v2783 = vadd.f32 %v2525, %v2725
      %v2784 = vadd.f32 %v2526, %v2730
      %v2785 = vadd.f32 %v2527, %v2733
      %v2786 = vadd.f32 %v2528, %v2738
      %v2787 = vadd.f32 %v2529, %v2741
      %v2788 = vadd.f32 %v2530, %v2746
      %v2789 = vadd.f32 %v2531, %v2749
      %v2790 = vadd.f32 %v2532, %v2754
      %v2791 = vadd.f32 %v2533, %v2757
      %v2793 = vshrl.u32 %v724, 16
      %v2795 = vshll.u32 %v724, 16
      %v2797 = vrot.slane %v2795, 1
      %v2798 = vor.u32 %v2793, %v2797
      %v2800 = vshll.u32 %v725, 16
      %v2802 = vrot.slane %v2800, 1
      %v2803 = vsel %vm742, %v2798, %v2802
      %s2805 = scalar_lea.vmem %s2, 448
      %v2806 = vld [vmem:[%s2805] sm:$0xf]
      %v2807 = vld [vmem:[%s2805 + $0x4] sm:$0xf]
      %v2808 = vld [vmem:[%s2805 + $0x8] sm:$0xf]
      %v2809 = vld [vmem:[%s2805 + $0xc] sm:$0xf]
      %v2810 = vld [vmem:[%s2805 + $0x10] sm:$0xf]
      %v2811 = vld [vmem:[%s2805 + $0x14] sm:$0xf]
      %v2812 = vld [vmem:[%s2805 + $0x18] sm:$0xf]
      %v2813 = vld [vmem:[%s2805 + $0x1c] sm:$0xf]
      %v2814 = vld [vmem:[%s2805 + $0x20] sm:$0xf]
      %v2815 = vld [vmem:[%s2805 + $0x24] sm:$0xf]
      %v2816 = vld [vmem:[%s2805 + $0x28] sm:$0xf]
      %v2817 = vld [vmem:[%s2805 + $0x2c] sm:$0xf]
      %v2818 = vld [vmem:[%s2805 + $0x30] sm:$0xf]
      %v2819 = vld [vmem:[%s2805 + $0x34] sm:$0xf]
      %v2820 = vld [vmem:[%s2805 + $0x38] sm:$0xf]
      %v2821 = vld [vmem:[%s2805 + $0x3c] sm:$0xf]
      %v2838 = vunpack.c.l.b16 %v2806
      %v2839 = vunpack.c.l.b16 %v2807
      %v2840 = vunpack.c.l.b16 %v2808
      %v2841 = vunpack.c.l.b16 %v2809
      %v2842 = vunpack.c.l.b16 %v2810
      %v2843 = vunpack.c.l.b16 %v2811
      %v2844 = vunpack.c.l.b16 %v2812
      %v2845 = vunpack.c.l.b16 %v2813
      %v2846 = vunpack.c.l.b16 %v2814
      %v2847 = vunpack.c.l.b16 %v2815
      %v2848 = vunpack.c.l.b16 %v2816
      %v2849 = vunpack.c.l.b16 %v2817
      %v2850 = vunpack.c.l.b16 %v2818
      %v2851 = vunpack.c.l.b16 %v2819
      %v2852 = vunpack.c.l.b16 %v2820
      %v2853 = vunpack.c.l.b16 %v2821
      %v2854 = vpack.c.b16 %v2839, %v2838
      %v2855 = vpack.c.b16 %v2841, %v2840
      %v2856 = vpack.c.b16 %v2843, %v2842
      %v2857 = vpack.c.b16 %v2845, %v2844
      %v2858 = vpack.c.b16 %v2847, %v2846
      %v2859 = vpack.c.b16 %v2849, %v2848
      %v2860 = vpack.c.b16 %v2851, %v2850
      %v2861 = vpack.c.b16 %v2853, %v2852
      %2870 = vmatprep.subr.bf16.mxu0 0
      %2871 = vmatpush1.bf16.msra.mxu0 %v2861
      %2872 = vmatprep.subr.bf16.mxu0 0
      %2873 = vmatpush1.bf16.msra.mxu0 %v2860
      %2874 = vmatprep.subr.bf16.mxu0 0
      %2875 = vmatpush1.bf16.msra.mxu0 %v2859
      %2876 = vmatprep.subr.bf16.mxu0 0
      %2877 = vmatpush1.bf16.msra.mxu0 %v2858
      %2878 = vmatprep.subr.bf16.mxu0 0
      %2879 = vmatpush1.bf16.msra.mxu0 %v2857
      %2880 = vmatprep.subr.bf16.mxu0 0
      %2881 = vmatpush1.bf16.msra.mxu0 %v2856
      %2882 = vmatprep.subr.bf16.mxu0 0
      %2883 = vmatpush1.bf16.msra.mxu0 %v2855
      %2884 = vmatprep.subr.bf16.mxu0 0
      %2885 = vmatpush1.bf16.msra.mxu0 %v2854
      %2886 = vmatprep.subr.bf16.mxu0 0
      %2887 = vmatpush2.bf16.msra.mxu0 0
      %2888 = vmatprep.subr.bf16.mxu0 0
      %2889 = vmatpush2.bf16.msra.mxu0 0
      %2890 = vmatprep.subr.bf16.mxu0 0
      %2891 = vmatpush2.bf16.msra.mxu0 0
      %2892 = vmatprep.subr.bf16.mxu0 0
      %2893 = vmatpush2.bf16.msra.mxu0 0
      %2894 = vmatprep.subr.bf16.mxu0 0
      %2895 = vmatpush2.bf16.msra.mxu0 0
      %2896 = vmatprep.subr.bf16.mxu0 0
      %2897 = vmatpush2.bf16.msra.mxu0 0
      %2898 = vmatprep.subr.bf16.mxu0 0
      %2899 = vmatpush2.bf16.msra.mxu0 0
      %2900 = vmatprep.subr.bf16.mxu0 0
      %2901 = vmatpush2.bf16.msra.mxu0 0
      %2902 = vmatprep.mubr.bf16.mxu0 0
      %2903 = vmatmul.mubr.bf16.gmra.mxu0 %v778
      %v2904 = vpop.f32.mrf.mxu0
      %v2905 = vadd.f32 0.0, %v2904
      %v2906 = vpop.f32.mrf.mxu0
      %v2907 = vpop.f32.mrf.mxu0
      %v2908 = vadd.f32 0.0, %v2907
      %v2909 = vpop.f32.mrf.mxu0
      %2910 = vmatprep.mubr.bf16.mxu0 0
      %2911 = vmatmul.mubr.bf16.gmra.mxu0 %v790
      %v2912 = vpop.f32.mrf.mxu0
      %v2913 = vadd.f32 0.0, %v2912
      %v2914 = vpop.f32.mrf.mxu0
      %v2915 = vpop.f32.mrf.mxu0
      %v2916 = vadd.f32 0.0, %v2915
      %v2917 = vpop.f32.mrf.mxu0
      %2918 = vmatprep.mubr.bf16.mxu0 0
      %2919 = vmatmul.mubr.bf16.gmra.mxu0 %v802
      %v2920 = vpop.f32.mrf.mxu0
      %v2921 = vadd.f32 0.0, %v2920
      %v2922 = vpop.f32.mrf.mxu0
      %v2923 = vpop.f32.mrf.mxu0
      %v2924 = vadd.f32 0.0, %v2923
      %v2925 = vpop.f32.mrf.mxu0
      %2926 = vmatprep.mubr.bf16.mxu0 0
      %2927 = vmatmul.mubr.bf16.gmra.mxu0 %v814
      %v2928 = vpop.f32.mrf.mxu0
      %v2929 = vadd.f32 0.0, %v2928
      %v2930 = vpop.f32.mrf.mxu0
      %v2931 = vpop.f32.mrf.mxu0
      %v2932 = vadd.f32 0.0, %v2931
      %v2933 = vpop.f32.mrf.mxu0
      %2934 = vmatprep.mubr.bf16.mxu0 0
      %2935 = vmatmul.mubr.bf16.gmra.mxu0 %v826
      %v2936 = vpop.f32.mrf.mxu0
      %v2937 = vadd.f32 0.0, %v2936
      %v2938 = vpop.f32.mrf.mxu0
      %v2939 = vpop.f32.mrf.mxu0
      %v2940 = vadd.f32 0.0, %v2939
      %v2941 = vpop.f32.mrf.mxu0
      %2942 = vmatprep.mubr.bf16.mxu0 0
      %2943 = vmatmul.mubr.bf16.gmra.mxu0 %v838
      %v2944 = vpop.f32.mrf.mxu0
      %v2945 = vadd.f32 0.0, %v2944
      %v2946 = vpop.f32.mrf.mxu0
      %v2947 = vpop.f32.mrf.mxu0
      %v2948 = vadd.f32 0.0, %v2947
      %v2949 = vpop.f32.mrf.mxu0
      %2950 = vmatprep.mubr.bf16.mxu0 0
      %2951 = vmatmul.mubr.bf16.gmra.mxu0 %v850
      %v2952 = vpop.f32.mrf.mxu0
      %v2953 = vadd.f32 0.0, %v2952
      %v2954 = vpop.f32.mrf.mxu0
      %v2955 = vpop.f32.mrf.mxu0
      %v2956 = vadd.f32 0.0, %v2955
      %v2957 = vpop.f32.mrf.mxu0
      %2958 = vmatprep.mubr.bf16.mxu0 0
      %2959 = vmatmul.mubr.bf16.gmra.mxu0 %v862
      %v2960 = vpop.f32.mrf.mxu0
      %v2961 = vadd.f32 0.0, %v2960
      %v2962 = vpop.f32.mrf.mxu0
      %v2963 = vpop.f32.mrf.mxu0
      %v2964 = vadd.f32 0.0, %v2963
      %v2965 = vpop.f32.mrf.mxu0
      %2966 = vmatprep.mubr.bf16.mxu0 0
      %2967 = vmatmul.mubr.bf16.gmra.mxu0 %v874
      %v2968 = vpop.f32.mrf.mxu0
      %v2969 = vadd.f32 0.0, %v2968
      %v2970 = vpop.f32.mrf.mxu0
      %v2971 = vpop.f32.mrf.mxu0
      %v2972 = vadd.f32 0.0, %v2971
      %v2973 = vpop.f32.mrf.mxu0
      %2974 = vmatprep.mubr.bf16.mxu0 0
      %2975 = vmatmul.mubr.bf16.gmra.mxu0 %v886
      %v2976 = vpop.f32.mrf.mxu0
      %v2977 = vadd.f32 0.0, %v2976
      %v2978 = vpop.f32.mrf.mxu0
      %v2979 = vpop.f32.mrf.mxu0
      %v2980 = vadd.f32 0.0, %v2979
      %v2981 = vpop.f32.mrf.mxu0
      %2982 = vmatprep.mubr.bf16.mxu0 0
      %2983 = vmatmul.mubr.bf16.gmra.mxu0 %v898
      %v2984 = vpop.f32.mrf.mxu0
      %v2985 = vadd.f32 0.0, %v2984
      %v2986 = vpop.f32.mrf.mxu0
      %v2987 = vpop.f32.mrf.mxu0
      %v2988 = vadd.f32 0.0, %v2987
      %v2989 = vpop.f32.mrf.mxu0
      %2990 = vmatprep.mubr.bf16.mxu0 0
      %2991 = vmatmul.mubr.bf16.gmra.mxu0 %v910
      %v2992 = vpop.f32.mrf.mxu0
      %v2993 = vadd.f32 0.0, %v2992
      %v2994 = vpop.f32.mrf.mxu0
      %v2995 = vpop.f32.mrf.mxu0
      %v2996 = vadd.f32 0.0, %v2995
      %v2997 = vpop.f32.mrf.mxu0
      %2998 = vmatprep.mubr.bf16.mxu0 0
      %2999 = vmatmul.mubr.bf16.gmra.mxu0 %v922
      %v3000 = vpop.f32.mrf.mxu0
      %v3001 = vadd.f32 0.0, %v3000
      %v3002 = vpop.f32.mrf.mxu0
      %v3003 = vpop.f32.mrf.mxu0
      %v3004 = vadd.f32 0.0, %v3003
      %v3005 = vpop.f32.mrf.mxu0
      %3006 = vmatprep.mubr.bf16.mxu0 0
      %3007 = vmatmul.mubr.bf16.gmra.mxu0 %v934
      %v3008 = vpop.f32.mrf.mxu0
      %v3009 = vadd.f32 0.0, %v3008
      %v3010 = vpop.f32.mrf.mxu0
      %v3011 = vpop.f32.mrf.mxu0
      %v3012 = vadd.f32 0.0, %v3011
      %v3013 = vpop.f32.mrf.mxu0
      %3014 = vmatprep.mubr.bf16.mxu0 0
      %3015 = vmatmul.mubr.bf16.gmra.mxu0 %v2010
      %v3016 = vpop.f32.mrf.mxu0
      %v3017 = vadd.f32 0.0, %v3016
      %v3018 = vpop.f32.mrf.mxu0
      %v3019 = vpop.f32.mrf.mxu0
      %v3020 = vadd.f32 0.0, %v3019
      %v3021 = vpop.f32.mrf.mxu0
      %3022 = vmatprep.mubr.bf16.mxu0 0
      %3023 = vmatmul.mubr.bf16.gmra.mxu0 %v2803
      %v3024 = vpop.f32.mrf.mxu0
      %v3025 = vadd.f32 0.0, %v3024
      %v3026 = vpop.f32.mrf.mxu0
      %v3027 = vpop.f32.mrf.mxu0
      %v3028 = vadd.f32 0.0, %v3027
      %v3029 = vpop.f32.mrf.mxu0
      %3030 = vdwg.mxu0
      %v3031 = vadd.f32 %v2760, %v2905
      %v3032 = vadd.f32 %v2761, %v2908
      %v3033 = vadd.f32 %v2762, %v2913
      %v3034 = vadd.f32 %v2763, %v2916
      %v3035 = vadd.f32 %v2764, %v2921
      %v3036 = vadd.f32 %v2765, %v2924
      %v3037 = vadd.f32 %v2766, %v2929
      %v3038 = vadd.f32 %v2767, %v2932
      %v3039 = vadd.f32 %v2768, %v2937
      %v3040 = vadd.f32 %v2769, %v2940
      %v3041 = vadd.f32 %v2770, %v2945
      %v3042 = vadd.f32 %v2771, %v2948
      %v3043 = vadd.f32 %v2772, %v2953
      %v3044 = vadd.f32 %v2773, %v2956
      %v3045 = vadd.f32 %v2774, %v2961
      %v3046 = vadd.f32 %v2775, %v2964
      %v3047 = vadd.f32 %v2776, %v2969
      %v3048 = vadd.f32 %v2777, %v2972
      %v3049 = vadd.f32 %v2778, %v2977
      %v3050 = vadd.f32 %v2779, %v2980
      %v3051 = vadd.f32 %v2780, %v2985
      %v3052 = vadd.f32 %v2781, %v2988
      %v3053 = vadd.f32 %v2782, %v2993
      %v3054 = vadd.f32 %v2783, %v2996
      %v3055 = vadd.f32 %v2784, %v3001
      %v3056 = vadd.f32 %v2785, %v3004
      %v3057 = vadd.f32 %v2786, %v3009
      %v3058 = vadd.f32 %v2787, %v3012
      %v3059 = vadd.f32 %v2788, %v3017
      %v3060 = vadd.f32 %v2789, %v3020
      %v3061 = vadd.f32 %v2790, %v3025
      %v3062 = vadd.f32 %v2791, %v3028
      %v3065 = vrot.slane %v724, 1
      %v3066 = vrot.slane %v725, 1
      %v3067 = vsel %vm1418, %v3065, %v3066
      %s3069 = scalar_lea.vmem %s2, 512
      %v3070 = vld [vmem:[%s3069] sm:$0xf]
      %v3071 = vld [vmem:[%s3069 + $0x4] sm:$0xf]
      %v3072 = vld [vmem:[%s3069 + $0x8] sm:$0xf]
      %v3073 = vld [vmem:[%s3069 + $0xc] sm:$0xf]
      %v3074 = vld [vmem:[%s3069 + $0x10] sm:$0xf]
      %v3075 = vld [vmem:[%s3069 + $0x14] sm:$0xf]
      %v3076 = vld [vmem:[%s3069 + $0x18] sm:$0xf]
      %v3077 = vld [vmem:[%s3069 + $0x1c] sm:$0xf]
      %v3078 = vld [vmem:[%s3069 + $0x20] sm:$0xf]
      %v3079 = vld [vmem:[%s3069 + $0x24] sm:$0xf]
      %v3080 = vld [vmem:[%s3069 + $0x28] sm:$0xf]
      %v3081 = vld [vmem:[%s3069 + $0x2c] sm:$0xf]
      %v3082 = vld [vmem:[%s3069 + $0x30] sm:$0xf]
      %v3083 = vld [vmem:[%s3069 + $0x34] sm:$0xf]
      %v3084 = vld [vmem:[%s3069 + $0x38] sm:$0xf]
      %v3085 = vld [vmem:[%s3069 + $0x3c] sm:$0xf]
      %v3102 = vunpack.c.l.b16 %v3070
      %v3103 = vunpack.c.l.b16 %v3071
      %v3104 = vunpack.c.l.b16 %v3072
      %v3105 = vunpack.c.l.b16 %v3073
      %v3106 = vunpack.c.l.b16 %v3074
      %v3107 = vunpack.c.l.b16 %v3075
      %v3108 = vunpack.c.l.b16 %v3076
      %v3109 = vunpack.c.l.b16 %v3077
      %v3110 = vunpack.c.l.b16 %v3078
      %v3111 = vunpack.c.l.b16 %v3079
      %v3112 = vunpack.c.l.b16 %v3080
      %v3113 = vunpack.c.l.b16 %v3081
      %v3114 = vunpack.c.l.b16 %v3082
      %v3115 = vunpack.c.l.b16 %v3083
      %v3116 = vunpack.c.l.b16 %v3084
      %v3117 = vunpack.c.l.b16 %v3085
      %v3118 = vpack.c.b16 %v3103, %v3102
      %v3119 = vpack.c.b16 %v3105, %v3104
      %v3120 = vpack.c.b16 %v3107, %v3106
      %v3121 = vpack.c.b16 %v3109, %v3108
      %v3122 = vpack.c.b16 %v3111, %v3110
      %v3123 = vpack.c.b16 %v3113, %v3112
      %v3124 = vpack.c.b16 %v3115, %v3114
      %v3125 = vpack.c.b16 %v3117, %v3116
      %3134 = vmatprep.subr.bf16.mxu0 0
      %3135 = vmatpush1.bf16.msra.mxu0 %v3125
      %3136 = vmatprep.subr.bf16.mxu0 0
      %3137 = vmatpush1.bf16.msra.mxu0 %v3124
      %3138 = vmatprep.subr.bf16.mxu0 0
      %3139 = vmatpush1.bf16.msra.mxu0 %v3123
      %3140 = vmatprep.subr.bf16.mxu0 0
      %3141 = vmatpush1.bf16.msra.mxu0 %v3122
      %3142 = vmatprep.subr.bf16.mxu0 0
      %3143 = vmatpush1.bf16.msra.mxu0 %v3121
      %3144 = vmatprep.subr.bf16.mxu0 0
      %3145 = vmatpush1.bf16.msra.mxu0 %v3120
      %3146 = vmatprep.subr.bf16.mxu0 0
      %3147 = vmatpush1.bf16.msra.mxu0 %v3119
      %3148 = vmatprep.subr.bf16.mxu0 0
      %3149 = vmatpush1.bf16.msra.mxu0 %v3118
      %3150 = vmatprep.subr.bf16.mxu0 0
      %3151 = vmatpush2.bf16.msra.mxu0 0
      %3152 = vmatprep.subr.bf16.mxu0 0
      %3153 = vmatpush2.bf16.msra.mxu0 0
      %3154 = vmatprep.subr.bf16.mxu0 0
      %3155 = vmatpush2.bf16.msra.mxu0 0
      %3156 = vmatprep.subr.bf16.mxu0 0
      %3157 = vmatpush2.bf16.msra.mxu0 0
      %3158 = vmatprep.subr.bf16.mxu0 0
      %3159 = vmatpush2.bf16.msra.mxu0 0
      %3160 = vmatprep.subr.bf16.mxu0 0
      %3161 = vmatpush2.bf16.msra.mxu0 0
      %3162 = vmatprep.subr.bf16.mxu0 0
      %3163 = vmatpush2.bf16.msra.mxu0 0
      %3164 = vmatprep.subr.bf16.mxu0 0
      %3165 = vmatpush2.bf16.msra.mxu0 0
      %3166 = vmatprep.mubr.bf16.mxu0 0
      %3167 = vmatmul.mubr.bf16.gmra.mxu0 %v1427
      %v3168 = vpop.f32.mrf.mxu0
      %v3169 = vadd.f32 0.0, %v3168
      %v3170 = vpop.f32.mrf.mxu0
      %v3171 = vpop.f32.mrf.mxu0
      %v3172 = vadd.f32 0.0, %v3171
      %v3173 = vpop.f32.mrf.mxu0
      %3174 = vmatprep.mubr.bf16.mxu0 0
      %3175 = vmatmul.mubr.bf16.gmra.mxu0 %v1430
      %v3176 = vpop.f32.mrf.mxu0
      %v3177 = vadd.f32 0.0, %v3176
      %v3178 = vpop.f32.mrf.mxu0
      %v3179 = vpop.f32.mrf.mxu0
      %v3180 = vadd.f32 0.0, %v3179
      %v3181 = vpop.f32.mrf.mxu0
      %3182 = vmatprep.mubr.bf16.mxu0 0
      %3183 = vmatmul.mubr.bf16.gmra.mxu0 %v1433
      %v3184 = vpop.f32.mrf.mxu0
      %v3185 = vadd.f32 0.0, %v3184
      %v3186 = vpop.f32.mrf.mxu0
      %v3187 = vpop.f32.mrf.mxu0
      %v3188 = vadd.f32 0.0, %v3187
      %v3189 = vpop.f32.mrf.mxu0
      %3190 = vmatprep.mubr.bf16.mxu0 0
      %3191 = vmatmul.mubr.bf16.gmra.mxu0 %v1436
      %v3192 = vpop.f32.mrf.mxu0
      %v3193 = vadd.f32 0.0, %v3192
      %v3194 = vpop.f32.mrf.mxu0
      %v3195 = vpop.f32.mrf.mxu0
      %v3196 = vadd.f32 0.0, %v3195
      %v3197 = vpop.f32.mrf.mxu0
      %3198 = vmatprep.mubr.bf16.mxu0 0
      %3199 = vmatmul.mubr.bf16.gmra.mxu0 %v1439
      %v3200 = vpop.f32.mrf.mxu0
      %v3201 = vadd.f32 0.0, %v3200
      %v3202 = vpop.f32.mrf.mxu0
      %v3203 = vpop.f32.mrf.mxu0
      %v3204 = vadd.f32 0.0, %v3203
      %v3205 = vpop.f32.mrf.mxu0
      %3206 = vmatprep.mubr.bf16.mxu0 0
      %3207 = vmatmul.mubr.bf16.gmra.mxu0 %v1442
      %v3208 = vpop.f32.mrf.mxu0
      %v3209 = vadd.f32 0.0, %v3208
      %v3210 = vpop.f32.mrf.mxu0
      %v3211 = vpop.f32.mrf.mxu0
      %v3212 = vadd.f32 0.0, %v3211
      %v3213 = vpop.f32.mrf.mxu0
      %3214 = vmatprep.mubr.bf16.mxu0 0
      %3215 = vmatmul.mubr.bf16.gmra.mxu0 %v1445
      %v3216 = vpop.f32.mrf.mxu0
      %v3217 = vadd.f32 0.0, %v3216
      %v3218 = vpop.f32.mrf.mxu0
      %v3219 = vpop.f32.mrf.mxu0
      %v3220 = vadd.f32 0.0, %v3219
      %v3221 = vpop.f32.mrf.mxu0
      %3222 = vmatprep.mubr.bf16.mxu0 0
      %3223 = vmatmul.mubr.bf16.gmra.mxu0 %v1448
      %v3224 = vpop.f32.mrf.mxu0
      %v3225 = vadd.f32 0.0, %v3224
      %v3226 = vpop.f32.mrf.mxu0
      %v3227 = vpop.f32.mrf.mxu0
      %v3228 = vadd.f32 0.0, %v3227
      %v3229 = vpop.f32.mrf.mxu0
      %3230 = vmatprep.mubr.bf16.mxu0 0
      %3231 = vmatmul.mubr.bf16.gmra.mxu0 %v1451
      %v3232 = vpop.f32.mrf.mxu0
      %v3233 = vadd.f32 0.0, %v3232
      %v3234 = vpop.f32.mrf.mxu0
      %v3235 = vpop.f32.mrf.mxu0
      %v3236 = vadd.f32 0.0, %v3235
      %v3237 = vpop.f32.mrf.mxu0
      %3238 = vmatprep.mubr.bf16.mxu0 0
      %3239 = vmatmul.mubr.bf16.gmra.mxu0 %v1454
      %v3240 = vpop.f32.mrf.mxu0
      %v3241 = vadd.f32 0.0, %v3240
      %v3242 = vpop.f32.mrf.mxu0
      %v3243 = vpop.f32.mrf.mxu0
      %v3244 = vadd.f32 0.0, %v3243
      %v3245 = vpop.f32.mrf.mxu0
      %3246 = vmatprep.mubr.bf16.mxu0 0
      %3247 = vmatmul.mubr.bf16.gmra.mxu0 %v1457
      %v3248 = vpop.f32.mrf.mxu0
      %v3249 = vadd.f32 0.0, %v3248
      %v3250 = vpop.f32.mrf.mxu0
      %v3251 = vpop.f32.mrf.mxu0
      %v3252 = vadd.f32 0.0, %v3251
      %v3253 = vpop.f32.mrf.mxu0
      %3254 = vmatprep.mubr.bf16.mxu0 0
      %3255 = vmatmul.mubr.bf16.gmra.mxu0 %v1460
      %v3256 = vpop.f32.mrf.mxu0
      %v3257 = vadd.f32 0.0, %v3256
      %v3258 = vpop.f32.mrf.mxu0
      %v3259 = vpop.f32.mrf.mxu0
      %v3260 = vadd.f32 0.0, %v3259
      %v3261 = vpop.f32.mrf.mxu0
      %3262 = vmatprep.mubr.bf16.mxu0 0
      %3263 = vmatmul.mubr.bf16.gmra.mxu0 %v1463
      %v3264 = vpop.f32.mrf.mxu0
      %v3265 = vadd.f32 0.0, %v3264
      %v3266 = vpop.f32.mrf.mxu0
      %v3267 = vpop.f32.mrf.mxu0
      %v3268 = vadd.f32 0.0, %v3267
      %v3269 = vpop.f32.mrf.mxu0
      %3270 = vmatprep.mubr.bf16.mxu0 0
      %3271 = vmatmul.mubr.bf16.gmra.mxu0 %v1466
      %v3272 = vpop.f32.mrf.mxu0
      %v3273 = vadd.f32 0.0, %v3272
      %v3274 = vpop.f32.mrf.mxu0
      %v3275 = vpop.f32.mrf.mxu0
      %v3276 = vadd.f32 0.0, %v3275
      %v3277 = vpop.f32.mrf.mxu0
      %3278 = vmatprep.mubr.bf16.mxu0 0
      %3279 = vmatmul.mubr.bf16.gmra.mxu0 %v2274
      %v3280 = vpop.f32.mrf.mxu0
      %v3281 = vadd.f32 0.0, %v3280
      %v3282 = vpop.f32.mrf.mxu0
      %v3283 = vpop.f32.mrf.mxu0
      %v3284 = vadd.f32 0.0, %v3283
      %v3285 = vpop.f32.mrf.mxu0
      %3286 = vmatprep.mubr.bf16.mxu0 0
      %3287 = vmatmul.mubr.bf16.gmra.mxu0 %v3067
      %v3288 = vpop.f32.mrf.mxu0
      %v3289 = vadd.f32 0.0, %v3288
      %v3290 = vpop.f32.mrf.mxu0
      %v3291 = vpop.f32.mrf.mxu0
      %v3292 = vadd.f32 0.0, %v3291
      %v3293 = vpop.f32.mrf.mxu0
      %3294 = vdwg.mxu0
      %v3295 = vadd.f32 %v3031, %v3169
      %v3296 = vadd.f32 %v3032, %v3172
      %v3297 = vadd.f32 %v3033, %v3177
      %v3298 = vadd.f32 %v3034, %v3180
      %v3299 = vadd.f32 %v3035, %v3185
      %v3300 = vadd.f32 %v3036, %v3188
      %v3301 = vadd.f32 %v3037, %v3193
      %v3302 = vadd.f32 %v3038, %v3196
      %v3303 = vadd.f32 %v3039, %v3201
      %v3304 = vadd.f32 %v3040, %v3204
      %v3305 = vadd.f32 %v3041, %v3209
      %v3306 = vadd.f32 %v3042, %v3212
      %v3307 = vadd.f32 %v3043, %v3217
      %v3308 = vadd.f32 %v3044, %v3220
      %v3309 = vadd.f32 %v3045, %v3225
      %v3310 = vadd.f32 %v3046, %v3228
      %v3311 = vadd.f32 %v3047, %v3233
      %v3312 = vadd.f32 %v3048, %v3236
      %v3313 = vadd.f32 %v3049, %v3241
      %v3314 = vadd.f32 %v3050, %v3244
      %v3315 = vadd.f32 %v3051, %v3249
      %v3316 = vadd.f32 %v3052, %v3252
      %v3317 = vadd.f32 %v3053, %v3257
      %v3318 = vadd.f32 %v3054, %v3260
      %v3319 = vadd.f32 %v3055, %v3265
      %v3320 = vadd.f32 %v3056, %v3268
      %v3321 = vadd.f32 %v3057, %v3273
      %v3322 = vadd.f32 %v3058, %v3276
      %v3323 = vadd.f32 %v3059, %v3281
      %v3324 = vadd.f32 %v3060, %v3284
      %v3325 = vadd.f32 %v3061, %v3289
      %v3326 = vadd.f32 %v3062, %v3292
      %3327 = vst [vmem:[%s237] sm:$0xff] %v3295
      %3328 = vst [vmem:[%s237 + $0x8] sm:$0xff] %v3296
      %3329 = vst [vmem:[%s237 + $0x10] sm:$0xff] %v3297
      %3330 = vst [vmem:[%s237 + $0x18] sm:$0xff] %v3298
      %3331 = vst [vmem:[%s237 + $0x20] sm:$0xff] %v3299
      %3332 = vst [vmem:[%s237 + $0x28] sm:$0xff] %v3300
      %3333 = vst [vmem:[%s237 + $0x30] sm:$0xff] %v3301
      %3334 = vst [vmem:[%s237 + $0x38] sm:$0xff] %v3302
      %3335 = vst [vmem:[%s237 + $0x40] sm:$0xff] %v3303
      %3336 = vst [vmem:[%s237 + $0x48] sm:$0xff] %v3304
      %3337 = vst [vmem:[%s237 + $0x50] sm:$0xff] %v3305
      %3338 = vst [vmem:[%s237 + $0x58] sm:$0xff] %v3306
      %3339 = vst [vmem:[%s237 + $0x60] sm:$0xff] %v3307
      %3340 = vst [vmem:[%s237 + $0x68] sm:$0xff] %v3308
      %3341 = vst [vmem:[%s237 + $0x70] sm:$0xff] %v3309
      %3342 = vst [vmem:[%s237 + $0x78] sm:$0xff] %v3310
      %3343 = vst [vmem:[%s237 + $0x80] sm:$0xff] %v3311
      %3344 = vst [vmem:[%s237 + $0x88] sm:$0xff] %v3312
      %3345 = vst [vmem:[%s237 + $0x90] sm:$0xff] %v3313
      %3346 = vst [vmem:[%s237 + $0x98] sm:$0xff] %v3314
      %3347 = vst [vmem:[%s237 + $0xa0] sm:$0xff] %v3315
      %3348 = vst [vmem:[%s237 + $0xa8] sm:$0xff] %v3316
      %3349 = vst [vmem:[%s237 + $0xb0] sm:$0xff] %v3317
      %3350 = vst [vmem:[%s237 + $0xb8] sm:$0xff] %v3318
      %3351 = vst [vmem:[%s237 + $0xc0] sm:$0xff] %v3319
      %3352 = vst [vmem:[%s237 + $0xc8] sm:$0xff] %v3320
      %3353 = vst [vmem:[%s237 + $0xd0] sm:$0xff] %v3321
      %3354 = vst [vmem:[%s237 + $0xd8] sm:$0xff] %v3322
      %3355 = vst [vmem:[%s237 + $0xe0] sm:$0xff] %v3323
      %3356 = vst [vmem:[%s237 + $0xe8] sm:$0xff] %v3324
      %3357 = vst [vmem:[%s237 + $0xf0] sm:$0xff] %v3325
      %3358 = vst [vmem:[%s237 + $0xf8] sm:$0xff] %v3326
      %v3359 = vadd.f32 %v3295, %v3296
      %v3360 = vadd.f32 %v3359, %v3297
      %v3361 = vadd.f32 %v3360, %v3298
      %v3362 = vadd.f32 %v3361, %v3299
      %v3363 = vadd.f32 %v3362, %v3300
      %v3364 = vadd.f32 %v3363, %v3301
      %v3365 = vadd.f32 %v3364, %v3302
      %v3366 = vadd.f32 %v3365, %v3303
      %v3367 = vadd.f32 %v3366, %v3304
      %v3368 = vadd.f32 %v3367, %v3305
      %v3369 = vadd.f32 %v3368, %v3306
      %v3370 = vadd.f32 %v3369, %v3307
      %v3371 = vadd.f32 %v3370, %v3308
      %v3372 = vadd.f32 %v3371, %v3309
      %v3373 = vadd.f32 %v3372, %v3310
      %v3374 = vadd.f32 %v3373, %v3311
      %v3375 = vadd.f32 %v3374, %v3312
      %v3376 = vadd.f32 %v3375, %v3313
      %v3377 = vadd.f32 %v3376, %v3314
      %v3378 = vadd.f32 %v3377, %v3315
      %v3379 = vadd.f32 %v3378, %v3316
      %v3380 = vadd.f32 %v3379, %v3317
      %v3381 = vadd.f32 %v3380, %v3318
      %v3382 = vadd.f32 %v3381, %v3319
      %v3383 = vadd.f32 %v3382, %v3320
      %v3384 = vadd.f32 %v3383, %v3321
      %v3385 = vadd.f32 %v3384, %v3322
      %v3386 = vadd.f32 %v3385, %v3323
      %v3387 = vadd.f32 %v3386, %v3324
      %v3388 = vadd.f32 %v3387, %v3325
      %v3389 = vadd.f32 %v3388, %v3326
      %v3390 = vrot.slane %v3389, 4
      %v3391 = vadd.f32 %v3389, %v3390
      %v3392 = vrot.slane %v3391, 2
      %v3393 = vadd.f32 %v3391, %v3392
      %v3394 = vrot.slane %v3393, 1
      %v3395 = vadd.f32 %v3393, %v3394
      %v3396 = vmul.f32 %v3295, %v3295
      %v3397 = vmul.f32 %v3296, %v3296
      %v3398 = vmul.f32 %v3297, %v3297
      %v3399 = vmul.f32 %v3298, %v3298
      %v3400 = vmul.f32 %v3299, %v3299
      %v3401 = vmul.f32 %v3300, %v3300
      %v3402 = vmul.f32 %v3301, %v3301
      %v3403 = vmul.f32 %v3302, %v3302
      %v3404 = vmul.f32 %v3303, %v3303
      %v3405 = vmul.f32 %v3304, %v3304
      %v3406 = vmul.f32 %v3305, %v3305
      %v3407 = vmul.f32 %v3306, %v3306
      %v3408 = vmul.f32 %v3307, %v3307
      %v3409 = vmul.f32 %v3308, %v3308
      %v3410 = vmul.f32 %v3309, %v3309
      %v3411 = vmul.f32 %v3310, %v3310
      %v3412 = vmul.f32 %v3311, %v3311
      %v3413 = vmul.f32 %v3312, %v3312
      %v3414 = vmul.f32 %v3313, %v3313
      %v3415 = vmul.f32 %v3314, %v3314
      %v3416 = vmul.f32 %v3315, %v3315
      %v3417 = vmul.f32 %v3316, %v3316
      %v3418 = vmul.f32 %v3317, %v3317
      %v3419 = vmul.f32 %v3318, %v3318
      %v3420 = vmul.f32 %v3319, %v3319
      %v3421 = vmul.f32 %v3320, %v3320
      %v3422 = vmul.f32 %v3321, %v3321
      %v3423 = vmul.f32 %v3322, %v3322
      %v3424 = vmul.f32 %v3323, %v3323
      %v3425 = vmul.f32 %v3324, %v3324
      %v3426 = vmul.f32 %v3325, %v3325
      %v3427 = vmul.f32 %v3326, %v3326
      %v3428 = vadd.f32 %v3396, %v3397
      %v3429 = vadd.f32 %v3428, %v3398
      %v3430 = vadd.f32 %v3429, %v3399
      %v3431 = vadd.f32 %v3430, %v3400
      %v3432 = vadd.f32 %v3431, %v3401
      %v3433 = vadd.f32 %v3432, %v3402
      %v3434 = vadd.f32 %v3433, %v3403
      %v3435 = vadd.f32 %v3434, %v3404
      %v3436 = vadd.f32 %v3435, %v3405
      %v3437 = vadd.f32 %v3436, %v3406
      %v3438 = vadd.f32 %v3437, %v3407
      %v3439 = vadd.f32 %v3438, %v3408
      %v3440 = vadd.f32 %v3439, %v3409
      %v3441 = vadd.f32 %v3440, %v3410
      %v3442 = vadd.f32 %v3441, %v3411
      %v3443 = vadd.f32 %v3442, %v3412
      %v3444 = vadd.f32 %v3443, %v3413
      %v3445 = vadd.f32 %v3444, %v3414
      %v3446 = vadd.f32 %v3445, %v3415
      %v3447 = vadd.f32 %v3446, %v3416
      %v3448 = vadd.f32 %v3447, %v3417
      %v3449 = vadd.f32 %v3448, %v3418
      %v3450 = vadd.f32 %v3449, %v3419
      %v3451 = vadd.f32 %v3450, %v3420
      %v3452 = vadd.f32 %v3451, %v3421
      %v3453 = vadd.f32 %v3452, %v3422
      %v3454 = vadd.f32 %v3453, %v3423
      %v3455 = vadd.f32 %v3454, %v3424
      %v3456 = vadd.f32 %v3455, %v3425
      %v3457 = vadd.f32 %v3456, %v3426
      %v3458 = vadd.f32 %v3457, %v3427
      %v3459 = vrot.slane %v3458, 4
      %v3460 = vadd.f32 %v3458, %v3459
      %v3461 = vrot.slane %v3460, 2
      %v3462 = vadd.f32 %v3460, %v3461
      %v3463 = vrot.slane %v3462, 1
      %v3464 = vadd.f32 %v3462, %v3463
      %vm3465 = vcmask 1040384
      %v3466 = vsel %vm3465, %v3395, %v3464
      %3467 = vst [vmem:[%s242] sm:$0x3] %v3466
      %vm3516 = vcmask 1046528
      %v3517 = vrot.slane %v639, 1
      %v3518 = vrot.slane %v640, 1
      %v3519 = vsel %vm3516, %v3517, %v3518
      %v3520 = vrot.slane %v641, 1
      %v3521 = vsel %vm3516, %v3518, %v3520
      %v3522 = vrot.slane %v642, 1
      %v3523 = vrot.slane %v643, 1
      %v3524 = vsel %vm3516, %v3522, %v3523
      %v3525 = vrot.slane %v644, 1
      %v3526 = vsel %vm3516, %v3523, %v3525
      %v3527 = vrot.slane %v645, 1
      %v3528 = vrot.slane %v646, 1
      %v3529 = vsel %vm3516, %v3527, %v3528
      %v3530 = vrot.slane %v647, 1
      %v3531 = vsel %vm3516, %v3528, %v3530
      %v3532 = vrot.slane %v648, 1
      %v3533 = vrot.slane %v649, 1
      %v3534 = vsel %vm3516, %v3532, %v3533
      %v3535 = vrot.slane %v650, 1
      %v3536 = vsel %vm3516, %v3533, %v3535
      %v3537 = vrot.slane %v651, 1
      %v3538 = vrot.slane %v652, 1
      %v3539 = vsel %vm3516, %v3537, %v3538
      %v3540 = vrot.slane %v653, 1
      %v3541 = vsel %vm3516, %v3538, %v3540
      %v3542 = vrot.slane %v654, 1
      %v3543 = vrot.slane %v655, 1
      %v3544 = vsel %vm3516, %v3542, %v3543
      %v3545 = vrot.slane %v656, 1
      %v3546 = vsel %vm3516, %v3543, %v3545
      %v3547 = vrot.slane %v657, 1
      %v3548 = vrot.slane %v658, 1
      %v3549 = vsel %vm3516, %v3547, %v3548
      %v3550 = vrot.slane %v659, 1
      %v3551 = vsel %vm3516, %v3548, %v3550
      %v3552 = vrot.slane %v660, 1
      %v3553 = vrot.slane %v661, 1
      %v3554 = vsel %vm3516, %v3552, %v3553
      %v3555 = vrot.slane %v662, 1
      %v3556 = vsel %vm3516, %v3553, %v3555
      %v3557 = vrot.slane %v663, 1
      %v3558 = vrot.slane %v664, 1
      %v3559 = vsel %vm3516, %v3557, %v3558
      %v3560 = vrot.slane %v665, 1
      %v3561 = vsel %vm3516, %v3558, %v3560
      %v3562 = vrot.slane %v666, 1
      %v3563 = vrot.slane %v667, 1
      %v3564 = vsel %vm3516, %v3562, %v3563
      %v3565 = vrot.slane %v668, 1
      %v3566 = vsel %vm3516, %v3563, %v3565
      %v3567 = vrot.slane %v669, 1
      %v3568 = vrot.slane %v670, 1
      %v3569 = vsel %vm3516, %v3567, %v3568
      %v3570 = vrot.slane %v671, 1
      %v3571 = vsel %vm3516, %v3568, %v3570
      %v3572 = vrot.slane %v672, 1
      %v3573 = vrot.slane %v673, 1
      %v3574 = vsel %vm3516, %v3572, %v3573
      %v3575 = vrot.slane %v674, 1
      %v3576 = vsel %vm3516, %v3573, %v3575
      %v3577 = vrot.slane %v675, 1
      %v3578 = vrot.slane %v676, 1
      %v3579 = vsel %vm3516, %v3577, %v3578
      %v3580 = vrot.slane %v677, 1
      %v3581 = vsel %vm3516, %v3578, %v3580
      %v3582 = vrot.slane %v678, 1
      %v3583 = vrot.slane %v679, 1
      %v3584 = vsel %vm3516, %v3582, %v3583
      %v3585 = vrot.slane %v680, 1
      %v3586 = vsel %vm3516, %v3583, %v3585
      %v3587 = vrot.slane %v681, 1
      %v3588 = vrot.slane %v682, 1
      %v3589 = vsel %vm3516, %v3587, %v3588
      %v3590 = vrot.slane %v683, 1
      %v3591 = vsel %vm3516, %v3588, %v3590
      %v3592 = vrot.slane %v684, 1
      %v3593 = vrot.slane %v685, 1
      %v3594 = vsel %vm3516, %v3592, %v3593
      %v3595 = vrot.slane %v686, 1
      %v3596 = vsel %vm3516, %v3593, %v3595
      %v3629 = vadd.f32 %v3519, %v3521
      %v3630 = vadd.f32 %v3629, %v3524
      %v3631 = vadd.f32 %v3630, %v3526
      %v3632 = vadd.f32 %v3631, %v3529
      %v3633 = vadd.f32 %v3632, %v3531
      %v3634 = vadd.f32 %v3633, %v3534
      %v3635 = vadd.f32 %v3634, %v3536
      %v3636 = vadd.f32 %v3635, %v3539
      %v3637 = vadd.f32 %v3636, %v3541
      %v3638 = vadd.f32 %v3637, %v3544
      %v3639 = vadd.f32 %v3638, %v3546
      %v3640 = vadd.f32 %v3639, %v3549
      %v3641 = vadd.f32 %v3640, %v3551
      %v3642 = vadd.f32 %v3641, %v3554
      %v3643 = vadd.f32 %v3642, %v3556
      %v3644 = vadd.f32 %v3643, %v3559
      %v3645 = vadd.f32 %v3644, %v3561
      %v3646 = vadd.f32 %v3645, %v3564
      %v3647 = vadd.f32 %v3646, %v3566
      %v3648 = vadd.f32 %v3647, %v3569
      %v3649 = vadd.f32 %v3648, %v3571
      %v3650 = vadd.f32 %v3649, %v3574
      %v3651 = vadd.f32 %v3650, %v3576
      %v3652 = vadd.f32 %v3651, %v3579
      %v3653 = vadd.f32 %v3652, %v3581
      %v3654 = vadd.f32 %v3653, %v3584
      %v3655 = vadd.f32 %v3654, %v3586
      %v3656 = vadd.f32 %v3655, %v3589
      %v3657 = vadd.f32 %v3656, %v3591
      %v3658 = vadd.f32 %v3657, %v3594
      %v3659 = vadd.f32 %v3658, %v3596
      %v3660 = vrot.slane %v3659, 4
      %v3661 = vadd.f32 %v3659, %v3660
      %v3662 = vrot.slane %v3661, 2
      %v3663 = vadd.f32 %v3661, %v3662
      %v3664 = vrot.slane %v3663, 1
      %v3665 = vadd.f32 %v3663, %v3664
      %v3666 = vmul.f32 %v3519, %v3519
      %v3667 = vmul.f32 %v3521, %v3521
      %v3668 = vmul.f32 %v3524, %v3524
      %v3669 = vmul.f32 %v3526, %v3526
      %v3670 = vmul.f32 %v3529, %v3529
      %v3671 = vmul.f32 %v3531, %v3531
      %v3672 = vmul.f32 %v3534, %v3534
      %v3673 = vmul.f32 %v3536, %v3536
      %v3674 = vmul.f32 %v3539, %v3539
      %v3675 = vmul.f32 %v3541, %v3541
      %v3676 = vmul.f32 %v3544, %v3544
      %v3677 = vmul.f32 %v3546, %v3546
      %v3678 = vmul.f32 %v3549, %v3549
      %v3679 = vmul.f32 %v3551, %v3551
      %v3680 = vmul.f32 %v3554, %v3554
      %v3681 = vmul.f32 %v3556, %v3556
      %v3682 = vmul.f32 %v3559, %v3559
      %v3683 = vmul.f32 %v3561, %v3561
      %v3684 = vmul.f32 %v3564, %v3564
      %v3685 = vmul.f32 %v3566, %v3566
      %v3686 = vmul.f32 %v3569, %v3569
      %v3687 = vmul.f32 %v3571, %v3571
      %v3688 = vmul.f32 %v3574, %v3574
      %v3689 = vmul.f32 %v3576, %v3576
      %v3690 = vmul.f32 %v3579, %v3579
      %v3691 = vmul.f32 %v3581, %v3581
      %v3692 = vmul.f32 %v3584, %v3584
      %v3693 = vmul.f32 %v3586, %v3586
      %v3694 = vmul.f32 %v3589, %v3589
      %v3695 = vmul.f32 %v3591, %v3591
      %v3696 = vmul.f32 %v3594, %v3594
      %v3697 = vmul.f32 %v3596, %v3596
      %v3698 = vadd.f32 %v3666, %v3667
      %v3699 = vadd.f32 %v3698, %v3668
      %v3700 = vadd.f32 %v3699, %v3669
      %v3701 = vadd.f32 %v3700, %v3670
      %v3702 = vadd.f32 %v3701, %v3671
      %v3703 = vadd.f32 %v3702, %v3672
      %v3704 = vadd.f32 %v3703, %v3673
      %v3705 = vadd.f32 %v3704, %v3674
      %v3706 = vadd.f32 %v3705, %v3675
      %v3707 = vadd.f32 %v3706, %v3676
      %v3708 = vadd.f32 %v3707, %v3677
      %v3709 = vadd.f32 %v3708, %v3678
      %v3710 = vadd.f32 %v3709, %v3679
      %v3711 = vadd.f32 %v3710, %v3680
      %v3712 = vadd.f32 %v3711, %v3681
      %v3713 = vadd.f32 %v3712, %v3682
      %v3714 = vadd.f32 %v3713, %v3683
      %v3715 = vadd.f32 %v3714, %v3684
      %v3716 = vadd.f32 %v3715, %v3685
      %v3717 = vadd.f32 %v3716, %v3686
      %v3718 = vadd.f32 %v3717, %v3687
      %v3719 = vadd.f32 %v3718, %v3688
      %v3720 = vadd.f32 %v3719, %v3689
      %v3721 = vadd.f32 %v3720, %v3690
      %v3722 = vadd.f32 %v3721, %v3691
      %v3723 = vadd.f32 %v3722, %v3692
      %v3724 = vadd.f32 %v3723, %v3693
      %v3725 = vadd.f32 %v3724, %v3694
      %v3726 = vadd.f32 %v3725, %v3695
      %v3727 = vadd.f32 %v3726, %v3696
      %v3728 = vadd.f32 %v3727, %v3697
      %v3729 = vrot.slane %v3728, 4
      %v3730 = vadd.f32 %v3728, %v3729
      %v3731 = vrot.slane %v3730, 2
      %v3732 = vadd.f32 %v3730, %v3731
      %v3733 = vrot.slane %v3732, 1
      %v3734 = vadd.f32 %v3732, %v3733
      %v3735 = vsel %vm3465, %v3665, %v3734
      %3736 = vst [vmem:[%s246] sm:$0x3] %v3735
      %s3737 = smul.u32 32, %s17
      %p3738 = scmp.lt.s32.totalorder %s3737, 63
      %s3739 = scalar_select %p3738, %s3737, 63
      %s3740 = smul.addr %s3739, 8
      %s3741 = scalar_lea.vmem %s3, %s3740
      %p3742 = scmp.lt.s32.totalorder %s17, 1
      %s3743 = scalar_select %p3742, %s17, 1
      %s3744 = smul.addr %s3743, 2
      %s3745 = scalar_lea.vmem %s4, %s3744
      %p3746 = scmp.lt.s32.totalorder %s17, 1
      %s3747 = scalar_select %p3746, %s17, 1
      %s3748 = smul.addr %s3747, 2
      %s3749 = scalar_lea.vmem %s5, %s3748
      // Predicated region
      $region33: #{_lambda_.7} parent=31 // pred_check
        %p3750 = pneg %p103
      $region34: #{_lambda_.7} parent=31 // pred_check_branch
        %3752 = sbr.rel (%p3750) target = $region36
      $region35: #{_lambda_.7} parent=31 // pred_region
        %s3753 = smul.u32 32, %s17
      $region36: #{_lambda_.7} parent=31 // pred_fallthru
        _
      // Predicated region
      $region37: #{_lambda_.7} parent=31 // pred_check
        %p3754 = pneg %p129
      $region38: #{_lambda_.7} parent=31 // pred_check_branch
        %3756 = sbr.rel (%p3754) target = $region40
      $region39: #{_lambda_.7} parent=31 // pred_region
        _
      $region40: #{_lambda_.7} parent=31 // pred_fallthru
        _
      // Predicated region
      $region41: #{_lambda_.7} parent=31 // pred_check
        %p3757 = pneg %p155
      $region42: #{_lambda_.7} parent=31 // pred_check_branch
        %3759 = sbr.rel (%p3757) target = $region44
      $region43: #{_lambda_.7} parent=31 // pred_region
        _
      $region44: #{_lambda_.7} parent=31 // pred_fallthru
        _
    $region32: #{_lambda_.7} parent=5 // pred_fallthru
      _
    %p3760 = scmp.le.s32.totalorder 2, %s12
    // Predicated region
    $region45: #{_lambda_.7} parent=5 // pred_check
      %p3761 = pneg %p3760
    $region46: #{_lambda_.7} parent=5 // pred_check_branch
      %3763 = sbr.rel (%p3761) target = $region48
    $region47: #{_lambda_.7} parent=5 // pred_region
      %s3764 = ssub.s32 %s12, 2
      // Predicated region
      $region49: #{_lambda_.7} parent=47 // pred_check
        %p3765 = pneg %p109
      $region50: #{_lambda_.7} parent=47 // pred_check_branch
        %3767 = sbr.rel (%p3765) target = $region52
      $region51: #{_lambda_.7} parent=47 // pred_region
        %s3768 = smul.u32 32, %s18
        %p3769 = scmp.lt.s32.totalorder %s3768, 63
        %s3770 = scalar_select %p3769, %s3768, 63
        %s3771 = smul.addr %s3770, 8
        %s3772 = scalar_lea.vmem %s3, %s3771
      $region52: #{_lambda_.7} parent=47 // pred_fallthru
        _
      // Predicated region
      $region53: #{_lambda_.7} parent=47 // pred_check
        %p3773 = pneg %p135
      $region54: #{_lambda_.7} parent=47 // pred_check_branch
        %3775 = sbr.rel (%p3773) target = $region56
      $region55: #{_lambda_.7} parent=47 // pred_region
        %p3776 = scmp.lt.s32.totalorder %s18, 1
        %s3777 = scalar_select %p3776, %s18, 1
        %s3778 = smul.addr %s3777, 2
        %s3779 = scalar_lea.vmem %s4, %s3778
      $region56: #{_lambda_.7} parent=47 // pred_fallthru
        _
      // Predicated region
      $region57: #{_lambda_.7} parent=47 // pred_check
        %p3780 = pneg %p161
      $region58: #{_lambda_.7} parent=47 // pred_check_branch
        %3782 = sbr.rel (%p3780) target = $region60
      $region59: #{_lambda_.7} parent=47 // pred_region
        %p3783 = scmp.lt.s32.totalorder %s18, 1
        %s3784 = scalar_select %p3783, %s18, 1
        %s3785 = smul.addr %s3784, 2
        %s3786 = scalar_lea.vmem %s5, %s3785
      $region60: #{_lambda_.7} parent=47 // pred_fallthru
        _
    $region48: #{_lambda_.7} parent=5 // pred_fallthru
      _
  $region6: #{_lambda_.7} parent=0 // loop_footer
    %s16 = sadd.s32 1, %s12
  $region7: #{_lambda_.7} parent=0 // loop_footer_branch
    %11 = sbr.rel target = $region3
  $region8: #{_lambda_.7} parent=0 // loop_exit
    _

// kernel: _lambda_.11
$region0: #{_lambda_.11}
  #allocation0 [shape = 'u32[]', space=smem, size = 0x4, offset = 0x4, fixed_abs, tag = 'smem constant byte address 0x4 - core index']
  #allocation1 [shape = 'u32[144,128]{1,0:T(1,128)}', space=vmem, size = 0x12000, scoped, tag = 'internal scratch']
  %s0 = inlined_call_operand.vmem [shape: f32[512,128], index: 0, kind: input, shape index: {}]
  %s1 = inlined_call_operand.vmem [shape: f32[2,128], index: 1, kind: input, shape index: {}]
  %s2 = inlined_call_operand.vmem [shape: f32[512,128], index: 2, kind: output, shape index: {}]
  %s3 = sld [smem:[#allocation0]]
  $region41: #{_lambda_.11} parent=0
    _
  %s5 = ssub.s32 1, %s3
  %s6 = scalar_select 0, %s5, %s3
  loop: start=0, step=1, limit=4
  $region2: #{_lambda_.11} parent=0 // loop_pre_header
    _
  $region3: #{_lambda_.11} parent=0 // loop_header
    %s8 = sphi 0, %s12
    %p9 = scmp.ge.s32.totalorder %s8, 4
    %s18 = sphi 0, %s20
    %s21 = sphi 0, %s18
    %s22 = sphi 0, %s21
    %s38 = sphi 0, %s22
    %s42 = sphi 0, %s42
    %s44 = sphi 0, %s42
    %s45 = sphi 0, %s44
    %s59 = sphi 0, %s45
    %s65 = sphi 0, %s67
    %s68 = sphi 0, %s65
    %s69 = sphi 0, %s68
    %s85 = sphi 0, %s69
  $region4: #{_lambda_.11} parent=0 // loop_header_branch
    %11 = sbr.rel (%p9) target = $region8
  $region5: #{_lambda_.11} parent=0 // loop_body
    %s13 = ssub.s32 %s8, 1
    %s14 = ssub.s32 %s8, 2
    %s15 = sadd.s32 %s8, 1
    %s16 = ssub.s32 %s8, %s15
    %p17 = scmp.eq.s32.totalorder %s16, 0
    %s19 = sadd.s32 %s18, 1
    %s20 = scalar_select %p17, %s18, %s19
    %p23 = pneg %p17
    %p24 = scmp.eq.s32.totalorder %s8, 1
    %p25 = por %p23, %p24
    %p26 = scmp.ne.s32.totalorder %s18, %s21
    %p27 = scmp.eq.s32.totalorder %s8, 0
    %p28 = por %p26, %p27
    %p29 = scmp.ne.s32.totalorder %s18, %s21
    %p30 = scmp.eq.s32.totalorder %s13, 1
    %p31 = por %p29, %p30
    %p32 = scmp.ne.s32.totalorder %s21, %s22
    %p33 = scmp.eq.s32.totalorder %s13, 0
    %p34 = por %p32, %p33
    %p35 = scmp.ne.s32.totalorder %s21, %s22
    %p36 = scmp.eq.s32.totalorder %s14, 1
    %p37 = por %p35, %p36
    %p39 = scmp.ne.s32.totalorder %s22, %s38
    %p40 = scmp.eq.s32.totalorder %s14, 0
    %p41 = por %p39, %p40
    %s43 = sadd.s32 %s42, 1
    %p46 = scmp.eq.s32.totalorder %s8, 1
    %p47 = scmp.ne.s32.totalorder %s42, %s44
    %p48 = scmp.eq.s32.totalorder %s8, 0
    %p49 = por %p47, %p48
    %p50 = scmp.ne.s32.totalorder %s42, %s44
    %p51 = scmp.eq.s32.totalorder %s13, 1
    %p52 = por %p50, %p51
    %p53 = scmp.ne.s32.totalorder %s44, %s45
    %p54 = scmp.eq.s32.totalorder %s13, 0
    %p55 = por %p53, %p54
    %p56 = scmp.ne.s32.totalorder %s44, %s45
    %p57 = scmp.eq.s32.totalorder %s14, 1
    %p58 = por %p56, %p57
    %p60 = scmp.ne.s32.totalorder %s45, %s59
    %p61 = scmp.eq.s32.totalorder %s14, 0
    %p62 = por %p60, %p61
    %s63 = ssub.s32 %s8, %s15
    %p64 = scmp.eq.s32.totalorder %s63, 0
    %s66 = sadd.s32 %s65, 1
    %s67 = scalar_select %p64, %s65, %s66
    %p70 = pneg %p64
    %p71 = scmp.eq.s32.totalorder %s8, 1
    %p72 = por %p70, %p71
    %p73 = scmp.ne.s32.totalorder %s65, %s68
    %p74 = scmp.eq.s32.totalorder %s8, 0
    %p75 = por %p73, %p74
    %p76 = scmp.ne.s32.totalorder %s65, %s68
    %p77 = scmp.eq.s32.totalorder %s13, 1
    %p78 = por %p76, %p77
    %p79 = scmp.ne.s32.totalorder %s68, %s69
    %p80 = scmp.eq.s32.totalorder %s13, 0
    %p81 = por %p79, %p80
    %p82 = scmp.ne.s32.totalorder %s68, %s69
    %p83 = scmp.eq.s32.totalorder %s14, 1
    %p84 = por %p82, %p83
    %p86 = scmp.ne.s32.totalorder %s69, %s85
    %p87 = scmp.eq.s32.totalorder %s14, 0
    %p88 = por %p86, %p87
    %p89 = scmp.le.s32.totalorder 1, %s8
    %p90 = scmp.lt.s32.totalorder %s8, 3
    %p91 = pnand %p89, %p90
    %p92 = pneg %p91
    // Predicated region
    $region9: #{_lambda_.11} parent=5 // pred_check
      _
    $region10: #{_lambda_.11} parent=5 // pred_check_branch
      %94 = sbr.rel (%p91) target = $region12
    $region11: #{_lambda_.11} parent=5 // pred_region
      %s95 = ssub.s32 %s8, 1
      // Predicated region
      $region13: #{_lambda_.11} parent=11 // pred_check
        %p96 = pneg %p55
      $region14: #{_lambda_.11} parent=11 // pred_check_branch
        %98 = sbr.rel (%p96) target = $region16
      $region15: #{_lambda_.11} parent=11 // pred_region
        _
      $region16: #{_lambda_.11} parent=11 // pred_fallthru
        _
    $region12: #{_lambda_.11} parent=5 // pred_fallthru
      _
    %p99 = scmp.lt.s32.totalorder %s8, 2
    // Predicated region
    $region17: #{_lambda_.11} parent=5 // pred_check
      %p100 = pneg %p99
    $region18: #{_lambda_.11} parent=5 // pred_check_branch
      %102 = sbr.rel (%p100) target = $region20
    $region19: #{_lambda_.11} parent=5 // pred_region
      // Predicated region
      $region21: #{_lambda_.11} parent=19 // pred_check
        %p103 = pneg %p28
      $region22: #{_lambda_.11} parent=19 // pred_check_branch
        %105 = sbr.rel (%p103) target = $region24
      $region23: #{_lambda_.11} parent=19 // pred_region
        %s106 = smul.u32 32, %s8
        %p107 = scmp.lt.s32.totalorder %s106, 63
        %s108 = scalar_select %p107, %s106, 63
        %s109 = smul.addr %s108, 8
        %s110 = scalar_lea.vmem %s0, %s109
        %s111 = smul.u32 32, %s8
      $region24: #{_lambda_.11} parent=19 // pred_fallthru
        _
    $region20: #{_lambda_.11} parent=5 // pred_fallthru
      _
    %p112 = scmp.le.s32.totalorder 1, %s8
    %p113 = scmp.lt.s32.totalorder %s8, 3
    %p114 = pnand %p112, %p113
    %p115 = pneg %p114
    // Predicated region
    $region25: #{_lambda_.11} parent=5 // pred_check
      _
    $region26: #{_lambda_.11} parent=5 // pred_check_branch
      %117 = sbr.rel (%p114) target = $region28
    $region27: #{_lambda_.11} parent=5 // pred_region
      %s118 = ssub.s32 %s8, 1
      %s119 = smul.u32 32, %s13
      %p120 = scmp.lt.s32.totalorder %s119, 63
      %s121 = scalar_select %p120, %s119, 63
      %s122 = smul.addr %s121, 8
      %s123 = scalar_lea.vmem %s0, %s122
      %p124 = pneg %p34
      %p125 = pneg %p31
      %p126 = pneg %p55
      %p127 = pneg %p52
      %p128 = pneg %p81
      %p129 = pneg %p78
      %s130 = smul.u32 32, %s13
      %p131 = scmp.lt.s32.totalorder %s130, 63
      %s132 = scalar_select %p131, %s130, 63
      %s133 = smul.addr %s132, 8
      %s134 = scalar_lea.vmem %s2, %s133
      %s135 = smul.u32 32, %s13
      %p136 = scmp.lt.s32.totalorder %s135, 63
      %s137 = scalar_select %p136, %s135, 63
      %s138 = smul.addr %s137, 8
      %s139 = scalar_lea.vmem %s0, %s138
      %s140 = smul.u32 32, %s13
      %s141 = smul.u32 32, %s13
      %p142 = scmp.lt.s32.totalorder %s141, 63
      %s143 = scalar_select %p142, %s141, 63
      %s144 = smul.addr %s143, 8
      %s145 = scalar_lea.vmem %s2, %s144
      %s146 = smul.u32 32, %s13
      %v147 = vld [vmem:[%s139] sm:$0xff]
      %v148 = vld [vmem:[%s139 + $0x8] sm:$0xff]
      %v149 = vld [vmem:[%s139 + $0x10] sm:$0xff]
      %v150 = vld [vmem:[%s139 + $0x18] sm:$0xff]
      %v151 = vld [vmem:[%s139 + $0x20] sm:$0xff]
      %v152 = vld [vmem:[%s139 + $0x28] sm:$0xff]
      %v153 = vld [vmem:[%s139 + $0x30] sm:$0xff]
      %v154 = vld [vmem:[%s139 + $0x38] sm:$0xff]
      %v155 = vld [vmem:[%s139 + $0x40] sm:$0xff]
      %v156 = vld [vmem:[%s139 + $0x48] sm:$0xff]
      %v157 = vld [vmem:[%s139 + $0x50] sm:$0xff]
      %v158 = vld [vmem:[%s139 + $0x58] sm:$0xff]
      %v159 = vld [vmem:[%s139 + $0x60] sm:$0xff]
      %v160 = vld [vmem:[%s139 + $0x68] sm:$0xff]
      %v161 = vld [vmem:[%s139 + $0x70] sm:$0xff]
      %v162 = vld [vmem:[%s139 + $0x78] sm:$0xff]
      %v163 = vld [vmem:[%s139 + $0x80] sm:$0xff]
      %v164 = vld [vmem:[%s139 + $0x88] sm:$0xff]
      %v165 = vld [vmem:[%s139 + $0x90] sm:$0xff]
      %v166 = vld [vmem:[%s139 + $0x98] sm:$0xff]
      %v167 = vld [vmem:[%s139 + $0xa0] sm:$0xff]
      %v168 = vld [vmem:[%s139 + $0xa8] sm:$0xff]
      %v169 = vld [vmem:[%s139 + $0xb0] sm:$0xff]
      %v170 = vld [vmem:[%s139 + $0xb8] sm:$0xff]
      %v171 = vld [vmem:[%s139 + $0xc0] sm:$0xff]
      %v172 = vld [vmem:[%s139 + $0xc8] sm:$0xff]
      %v173 = vld [vmem:[%s139 + $0xd0] sm:$0xff]
      %v174 = vld [vmem:[%s139 + $0xd8] sm:$0xff]
      %v175 = vld [vmem:[%s139 + $0xe0] sm:$0xff]
      %v176 = vld [vmem:[%s139 + $0xe8] sm:$0xff]
      %v177 = vld [vmem:[%s139 + $0xf0] sm:$0xff]
      %v178 = vld [vmem:[%s139 + $0xf8] sm:$0xff]
      %v179 = vld [vmem:[%s1] sm:$0x1]
      %v180 = vlaneseq
      %v181 = vshrl.u32 %v180, 7
      %v182 = vsub.s32 0, %v181
      %v183 = vrot.slane %v179, %v182
      %v184 = vmul.f32 %v147, %v183
      %v185 = vmul.f32 %v148, %v183
      %v186 = vmul.f32 %v149, %v183
      %v187 = vmul.f32 %v150, %v183
      %v188 = vmul.f32 %v151, %v183
      %v189 = vmul.f32 %v152, %v183
      %v190 = vmul.f32 %v153, %v183
      %v191 = vmul.f32 %v154, %v183
      %v192 = vmul.f32 %v155, %v183
      %v193 = vmul.f32 %v156, %v183
      %v194 = vmul.f32 %v157, %v183
      %v195 = vmul.f32 %v158, %v183
      %v196 = vmul.f32 %v159, %v183
      %v197 = vmul.f32 %v160, %v183
      %v198 = vmul.f32 %v161, %v183
      %v199 = vmul.f32 %v162, %v183
      %v200 = vmul.f32 %v163, %v183
      %v201 = vmul.f32 %v164, %v183
      %v202 = vmul.f32 %v165, %v183
      %v203 = vmul.f32 %v166, %v183
      %v204 = vmul.f32 %v167, %v183
      %v205 = vmul.f32 %v168, %v183
      %v206 = vmul.f32 %v169, %v183
      %v207 = vmul.f32 %v170, %v183
      %v208 = vmul.f32 %v171, %v183
      %v209 = vmul.f32 %v172, %v183
      %v210 = vmul.f32 %v173, %v183
      %v211 = vmul.f32 %v174, %v183
      %v212 = vmul.f32 %v175, %v183
      %v213 = vmul.f32 %v176, %v183
      %v214 = vmul.f32 %v177, %v183
      %v215 = vmul.f32 %v178, %v183
      %v216 = vld [vmem:[%s1 + $0x1] sm:$0x1]
      %v217 = vlaneseq
      %v218 = vshrl.u32 %v217, 7
      %v219 = vsub.s32 0, %v218
      %v220 = vrot.slane %v216, %v219
      %v221 = vadd.f32 %v184, %v220
      %v222 = vadd.f32 %v185, %v220
      %v223 = vadd.f32 %v186, %v220
      %v224 = vadd.f32 %v187, %v220
      %v225 = vadd.f32 %v188, %v220
      %v226 = vadd.f32 %v189, %v220
      %v227 = vadd.f32 %v190, %v220
      %v228 = vadd.f32 %v191, %v220
      %v229 = vadd.f32 %v192, %v220
      %v230 = vadd.f32 %v193, %v220
      %v231 = vadd.f32 %v194, %v220
      %v232 = vadd.f32 %v195, %v220
      %v233 = vadd.f32 %v196, %v220
      %v234 = vadd.f32 %v197, %v220
      %v235 = vadd.f32 %v198, %v220
      %v236 = vadd.f32 %v199, %v220
      %v237 = vadd.f32 %v200, %v220
      %v238 = vadd.f32 %v201, %v220
      %v239 = vadd.f32 %v202, %v220
      %v240 = vadd.f32 %v203, %v220
      %v241 = vadd.f32 %v204, %v220
      %v242 = vadd.f32 %v205, %v220
      %v243 = vadd.f32 %v206, %v220
      %v244 = vadd.f32 %v207, %v220
      %v245 = vadd.f32 %v208, %v220
      %v246 = vadd.f32 %v209, %v220
      %v247 = vadd.f32 %v210, %v220
      %v248 = vadd.f32 %v211, %v220
      %v249 = vadd.f32 %v212, %v220
      %v250 = vadd.f32 %v213, %v220
      %v251 = vadd.f32 %v214, %v220
      %v252 = vadd.f32 %v215, %v220
      %253 = vst [vmem:[%s145] sm:$0xff] %v221
      %254 = vst [vmem:[%s145 + $0x8] sm:$0xff] %v222
      %255 = vst [vmem:[%s145 + $0x10] sm:$0xff] %v223
      %256 = vst [vmem:[%s145 + $0x18] sm:$0xff] %v224
      %257 = vst [vmem:[%s145 + $0x20] sm:$0xff] %v225
      %258 = vst [vmem:[%s145 + $0x28] sm:$0xff] %v226
      %259 = vst [vmem:[%s145 + $0x30] sm:$0xff] %v227
      %260 = vst [vmem:[%s145 + $0x38] sm:$0xff] %v228
      %261 = vst [vmem:[%s145 + $0x40] sm:$0xff] %v229
      %262 = vst [vmem:[%s145 + $0x48] sm:$0xff] %v230
      %263 = vst [vmem:[%s145 + $0x50] sm:$0xff] %v231
      %264 = vst [vmem:[%s145 + $0x58] sm:$0xff] %v232
      %265 = vst [vmem:[%s145 + $0x60] sm:$0xff] %v233
      %266 = vst [vmem:[%s145 + $0x68] sm:$0xff] %v234
      %267 = vst [vmem:[%s145 + $0x70] sm:$0xff] %v235
      %268 = vst [vmem:[%s145 + $0x78] sm:$0xff] %v236
      %269 = vst [vmem:[%s145 + $0x80] sm:$0xff] %v237
      %270 = vst [vmem:[%s145 + $0x88] sm:$0xff] %v238
      %271 = vst [vmem:[%s145 + $0x90] sm:$0xff] %v239
      %272 = vst [vmem:[%s145 + $0x98] sm:$0xff] %v240
      %273 = vst [vmem:[%s145 + $0xa0] sm:$0xff] %v241
      %274 = vst [vmem:[%s145 + $0xa8] sm:$0xff] %v242
      %275 = vst [vmem:[%s145 + $0xb0] sm:$0xff] %v243
      %276 = vst [vmem:[%s145 + $0xb8] sm:$0xff] %v244
      %277 = vst [vmem:[%s145 + $0xc0] sm:$0xff] %v245
      %278 = vst [vmem:[%s145 + $0xc8] sm:$0xff] %v246
      %279 = vst [vmem:[%s145 + $0xd0] sm:$0xff] %v247
      %280 = vst [vmem:[%s145 + $0xd8] sm:$0xff] %v248
      %281 = vst [vmem:[%s145 + $0xe0] sm:$0xff] %v249
      %282 = vst [vmem:[%s145 + $0xe8] sm:$0xff] %v250
      %283 = vst [vmem:[%s145 + $0xf0] sm:$0xff] %v251
      %284 = vst [vmem:[%s145 + $0xf8] sm:$0xff] %v252
      %s285 = smul.u32 32, %s13
      %p286 = scmp.lt.s32.totalorder %s285, 63
      %s287 = scalar_select %p286, %s285, 63
      %s288 = smul.addr %s287, 8
      %s289 = scalar_lea.vmem %s2, %s288
      // Predicated region
      $region29: #{_lambda_.11} parent=27 // pred_check
        %p290 = pneg %p78
      $region30: #{_lambda_.11} parent=27 // pred_check_branch
        %292 = sbr.rel (%p290) target = $region32
      $region31: #{_lambda_.11} parent=27 // pred_region
        %s293 = smul.u32 32, %s13
      $region32: #{_lambda_.11} parent=27 // pred_fallthru
        _
    $region28: #{_lambda_.11} parent=5 // pred_fallthru
      _
    %p294 = scmp.le.s32.totalorder 2, %s8
    // Predicated region
    $region33: #{_lambda_.11} parent=5 // pred_check
      %p295 = pneg %p294
    $region34: #{_lambda_.11} parent=5 // pred_check_branch
      %297 = sbr.rel (%p295) target = $region36
    $region35: #{_lambda_.11} parent=5 // pred_region
      %s298 = ssub.s32 %s8, 2
      // Predicated region
      $region37: #{_lambda_.11} parent=35 // pred_check
        %p299 = pneg %p84
      $region38: #{_lambda_.11} parent=35 // pred_check_branch
        %301 = sbr.rel (%p299) target = $region40
      $region39: #{_lambda_.11} parent=35 // pred_region
        %s302 = smul.u32 32, %s14
        %p303 = scmp.lt.s32.totalorder %s302, 63
        %s304 = scalar_select %p303, %s302, 63
        %s305 = smul.addr %s304, 8
        %s306 = scalar_lea.vmem %s2, %s305
      $region40: #{_lambda_.11} parent=35 // pred_fallthru
        _
    $region36: #{_lambda_.11} parent=5 // pred_fallthru
      _
  $region6: #{_lambda_.11} parent=0 // loop_footer
    %s12 = sadd.s32 1, %s8
  $region7: #{_lambda_.11} parent=0 // loop_footer_branch
    %7 = sbr.rel target = $region3
  $region8: #{_lambda_.11} parent=0 // loop_exit
    _

// kernel: _lambda_.10
$region0: #{_lambda_.10}
  #allocation0 [shape = 'u32[]', space=smem, size = 0x4, offset = 0x4, fixed_abs, tag = 'smem constant byte address 0x4 - core index']
  #allocation1 [shape = 'u32[144,128]{1,0:T(1,128)}', space=vmem, size = 0x12000, scoped, tag = 'internal scratch']
  %s0 = inlined_call_operand.vmem [shape: f32[512,128], index: 0, kind: input, shape index: {}]
  %s1 = inlined_call_operand.vmem [shape: f32[512,128], index: 1, kind: input, shape index: {}]
  %s2 = inlined_call_operand.vmem [shape: f32[512,128], index: 2, kind: input, shape index: {}]
  %s3 = inlined_call_operand.vmem [shape: f32[512,128], index: 3, kind: input, shape index: {}]
  %s4 = inlined_call_operand.vmem [shape: f32[14,128], index: 4, kind: input, shape index: {}]
  %s5 = inlined_call_operand.vmem [shape: f32[128,128], index: 5, kind: input, shape index: {}]
  %s6 = inlined_call_operand.vmem [shape: f32[128,128], index: 6, kind: input, shape index: {}]
  %s7 = inlined_call_operand.vmem [shape: f32[128,128], index: 7, kind: input, shape index: {}]
  %s8 = inlined_call_operand.vmem [shape: f32[512,128], index: 8, kind: output, shape index: {0}]
  %s9 = inlined_call_operand.vmem [shape: f32[2,2,128], index: 9, kind: output, shape index: {1}]
  %10 = xla_tuple %s8, %s9
  %s11 = sld [smem:[#allocation0]]
  $region73: #{_lambda_.10} parent=0
    _
  %s13 = ssub.s32 1, %s11
  %s14 = scalar_select 0, %s13, %s11
  loop: start=0, step=1, limit=4
  $region2: #{_lambda_.10} parent=0 // loop_pre_header
    _
  $region3: #{_lambda_.10} parent=0 // loop_header
    %s16 = sphi 0, %s20
    %p17 = scmp.ge.s32.totalorder %s16, 4
    %s26 = sphi 0, %s28
    %s29 = sphi 0, %s26
    %s30 = sphi 0, %s29
    %s46 = sphi 0, %s30
    %s52 = sphi 0, %s54
    %s55 = sphi 0, %s52
    %s56 = sphi 0, %s55
    %s72 = sphi 0, %s56
    %s78 = sphi 0, %s80
    %s81 = sphi 0, %s78
    %s82 = sphi 0, %s81
    %s98 = sphi 0, %s82
    %s104 = sphi 0, %s106
    %s107 = sphi 0, %s104
    %s108 = sphi 0, %s107
    %s124 = sphi 0, %s108
    %s128 = sphi 0, %s128
    %s130 = sphi 0, %s128
    %s131 = sphi 0, %s130
    %s145 = sphi 0, %s131
    %s149 = sphi 0, %s149
    %s151 = sphi 0, %s149
    %s152 = sphi 0, %s151
    %s166 = sphi 0, %s152
    %s170 = sphi 0, %s170
    %s172 = sphi 0, %s170
    %s173 = sphi 0, %s172
    %s187 = sphi 0, %s173
    %s191 = sphi 0, %s191
    %s193 = sphi 0, %s191
    %s194 = sphi 0, %s193
    %s208 = sphi 0, %s194
    %s214 = sphi 0, %s216
    %s217 = sphi 0, %s214
    %s218 = sphi 0, %s217
    %s234 = sphi 0, %s218
    %s240 = sphi 0, %s242
    %s243 = sphi 0, %s240
    %s244 = sphi 0, %s243
    %s260 = sphi 0, %s244
  $region4: #{_lambda_.10} parent=0 // loop_header_branch
    %19 = sbr.rel (%p17) target = $region8
  $region5: #{_lambda_.10} parent=0 // loop_body
    %s21 = ssub.s32 %s16, 1
    %s22 = ssub.s32 %s16, 2
    %s23 = sadd.s32 %s16, 1
    %s24 = ssub.s32 %s16, %s23
    %p25 = scmp.eq.s32.totalorder %s24, 0
    %s27 = sadd.s32 %s26, 1
    %s28 = scalar_select %p25, %s26, %s27
    %p31 = pneg %p25
    %p32 = scmp.eq.s32.totalorder %s16, 1
    %p33 = por %p31, %p32
    %p34 = scmp.ne.s32.totalorder %s26, %s29
    %p35 = scmp.eq.s32.totalorder %s16, 0
    %p36 = por %p34, %p35
    %p37 = scmp.ne.s32.totalorder %s26, %s29
    %p38 = scmp.eq.s32.totalorder %s21, 1
    %p39 = por %p37, %p38
    %p40 = scmp.ne.s32.totalorder %s29, %s30
    %p41 = scmp.eq.s32.totalorder %s21, 0
    %p42 = por %p40, %p41
    %p43 = scmp.ne.s32.totalorder %s29, %s30
    %p44 = scmp.eq.s32.totalorder %s22, 1
    %p45 = por %p43, %p44
    %p47 = scmp.ne.s32.totalorder %s30, %s46
    %p48 = scmp.eq.s32.totalorder %s22, 0
    %p49 = por %p47, %p48
    %s50 = ssub.s32 %s16, %s23
    %p51 = scmp.eq.s32.totalorder %s50, 0
    %s53 = sadd.s32 %s52, 1
    %s54 = scalar_select %p51, %s52, %s53
    %p57 = pneg %p51
    %p58 = scmp.eq.s32.totalorder %s16, 1
    %p59 = por %p57, %p58
    %p60 = scmp.ne.s32.totalorder %s52, %s55
    %p61 = scmp.eq.s32.totalorder %s16, 0
    %p62 = por %p60, %p61
    %p63 = scmp.ne.s32.totalorder %s52, %s55
    %p64 = scmp.eq.s32.totalorder %s21, 1
    %p65 = por %p63, %p64
    %p66 = scmp.ne.s32.totalorder %s55, %s56
    %p67 = scmp.eq.s32.totalorder %s21, 0
    %p68 = por %p66, %p67
    %p69 = scmp.ne.s32.totalorder %s55, %s56
    %p70 = scmp.eq.s32.totalorder %s22, 1
    %p71 = por %p69, %p70
    %p73 = scmp.ne.s32.totalorder %s56, %s72
    %p74 = scmp.eq.s32.totalorder %s22, 0
    %p75 = por %p73, %p74
    %s76 = ssub.s32 %s16, %s23
    %p77 = scmp.eq.s32.totalorder %s76, 0
    %s79 = sadd.s32 %s78, 1
    %s80 = scalar_select %p77, %s78, %s79
    %p83 = pneg %p77
    %p84 = scmp.eq.s32.totalorder %s16, 1
    %p85 = por %p83, %p84
    %p86 = scmp.ne.s32.totalorder %s78, %s81
    %p87 = scmp.eq.s32.totalorder %s16, 0
    %p88 = por %p86, %p87
    %p89 = scmp.ne.s32.totalorder %s78, %s81
    %p90 = scmp.eq.s32.totalorder %s21, 1
    %p91 = por %p89, %p90
    %p92 = scmp.ne.s32.totalorder %s81, %s82
    %p93 = scmp.eq.s32.totalorder %s21, 0
    %p94 = por %p92, %p93
    %p95 = scmp.ne.s32.totalorder %s81, %s82
    %p96 = scmp.eq.s32.totalorder %s22, 1
    %p97 = por %p95, %p96
    %p99 = scmp.ne.s32.totalorder %s82, %s98
    %p100 = scmp.eq.s32.totalorder %s22, 0
    %p101 = por %p99, %p100
    %s102 = ssub.s32 %s16, %s23
    %p103 = scmp.eq.s32.totalorder %s102, 0
    %s105 = sadd.s32 %s104, 1
    %s106 = scalar_select %p103, %s104, %s105
    %p109 = pneg %p103
    %p110 = scmp.eq.s32.totalorder %s16, 1
    %p111 = por %p109, %p110
    %p112 = scmp.ne.s32.totalorder %s104, %s107
    %p113 = scmp.eq.s32.totalorder %s16, 0
    %p114 = por %p112, %p113
    %p115 = scmp.ne.s32.totalorder %s104, %s107
    %p116 = scmp.eq.s32.totalorder %s21, 1
    %p117 = por %p115, %p116
    %p118 = scmp.ne.s32.totalorder %s107, %s108
    %p119 = scmp.eq.s32.totalorder %s21, 0
    %p120 = por %p118, %p119
    %p121 = scmp.ne.s32.totalorder %s107, %s108
    %p122 = scmp.eq.s32.totalorder %s22, 1
    %p123 = por %p121, %p122
    %p125 = scmp.ne.s32.totalorder %s108, %s124
    %p126 = scmp.eq.s32.totalorder %s22, 0
    %p127 = por %p125, %p126
    %s129 = sadd.s32 %s128, 1
    %p132 = scmp.eq.s32.totalorder %s16, 1
    %p133 = scmp.ne.s32.totalorder %s128, %s130
    %p134 = scmp.eq.s32.totalorder %s16, 0
    %p135 = por %p133, %p134
    %p136 = scmp.ne.s32.totalorder %s128, %s130
    %p137 = scmp.eq.s32.totalorder %s21, 1
    %p138 = por %p136, %p137
    %p139 = scmp.ne.s32.totalorder %s130, %s131
    %p140 = scmp.eq.s32.totalorder %s21, 0
    %p141 = por %p139, %p140
    %p142 = scmp.ne.s32.totalorder %s130, %s131
    %p143 = scmp.eq.s32.totalorder %s22, 1
    %p144 = por %p142, %p143
    %p146 = scmp.ne.s32.totalorder %s131, %s145
    %p147 = scmp.eq.s32.totalorder %s22, 0
    %p148 = por %p146, %p147
    %s150 = sadd.s32 %s149, 1
    %p153 = scmp.eq.s32.totalorder %s16, 1
    %p154 = scmp.ne.s32.totalorder %s149, %s151
    %p155 = scmp.eq.s32.totalorder %s16, 0
    %p156 = por %p154, %p155
    %p157 = scmp.ne.s32.totalorder %s149, %s151
    %p158 = scmp.eq.s32.totalorder %s21, 1
    %p159 = por %p157, %p158
    %p160 = scmp.ne.s32.totalorder %s151, %s152
    %p161 = scmp.eq.s32.totalorder %s21, 0
    %p162 = por %p160, %p161
    %p163 = scmp.ne.s32.totalorder %s151, %s152
    %p164 = scmp.eq.s32.totalorder %s22, 1
    %p165 = por %p163, %p164
    %p167 = scmp.ne.s32.totalorder %s152, %s166
    %p168 = scmp.eq.s32.totalorder %s22, 0
    %p169 = por %p167, %p168
    %s171 = sadd.s32 %s170, 1
    %p174 = scmp.eq.s32.totalorder %s16, 1
    %p175 = scmp.ne.s32.totalorder %s170, %s172
    %p176 = scmp.eq.s32.totalorder %s16, 0
    %p177 = por %p175, %p176
    %p178 = scmp.ne.s32.totalorder %s170, %s172
    %p179 = scmp.eq.s32.totalorder %s21, 1
    %p180 = por %p178, %p179
    %p181 = scmp.ne.s32.totalorder %s172, %s173
    %p182 = scmp.eq.s32.totalorder %s21, 0
    %p183 = por %p181, %p182
    %p184 = scmp.ne.s32.totalorder %s172, %s173
    %p185 = scmp.eq.s32.totalorder %s22, 1
    %p186 = por %p184, %p185
    %p188 = scmp.ne.s32.totalorder %s173, %s187
    %p189 = scmp.eq.s32.totalorder %s22, 0
    %p190 = por %p188, %p189
    %s192 = sadd.s32 %s191, 1
    %p195 = scmp.eq.s32.totalorder %s16, 1
    %p196 = scmp.ne.s32.totalorder %s191, %s193
    %p197 = scmp.eq.s32.totalorder %s16, 0
    %p198 = por %p196, %p197
    %p199 = scmp.ne.s32.totalorder %s191, %s193
    %p200 = scmp.eq.s32.totalorder %s21, 1
    %p201 = por %p199, %p200
    %p202 = scmp.ne.s32.totalorder %s193, %s194
    %p203 = scmp.eq.s32.totalorder %s21, 0
    %p204 = por %p202, %p203
    %p205 = scmp.ne.s32.totalorder %s193, %s194
    %p206 = scmp.eq.s32.totalorder %s22, 1
    %p207 = por %p205, %p206
    %p209 = scmp.ne.s32.totalorder %s194, %s208
    %p210 = scmp.eq.s32.totalorder %s22, 0
    %p211 = por %p209, %p210
    %s212 = ssub.s32 %s16, %s23
    %p213 = scmp.eq.s32.totalorder %s212, 0
    %s215 = sadd.s32 %s214, 1
    %s216 = scalar_select %p213, %s214, %s215
    %p219 = pneg %p213
    %p220 = scmp.eq.s32.totalorder %s16, 1
    %p221 = por %p219, %p220
    %p222 = scmp.ne.s32.totalorder %s214, %s217
    %p223 = scmp.eq.s32.totalorder %s16, 0
    %p224 = por %p222, %p223
    %p225 = scmp.ne.s32.totalorder %s214, %s217
    %p226 = scmp.eq.s32.totalorder %s21, 1
    %p227 = por %p225, %p226
    %p228 = scmp.ne.s32.totalorder %s217, %s218
    %p229 = scmp.eq.s32.totalorder %s21, 0
    %p230 = por %p228, %p229
    %p231 = scmp.ne.s32.totalorder %s217, %s218
    %p232 = scmp.eq.s32.totalorder %s22, 1
    %p233 = por %p231, %p232
    %p235 = scmp.ne.s32.totalorder %s218, %s234
    %p236 = scmp.eq.s32.totalorder %s22, 0
    %p237 = por %p235, %p236
    %s238 = ssub.s32 %s16, %s23
    %p239 = scmp.eq.s32.totalorder %s238, 0
    %s241 = sadd.s32 %s240, 1
    %s242 = scalar_select %p239, %s240, %s241
    %p245 = pneg %p239
    %p246 = scmp.eq.s32.totalorder %s16, 1
    %p247 = por %p245, %p246
    %p248 = scmp.ne.s32.totalorder %s240, %s243
    %p249 = scmp.eq.s32.totalorder %s16, 0
    %p250 = por %p248, %p249
    %p251 = scmp.ne.s32.totalorder %s240, %s243
    %p252 = scmp.eq.s32.totalorder %s21, 1
    %p253 = por %p251, %p252
    %p254 = scmp.ne.s32.totalorder %s243, %s244
    %p255 = scmp.eq.s32.totalorder %s21, 0
    %p256 = por %p254, %p255
    %p257 = scmp.ne.s32.totalorder %s243, %s244
    %p258 = scmp.eq.s32.totalorder %s22, 1
    %p259 = por %p257, %p258
    %p261 = scmp.ne.s32.totalorder %s244, %s260
    %p262 = scmp.eq.s32.totalorder %s22, 0
    %p263 = por %p261, %p262
    %p264 = scmp.le.s32.totalorder 1, %s16
    %p265 = scmp.lt.s32.totalorder %s16, 3
    %p266 = pnand %p264, %p265
    %p267 = pneg %p266
    // Predicated region
    $region9: #{_lambda_.10} parent=5 // pred_check
      _
    $region10: #{_lambda_.10} parent=5 // pred_check_branch
      %269 = sbr.rel (%p266) target = $region12
    $region11: #{_lambda_.10} parent=5 // pred_region
      %s270 = ssub.s32 %s16, 1
      // Predicated region
      $region13: #{_lambda_.10} parent=11 // pred_check
        %p271 = pneg %p141
      $region14: #{_lambda_.10} parent=11 // pred_check_branch
        %273 = sbr.rel (%p271) target = $region16
      $region15: #{_lambda_.10} parent=11 // pred_region
        _
      $region16: #{_lambda_.10} parent=11 // pred_fallthru
        _
      // Predicated region
      $region17: #{_lambda_.10} parent=11 // pred_check
        %p274 = pneg %p162
      $region18: #{_lambda_.10} parent=11 // pred_check_branch
        %276 = sbr.rel (%p274) target = $region20
      $region19: #{_lambda_.10} parent=11 // pred_region
        _
      $region20: #{_lambda_.10} parent=11 // pred_fallthru
        _
      // Predicated region
      $region21: #{_lambda_.10} parent=11 // pred_check
        %p277 = pneg %p183
      $region22: #{_lambda_.10} parent=11 // pred_check_branch
        %279 = sbr.rel (%p277) target = $region24
      $region23: #{_lambda_.10} parent=11 // pred_region
        _
      $region24: #{_lambda_.10} parent=11 // pred_fallthru
        _
      // Predicated region
      $region25: #{_lambda_.10} parent=11 // pred_check
        %p280 = pneg %p204
      $region26: #{_lambda_.10} parent=11 // pred_check_branch
        %282 = sbr.rel (%p280) target = $region28
      $region27: #{_lambda_.10} parent=11 // pred_region
        _
      $region28: #{_lambda_.10} parent=11 // pred_fallthru
        _
    $region12: #{_lambda_.10} parent=5 // pred_fallthru
      _
    %p283 = scmp.lt.s32.totalorder %s16, 2
    // Predicated region
    $region29: #{_lambda_.10} parent=5 // pred_check
      %p284 = pneg %p283
    $region30: #{_lambda_.10} parent=5 // pred_check_branch
      %286 = sbr.rel (%p284) target = $region32
    $region31: #{_lambda_.10} parent=5 // pred_region
      // Predicated region
      $region33: #{_lambda_.10} parent=31 // pred_check
        %p287 = pneg %p36
      $region34: #{_lambda_.10} parent=31 // pred_check_branch
        %289 = sbr.rel (%p287) target = $region36
      $region35: #{_lambda_.10} parent=31 // pred_region
        %s290 = smul.u32 32, %s16
        %p291 = scmp.lt.s32.totalorder %s290, 63
        %s292 = scalar_select %p291, %s290, 63
        %s293 = smul.addr %s292, 8
        %s294 = scalar_lea.vmem %s0, %s293
        %s295 = smul.u32 32, %s16
      $region36: #{_lambda_.10} parent=31 // pred_fallthru
        _
      // Predicated region
      $region37: #{_lambda_.10} parent=31 // pred_check
        %p296 = pneg %p62
      $region38: #{_lambda_.10} parent=31 // pred_check_branch
        %298 = sbr.rel (%p296) target = $region40
      $region39: #{_lambda_.10} parent=31 // pred_region
        %s299 = smul.u32 32, %s16
        %p300 = scmp.lt.s32.totalorder %s299, 63
        %s301 = scalar_select %p300, %s299, 63
        %s302 = smul.addr %s301, 8
        %s303 = scalar_lea.vmem %s1, %s302
        %s304 = smul.u32 32, %s16
      $region40: #{_lambda_.10} parent=31 // pred_fallthru
        _
      // Predicated region
      $region41: #{_lambda_.10} parent=31 // pred_check
        %p305 = pneg %p88
      $region42: #{_lambda_.10} parent=31 // pred_check_branch
        %307 = sbr.rel (%p305) target = $region44
      $region43: #{_lambda_.10} parent=31 // pred_region
        %s308 = smul.u32 32, %s16
        %p309 = scmp.lt.s32.totalorder %s308, 63
        %s310 = scalar_select %p309, %s308, 63
        %s311 = smul.addr %s310, 8
        %s312 = scalar_lea.vmem %s2, %s311
        %s313 = smul.u32 32, %s16
      $region44: #{_lambda_.10} parent=31 // pred_fallthru
        _
      // Predicated region
      $region45: #{_lambda_.10} parent=31 // pred_check
        %p314 = pneg %p114
      $region46: #{_lambda_.10} parent=31 // pred_check_branch
        %316 = sbr.rel (%p314) target = $region48
      $region47: #{_lambda_.10} parent=31 // pred_region
        %s317 = smul.u32 32, %s16
        %p318 = scmp.lt.s32.totalorder %s317, 63
        %s319 = scalar_select %p318, %s317, 63
        %s320 = smul.addr %s319, 8
        %s321 = scalar_lea.vmem %s3, %s320
        %s322 = smul.u32 32, %s16
      $region48: #{_lambda_.10} parent=31 // pred_fallthru
        _
    $region32: #{_lambda_.10} parent=5 // pred_fallthru
      _
    %p323 = scmp.le.s32.totalorder 1, %s16
    %p324 = scmp.lt.s32.totalorder %s16, 3
    %p325 = pnand %p323, %p324
    %p326 = pneg %p325
    // Predicated region
    $region49: #{_lambda_.10} parent=5 // pred_check
      _
    $region50: #{_lambda_.10} parent=5 // pred_check_branch
      %328 = sbr.rel (%p325) target = $region52
    $region51: #{_lambda_.10} parent=5 // pred_region
      %s329 = ssub.s32 %s16, 1
      %s330 = smul.u32 32, %s21
      %p331 = scmp.lt.s32.totalorder %s330, 63
      %s332 = scalar_select %p331, %s330, 63
      %s333 = smul.addr %s332, 8
      %s334 = scalar_lea.vmem %s0, %s333
      %p335 = pneg %p42
      %p336 = pneg %p39
      %s337 = smul.u32 32, %s21
      %p338 = scmp.lt.s32.totalorder %s337, 63
      %s339 = scalar_select %p338, %s337, 63
      %s340 = smul.addr %s339, 8
      %s341 = scalar_lea.vmem %s1, %s340
      %p342 = pneg %p68
      %p343 = pneg %p65
      %s344 = smul.u32 32, %s21
      %p345 = scmp.lt.s32.totalorder %s344, 63
      %s346 = scalar_select %p345, %s344, 63
      %s347 = smul.addr %s346, 8
      %s348 = scalar_lea.vmem %s2, %s347
      %p349 = pneg %p94
      %p350 = pneg %p91
      %s351 = smul.u32 32, %s21
      %p352 = scmp.lt.s32.totalorder %s351, 63
      %s353 = scalar_select %p352, %s351, 63
      %s354 = smul.addr %s353, 8
      %s355 = scalar_lea.vmem %s3, %s354
      %p356 = pneg %p120
      %p357 = pneg %p117
      %p358 = pneg %p141
      %p359 = pneg %p138
      %p360 = pneg %p162
      %p361 = pneg %p159
      %p362 = pneg %p183
      %p363 = pneg %p180
      %p364 = pneg %p204
      %p365 = pneg %p201
      %p366 = pneg %p230
      %p367 = pneg %p227
      %s368 = smul.u32 32, %s21
      %p369 = scmp.lt.s32.totalorder %s368, 63
      %s370 = scalar_select %p369, %s368, 63
      %s371 = smul.addr %s370, 8
      %s372 = scalar_lea.vmem %s8, %s371
      %p373 = pneg %p256
      %p374 = pneg %p253
      %p375 = scmp.lt.s32.totalorder %s21, 1
      %s376 = scalar_select %p375, %s21, 1
      %s377 = smul.addr %s376, 2
      %s378 = scalar_lea.vmem %s9, %s377
      %s379 = smul.u32 32, %s21
      %p380 = scmp.lt.s32.totalorder %s379, 63
      %s381 = scalar_select %p380, %s379, 63
      %s382 = smul.addr %s381, 8
      %s383 = scalar_lea.vmem %s0, %s382
      %s384 = smul.u32 32, %s21
      %s385 = smul.u32 32, %s21
      %p386 = scmp.lt.s32.totalorder %s385, 63
      %s387 = scalar_select %p386, %s385, 63
      %s388 = smul.addr %s387, 8
      %s389 = scalar_lea.vmem %s1, %s388
      %s390 = smul.u32 32, %s21
      %s391 = smul.u32 32, %s21
      %p392 = scmp.lt.s32.totalorder %s391, 63
      %s393 = scalar_select %p392, %s391, 63
      %s394 = smul.addr %s393, 8
      %s395 = scalar_lea.vmem %s2, %s394
      %s396 = smul.u32 32, %s21
      %s397 = smul.u32 32, %s21
      %p398 = scmp.lt.s32.totalorder %s397, 63
      %s399 = scalar_select %p398, %s397, 63
      %s400 = smul.addr %s399, 8
      %s401 = scalar_lea.vmem %s3, %s400
      %s402 = smul.u32 32, %s21
      %s403 = smul.u32 32, %s21
      %p404 = scmp.lt.s32.totalorder %s403, 63
      %s405 = scalar_select %p404, %s403, 63
      %s406 = smul.addr %s405, 8
      %s407 = scalar_lea.vmem %s8, %s406
      %s408 = smul.u32 32, %s21
      %p409 = scmp.lt.s32.totalorder %s21, 1
      %s410 = scalar_select %p409, %s21, 1
      %s411 = smul.addr %s410, 2
      %s412 = scalar_lea.vmem %s9, %s411
      %v413 = vld [vmem:[%s4] sm:$0xff]
      %v414 = vld [vmem:[%s4 + $0x8] sm:$0x3f]
      %v415 = vld [vmem:[%s383] sm:$0xff]
      %v416 = vld [vmem:[%s383 + $0x8] sm:$0xff]
      %v417 = vld [vmem:[%s383 + $0x10] sm:$0xff]
      %v418 = vld [vmem:[%s383 + $0x18] sm:$0xff]
      %v419 = vld [vmem:[%s383 + $0x20] sm:$0xff]
      %v420 = vld [vmem:[%s383 + $0x28] sm:$0xff]
      %v421 = vld [vmem:[%s383 + $0x30] sm:$0xff]
      %v422 = vld [vmem:[%s383 + $0x38] sm:$0xff]
      %v423 = vld [vmem:[%s383 + $0x40] sm:$0xff]
      %v424 = vld [vmem:[%s383 + $0x48] sm:$0xff]
      %v425 = vld [vmem:[%s383 + $0x50] sm:$0xff]
      %v426 = vld [vmem:[%s383 + $0x58] sm:$0xff]
      %v427 = vld [vmem:[%s383 + $0x60] sm:$0xff]
      %v428 = vld [vmem:[%s383 + $0x68] sm:$0xff]
      %v429 = vld [vmem:[%s383 + $0x70] sm:$0xff]
      %v430 = vld [vmem:[%s383 + $0x78] sm:$0xff]
      %v431 = vld [vmem:[%s383 + $0x80] sm:$0xff]
      %v432 = vld [vmem:[%s383 + $0x88] sm:$0xff]
      %v433 = vld [vmem:[%s383 + $0x90] sm:$0xff]
      %v434 = vld [vmem:[%s383 + $0x98] sm:$0xff]
      %v435 = vld [vmem:[%s383 + $0xa0] sm:$0xff]
      %v436 = vld [vmem:[%s383 + $0xa8] sm:$0xff]
      %v437 = vld [vmem:[%s383 + $0xb0] sm:$0xff]
      %v438 = vld [vmem:[%s383 + $0xb8] sm:$0xff]
      %v439 = vld [vmem:[%s383 + $0xc0] sm:$0xff]
      %v440 = vld [vmem:[%s383 + $0xc8] sm:$0xff]
      %v441 = vld [vmem:[%s383 + $0xd0] sm:$0xff]
      %v442 = vld [vmem:[%s383 + $0xd8] sm:$0xff]
      %v443 = vld [vmem:[%s383 + $0xe0] sm:$0xff]
      %v444 = vld [vmem:[%s383 + $0xe8] sm:$0xff]
      %v445 = vld [vmem:[%s383 + $0xf0] sm:$0xff]
      %v446 = vld [vmem:[%s383 + $0xf8] sm:$0xff]
      %v447 = vlaneseq
      %v448 = vshrl.u32 %v447, 7
      %v449 = vsub.s32 0, %v448
      %v450 = vrot.slane %v413, %v449
      %v451 = vmul.f32 %v415, %v450
      %v452 = vmul.f32 %v416, %v450
      %v453 = vmul.f32 %v417, %v450
      %v454 = vmul.f32 %v418, %v450
      %v455 = vmul.f32 %v419, %v450
      %v456 = vmul.f32 %v420, %v450
      %v457 = vmul.f32 %v421, %v450
      %v458 = vmul.f32 %v422, %v450
      %v459 = vmul.f32 %v423, %v450
      %v460 = vmul.f32 %v424, %v450
      %v461 = vmul.f32 %v425, %v450
      %v462 = vmul.f32 %v426, %v450
      %v463 = vmul.f32 %v427, %v450
      %v464 = vmul.f32 %v428, %v450
      %v465 = vmul.f32 %v429, %v450
      %v466 = vmul.f32 %v430, %v450
      %v467 = vmul.f32 %v431, %v450
      %v468 = vmul.f32 %v432, %v450
      %v469 = vmul.f32 %v433, %v450
      %v470 = vmul.f32 %v434, %v450
      %v471 = vmul.f32 %v435, %v450
      %v472 = vmul.f32 %v436, %v450
      %v473 = vmul.f32 %v437, %v450
      %v474 = vmul.f32 %v438, %v450
      %v475 = vmul.f32 %v439, %v450
      %v476 = vmul.f32 %v440, %v450
      %v477 = vmul.f32 %v441, %v450
      %v478 = vmul.f32 %v442, %v450
      %v479 = vmul.f32 %v443, %v450
      %v480 = vmul.f32 %v444, %v450
      %v481 = vmul.f32 %v445, %v450
      %v482 = vmul.f32 %v446, %v450
      %v483 = vlaneseq
      %v484 = vshrl.u32 %v483, 7
      %v485 = vsub.s32 1, %v484
      %v486 = vrot.slane %v413, %v485
      %v487 = vadd.f32 %v451, %v486
      %v488 = vadd.f32 %v452, %v486
      %v489 = vadd.f32 %v453, %v486
      %v490 = vadd.f32 %v454, %v486
      %v491 = vadd.f32 %v455, %v486
      %v492 = vadd.f32 %v456, %v486
      %v493 = vadd.f32 %v457, %v486
      %v494 = vadd.f32 %v458, %v486
      %v495 = vadd.f32 %v459, %v486
      %v496 = vadd.f32 %v460, %v486
      %v497 = vadd.f32 %v461, %v486
      %v498 = vadd.f32 %v462, %v486
      %v499 = vadd.f32 %v463, %v486
      %v500 = vadd.f32 %v464, %v486
      %v501 = vadd.f32 %v465, %v486
      %v502 = vadd.f32 %v466, %v486
      %v503 = vadd.f32 %v467, %v486
      %v504 = vadd.f32 %v468, %v486
      %v505 = vadd.f32 %v469, %v486
      %v506 = vadd.f32 %v470, %v486
      %v507 = vadd.f32 %v471, %v486
      %v508 = vadd.f32 %v472, %v486
      %v509 = vadd.f32 %v473, %v486
      %v510 = vadd.f32 %v474, %v486
      %v511 = vadd.f32 %v475, %v486
      %v512 = vadd.f32 %v476, %v486
      %v513 = vadd.f32 %v477, %v486
      %v514 = vadd.f32 %v478, %v486
      %v515 = vadd.f32 %v479, %v486
      %v516 = vadd.f32 %v480, %v486
      %v517 = vadd.f32 %v481, %v486
      %v518 = vadd.f32 %v482, %v486
      %v519 = vld [vmem:[%s389] sm:$0xff]
      %v520 = vld [vmem:[%s389 + $0x8] sm:$0xff]
      %v521 = vld [vmem:[%s389 + $0x10] sm:$0xff]
      %v522 = vld [vmem:[%s389 + $0x18] sm:$0xff]
      %v523 = vld [vmem:[%s389 + $0x20] sm:$0xff]
      %v524 = vld [vmem:[%s389 + $0x28] sm:$0xff]
      %v525 = vld [vmem:[%s389 + $0x30] sm:$0xff]
      %v526 = vld [vmem:[%s389 + $0x38] sm:$0xff]
      %v527 = vld [vmem:[%s389 + $0x40] sm:$0xff]
      %v528 = vld [vmem:[%s389 + $0x48] sm:$0xff]
      %v529 = vld [vmem:[%s389 + $0x50] sm:$0xff]
      %v530 = vld [vmem:[%s389 + $0x58] sm:$0xff]
      %v531 = vld [vmem:[%s389 + $0x60] sm:$0xff]
      %v532 = vld [vmem:[%s389 + $0x68] sm:$0xff]
      %v533 = vld [vmem:[%s389 + $0x70] sm:$0xff]
      %v534 = vld [vmem:[%s389 + $0x78] sm:$0xff]
      %v535 = vld [vmem:[%s389 + $0x80] sm:$0xff]
      %v536 = vld [vmem:[%s389 + $0x88] sm:$0xff]
      %v537 = vld [vmem:[%s389 + $0x90] sm:$0xff]
      %v538 = vld [vmem:[%s389 + $0x98] sm:$0xff]
      %v539 = vld [vmem:[%s389 + $0xa0] sm:$0xff]
      %v540 = vld [vmem:[%s389 + $0xa8] sm:$0xff]
      %v541 = vld [vmem:[%s389 + $0xb0] sm:$0xff]
      %v542 = vld [vmem:[%s389 + $0xb8] sm:$0xff]
      %v543 = vld [vmem:[%s389 + $0xc0] sm:$0xff]
      %v544 = vld [vmem:[%s389 + $0xc8] sm:$0xff]
      %v545 = vld [vmem:[%s389 + $0xd0] sm:$0xff]
      %v546 = vld [vmem:[%s389 + $0xd8] sm:$0xff]
      %v547 = vld [vmem:[%s389 + $0xe0] sm:$0xff]
      %v548 = vld [vmem:[%s389 + $0xe8] sm:$0xff]
      %v549 = vld [vmem:[%s389 + $0xf0] sm:$0xff]
      %v550 = vld [vmem:[%s389 + $0xf8] sm:$0xff]
      %v551 = vlaneseq
      %v552 = vshrl.u32 %v551, 7
      %v553 = vsub.s32 2, %v552
      %v554 = vrot.slane %v413, %v553
      %v555 = vmul.f32 %v519, %v554
      %v556 = vmul.f32 %v520, %v554
      %v557 = vmul.f32 %v521, %v554
      %v558 = vmul.f32 %v522, %v554
      %v559 = vmul.f32 %v523, %v554
      %v560 = vmul.f32 %v524, %v554
      %v561 = vmul.f32 %v525, %v554
      %v562 = vmul.f32 %v526, %v554
      %v563 = vmul.f32 %v527, %v554
      %v564 = vmul.f32 %v528, %v554
      %v565 = vmul.f32 %v529, %v554
      %v566 = vmul.f32 %v530, %v554
      %v567 = vmul.f32 %v531, %v554
      %v568 = vmul.f32 %v532, %v554
      %v569 = vmul.f32 %v533, %v554
      %v570 = vmul.f32 %v534, %v554
      %v571 = vmul.f32 %v535, %v554
      %v572 = vmul.f32 %v536, %v554
      %v573 = vmul.f32 %v537, %v554
      %v574 = vmul.f32 %v538, %v554
      %v575 = vmul.f32 %v539, %v554
      %v576 = vmul.f32 %v540, %v554
      %v577 = vmul.f32 %v541, %v554
      %v578 = vmul.f32 %v542, %v554
      %v579 = vmul.f32 %v543, %v554
      %v580 = vmul.f32 %v544, %v554
      %v581 = vmul.f32 %v545, %v554
      %v582 = vmul.f32 %v546, %v554
      %v583 = vmul.f32 %v547, %v554
      %v584 = vmul.f32 %v548, %v554
      %v585 = vmul.f32 %v549, %v554
      %v586 = vmul.f32 %v550, %v554
      %v587 = vlaneseq
      %v588 = vshrl.u32 %v587, 7
      %v589 = vsub.s32 3, %v588
      %v590 = vrot.slane %v413, %v589
      %v591 = vadd.f32 %v555, %v590
      %v592 = vadd.f32 %v556, %v590
      %v593 = vadd.f32 %v557, %v590
      %v594 = vadd.f32 %v558, %v590
      %v595 = vadd.f32 %v559, %v590
      %v596 = vadd.f32 %v560, %v590
      %v597 = vadd.f32 %v561, %v590
      %v598 = vadd.f32 %v562, %v590
      %v599 = vadd.f32 %v563, %v590
      %v600 = vadd.f32 %v564, %v590
      %v601 = vadd.f32 %v565, %v590
      %v602 = vadd.f32 %v566, %v590
      %v603 = vadd.f32 %v567, %v590
      %v604 = vadd.f32 %v568, %v590
      %v605 = vadd.f32 %v569, %v590
      %v606 = vadd.f32 %v570, %v590
      %v607 = vadd.f32 %v571, %v590
      %v608 = vadd.f32 %v572, %v590
      %v609 = vadd.f32 %v573, %v590
      %v610 = vadd.f32 %v574, %v590
      %v611 = vadd.f32 %v575, %v590
      %v612 = vadd.f32 %v576, %v590
      %v613 = vadd.f32 %v577, %v590
      %v614 = vadd.f32 %v578, %v590
      %v615 = vadd.f32 %v579, %v590
      %v616 = vadd.f32 %v580, %v590
      %v617 = vadd.f32 %v581, %v590
      %v618 = vadd.f32 %v582, %v590
      %v619 = vadd.f32 %v583, %v590
      %v620 = vadd.f32 %v584, %v590
      %v621 = vadd.f32 %v585, %v590
      %v622 = vadd.f32 %v586, %v590
      %v623 = vmul.f32 %v591, 0.5
      %v624 = vmul.f32 %v592, 0.5
      %v625 = vmul.f32 %v593, 0.5
      %v626 = vmul.f32 %v594, 0.5
      %v627 = vmul.f32 %v595, 0.5
      %v628 = vmul.f32 %v596, 0.5
      %v629 = vmul.f32 %v597, 0.5
      %v630 = vmul.f32 %v598, 0.5
      %v631 = vmul.f32 %v599, 0.5
      %v632 = vmul.f32 %v600, 0.5
      %v633 = vmul.f32 %v601, 0.5
      %v634 = vmul.f32 %v602, 0.5
      %v635 = vmul.f32 %v603, 0.5
      %v636 = vmul.f32 %v604, 0.5
      %v637 = vmul.f32 %v605, 0.5
      %v638 = vmul.f32 %v606, 0.5
      %v639 = vmul.f32 %v607, 0.5
      %v640 = vmul.f32 %v608, 0.5
      %v641 = vmul.f32 %v609, 0.5
      %v642 = vmul.f32 %v610, 0.5
      %v643 = vmul.f32 %v611, 0.5
      %v644 = vmul.f32 %v612, 0.5
      %v645 = vmul.f32 %v613, 0.5
      %v646 = vmul.f32 %v614, 0.5
      %v647 = vmul.f32 %v615, 0.5
      %v648 = vmul.f32 %v616, 0.5
      %v649 = vmul.f32 %v617, 0.5
      %v650 = vmul.f32 %v618, 0.5
      %v651 = vmul.f32 %v619, 0.5
      %v652 = vmul.f32 %v620, 0.5
      %v653 = vmul.f32 %v621, 0.5
      %v654 = vmul.f32 %v622, 0.5
      %v655 = vmul.f32 %v591, 0.70710677
      %v656 = vmul.f32 %v592, 0.70710677
      %v657 = vmul.f32 %v593, 0.70710677
      %v658 = vmul.f32 %v594, 0.70710677
      %v659 = vmul.f32 %v595, 0.70710677
      %v660 = vmul.f32 %v596, 0.70710677
      %v661 = vmul.f32 %v597, 0.70710677
      %v662 = vmul.f32 %v598, 0.70710677
      %v663 = vmul.f32 %v599, 0.70710677
      %v664 = vmul.f32 %v600, 0.70710677
      %v665 = vmul.f32 %v601, 0.70710677
      %v666 = vmul.f32 %v602, 0.70710677
      %v667 = vmul.f32 %v603, 0.70710677
      %v668 = vmul.f32 %v604, 0.70710677
      %v669 = vmul.f32 %v605, 0.70710677
      %v670 = vmul.f32 %v606, 0.70710677
      %v671 = vmul.f32 %v607, 0.70710677
      %v672 = vmul.f32 %v608, 0.70710677
      %v673 = vmul.f32 %v609, 0.70710677
      %v674 = vmul.f32 %v610, 0.70710677
      %v675 = vmul.f32 %v611, 0.70710677
      %v676 = vmul.f32 %v612, 0.70710677
      %v677 = vmul.f32 %v613, 0.70710677
      %v678 = vmul.f32 %v614, 0.70710677
      %v679 = vmul.f32 %v615, 0.70710677
      %v680 = vmul.f32 %v616, 0.70710677
      %v681 = vmul.f32 %v617, 0.70710677
      %v682 = vmul.f32 %v618, 0.70710677
      %v683 = vmul.f32 %v619, 0.70710677
      %v684 = vmul.f32 %v620, 0.70710677
      %v685 = vmul.f32 %v621, 0.70710677
      %v686 = vmul.f32 %v622, 0.70710677
      %v687 = verf.f32.pop %v655
      %v688 = verf.f32.pop %v656
      %v689 = verf.f32.pop %v657
      %v690 = verf.f32.pop %v658
      %v691 = verf.f32.pop %v659
      %v692 = verf.f32.pop %v660
      %v693 = verf.f32.pop %v661
      %v694 = verf.f32.pop %v662
      %v695 = verf.f32.pop %v663
      %v696 = verf.f32.pop %v664
      %v697 = verf.f32.pop %v665
      %v698 = verf.f32.pop %v666
      %v699 = verf.f32.pop %v667
      %v700 = verf.f32.pop %v668
      %v701 = verf.f32.pop %v669
      %v702 = verf.f32.pop %v670
      %v703 = verf.f32.pop %v671
      %v704 = verf.f32.pop %v672
      %v705 = verf.f32.pop %v673
      %v706 = verf.f32.pop %v674
      %v707 = verf.f32.pop %v675
      %v708 = verf.f32.pop %v676
      %v709 = verf.f32.pop %v677
      %v710 = verf.f32.pop %v678
      %v711 = verf.f32.pop %v679
      %v712 = verf.f32.pop %v680
      %v713 = verf.f32.pop %v681
      %v714 = verf.f32.pop %v682
      %v715 = verf.f32.pop %v683
      %v716 = verf.f32.pop %v684
      %v717 = verf.f32.pop %v685
      %v718 = verf.f32.pop %v686
      %v719 = vadd.f32 %v687, 1.0
      %v720 = vadd.f32 %v688, 1.0
      %v721 = vadd.f32 %v689, 1.0
      %v722 = vadd.f32 %v690, 1.0
      %v723 = vadd.f32 %v691, 1.0
      %v724 = vadd.f32 %v692, 1.0
      %v725 = vadd.f32 %v693, 1.0
      %v726 = vadd.f32 %v694, 1.0
      %v727 = vadd.f32 %v695, 1.0
      %v728 = vadd.f32 %v696, 1.0
      %v729 = vadd.f32 %v697, 1.0
      %v730 = vadd.f32 %v698, 1.0
      %v731 = vadd.f32 %v699, 1.0
      %v732 = vadd.f32 %v700, 1.0
      %v733 = vadd.f32 %v701, 1.0
      %v734 = vadd.f32 %v702, 1.0
      %v735 = vadd.f32 %v703, 1.0
      %v736 = vadd.f32 %v704, 1.0
      %v737 = vadd.f32 %v705, 1.0
      %v738 = vadd.f32 %v706, 1.0
      %v739 = vadd.f32 %v707, 1.0
      %v740 = vadd.f32 %v708, 1.0
      %v741 = vadd.f32 %v709, 1.0
      %v742 = vadd.f32 %v710, 1.0
      %v743 = vadd.f32 %v711, 1.0
      %v744 = vadd.f32 %v712, 1.0
      %v745 = vadd.f32 %v713, 1.0
      %v746 = vadd.f32 %v714, 1.0
      %v747 = vadd.f32 %v715, 1.0
      %v748 = vadd.f32 %v716, 1.0
      %v749 = vadd.f32 %v717, 1.0
      %v750 = vadd.f32 %v718, 1.0
      %v751 = vmul.f32 %v623, %v719
      %v752 = vmul.f32 %v624, %v720
      %v753 = vmul.f32 %v625, %v721
      %v754 = vmul.f32 %v626, %v722
      %v755 = vmul.f32 %v627, %v723
      %v756 = vmul.f32 %v628, %v724
      %v757 = vmul.f32 %v629, %v725
      %v758 = vmul.f32 %v630, %v726
      %v759 = vmul.f32 %v631, %v727
      %v760 = vmul.f32 %v632, %v728
      %v761 = vmul.f32 %v633, %v729
      %v762 = vmul.f32 %v634, %v730
      %v763 = vmul.f32 %v635, %v731
      %v764 = vmul.f32 %v636, %v732
      %v765 = vmul.f32 %v637, %v733
      %v766 = vmul.f32 %v638, %v734
      %v767 = vmul.f32 %v639, %v735
      %v768 = vmul.f32 %v640, %v736
      %v769 = vmul.f32 %v641, %v737
      %v770 = vmul.f32 %v642, %v738
      %v771 = vmul.f32 %v643, %v739
      %v772 = vmul.f32 %v644, %v740
      %v773 = vmul.f32 %v645, %v741
      %v774 = vmul.f32 %v646, %v742
      %v775 = vmul.f32 %v647, %v743
      %v776 = vmul.f32 %v648, %v744
      %v777 = vmul.f32 %v649, %v745
      %v778 = vmul.f32 %v650, %v746
      %v779 = vmul.f32 %v651, %v747
      %v780 = vmul.f32 %v652, %v748
      %v781 = vmul.f32 %v653, %v749
      %v782 = vmul.f32 %v654, %v750
      %v783 = vlaneseq
      %v784 = vshrl.u32 %v783, 7
      %v785 = vsub.s32 4, %v784
      %v786 = vrot.slane %v413, %v785
      %v787 = vmul.f32 %v751, %v786
      %v788 = vmul.f32 %v752, %v786
      %v789 = vmul.f32 %v753, %v786
      %v790 = vmul.f32 %v754, %v786
      %v791 = vmul.f32 %v755, %v786
      %v792 = vmul.f32 %v756, %v786
      %v793 = vmul.f32 %v757, %v786
      %v794 = vmul.f32 %v758, %v786
      %v795 = vmul.f32 %v759, %v786
      %v796 = vmul.f32 %v760, %v786
      %v797 = vmul.f32 %v761, %v786
      %v798 = vmul.f32 %v762, %v786
      %v799 = vmul.f32 %v763, %v786
      %v800 = vmul.f32 %v764, %v786
      %v801 = vmul.f32 %v765, %v786
      %v802 = vmul.f32 %v766, %v786
      %v803 = vmul.f32 %v767, %v786
      %v804 = vmul.f32 %v768, %v786
      %v805 = vmul.f32 %v769, %v786
      %v806 = vmul.f32 %v770, %v786
      %v807 = vmul.f32 %v771, %v786
      %v808 = vmul.f32 %v772, %v786
      %v809 = vmul.f32 %v773, %v786
      %v810 = vmul.f32 %v774, %v786
      %v811 = vmul.f32 %v775, %v786
      %v812 = vmul.f32 %v776, %v786
      %v813 = vmul.f32 %v777, %v786
      %v814 = vmul.f32 %v778, %v786
      %v815 = vmul.f32 %v779, %v786
      %v816 = vmul.f32 %v780, %v786
      %v817 = vmul.f32 %v781, %v786
      %v818 = vmul.f32 %v782, %v786
      %v819 = vlaneseq
      %v820 = vshrl.u32 %v819, 7
      %v821 = vsub.s32 5, %v820
      %v822 = vrot.slane %v413, %v821
      %v823 = vadd.f32 %v787, %v822
      %v824 = vadd.f32 %v788, %v822
      %v825 = vadd.f32 %v789, %v822
      %v826 = vadd.f32 %v790, %v822
      %v827 = vadd.f32 %v791, %v822
      %v828 = vadd.f32 %v792, %v822
      %v829 = vadd.f32 %v793, %v822
      %v830 = vadd.f32 %v794, %v822
      %v831 = vadd.f32 %v795, %v822
      %v832 = vadd.f32 %v796, %v822
      %v833 = vadd.f32 %v797, %v822
      %v834 = vadd.f32 %v798, %v822
      %v835 = vadd.f32 %v799, %v822
      %v836 = vadd.f32 %v800, %v822
      %v837 = vadd.f32 %v801, %v822
      %v838 = vadd.f32 %v802, %v822
      %v839 = vadd.f32 %v803, %v822
      %v840 = vadd.f32 %v804, %v822
      %v841 = vadd.f32 %v805, %v822
      %v842 = vadd.f32 %v806, %v822
      %v843 = vadd.f32 %v807, %v822
      %v844 = vadd.f32 %v808, %v822
      %v845 = vadd.f32 %v809, %v822
      %v846 = vadd.f32 %v810, %v822
      %v847 = vadd.f32 %v811, %v822
      %v848 = vadd.f32 %v812, %v822
      %v849 = vadd.f32 %v813, %v822
      %v850 = vadd.f32 %v814, %v822
      %v851 = vadd.f32 %v815, %v822
      %v852 = vadd.f32 %v816, %v822
      %v853 = vadd.f32 %v817, %v822
      %v854 = vadd.f32 %v818, %v822
      %v855 = vld [vmem:[%s5] sm:$0xff]
      %v856 = vld [vmem:[%s5 + $0x8] sm:$0xff]
      %v857 = vld [vmem:[%s5 + $0x10] sm:$0xff]
      %v858 = vld [vmem:[%s5 + $0x18] sm:$0xff]
      %v859 = vld [vmem:[%s5 + $0x20] sm:$0xff]
      %v860 = vld [vmem:[%s5 + $0x28] sm:$0xff]
      %v861 = vld [vmem:[%s5 + $0x30] sm:$0xff]
      %v862 = vld [vmem:[%s5 + $0x38] sm:$0xff]
      %v863 = vld [vmem:[%s5 + $0x40] sm:$0xff]
      %v864 = vld [vmem:[%s5 + $0x48] sm:$0xff]
      %v865 = vld [vmem:[%s5 + $0x50] sm:$0xff]
      %v866 = vld [vmem:[%s5 + $0x58] sm:$0xff]
      %v867 = vld [vmem:[%s5 + $0x60] sm:$0xff]
      %v868 = vld [vmem:[%s5 + $0x68] sm:$0xff]
      %v869 = vld [vmem:[%s5 + $0x70] sm:$0xff]
      %v870 = vld [vmem:[%s5 + $0x78] sm:$0xff]
      %871 = vmatprep.subr.mxu0 0.0
      %872 = vmatpush1.msra.mxu0 %v870
      %873 = vmatprep.subr.mxu0 0.0
      %874 = vmatpush1.msra.mxu0 %v869
      %875 = vmatprep.subr.mxu0 0.0
      %876 = vmatpush1.msra.mxu0 %v868
      %877 = vmatprep.subr.mxu0 0.0
      %878 = vmatpush1.msra.mxu0 %v867
      %879 = vmatprep.subr.mxu0 0.0
      %880 = vmatpush1.msra.mxu0 %v866
      %881 = vmatprep.subr.mxu0 0.0
      %882 = vmatpush1.msra.mxu0 %v865
      %883 = vmatprep.subr.mxu0 0.0
      %884 = vmatpush1.msra.mxu0 %v864
      %885 = vmatprep.subr.mxu0 0.0
      %886 = vmatpush1.msra.mxu0 %v863
      %887 = vmatprep.subr.mxu0 0.0
      %888 = vmatpush1.msra.mxu0 %v862
      %889 = vmatprep.subr.mxu0 0.0
      %890 = vmatpush1.msra.mxu0 %v861
      %891 = vmatprep.subr.mxu0 0.0
      %892 = vmatpush1.msra.mxu0 %v860
      %893 = vmatprep.subr.mxu0 0.0
      %894 = vmatpush1.msra.mxu0 %v859
      %895 = vmatprep.subr.mxu0 0.0
      %896 = vmatpush1.msra.mxu0 %v858
      %897 = vmatprep.subr.mxu0 0.0
      %898 = vmatpush1.msra.mxu0 %v857
      %899 = vmatprep.subr.mxu0 0.0
      %900 = vmatpush1.msra.mxu0 %v856
      %901 = vmatprep.subr.mxu0 0.0
      %902 = vmatpush1.msra.mxu0 %v855
      %903 = vmatprep.subr.mxu0 0.0
      %904 = vmatpush2.msra.mxu0 0.0
      %905 = vmatprep.subr.mxu0 0.0
      %906 = vmatpush2.msra.mxu0 0.0
      %907 = vmatprep.subr.mxu0 0.0
      %908 = vmatpush2.msra.mxu0 0.0
      %909 = vmatprep.subr.mxu0 0.0
      %910 = vmatpush2.msra.mxu0 0.0
      %911 = vmatprep.subr.mxu0 0.0
      %912 = vmatpush2.msra.mxu0 0.0
      %913 = vmatprep.subr.mxu0 0.0
      %914 = vmatpush2.msra.mxu0 0.0
      %915 = vmatprep.subr.mxu0 0.0
      %916 = vmatpush2.msra.mxu0 0.0
      %917 = vmatprep.subr.mxu0 0.0
      %918 = vmatpush2.msra.mxu0 0.0
      %919 = vmatprep.subr.mxu0 0.0
      %920 = vmatpush2.msra.mxu0 0.0
      %921 = vmatprep.subr.mxu0 0.0
      %922 = vmatpush2.msra.mxu0 0.0
      %923 = vmatprep.subr.mxu0 0.0
      %924 = vmatpush2.msra.mxu0 0.0
      %925 = vmatprep.subr.mxu0 0.0
      %926 = vmatpush2.msra.mxu0 0.0
      %927 = vmatprep.subr.mxu0 0.0
      %928 = vmatpush2.msra.mxu0 0.0
      %929 = vmatprep.subr.mxu0 0.0
      %930 = vmatpush2.msra.mxu0 0.0
      %931 = vmatprep.subr.mxu0 0.0
      %932 = vmatpush2.msra.mxu0 0.0
      %933 = vmatprep.subr.mxu0 0.0
      %934 = vmatpush2.msra.mxu0 0.0
      %935 = vmatprep.mubr.f32.mxu0 0.0
      %936 = vmatmul.mubr.f32.gmra.mxu0 %v823
      %v937 = vpop.f32.mrf.mxu0
      %v938 = vadd.f32 0.0, %v937
      %v939 = vpop.f32.mrf.mxu0
      %940 = vmatprep.mubr.f32.mxu0 0.0
      %941 = vmatmul.mubr.f32.gmra.mxu0 %v824
      %v942 = vpop.f32.mrf.mxu0
      %v943 = vadd.f32 0.0, %v942
      %v944 = vpop.f32.mrf.mxu0
      %945 = vmatprep.mubr.f32.mxu0 0.0
      %946 = vmatmul.mubr.f32.gmra.mxu0 %v825
      %v947 = vpop.f32.mrf.mxu0
      %v948 = vadd.f32 0.0, %v947
      %v949 = vpop.f32.mrf.mxu0
      %950 = vmatprep.mubr.f32.mxu0 0.0
      %951 = vmatmul.mubr.f32.gmra.mxu0 %v826
      %v952 = vpop.f32.mrf.mxu0
      %v953 = vadd.f32 0.0, %v952
      %v954 = vpop.f32.mrf.mxu0
      %955 = vmatprep.mubr.f32.mxu0 0.0
      %956 = vmatmul.mubr.f32.gmra.mxu0 %v827
      %v957 = vpop.f32.mrf.mxu0
      %v958 = vadd.f32 0.0, %v957
      %v959 = vpop.f32.mrf.mxu0
      %960 = vmatprep.mubr.f32.mxu0 0.0
      %961 = vmatmul.mubr.f32.gmra.mxu0 %v828
      %v962 = vpop.f32.mrf.mxu0
      %v963 = vadd.f32 0.0, %v962
      %v964 = vpop.f32.mrf.mxu0
      %965 = vmatprep.mubr.f32.mxu0 0.0
      %966 = vmatmul.mubr.f32.gmra.mxu0 %v829
      %v967 = vpop.f32.mrf.mxu0
      %v968 = vadd.f32 0.0, %v967
      %v969 = vpop.f32.mrf.mxu0
      %970 = vmatprep.mubr.f32.mxu0 0.0
      %971 = vmatmul.mubr.f32.gmra.mxu0 %v830
      %v972 = vpop.f32.mrf.mxu0
      %v973 = vadd.f32 0.0, %v972
      %v974 = vpop.f32.mrf.mxu0
      %975 = vmatprep.mubr.f32.mxu0 0.0
      %976 = vmatmul.mubr.f32.gmra.mxu0 %v831
      %v977 = vpop.f32.mrf.mxu0
      %v978 = vadd.f32 0.0, %v977
      %v979 = vpop.f32.mrf.mxu0
      %980 = vmatprep.mubr.f32.mxu0 0.0
      %981 = vmatmul.mubr.f32.gmra.mxu0 %v832
      %v982 = vpop.f32.mrf.mxu0
      %v983 = vadd.f32 0.0, %v982
      %v984 = vpop.f32.mrf.mxu0
      %985 = vmatprep.mubr.f32.mxu0 0.0
      %986 = vmatmul.mubr.f32.gmra.mxu0 %v833
      %v987 = vpop.f32.mrf.mxu0
      %v988 = vadd.f32 0.0, %v987
      %v989 = vpop.f32.mrf.mxu0
      %990 = vmatprep.mubr.f32.mxu0 0.0
      %991 = vmatmul.mubr.f32.gmra.mxu0 %v834
      %v992 = vpop.f32.mrf.mxu0
      %v993 = vadd.f32 0.0, %v992
      %v994 = vpop.f32.mrf.mxu0
      %995 = vmatprep.mubr.f32.mxu0 0.0
      %996 = vmatmul.mubr.f32.gmra.mxu0 %v835
      %v997 = vpop.f32.mrf.mxu0
      %v998 = vadd.f32 0.0, %v997
      %v999 = vpop.f32.mrf.mxu0
      %1000 = vmatprep.mubr.f32.mxu0 0.0
      %1001 = vmatmul.mubr.f32.gmra.mxu0 %v836
      %v1002 = vpop.f32.mrf.mxu0
      %v1003 = vadd.f32 0.0, %v1002
      %v1004 = vpop.f32.mrf.mxu0
      %1005 = vmatprep.mubr.f32.mxu0 0.0
      %1006 = vmatmul.mubr.f32.gmra.mxu0 %v837
      %v1007 = vpop.f32.mrf.mxu0
      %v1008 = vadd.f32 0.0, %v1007
      %v1009 = vpop.f32.mrf.mxu0
      %1010 = vmatprep.mubr.f32.mxu0 0.0
      %1011 = vmatmul.mubr.f32.gmra.mxu0 %v838
      %v1012 = vpop.f32.mrf.mxu0
      %v1013 = vadd.f32 0.0, %v1012
      %v1014 = vpop.f32.mrf.mxu0
      %1015 = vmatprep.mubr.f32.mxu0 0.0
      %1016 = vmatmul.mubr.f32.gmra.mxu0 %v839
      %v1017 = vpop.f32.mrf.mxu0
      %v1018 = vadd.f32 0.0, %v1017
      %v1019 = vpop.f32.mrf.mxu0
      %1020 = vmatprep.mubr.f32.mxu0 0.0
      %1021 = vmatmul.mubr.f32.gmra.mxu0 %v840
      %v1022 = vpop.f32.mrf.mxu0
      %v1023 = vadd.f32 0.0, %v1022
      %v1024 = vpop.f32.mrf.mxu0
      %1025 = vmatprep.mubr.f32.mxu0 0.0
      %1026 = vmatmul.mubr.f32.gmra.mxu0 %v841
      %v1027 = vpop.f32.mrf.mxu0
      %v1028 = vadd.f32 0.0, %v1027
      %v1029 = vpop.f32.mrf.mxu0
      %1030 = vmatprep.mubr.f32.mxu0 0.0
      %1031 = vmatmul.mubr.f32.gmra.mxu0 %v842
      %v1032 = vpop.f32.mrf.mxu0
      %v1033 = vadd.f32 0.0, %v1032
      %v1034 = vpop.f32.mrf.mxu0
      %1035 = vmatprep.mubr.f32.mxu0 0.0
      %1036 = vmatmul.mubr.f32.gmra.mxu0 %v843
      %v1037 = vpop.f32.mrf.mxu0
      %v1038 = vadd.f32 0.0, %v1037
      %v1039 = vpop.f32.mrf.mxu0
      %1040 = vmatprep.mubr.f32.mxu0 0.0
      %1041 = vmatmul.mubr.f32.gmra.mxu0 %v844
      %v1042 = vpop.f32.mrf.mxu0
      %v1043 = vadd.f32 0.0, %v1042
      %v1044 = vpop.f32.mrf.mxu0
      %1045 = vmatprep.mubr.f32.mxu0 0.0
      %1046 = vmatmul.mubr.f32.gmra.mxu0 %v845
      %v1047 = vpop.f32.mrf.mxu0
      %v1048 = vadd.f32 0.0, %v1047
      %v1049 = vpop.f32.mrf.mxu0
      %1050 = vmatprep.mubr.f32.mxu0 0.0
      %1051 = vmatmul.mubr.f32.gmra.mxu0 %v846
      %v1052 = vpop.f32.mrf.mxu0
      %v1053 = vadd.f32 0.0, %v1052
      %v1054 = vpop.f32.mrf.mxu0
      %1055 = vmatprep.mubr.f32.mxu0 0.0
      %1056 = vmatmul.mubr.f32.gmra.mxu0 %v847
      %v1057 = vpop.f32.mrf.mxu0
      %v1058 = vadd.f32 0.0, %v1057
      %v1059 = vpop.f32.mrf.mxu0
      %1060 = vmatprep.mubr.f32.mxu0 0.0
      %1061 = vmatmul.mubr.f32.gmra.mxu0 %v848
      %v1062 = vpop.f32.mrf.mxu0
      %v1063 = vadd.f32 0.0, %v1062
      %v1064 = vpop.f32.mrf.mxu0
      %1065 = vmatprep.mubr.f32.mxu0 0.0
      %1066 = vmatmul.mubr.f32.gmra.mxu0 %v849
      %v1067 = vpop.f32.mrf.mxu0
      %v1068 = vadd.f32 0.0, %v1067
      %v1069 = vpop.f32.mrf.mxu0
      %1070 = vmatprep.mubr.f32.mxu0 0.0
      %1071 = vmatmul.mubr.f32.gmra.mxu0 %v850
      %v1072 = vpop.f32.mrf.mxu0
      %v1073 = vadd.f32 0.0, %v1072
      %v1074 = vpop.f32.mrf.mxu0
      %1075 = vmatprep.mubr.f32.mxu0 0.0
      %1076 = vmatmul.mubr.f32.gmra.mxu0 %v851
      %v1077 = vpop.f32.mrf.mxu0
      %v1078 = vadd.f32 0.0, %v1077
      %v1079 = vpop.f32.mrf.mxu0
      %1080 = vmatprep.mubr.f32.mxu0 0.0
      %1081 = vmatmul.mubr.f32.gmra.mxu0 %v852
      %v1082 = vpop.f32.mrf.mxu0
      %v1083 = vadd.f32 0.0, %v1082
      %v1084 = vpop.f32.mrf.mxu0
      %1085 = vmatprep.mubr.f32.mxu0 0.0
      %1086 = vmatmul.mubr.f32.gmra.mxu0 %v853
      %v1087 = vpop.f32.mrf.mxu0
      %v1088 = vadd.f32 0.0, %v1087
      %v1089 = vpop.f32.mrf.mxu0
      %1090 = vmatprep.mubr.f32.mxu0 0.0
      %1091 = vmatmul.mubr.f32.gmra.mxu0 %v854
      %v1092 = vpop.f32.mrf.mxu0
      %v1093 = vadd.f32 0.0, %v1092
      %v1094 = vpop.f32.mrf.mxu0
      %1095 = vdwg.mxu0
      %v1096 = vadd.f32 %v487, %v938
      %v1097 = vadd.f32 %v488, %v943
      %v1098 = vadd.f32 %v489, %v948
      %v1099 = vadd.f32 %v490, %v953
      %v1100 = vadd.f32 %v491, %v958
      %v1101 = vadd.f32 %v492, %v963
      %v1102 = vadd.f32 %v493, %v968
      %v1103 = vadd.f32 %v494, %v973
      %v1104 = vadd.f32 %v495, %v978
      %v1105 = vadd.f32 %v496, %v983
      %v1106 = vadd.f32 %v497, %v988
      %v1107 = vadd.f32 %v498, %v993
      %v1108 = vadd.f32 %v499, %v998
      %v1109 = vadd.f32 %v500, %v1003
      %v1110 = vadd.f32 %v501, %v1008
      %v1111 = vadd.f32 %v502, %v1013
      %v1112 = vadd.f32 %v503, %v1018
      %v1113 = vadd.f32 %v504, %v1023
      %v1114 = vadd.f32 %v505, %v1028
      %v1115 = vadd.f32 %v506, %v1033
      %v1116 = vadd.f32 %v507, %v1038
      %v1117 = vadd.f32 %v508, %v1043
      %v1118 = vadd.f32 %v509, %v1048
      %v1119 = vadd.f32 %v510, %v1053
      %v1120 = vadd.f32 %v511, %v1058
      %v1121 = vadd.f32 %v512, %v1063
      %v1122 = vadd.f32 %v513, %v1068
      %v1123 = vadd.f32 %v514, %v1073
      %v1124 = vadd.f32 %v515, %v1078
      %v1125 = vadd.f32 %v516, %v1083
      %v1126 = vadd.f32 %v517, %v1088
      %v1127 = vadd.f32 %v518, %v1093
      %v1128 = vld [vmem:[%s395] sm:$0xff]
      %v1129 = vld [vmem:[%s395 + $0x8] sm:$0xff]
      %v1130 = vld [vmem:[%s395 + $0x10] sm:$0xff]
      %v1131 = vld [vmem:[%s395 + $0x18] sm:$0xff]
      %v1132 = vld [vmem:[%s395 + $0x20] sm:$0xff]
      %v1133 = vld [vmem:[%s395 + $0x28] sm:$0xff]
      %v1134 = vld [vmem:[%s395 + $0x30] sm:$0xff]
      %v1135 = vld [vmem:[%s395 + $0x38] sm:$0xff]
      %v1136 = vld [vmem:[%s395 + $0x40] sm:$0xff]
      %v1137 = vld [vmem:[%s395 + $0x48] sm:$0xff]
      %v1138 = vld [vmem:[%s395 + $0x50] sm:$0xff]
      %v1139 = vld [vmem:[%s395 + $0x58] sm:$0xff]
      %v1140 = vld [vmem:[%s395 + $0x60] sm:$0xff]
      %v1141 = vld [vmem:[%s395 + $0x68] sm:$0xff]
      %v1142 = vld [vmem:[%s395 + $0x70] sm:$0xff]
      %v1143 = vld [vmem:[%s395 + $0x78] sm:$0xff]
      %v1144 = vld [vmem:[%s395 + $0x80] sm:$0xff]
      %v1145 = vld [vmem:[%s395 + $0x88] sm:$0xff]
      %v1146 = vld [vmem:[%s395 + $0x90] sm:$0xff]
      %v1147 = vld [vmem:[%s395 + $0x98] sm:$0xff]
      %v1148 = vld [vmem:[%s395 + $0xa0] sm:$0xff]
      %v1149 = vld [vmem:[%s395 + $0xa8] sm:$0xff]
      %v1150 = vld [vmem:[%s395 + $0xb0] sm:$0xff]
      %v1151 = vld [vmem:[%s395 + $0xb8] sm:$0xff]
      %v1152 = vld [vmem:[%s395 + $0xc0] sm:$0xff]
      %v1153 = vld [vmem:[%s395 + $0xc8] sm:$0xff]
      %v1154 = vld [vmem:[%s395 + $0xd0] sm:$0xff]
      %v1155 = vld [vmem:[%s395 + $0xd8] sm:$0xff]
      %v1156 = vld [vmem:[%s395 + $0xe0] sm:$0xff]
      %v1157 = vld [vmem:[%s395 + $0xe8] sm:$0xff]
      %v1158 = vld [vmem:[%s395 + $0xf0] sm:$0xff]
      %v1159 = vld [vmem:[%s395 + $0xf8] sm:$0xff]
      %v1160 = vlaneseq
      %v1161 = vshrl.u32 %v1160, 7
      %v1162 = vsub.s32 6, %v1161
      %v1163 = vrot.slane %v413, %v1162
      %v1164 = vmul.f32 %v1128, %v1163
      %v1165 = vmul.f32 %v1129, %v1163
      %v1166 = vmul.f32 %v1130, %v1163
      %v1167 = vmul.f32 %v1131, %v1163
      %v1168 = vmul.f32 %v1132, %v1163
      %v1169 = vmul.f32 %v1133, %v1163
      %v1170 = vmul.f32 %v1134, %v1163
      %v1171 = vmul.f32 %v1135, %v1163
      %v1172 = vmul.f32 %v1136, %v1163
      %v1173 = vmul.f32 %v1137, %v1163
      %v1174 = vmul.f32 %v1138, %v1163
      %v1175 = vmul.f32 %v1139, %v1163
      %v1176 = vmul.f32 %v1140, %v1163
      %v1177 = vmul.f32 %v1141, %v1163
      %v1178 = vmul.f32 %v1142, %v1163
      %v1179 = vmul.f32 %v1143, %v1163
      %v1180 = vmul.f32 %v1144, %v1163
      %v1181 = vmul.f32 %v1145, %v1163
      %v1182 = vmul.f32 %v1146, %v1163
      %v1183 = vmul.f32 %v1147, %v1163
      %v1184 = vmul.f32 %v1148, %v1163
      %v1185 = vmul.f32 %v1149, %v1163
      %v1186 = vmul.f32 %v1150, %v1163
      %v1187 = vmul.f32 %v1151, %v1163
      %v1188 = vmul.f32 %v1152, %v1163
      %v1189 = vmul.f32 %v1153, %v1163
      %v1190 = vmul.f32 %v1154, %v1163
      %v1191 = vmul.f32 %v1155, %v1163
      %v1192 = vmul.f32 %v1156, %v1163
      %v1193 = vmul.f32 %v1157, %v1163
      %v1194 = vmul.f32 %v1158, %v1163
      %v1195 = vmul.f32 %v1159, %v1163
      %v1196 = vlaneseq
      %v1197 = vshrl.u32 %v1196, 7
      %v1198 = vsub.s32 7, %v1197
      %v1199 = vrot.slane %v413, %v1198
      %v1200 = vadd.f32 %v1164, %v1199
      %v1201 = vadd.f32 %v1165, %v1199
      %v1202 = vadd.f32 %v1166, %v1199
      %v1203 = vadd.f32 %v1167, %v1199
      %v1204 = vadd.f32 %v1168, %v1199
      %v1205 = vadd.f32 %v1169, %v1199
      %v1206 = vadd.f32 %v1170, %v1199
      %v1207 = vadd.f32 %v1171, %v1199
      %v1208 = vadd.f32 %v1172, %v1199
      %v1209 = vadd.f32 %v1173, %v1199
      %v1210 = vadd.f32 %v1174, %v1199
      %v1211 = vadd.f32 %v1175, %v1199
      %v1212 = vadd.f32 %v1176, %v1199
      %v1213 = vadd.f32 %v1177, %v1199
      %v1214 = vadd.f32 %v1178, %v1199
      %v1215 = vadd.f32 %v1179, %v1199
      %v1216 = vadd.f32 %v1180, %v1199
      %v1217 = vadd.f32 %v1181, %v1199
      %v1218 = vadd.f32 %v1182, %v1199
      %v1219 = vadd.f32 %v1183, %v1199
      %v1220 = vadd.f32 %v1184, %v1199
      %v1221 = vadd.f32 %v1185, %v1199
      %v1222 = vadd.f32 %v1186, %v1199
      %v1223 = vadd.f32 %v1187, %v1199
      %v1224 = vadd.f32 %v1188, %v1199
      %v1225 = vadd.f32 %v1189, %v1199
      %v1226 = vadd.f32 %v1190, %v1199
      %v1227 = vadd.f32 %v1191, %v1199
      %v1228 = vadd.f32 %v1192, %v1199
      %v1229 = vadd.f32 %v1193, %v1199
      %v1230 = vadd.f32 %v1194, %v1199
      %v1231 = vadd.f32 %v1195, %v1199
      %v1232 = vmul.f32 %v1200, 0.5
      %v1233 = vmul.f32 %v1201, 0.5
      %v1234 = vmul.f32 %v1202, 0.5
      %v1235 = vmul.f32 %v1203, 0.5
      %v1236 = vmul.f32 %v1204, 0.5
      %v1237 = vmul.f32 %v1205, 0.5
      %v1238 = vmul.f32 %v1206, 0.5
      %v1239 = vmul.f32 %v1207, 0.5
      %v1240 = vmul.f32 %v1208, 0.5
      %v1241 = vmul.f32 %v1209, 0.5
      %v1242 = vmul.f32 %v1210, 0.5
      %v1243 = vmul.f32 %v1211, 0.5
      %v1244 = vmul.f32 %v1212, 0.5
      %v1245 = vmul.f32 %v1213, 0.5
      %v1246 = vmul.f32 %v1214, 0.5
      %v1247 = vmul.f32 %v1215, 0.5
      %v1248 = vmul.f32 %v1216, 0.5
      %v1249 = vmul.f32 %v1217, 0.5
      %v1250 = vmul.f32 %v1218, 0.5
      %v1251 = vmul.f32 %v1219, 0.5
      %v1252 = vmul.f32 %v1220, 0.5
      %v1253 = vmul.f32 %v1221, 0.5
      %v1254 = vmul.f32 %v1222, 0.5
      %v1255 = vmul.f32 %v1223, 0.5
      %v1256 = vmul.f32 %v1224, 0.5
      %v1257 = vmul.f32 %v1225, 0.5
      %v1258 = vmul.f32 %v1226, 0.5
      %v1259 = vmul.f32 %v1227, 0.5
      %v1260 = vmul.f32 %v1228, 0.5
      %v1261 = vmul.f32 %v1229, 0.5
      %v1262 = vmul.f32 %v1230, 0.5
      %v1263 = vmul.f32 %v1231, 0.5
      %v1264 = vmul.f32 %v1200, 0.70710677
      %v1265 = vmul.f32 %v1201, 0.70710677
      %v1266 = vmul.f32 %v1202, 0.70710677
      %v1267 = vmul.f32 %v1203, 0.70710677
      %v1268 = vmul.f32 %v1204, 0.70710677
      %v1269 = vmul.f32 %v1205, 0.70710677
      %v1270 = vmul.f32 %v1206, 0.70710677
      %v1271 = vmul.f32 %v1207, 0.70710677
      %v1272 = vmul.f32 %v1208, 0.70710677
      %v1273 = vmul.f32 %v1209, 0.70710677
      %v1274 = vmul.f32 %v1210, 0.70710677
      %v1275 = vmul.f32 %v1211, 0.70710677
      %v1276 = vmul.f32 %v1212, 0.70710677
      %v1277 = vmul.f32 %v1213, 0.70710677
      %v1278 = vmul.f32 %v1214, 0.70710677
      %v1279 = vmul.f32 %v1215, 0.70710677
      %v1280 = vmul.f32 %v1216, 0.70710677
      %v1281 = vmul.f32 %v1217, 0.70710677
      %v1282 = vmul.f32 %v1218, 0.70710677
      %v1283 = vmul.f32 %v1219, 0.70710677
      %v1284 = vmul.f32 %v1220, 0.70710677
      %v1285 = vmul.f32 %v1221, 0.70710677
      %v1286 = vmul.f32 %v1222, 0.70710677
      %v1287 = vmul.f32 %v1223, 0.70710677
      %v1288 = vmul.f32 %v1224, 0.70710677
      %v1289 = vmul.f32 %v1225, 0.70710677
      %v1290 = vmul.f32 %v1226, 0.70710677
      %v1291 = vmul.f32 %v1227, 0.70710677
      %v1292 = vmul.f32 %v1228, 0.70710677
      %v1293 = vmul.f32 %v1229, 0.70710677
      %v1294 = vmul.f32 %v1230, 0.70710677
      %v1295 = vmul.f32 %v1231, 0.70710677
      %v1296 = verf.f32.pop %v1264
      %v1297 = verf.f32.pop %v1265
      %v1298 = verf.f32.pop %v1266
      %v1299 = verf.f32.pop %v1267
      %v1300 = verf.f32.pop %v1268
      %v1301 = verf.f32.pop %v1269
      %v1302 = verf.f32.pop %v1270
      %v1303 = verf.f32.pop %v1271
      %v1304 = verf.f32.pop %v1272
      %v1305 = verf.f32.pop %v1273
      %v1306 = verf.f32.pop %v1274
      %v1307 = verf.f32.pop %v1275
      %v1308 = verf.f32.pop %v1276
      %v1309 = verf.f32.pop %v1277
      %v1310 = verf.f32.pop %v1278
      %v1311 = verf.f32.pop %v1279
      %v1312 = verf.f32.pop %v1280
      %v1313 = verf.f32.pop %v1281
      %v1314 = verf.f32.pop %v1282
      %v1315 = verf.f32.pop %v1283
      %v1316 = verf.f32.pop %v1284
      %v1317 = verf.f32.pop %v1285
      %v1318 = verf.f32.pop %v1286
      %v1319 = verf.f32.pop %v1287
      %v1320 = verf.f32.pop %v1288
      %v1321 = verf.f32.pop %v1289
      %v1322 = verf.f32.pop %v1290
      %v1323 = verf.f32.pop %v1291
      %v1324 = verf.f32.pop %v1292
      %v1325 = verf.f32.pop %v1293
      %v1326 = verf.f32.pop %v1294
      %v1327 = verf.f32.pop %v1295
      %v1328 = vadd.f32 %v1296, 1.0
      %v1329 = vadd.f32 %v1297, 1.0
      %v1330 = vadd.f32 %v1298, 1.0
      %v1331 = vadd.f32 %v1299, 1.0
      %v1332 = vadd.f32 %v1300, 1.0
      %v1333 = vadd.f32 %v1301, 1.0
      %v1334 = vadd.f32 %v1302, 1.0
      %v1335 = vadd.f32 %v1303, 1.0
      %v1336 = vadd.f32 %v1304, 1.0
      %v1337 = vadd.f32 %v1305, 1.0
      %v1338 = vadd.f32 %v1306, 1.0
      %v1339 = vadd.f32 %v1307, 1.0
      %v1340 = vadd.f32 %v1308, 1.0
      %v1341 = vadd.f32 %v1309, 1.0
      %v1342 = vadd.f32 %v1310, 1.0
      %v1343 = vadd.f32 %v1311, 1.0
      %v1344 = vadd.f32 %v1312, 1.0
      %v1345 = vadd.f32 %v1313, 1.0
      %v1346 = vadd.f32 %v1314, 1.0
      %v1347 = vadd.f32 %v1315, 1.0
      %v1348 = vadd.f32 %v1316, 1.0
      %v1349 = vadd.f32 %v1317, 1.0
      %v1350 = vadd.f32 %v1318, 1.0
      %v1351 = vadd.f32 %v1319, 1.0
      %v1352 = vadd.f32 %v1320, 1.0
      %v1353 = vadd.f32 %v1321, 1.0
      %v1354 = vadd.f32 %v1322, 1.0
      %v1355 = vadd.f32 %v1323, 1.0
      %v1356 = vadd.f32 %v1324, 1.0
      %v1357 = vadd.f32 %v1325, 1.0
      %v1358 = vadd.f32 %v1326, 1.0
      %v1359 = vadd.f32 %v1327, 1.0
      %v1360 = vmul.f32 %v1232, %v1328
      %v1361 = vmul.f32 %v1233, %v1329
      %v1362 = vmul.f32 %v1234, %v1330
      %v1363 = vmul.f32 %v1235, %v1331
      %v1364 = vmul.f32 %v1236, %v1332
      %v1365 = vmul.f32 %v1237, %v1333
      %v1366 = vmul.f32 %v1238, %v1334
      %v1367 = vmul.f32 %v1239, %v1335
      %v1368 = vmul.f32 %v1240, %v1336
      %v1369 = vmul.f32 %v1241, %v1337
      %v1370 = vmul.f32 %v1242, %v1338
      %v1371 = vmul.f32 %v1243, %v1339
      %v1372 = vmul.f32 %v1244, %v1340
      %v1373 = vmul.f32 %v1245, %v1341
      %v1374 = vmul.f32 %v1246, %v1342
      %v1375 = vmul.f32 %v1247, %v1343
      %v1376 = vmul.f32 %v1248, %v1344
      %v1377 = vmul.f32 %v1249, %v1345
      %v1378 = vmul.f32 %v1250, %v1346
      %v1379 = vmul.f32 %v1251, %v1347
      %v1380 = vmul.f32 %v1252, %v1348
      %v1381 = vmul.f32 %v1253, %v1349
      %v1382 = vmul.f32 %v1254, %v1350
      %v1383 = vmul.f32 %v1255, %v1351
      %v1384 = vmul.f32 %v1256, %v1352
      %v1385 = vmul.f32 %v1257, %v1353
      %v1386 = vmul.f32 %v1258, %v1354
      %v1387 = vmul.f32 %v1259, %v1355
      %v1388 = vmul.f32 %v1260, %v1356
      %v1389 = vmul.f32 %v1261, %v1357
      %v1390 = vmul.f32 %v1262, %v1358
      %v1391 = vmul.f32 %v1263, %v1359
      %v1392 = vlaneseq
      %v1393 = vshrl.u32 %v1392, 7
      %v1394 = vsub.s32 0, %v1393
      %v1395 = vrot.slane %v414, %v1394
      %v1396 = vmul.f32 %v1360, %v1395
      %v1397 = vmul.f32 %v1361, %v1395
      %v1398 = vmul.f32 %v1362, %v1395
      %v1399 = vmul.f32 %v1363, %v1395
      %v1400 = vmul.f32 %v1364, %v1395
      %v1401 = vmul.f32 %v1365, %v1395
      %v1402 = vmul.f32 %v1366, %v1395
      %v1403 = vmul.f32 %v1367, %v1395
      %v1404 = vmul.f32 %v1368, %v1395
      %v1405 = vmul.f32 %v1369, %v1395
      %v1406 = vmul.f32 %v1370, %v1395
      %v1407 = vmul.f32 %v1371, %v1395
      %v1408 = vmul.f32 %v1372, %v1395
      %v1409 = vmul.f32 %v1373, %v1395
      %v1410 = vmul.f32 %v1374, %v1395
      %v1411 = vmul.f32 %v1375, %v1395
      %v1412 = vmul.f32 %v1376, %v1395
      %v1413 = vmul.f32 %v1377, %v1395
      %v1414 = vmul.f32 %v1378, %v1395
      %v1415 = vmul.f32 %v1379, %v1395
      %v1416 = vmul.f32 %v1380, %v1395
      %v1417 = vmul.f32 %v1381, %v1395
      %v1418 = vmul.f32 %v1382, %v1395
      %v1419 = vmul.f32 %v1383, %v1395
      %v1420 = vmul.f32 %v1384, %v1395
      %v1421 = vmul.f32 %v1385, %v1395
      %v1422 = vmul.f32 %v1386, %v1395
      %v1423 = vmul.f32 %v1387, %v1395
      %v1424 = vmul.f32 %v1388, %v1395
      %v1425 = vmul.f32 %v1389, %v1395
      %v1426 = vmul.f32 %v1390, %v1395
      %v1427 = vmul.f32 %v1391, %v1395
      %v1428 = vlaneseq
      %v1429 = vshrl.u32 %v1428, 7
      %v1430 = vsub.s32 1, %v1429
      %v1431 = vrot.slane %v414, %v1430
      %v1432 = vadd.f32 %v1396, %v1431
      %v1433 = vadd.f32 %v1397, %v1431
      %v1434 = vadd.f32 %v1398, %v1431
      %v1435 = vadd.f32 %v1399, %v1431
      %v1436 = vadd.f32 %v1400, %v1431
      %v1437 = vadd.f32 %v1401, %v1431
      %v1438 = vadd.f32 %v1402, %v1431
      %v1439 = vadd.f32 %v1403, %v1431
      %v1440 = vadd.f32 %v1404, %v1431
      %v1441 = vadd.f32 %v1405, %v1431
      %v1442 = vadd.f32 %v1406, %v1431
      %v1443 = vadd.f32 %v1407, %v1431
      %v1444 = vadd.f32 %v1408, %v1431
      %v1445 = vadd.f32 %v1409, %v1431
      %v1446 = vadd.f32 %v1410, %v1431
      %v1447 = vadd.f32 %v1411, %v1431
      %v1448 = vadd.f32 %v1412, %v1431
      %v1449 = vadd.f32 %v1413, %v1431
      %v1450 = vadd.f32 %v1414, %v1431
      %v1451 = vadd.f32 %v1415, %v1431
      %v1452 = vadd.f32 %v1416, %v1431
      %v1453 = vadd.f32 %v1417, %v1431
      %v1454 = vadd.f32 %v1418, %v1431
      %v1455 = vadd.f32 %v1419, %v1431
      %v1456 = vadd.f32 %v1420, %v1431
      %v1457 = vadd.f32 %v1421, %v1431
      %v1458 = vadd.f32 %v1422, %v1431
      %v1459 = vadd.f32 %v1423, %v1431
      %v1460 = vadd.f32 %v1424, %v1431
      %v1461 = vadd.f32 %v1425, %v1431
      %v1462 = vadd.f32 %v1426, %v1431
      %v1463 = vadd.f32 %v1427, %v1431
      %v1464 = vld [vmem:[%s6] sm:$0xff]
      %v1465 = vld [vmem:[%s6 + $0x8] sm:$0xff]
      %v1466 = vld [vmem:[%s6 + $0x10] sm:$0xff]
      %v1467 = vld [vmem:[%s6 + $0x18] sm:$0xff]
      %v1468 = vld [vmem:[%s6 + $0x20] sm:$0xff]
      %v1469 = vld [vmem:[%s6 + $0x28] sm:$0xff]
      %v1470 = vld [vmem:[%s6 + $0x30] sm:$0xff]
      %v1471 = vld [vmem:[%s6 + $0x38] sm:$0xff]
      %v1472 = vld [vmem:[%s6 + $0x40] sm:$0xff]
      %v1473 = vld [vmem:[%s6 + $0x48] sm:$0xff]
      %v1474 = vld [vmem:[%s6 + $0x50] sm:$0xff]
      %v1475 = vld [vmem:[%s6 + $0x58] sm:$0xff]
      %v1476 = vld [vmem:[%s6 + $0x60] sm:$0xff]
      %v1477 = vld [vmem:[%s6 + $0x68] sm:$0xff]
      %v1478 = vld [vmem:[%s6 + $0x70] sm:$0xff]
      %v1479 = vld [vmem:[%s6 + $0x78] sm:$0xff]
      %1480 = vmatprep.subr.mxu0 0.0
      %1481 = vmatpush1.msra.mxu0 %v1479
      %1482 = vmatprep.subr.mxu0 0.0
      %1483 = vmatpush1.msra.mxu0 %v1478
      %1484 = vmatprep.subr.mxu0 0.0
      %1485 = vmatpush1.msra.mxu0 %v1477
      %1486 = vmatprep.subr.mxu0 0.0
      %1487 = vmatpush1.msra.mxu0 %v1476
      %1488 = vmatprep.subr.mxu0 0.0
      %1489 = vmatpush1.msra.mxu0 %v1475
      %1490 = vmatprep.subr.mxu0 0.0
      %1491 = vmatpush1.msra.mxu0 %v1474
      %1492 = vmatprep.subr.mxu0 0.0
      %1493 = vmatpush1.msra.mxu0 %v1473
      %1494 = vmatprep.subr.mxu0 0.0
      %1495 = vmatpush1.msra.mxu0 %v1472
      %1496 = vmatprep.subr.mxu0 0.0
      %1497 = vmatpush1.msra.mxu0 %v1471
      %1498 = vmatprep.subr.mxu0 0.0
      %1499 = vmatpush1.msra.mxu0 %v1470
      %1500 = vmatprep.subr.mxu0 0.0
      %1501 = vmatpush1.msra.mxu0 %v1469
      %1502 = vmatprep.subr.mxu0 0.0
      %1503 = vmatpush1.msra.mxu0 %v1468
      %1504 = vmatprep.subr.mxu0 0.0
      %1505 = vmatpush1.msra.mxu0 %v1467
      %1506 = vmatprep.subr.mxu0 0.0
      %1507 = vmatpush1.msra.mxu0 %v1466
      %1508 = vmatprep.subr.mxu0 0.0
      %1509 = vmatpush1.msra.mxu0 %v1465
      %1510 = vmatprep.subr.mxu0 0.0
      %1511 = vmatpush1.msra.mxu0 %v1464
      %1512 = vmatprep.subr.mxu0 0.0
      %1513 = vmatpush2.msra.mxu0 0.0
      %1514 = vmatprep.subr.mxu0 0.0
      %1515 = vmatpush2.msra.mxu0 0.0
      %1516 = vmatprep.subr.mxu0 0.0
      %1517 = vmatpush2.msra.mxu0 0.0
      %1518 = vmatprep.subr.mxu0 0.0
      %1519 = vmatpush2.msra.mxu0 0.0
      %1520 = vmatprep.subr.mxu0 0.0
      %1521 = vmatpush2.msra.mxu0 0.0
      %1522 = vmatprep.subr.mxu0 0.0
      %1523 = vmatpush2.msra.mxu0 0.0
      %1524 = vmatprep.subr.mxu0 0.0
      %1525 = vmatpush2.msra.mxu0 0.0
      %1526 = vmatprep.subr.mxu0 0.0
      %1527 = vmatpush2.msra.mxu0 0.0
      %1528 = vmatprep.subr.mxu0 0.0
      %1529 = vmatpush2.msra.mxu0 0.0
      %1530 = vmatprep.subr.mxu0 0.0
      %1531 = vmatpush2.msra.mxu0 0.0
      %1532 = vmatprep.subr.mxu0 0.0
      %1533 = vmatpush2.msra.mxu0 0.0
      %1534 = vmatprep.subr.mxu0 0.0
      %1535 = vmatpush2.msra.mxu0 0.0
      %1536 = vmatprep.subr.mxu0 0.0
      %1537 = vmatpush2.msra.mxu0 0.0
      %1538 = vmatprep.subr.mxu0 0.0
      %1539 = vmatpush2.msra.mxu0 0.0
      %1540 = vmatprep.subr.mxu0 0.0
      %1541 = vmatpush2.msra.mxu0 0.0
      %1542 = vmatprep.subr.mxu0 0.0
      %1543 = vmatpush2.msra.mxu0 0.0
      %1544 = vmatprep.mubr.f32.mxu0 0.0
      %1545 = vmatmul.mubr.f32.gmra.mxu0 %v1432
      %v1546 = vpop.f32.mrf.mxu0
      %v1547 = vadd.f32 0.0, %v1546
      %v1548 = vpop.f32.mrf.mxu0
      %1549 = vmatprep.mubr.f32.mxu0 0.0
      %1550 = vmatmul.mubr.f32.gmra.mxu0 %v1433
      %v1551 = vpop.f32.mrf.mxu0
      %v1552 = vadd.f32 0.0, %v1551
      %v1553 = vpop.f32.mrf.mxu0
      %1554 = vmatprep.mubr.f32.mxu0 0.0
      %1555 = vmatmul.mubr.f32.gmra.mxu0 %v1434
      %v1556 = vpop.f32.mrf.mxu0
      %v1557 = vadd.f32 0.0, %v1556
      %v1558 = vpop.f32.mrf.mxu0
      %1559 = vmatprep.mubr.f32.mxu0 0.0
      %1560 = vmatmul.mubr.f32.gmra.mxu0 %v1435
      %v1561 = vpop.f32.mrf.mxu0
      %v1562 = vadd.f32 0.0, %v1561
      %v1563 = vpop.f32.mrf.mxu0
      %1564 = vmatprep.mubr.f32.mxu0 0.0
      %1565 = vmatmul.mubr.f32.gmra.mxu0 %v1436
      %v1566 = vpop.f32.mrf.mxu0
      %v1567 = vadd.f32 0.0, %v1566
      %v1568 = vpop.f32.mrf.mxu0
      %1569 = vmatprep.mubr.f32.mxu0 0.0
      %1570 = vmatmul.mubr.f32.gmra.mxu0 %v1437
      %v1571 = vpop.f32.mrf.mxu0
      %v1572 = vadd.f32 0.0, %v1571
      %v1573 = vpop.f32.mrf.mxu0
      %1574 = vmatprep.mubr.f32.mxu0 0.0
      %1575 = vmatmul.mubr.f32.gmra.mxu0 %v1438
      %v1576 = vpop.f32.mrf.mxu0
      %v1577 = vadd.f32 0.0, %v1576
      %v1578 = vpop.f32.mrf.mxu0
      %1579 = vmatprep.mubr.f32.mxu0 0.0
      %1580 = vmatmul.mubr.f32.gmra.mxu0 %v1439
      %v1581 = vpop.f32.mrf.mxu0
      %v1582 = vadd.f32 0.0, %v1581
      %v1583 = vpop.f32.mrf.mxu0
      %1584 = vmatprep.mubr.f32.mxu0 0.0
      %1585 = vmatmul.mubr.f32.gmra.mxu0 %v1440
      %v1586 = vpop.f32.mrf.mxu0
      %v1587 = vadd.f32 0.0, %v1586
      %v1588 = vpop.f32.mrf.mxu0
      %1589 = vmatprep.mubr.f32.mxu0 0.0
      %1590 = vmatmul.mubr.f32.gmra.mxu0 %v1441
      %v1591 = vpop.f32.mrf.mxu0
      %v1592 = vadd.f32 0.0, %v1591
      %v1593 = vpop.f32.mrf.mxu0
      %1594 = vmatprep.mubr.f32.mxu0 0.0
      %1595 = vmatmul.mubr.f32.gmra.mxu0 %v1442
      %v1596 = vpop.f32.mrf.mxu0
      %v1597 = vadd.f32 0.0, %v1596
      %v1598 = vpop.f32.mrf.mxu0
      %1599 = vmatprep.mubr.f32.mxu0 0.0
      %1600 = vmatmul.mubr.f32.gmra.mxu0 %v1443
      %v1601 = vpop.f32.mrf.mxu0
      %v1602 = vadd.f32 0.0, %v1601
      %v1603 = vpop.f32.mrf.mxu0
      %1604 = vmatprep.mubr.f32.mxu0 0.0
      %1605 = vmatmul.mubr.f32.gmra.mxu0 %v1444
      %v1606 = vpop.f32.mrf.mxu0
      %v1607 = vadd.f32 0.0, %v1606
      %v1608 = vpop.f32.mrf.mxu0
      %1609 = vmatprep.mubr.f32.mxu0 0.0
      %1610 = vmatmul.mubr.f32.gmra.mxu0 %v1445
      %v1611 = vpop.f32.mrf.mxu0
      %v1612 = vadd.f32 0.0, %v1611
      %v1613 = vpop.f32.mrf.mxu0
      %1614 = vmatprep.mubr.f32.mxu0 0.0
      %1615 = vmatmul.mubr.f32.gmra.mxu0 %v1446
      %v1616 = vpop.f32.mrf.mxu0
      %v1617 = vadd.f32 0.0, %v1616
      %v1618 = vpop.f32.mrf.mxu0
      %1619 = vmatprep.mubr.f32.mxu0 0.0
      %1620 = vmatmul.mubr.f32.gmra.mxu0 %v1447
      %v1621 = vpop.f32.mrf.mxu0
      %v1622 = vadd.f32 0.0, %v1621
      %v1623 = vpop.f32.mrf.mxu0
      %1624 = vmatprep.mubr.f32.mxu0 0.0
      %1625 = vmatmul.mubr.f32.gmra.mxu0 %v1448
      %v1626 = vpop.f32.mrf.mxu0
      %v1627 = vadd.f32 0.0, %v1626
      %v1628 = vpop.f32.mrf.mxu0
      %1629 = vmatprep.mubr.f32.mxu0 0.0
      %1630 = vmatmul.mubr.f32.gmra.mxu0 %v1449
      %v1631 = vpop.f32.mrf.mxu0
      %v1632 = vadd.f32 0.0, %v1631
      %v1633 = vpop.f32.mrf.mxu0
      %1634 = vmatprep.mubr.f32.mxu0 0.0
      %1635 = vmatmul.mubr.f32.gmra.mxu0 %v1450
      %v1636 = vpop.f32.mrf.mxu0
      %v1637 = vadd.f32 0.0, %v1636
      %v1638 = vpop.f32.mrf.mxu0
      %1639 = vmatprep.mubr.f32.mxu0 0.0
      %1640 = vmatmul.mubr.f32.gmra.mxu0 %v1451
      %v1641 = vpop.f32.mrf.mxu0
      %v1642 = vadd.f32 0.0, %v1641
      %v1643 = vpop.f32.mrf.mxu0
      %1644 = vmatprep.mubr.f32.mxu0 0.0
      %1645 = vmatmul.mubr.f32.gmra.mxu0 %v1452
      %v1646 = vpop.f32.mrf.mxu0
      %v1647 = vadd.f32 0.0, %v1646
      %v1648 = vpop.f32.mrf.mxu0
      %1649 = vmatprep.mubr.f32.mxu0 0.0
      %1650 = vmatmul.mubr.f32.gmra.mxu0 %v1453
      %v1651 = vpop.f32.mrf.mxu0
      %v1652 = vadd.f32 0.0, %v1651
      %v1653 = vpop.f32.mrf.mxu0
      %1654 = vmatprep.mubr.f32.mxu0 0.0
      %1655 = vmatmul.mubr.f32.gmra.mxu0 %v1454
      %v1656 = vpop.f32.mrf.mxu0
      %v1657 = vadd.f32 0.0, %v1656
      %v1658 = vpop.f32.mrf.mxu0
      %1659 = vmatprep.mubr.f32.mxu0 0.0
      %1660 = vmatmul.mubr.f32.gmra.mxu0 %v1455
      %v1661 = vpop.f32.mrf.mxu0
      %v1662 = vadd.f32 0.0, %v1661
      %v1663 = vpop.f32.mrf.mxu0
      %1664 = vmatprep.mubr.f32.mxu0 0.0
      %1665 = vmatmul.mubr.f32.gmra.mxu0 %v1456
      %v1666 = vpop.f32.mrf.mxu0
      %v1667 = vadd.f32 0.0, %v1666
      %v1668 = vpop.f32.mrf.mxu0
      %1669 = vmatprep.mubr.f32.mxu0 0.0
      %1670 = vmatmul.mubr.f32.gmra.mxu0 %v1457
      %v1671 = vpop.f32.mrf.mxu0
      %v1672 = vadd.f32 0.0, %v1671
      %v1673 = vpop.f32.mrf.mxu0
      %1674 = vmatprep.mubr.f32.mxu0 0.0
      %1675 = vmatmul.mubr.f32.gmra.mxu0 %v1458
      %v1676 = vpop.f32.mrf.mxu0
      %v1677 = vadd.f32 0.0, %v1676
      %v1678 = vpop.f32.mrf.mxu0
      %1679 = vmatprep.mubr.f32.mxu0 0.0
      %1680 = vmatmul.mubr.f32.gmra.mxu0 %v1459
      %v1681 = vpop.f32.mrf.mxu0
      %v1682 = vadd.f32 0.0, %v1681
      %v1683 = vpop.f32.mrf.mxu0
      %1684 = vmatprep.mubr.f32.mxu0 0.0
      %1685 = vmatmul.mubr.f32.gmra.mxu0 %v1460
      %v1686 = vpop.f32.mrf.mxu0
      %v1687 = vadd.f32 0.0, %v1686
      %v1688 = vpop.f32.mrf.mxu0
      %1689 = vmatprep.mubr.f32.mxu0 0.0
      %1690 = vmatmul.mubr.f32.gmra.mxu0 %v1461
      %v1691 = vpop.f32.mrf.mxu0
      %v1692 = vadd.f32 0.0, %v1691
      %v1693 = vpop.f32.mrf.mxu0
      %1694 = vmatprep.mubr.f32.mxu0 0.0
      %1695 = vmatmul.mubr.f32.gmra.mxu0 %v1462
      %v1696 = vpop.f32.mrf.mxu0
      %v1697 = vadd.f32 0.0, %v1696
      %v1698 = vpop.f32.mrf.mxu0
      %1699 = vmatprep.mubr.f32.mxu0 0.0
      %1700 = vmatmul.mubr.f32.gmra.mxu0 %v1463
      %v1701 = vpop.f32.mrf.mxu0
      %v1702 = vadd.f32 0.0, %v1701
      %v1703 = vpop.f32.mrf.mxu0
      %1704 = vdwg.mxu0
      %v1705 = vadd.f32 %v1096, %v1547
      %v1706 = vadd.f32 %v1097, %v1552
      %v1707 = vadd.f32 %v1098, %v1557
      %v1708 = vadd.f32 %v1099, %v1562
      %v1709 = vadd.f32 %v1100, %v1567
      %v1710 = vadd.f32 %v1101, %v1572
      %v1711 = vadd.f32 %v1102, %v1577
      %v1712 = vadd.f32 %v1103, %v1582
      %v1713 = vadd.f32 %v1104, %v1587
      %v1714 = vadd.f32 %v1105, %v1592
      %v1715 = vadd.f32 %v1106, %v1597
      %v1716 = vadd.f32 %v1107, %v1602
      %v1717 = vadd.f32 %v1108, %v1607
      %v1718 = vadd.f32 %v1109, %v1612
      %v1719 = vadd.f32 %v1110, %v1617
      %v1720 = vadd.f32 %v1111, %v1622
      %v1721 = vadd.f32 %v1112, %v1627
      %v1722 = vadd.f32 %v1113, %v1632
      %v1723 = vadd.f32 %v1114, %v1637
      %v1724 = vadd.f32 %v1115, %v1642
      %v1725 = vadd.f32 %v1116, %v1647
      %v1726 = vadd.f32 %v1117, %v1652
      %v1727 = vadd.f32 %v1118, %v1657
      %v1728 = vadd.f32 %v1119, %v1662
      %v1729 = vadd.f32 %v1120, %v1667
      %v1730 = vadd.f32 %v1121, %v1672
      %v1731 = vadd.f32 %v1122, %v1677
      %v1732 = vadd.f32 %v1123, %v1682
      %v1733 = vadd.f32 %v1124, %v1687
      %v1734 = vadd.f32 %v1125, %v1692
      %v1735 = vadd.f32 %v1126, %v1697
      %v1736 = vadd.f32 %v1127, %v1702
      %v1737 = vld [vmem:[%s401] sm:$0xff]
      %v1738 = vld [vmem:[%s401 + $0x8] sm:$0xff]
      %v1739 = vld [vmem:[%s401 + $0x10] sm:$0xff]
      %v1740 = vld [vmem:[%s401 + $0x18] sm:$0xff]
      %v1741 = vld [vmem:[%s401 + $0x20] sm:$0xff]
      %v1742 = vld [vmem:[%s401 + $0x28] sm:$0xff]
      %v1743 = vld [vmem:[%s401 + $0x30] sm:$0xff]
      %v1744 = vld [vmem:[%s401 + $0x38] sm:$0xff]
      %v1745 = vld [vmem:[%s401 + $0x40] sm:$0xff]
      %v1746 = vld [vmem:[%s401 + $0x48] sm:$0xff]
      %v1747 = vld [vmem:[%s401 + $0x50] sm:$0xff]
      %v1748 = vld [vmem:[%s401 + $0x58] sm:$0xff]
      %v1749 = vld [vmem:[%s401 + $0x60] sm:$0xff]
      %v1750 = vld [vmem:[%s401 + $0x68] sm:$0xff]
      %v1751 = vld [vmem:[%s401 + $0x70] sm:$0xff]
      %v1752 = vld [vmem:[%s401 + $0x78] sm:$0xff]
      %v1753 = vld [vmem:[%s401 + $0x80] sm:$0xff]
      %v1754 = vld [vmem:[%s401 + $0x88] sm:$0xff]
      %v1755 = vld [vmem:[%s401 + $0x90] sm:$0xff]
      %v1756 = vld [vmem:[%s401 + $0x98] sm:$0xff]
      %v1757 = vld [vmem:[%s401 + $0xa0] sm:$0xff]
      %v1758 = vld [vmem:[%s401 + $0xa8] sm:$0xff]
      %v1759 = vld [vmem:[%s401 + $0xb0] sm:$0xff]
      %v1760 = vld [vmem:[%s401 + $0xb8] sm:$0xff]
      %v1761 = vld [vmem:[%s401 + $0xc0] sm:$0xff]
      %v1762 = vld [vmem:[%s401 + $0xc8] sm:$0xff]
      %v1763 = vld [vmem:[%s401 + $0xd0] sm:$0xff]
      %v1764 = vld [vmem:[%s401 + $0xd8] sm:$0xff]
      %v1765 = vld [vmem:[%s401 + $0xe0] sm:$0xff]
      %v1766 = vld [vmem:[%s401 + $0xe8] sm:$0xff]
      %v1767 = vld [vmem:[%s401 + $0xf0] sm:$0xff]
      %v1768 = vld [vmem:[%s401 + $0xf8] sm:$0xff]
      %v1769 = vlaneseq
      %v1770 = vshrl.u32 %v1769, 7
      %v1771 = vsub.s32 2, %v1770
      %v1772 = vrot.slane %v414, %v1771
      %v1773 = vmul.f32 %v1737, %v1772
      %v1774 = vmul.f32 %v1738, %v1772
      %v1775 = vmul.f32 %v1739, %v1772
      %v1776 = vmul.f32 %v1740, %v1772
      %v1777 = vmul.f32 %v1741, %v1772
      %v1778 = vmul.f32 %v1742, %v1772
      %v1779 = vmul.f32 %v1743, %v1772
      %v1780 = vmul.f32 %v1744, %v1772
      %v1781 = vmul.f32 %v1745, %v1772
      %v1782 = vmul.f32 %v1746, %v1772
      %v1783 = vmul.f32 %v1747, %v1772
      %v1784 = vmul.f32 %v1748, %v1772
      %v1785 = vmul.f32 %v1749, %v1772
      %v1786 = vmul.f32 %v1750, %v1772
      %v1787 = vmul.f32 %v1751, %v1772
      %v1788 = vmul.f32 %v1752, %v1772
      %v1789 = vmul.f32 %v1753, %v1772
      %v1790 = vmul.f32 %v1754, %v1772
      %v1791 = vmul.f32 %v1755, %v1772
      %v1792 = vmul.f32 %v1756, %v1772
      %v1793 = vmul.f32 %v1757, %v1772
      %v1794 = vmul.f32 %v1758, %v1772
      %v1795 = vmul.f32 %v1759, %v1772
      %v1796 = vmul.f32 %v1760, %v1772
      %v1797 = vmul.f32 %v1761, %v1772
      %v1798 = vmul.f32 %v1762, %v1772
      %v1799 = vmul.f32 %v1763, %v1772
      %v1800 = vmul.f32 %v1764, %v1772
      %v1801 = vmul.f32 %v1765, %v1772
      %v1802 = vmul.f32 %v1766, %v1772
      %v1803 = vmul.f32 %v1767, %v1772
      %v1804 = vmul.f32 %v1768, %v1772
      %v1805 = vlaneseq
      %v1806 = vshrl.u32 %v1805, 7
      %v1807 = vsub.s32 3, %v1806
      %v1808 = vrot.slane %v414, %v1807
      %v1809 = vadd.f32 %v1773, %v1808
      %v1810 = vadd.f32 %v1774, %v1808
      %v1811 = vadd.f32 %v1775, %v1808
      %v1812 = vadd.f32 %v1776, %v1808
      %v1813 = vadd.f32 %v1777, %v1808
      %v1814 = vadd.f32 %v1778, %v1808
      %v1815 = vadd.f32 %v1779, %v1808
      %v1816 = vadd.f32 %v1780, %v1808
      %v1817 = vadd.f32 %v1781, %v1808
      %v1818 = vadd.f32 %v1782, %v1808
      %v1819 = vadd.f32 %v1783, %v1808
      %v1820 = vadd.f32 %v1784, %v1808
      %v1821 = vadd.f32 %v1785, %v1808
      %v1822 = vadd.f32 %v1786, %v1808
      %v1823 = vadd.f32 %v1787, %v1808
      %v1824 = vadd.f32 %v1788, %v1808
      %v1825 = vadd.f32 %v1789, %v1808
      %v1826 = vadd.f32 %v1790, %v1808
      %v1827 = vadd.f32 %v1791, %v1808
      %v1828 = vadd.f32 %v1792, %v1808
      %v1829 = vadd.f32 %v1793, %v1808
      %v1830 = vadd.f32 %v1794, %v1808
      %v1831 = vadd.f32 %v1795, %v1808
      %v1832 = vadd.f32 %v1796, %v1808
      %v1833 = vadd.f32 %v1797, %v1808
      %v1834 = vadd.f32 %v1798, %v1808
      %v1835 = vadd.f32 %v1799, %v1808
      %v1836 = vadd.f32 %v1800, %v1808
      %v1837 = vadd.f32 %v1801, %v1808
      %v1838 = vadd.f32 %v1802, %v1808
      %v1839 = vadd.f32 %v1803, %v1808
      %v1840 = vadd.f32 %v1804, %v1808
      %v1841 = vmul.f32 %v1809, 0.5
      %v1842 = vmul.f32 %v1810, 0.5
      %v1843 = vmul.f32 %v1811, 0.5
      %v1844 = vmul.f32 %v1812, 0.5
      %v1845 = vmul.f32 %v1813, 0.5
      %v1846 = vmul.f32 %v1814, 0.5
      %v1847 = vmul.f32 %v1815, 0.5
      %v1848 = vmul.f32 %v1816, 0.5
      %v1849 = vmul.f32 %v1817, 0.5
      %v1850 = vmul.f32 %v1818, 0.5
      %v1851 = vmul.f32 %v1819, 0.5
      %v1852 = vmul.f32 %v1820, 0.5
      %v1853 = vmul.f32 %v1821, 0.5
      %v1854 = vmul.f32 %v1822, 0.5
      %v1855 = vmul.f32 %v1823, 0.5
      %v1856 = vmul.f32 %v1824, 0.5
      %v1857 = vmul.f32 %v1825, 0.5
      %v1858 = vmul.f32 %v1826, 0.5
      %v1859 = vmul.f32 %v1827, 0.5
      %v1860 = vmul.f32 %v1828, 0.5
      %v1861 = vmul.f32 %v1829, 0.5
      %v1862 = vmul.f32 %v1830, 0.5
      %v1863 = vmul.f32 %v1831, 0.5
      %v1864 = vmul.f32 %v1832, 0.5
      %v1865 = vmul.f32 %v1833, 0.5
      %v1866 = vmul.f32 %v1834, 0.5
      %v1867 = vmul.f32 %v1835, 0.5
      %v1868 = vmul.f32 %v1836, 0.5
      %v1869 = vmul.f32 %v1837, 0.5
      %v1870 = vmul.f32 %v1838, 0.5
      %v1871 = vmul.f32 %v1839, 0.5
      %v1872 = vmul.f32 %v1840, 0.5
      %v1873 = vmul.f32 %v1809, 0.70710677
      %v1874 = vmul.f32 %v1810, 0.70710677
      %v1875 = vmul.f32 %v1811, 0.70710677
      %v1876 = vmul.f32 %v1812, 0.70710677
      %v1877 = vmul.f32 %v1813, 0.70710677
      %v1878 = vmul.f32 %v1814, 0.70710677
      %v1879 = vmul.f32 %v1815, 0.70710677
      %v1880 = vmul.f32 %v1816, 0.70710677
      %v1881 = vmul.f32 %v1817, 0.70710677
      %v1882 = vmul.f32 %v1818, 0.70710677
      %v1883 = vmul.f32 %v1819, 0.70710677
      %v1884 = vmul.f32 %v1820, 0.70710677
      %v1885 = vmul.f32 %v1821, 0.70710677
      %v1886 = vmul.f32 %v1822, 0.70710677
      %v1887 = vmul.f32 %v1823, 0.70710677
      %v1888 = vmul.f32 %v1824, 0.70710677
      %v1889 = vmul.f32 %v1825, 0.70710677
      %v1890 = vmul.f32 %v1826, 0.70710677
      %v1891 = vmul.f32 %v1827, 0.70710677
      %v1892 = vmul.f32 %v1828, 0.70710677
      %v1893 = vmul.f32 %v1829, 0.70710677
      %v1894 = vmul.f32 %v1830, 0.70710677
      %v1895 = vmul.f32 %v1831, 0.70710677
      %v1896 = vmul.f32 %v1832, 0.70710677
      %v1897 = vmul.f32 %v1833, 0.70710677
      %v1898 = vmul.f32 %v1834, 0.70710677
      %v1899 = vmul.f32 %v1835, 0.70710677
      %v1900 = vmul.f32 %v1836, 0.70710677
      %v1901 = vmul.f32 %v1837, 0.70710677
      %v1902 = vmul.f32 %v1838, 0.70710677
      %v1903 = vmul.f32 %v1839, 0.70710677
      %v1904 = vmul.f32 %v1840, 0.70710677
      %v1905 = verf.f32.pop %v1873
      %v1906 = verf.f32.pop %v1874
      %v1907 = verf.f32.pop %v1875
      %v1908 = verf.f32.pop %v1876
      %v1909 = verf.f32.pop %v1877
      %v1910 = verf.f32.pop %v1878
      %v1911 = verf.f32.pop %v1879
      %v1912 = verf.f32.pop %v1880
      %v1913 = verf.f32.pop %v1881
      %v1914 = verf.f32.pop %v1882
      %v1915 = verf.f32.pop %v1883
      %v1916 = verf.f32.pop %v1884
      %v1917 = verf.f32.pop %v1885
      %v1918 = verf.f32.pop %v1886
      %v1919 = verf.f32.pop %v1887
      %v1920 = verf.f32.pop %v1888
      %v1921 = verf.f32.pop %v1889
      %v1922 = verf.f32.pop %v1890
      %v1923 = verf.f32.pop %v1891
      %v1924 = verf.f32.pop %v1892
      %v1925 = verf.f32.pop %v1893
      %v1926 = verf.f32.pop %v1894
      %v1927 = verf.f32.pop %v1895
      %v1928 = verf.f32.pop %v1896
      %v1929 = verf.f32.pop %v1897
      %v1930 = verf.f32.pop %v1898
      %v1931 = verf.f32.pop %v1899
      %v1932 = verf.f32.pop %v1900
      %v1933 = verf.f32.pop %v1901
      %v1934 = verf.f32.pop %v1902
      %v1935 = verf.f32.pop %v1903
      %v1936 = verf.f32.pop %v1904
      %v1937 = vadd.f32 %v1905, 1.0
      %v1938 = vadd.f32 %v1906, 1.0
      %v1939 = vadd.f32 %v1907, 1.0
      %v1940 = vadd.f32 %v1908, 1.0
      %v1941 = vadd.f32 %v1909, 1.0
      %v1942 = vadd.f32 %v1910, 1.0
      %v1943 = vadd.f32 %v1911, 1.0
      %v1944 = vadd.f32 %v1912, 1.0
      %v1945 = vadd.f32 %v1913, 1.0
      %v1946 = vadd.f32 %v1914, 1.0
      %v1947 = vadd.f32 %v1915, 1.0
      %v1948 = vadd.f32 %v1916, 1.0
      %v1949 = vadd.f32 %v1917, 1.0
      %v1950 = vadd.f32 %v1918, 1.0
      %v1951 = vadd.f32 %v1919, 1.0
      %v1952 = vadd.f32 %v1920, 1.0
      %v1953 = vadd.f32 %v1921, 1.0
      %v1954 = vadd.f32 %v1922, 1.0
      %v1955 = vadd.f32 %v1923, 1.0
      %v1956 = vadd.f32 %v1924, 1.0
      %v1957 = vadd.f32 %v1925, 1.0
      %v1958 = vadd.f32 %v1926, 1.0
      %v1959 = vadd.f32 %v1927, 1.0
      %v1960 = vadd.f32 %v1928, 1.0
      %v1961 = vadd.f32 %v1929, 1.0
      %v1962 = vadd.f32 %v1930, 1.0
      %v1963 = vadd.f32 %v1931, 1.0
      %v1964 = vadd.f32 %v1932, 1.0
      %v1965 = vadd.f32 %v1933, 1.0
      %v1966 = vadd.f32 %v1934, 1.0
      %v1967 = vadd.f32 %v1935, 1.0
      %v1968 = vadd.f32 %v1936, 1.0
      %v1969 = vmul.f32 %v1841, %v1937
      %v1970 = vmul.f32 %v1842, %v1938
      %v1971 = vmul.f32 %v1843, %v1939
      %v1972 = vmul.f32 %v1844, %v1940
      %v1973 = vmul.f32 %v1845, %v1941
      %v1974 = vmul.f32 %v1846, %v1942
      %v1975 = vmul.f32 %v1847, %v1943
      %v1976 = vmul.f32 %v1848, %v1944
      %v1977 = vmul.f32 %v1849, %v1945
      %v1978 = vmul.f32 %v1850, %v1946
      %v1979 = vmul.f32 %v1851, %v1947
      %v1980 = vmul.f32 %v1852, %v1948
      %v1981 = vmul.f32 %v1853, %v1949
      %v1982 = vmul.f32 %v1854, %v1950
      %v1983 = vmul.f32 %v1855, %v1951
      %v1984 = vmul.f32 %v1856, %v1952
      %v1985 = vmul.f32 %v1857, %v1953
      %v1986 = vmul.f32 %v1858, %v1954
      %v1987 = vmul.f32 %v1859, %v1955
      %v1988 = vmul.f32 %v1860, %v1956
      %v1989 = vmul.f32 %v1861, %v1957
      %v1990 = vmul.f32 %v1862, %v1958
      %v1991 = vmul.f32 %v1863, %v1959
      %v1992 = vmul.f32 %v1864, %v1960
      %v1993 = vmul.f32 %v1865, %v1961
      %v1994 = vmul.f32 %v1866, %v1962
      %v1995 = vmul.f32 %v1867, %v1963
      %v1996 = vmul.f32 %v1868, %v1964
      %v1997 = vmul.f32 %v1869, %v1965
      %v1998 = vmul.f32 %v1870, %v1966
      %v1999 = vmul.f32 %v1871, %v1967
      %v2000 = vmul.f32 %v1872, %v1968
      %v2001 = vlaneseq
      %v2002 = vshrl.u32 %v2001, 7
      %v2003 = vsub.s32 4, %v2002
      %v2004 = vrot.slane %v414, %v2003
      %v2005 = vmul.f32 %v1969, %v2004
      %v2006 = vmul.f32 %v1970, %v2004
      %v2007 = vmul.f32 %v1971, %v2004
      %v2008 = vmul.f32 %v1972, %v2004
      %v2009 = vmul.f32 %v1973, %v2004
      %v2010 = vmul.f32 %v1974, %v2004
      %v2011 = vmul.f32 %v1975, %v2004
      %v2012 = vmul.f32 %v1976, %v2004
      %v2013 = vmul.f32 %v1977, %v2004
      %v2014 = vmul.f32 %v1978, %v2004
      %v2015 = vmul.f32 %v1979, %v2004
      %v2016 = vmul.f32 %v1980, %v2004
      %v2017 = vmul.f32 %v1981, %v2004
      %v2018 = vmul.f32 %v1982, %v2004
      %v2019 = vmul.f32 %v1983, %v2004
      %v2020 = vmul.f32 %v1984, %v2004
      %v2021 = vmul.f32 %v1985, %v2004
      %v2022 = vmul.f32 %v1986, %v2004
      %v2023 = vmul.f32 %v1987, %v2004
      %v2024 = vmul.f32 %v1988, %v2004
      %v2025 = vmul.f32 %v1989, %v2004
      %v2026 = vmul.f32 %v1990, %v2004
      %v2027 = vmul.f32 %v1991, %v2004
      %v2028 = vmul.f32 %v1992, %v2004
      %v2029 = vmul.f32 %v1993, %v2004
      %v2030 = vmul.f32 %v1994, %v2004
      %v2031 = vmul.f32 %v1995, %v2004
      %v2032 = vmul.f32 %v1996, %v2004
      %v2033 = vmul.f32 %v1997, %v2004
      %v2034 = vmul.f32 %v1998, %v2004
      %v2035 = vmul.f32 %v1999, %v2004
      %v2036 = vmul.f32 %v2000, %v2004
      %v2037 = vlaneseq
      %v2038 = vshrl.u32 %v2037, 7
      %v2039 = vsub.s32 5, %v2038
      %v2040 = vrot.slane %v414, %v2039
      %v2041 = vadd.f32 %v2005, %v2040
      %v2042 = vadd.f32 %v2006, %v2040
      %v2043 = vadd.f32 %v2007, %v2040
      %v2044 = vadd.f32 %v2008, %v2040
      %v2045 = vadd.f32 %v2009, %v2040
      %v2046 = vadd.f32 %v2010, %v2040
      %v2047 = vadd.f32 %v2011, %v2040
      %v2048 = vadd.f32 %v2012, %v2040
      %v2049 = vadd.f32 %v2013, %v2040
      %v2050 = vadd.f32 %v2014, %v2040
      %v2051 = vadd.f32 %v2015, %v2040
      %v2052 = vadd.f32 %v2016, %v2040
      %v2053 = vadd.f32 %v2017, %v2040
      %v2054 = vadd.f32 %v2018, %v2040
      %v2055 = vadd.f32 %v2019, %v2040
      %v2056 = vadd.f32 %v2020, %v2040
      %v2057 = vadd.f32 %v2021, %v2040
      %v2058 = vadd.f32 %v2022, %v2040
      %v2059 = vadd.f32 %v2023, %v2040
      %v2060 = vadd.f32 %v2024, %v2040
      %v2061 = vadd.f32 %v2025, %v2040
      %v2062 = vadd.f32 %v2026, %v2040
      %v2063 = vadd.f32 %v2027, %v2040
      %v2064 = vadd.f32 %v2028, %v2040
      %v2065 = vadd.f32 %v2029, %v2040
      %v2066 = vadd.f32 %v2030, %v2040
      %v2067 = vadd.f32 %v2031, %v2040
      %v2068 = vadd.f32 %v2032, %v2040
      %v2069 = vadd.f32 %v2033, %v2040
      %v2070 = vadd.f32 %v2034, %v2040
      %v2071 = vadd.f32 %v2035, %v2040
      %v2072 = vadd.f32 %v2036, %v2040
      %v2073 = vld [vmem:[%s7] sm:$0xff]
      %v2074 = vld [vmem:[%s7 + $0x8] sm:$0xff]
      %v2075 = vld [vmem:[%s7 + $0x10] sm:$0xff]
      %v2076 = vld [vmem:[%s7 + $0x18] sm:$0xff]
      %v2077 = vld [vmem:[%s7 + $0x20] sm:$0xff]
      %v2078 = vld [vmem:[%s7 + $0x28] sm:$0xff]
      %v2079 = vld [vmem:[%s7 + $0x30] sm:$0xff]
      %v2080 = vld [vmem:[%s7 + $0x38] sm:$0xff]
      %v2081 = vld [vmem:[%s7 + $0x40] sm:$0xff]
      %v2082 = vld [vmem:[%s7 + $0x48] sm:$0xff]
      %v2083 = vld [vmem:[%s7 + $0x50] sm:$0xff]
      %v2084 = vld [vmem:[%s7 + $0x58] sm:$0xff]
      %v2085 = vld [vmem:[%s7 + $0x60] sm:$0xff]
      %v2086 = vld [vmem:[%s7 + $0x68] sm:$0xff]
      %v2087 = vld [vmem:[%s7 + $0x70] sm:$0xff]
      %v2088 = vld [vmem:[%s7 + $0x78] sm:$0xff]
      %2089 = vmatprep.subr.mxu0 0.0
      %2090 = vmatpush1.msra.mxu0 %v2088
      %2091 = vmatprep.subr.mxu0 0.0
      %2092 = vmatpush1.msra.mxu0 %v2087
      %2093 = vmatprep.subr.mxu0 0.0
      %2094 = vmatpush1.msra.mxu0 %v2086
      %2095 = vmatprep.subr.mxu0 0.0
      %2096 = vmatpush1.msra.mxu0 %v2085
      %2097 = vmatprep.subr.mxu0 0.0
      %2098 = vmatpush1.msra.mxu0 %v2084
      %2099 = vmatprep.subr.mxu0 0.0
      %2100 = vmatpush1.msra.mxu0 %v2083
      %2101 = vmatprep.subr.mxu0 0.0
      %2102 = vmatpush1.msra.mxu0 %v2082
      %2103 = vmatprep.subr.mxu0 0.0
      %2104 = vmatpush1.msra.mxu0 %v2081
      %2105 = vmatprep.subr.mxu0 0.0
      %2106 = vmatpush1.msra.mxu0 %v2080
      %2107 = vmatprep.subr.mxu0 0.0
      %2108 = vmatpush1.msra.mxu0 %v2079
      %2109 = vmatprep.subr.mxu0 0.0
      %2110 = vmatpush1.msra.mxu0 %v2078
      %2111 = vmatprep.subr.mxu0 0.0
      %2112 = vmatpush1.msra.mxu0 %v2077
      %2113 = vmatprep.subr.mxu0 0.0
      %2114 = vmatpush1.msra.mxu0 %v2076
      %2115 = vmatprep.subr.mxu0 0.0
      %2116 = vmatpush1.msra.mxu0 %v2075
      %2117 = vmatprep.subr.mxu0 0.0
      %2118 = vmatpush1.msra.mxu0 %v2074
      %2119 = vmatprep.subr.mxu0 0.0
      %2120 = vmatpush1.msra.mxu0 %v2073
      %2121 = vmatprep.subr.mxu0 0.0
      %2122 = vmatpush2.msra.mxu0 0.0
      %2123 = vmatprep.subr.mxu0 0.0
      %2124 = vmatpush2.msra.mxu0 0.0
      %2125 = vmatprep.subr.mxu0 0.0
      %2126 = vmatpush2.msra.mxu0 0.0
      %2127 = vmatprep.subr.mxu0 0.0
      %2128 = vmatpush2.msra.mxu0 0.0
      %2129 = vmatprep.subr.mxu0 0.0
      %2130 = vmatpush2.msra.mxu0 0.0
      %2131 = vmatprep.subr.mxu0 0.0
      %2132 = vmatpush2.msra.mxu0 0.0
      %2133 = vmatprep.subr.mxu0 0.0
      %2134 = vmatpush2.msra.mxu0 0.0
      %2135 = vmatprep.subr.mxu0 0.0
      %2136 = vmatpush2.msra.mxu0 0.0
      %2137 = vmatprep.subr.mxu0 0.0
      %2138 = vmatpush2.msra.mxu0 0.0
      %2139 = vmatprep.subr.mxu0 0.0
      %2140 = vmatpush2.msra.mxu0 0.0
      %2141 = vmatprep.subr.mxu0 0.0
      %2142 = vmatpush2.msra.mxu0 0.0
      %2143 = vmatprep.subr.mxu0 0.0
      %2144 = vmatpush2.msra.mxu0 0.0
      %2145 = vmatprep.subr.mxu0 0.0
      %2146 = vmatpush2.msra.mxu0 0.0
      %2147 = vmatprep.subr.mxu0 0.0
      %2148 = vmatpush2.msra.mxu0 0.0
      %2149 = vmatprep.subr.mxu0 0.0
      %2150 = vmatpush2.msra.mxu0 0.0
      %2151 = vmatprep.subr.mxu0 0.0
      %2152 = vmatpush2.msra.mxu0 0.0
      %2153 = vmatprep.mubr.f32.mxu0 0.0
      %2154 = vmatmul.mubr.f32.gmra.mxu0 %v2041
      %v2155 = vpop.f32.mrf.mxu0
      %v2156 = vadd.f32 0.0, %v2155
      %v2157 = vpop.f32.mrf.mxu0
      %2158 = vmatprep.mubr.f32.mxu0 0.0
      %2159 = vmatmul.mubr.f32.gmra.mxu0 %v2042
      %v2160 = vpop.f32.mrf.mxu0
      %v2161 = vadd.f32 0.0, %v2160
      %v2162 = vpop.f32.mrf.mxu0
      %2163 = vmatprep.mubr.f32.mxu0 0.0
      %2164 = vmatmul.mubr.f32.gmra.mxu0 %v2043
      %v2165 = vpop.f32.mrf.mxu0
      %v2166 = vadd.f32 0.0, %v2165
      %v2167 = vpop.f32.mrf.mxu0
      %2168 = vmatprep.mubr.f32.mxu0 0.0
      %2169 = vmatmul.mubr.f32.gmra.mxu0 %v2044
      %v2170 = vpop.f32.mrf.mxu0
      %v2171 = vadd.f32 0.0, %v2170
      %v2172 = vpop.f32.mrf.mxu0
      %2173 = vmatprep.mubr.f32.mxu0 0.0
      %2174 = vmatmul.mubr.f32.gmra.mxu0 %v2045
      %v2175 = vpop.f32.mrf.mxu0
      %v2176 = vadd.f32 0.0, %v2175
      %v2177 = vpop.f32.mrf.mxu0
      %2178 = vmatprep.mubr.f32.mxu0 0.0
      %2179 = vmatmul.mubr.f32.gmra.mxu0 %v2046
      %v2180 = vpop.f32.mrf.mxu0
      %v2181 = vadd.f32 0.0, %v2180
      %v2182 = vpop.f32.mrf.mxu0
      %2183 = vmatprep.mubr.f32.mxu0 0.0
      %2184 = vmatmul.mubr.f32.gmra.mxu0 %v2047
      %v2185 = vpop.f32.mrf.mxu0
      %v2186 = vadd.f32 0.0, %v2185
      %v2187 = vpop.f32.mrf.mxu0
      %2188 = vmatprep.mubr.f32.mxu0 0.0
      %2189 = vmatmul.mubr.f32.gmra.mxu0 %v2048
      %v2190 = vpop.f32.mrf.mxu0
      %v2191 = vadd.f32 0.0, %v2190
      %v2192 = vpop.f32.mrf.mxu0
      %2193 = vmatprep.mubr.f32.mxu0 0.0
      %2194 = vmatmul.mubr.f32.gmra.mxu0 %v2049
      %v2195 = vpop.f32.mrf.mxu0
      %v2196 = vadd.f32 0.0, %v2195
      %v2197 = vpop.f32.mrf.mxu0
      %2198 = vmatprep.mubr.f32.mxu0 0.0
      %2199 = vmatmul.mubr.f32.gmra.mxu0 %v2050
      %v2200 = vpop.f32.mrf.mxu0
      %v2201 = vadd.f32 0.0, %v2200
      %v2202 = vpop.f32.mrf.mxu0
      %2203 = vmatprep.mubr.f32.mxu0 0.0
      %2204 = vmatmul.mubr.f32.gmra.mxu0 %v2051
      %v2205 = vpop.f32.mrf.mxu0
      %v2206 = vadd.f32 0.0, %v2205
      %v2207 = vpop.f32.mrf.mxu0
      %2208 = vmatprep.mubr.f32.mxu0 0.0
      %2209 = vmatmul.mubr.f32.gmra.mxu0 %v2052
      %v2210 = vpop.f32.mrf.mxu0
      %v2211 = vadd.f32 0.0, %v2210
      %v2212 = vpop.f32.mrf.mxu0
      %2213 = vmatprep.mubr.f32.mxu0 0.0
      %2214 = vmatmul.mubr.f32.gmra.mxu0 %v2053
      %v2215 = vpop.f32.mrf.mxu0
      %v2216 = vadd.f32 0.0, %v2215
      %v2217 = vpop.f32.mrf.mxu0
      %2218 = vmatprep.mubr.f32.mxu0 0.0
      %2219 = vmatmul.mubr.f32.gmra.mxu0 %v2054
      %v2220 = vpop.f32.mrf.mxu0
      %v2221 = vadd.f32 0.0, %v2220
      %v2222 = vpop.f32.mrf.mxu0
      %2223 = vmatprep.mubr.f32.mxu0 0.0
      %2224 = vmatmul.mubr.f32.gmra.mxu0 %v2055
      %v2225 = vpop.f32.mrf.mxu0
      %v2226 = vadd.f32 0.0, %v2225
      %v2227 = vpop.f32.mrf.mxu0
      %2228 = vmatprep.mubr.f32.mxu0 0.0
      %2229 = vmatmul.mubr.f32.gmra.mxu0 %v2056
      %v2230 = vpop.f32.mrf.mxu0
      %v2231 = vadd.f32 0.0, %v2230
      %v2232 = vpop.f32.mrf.mxu0
      %2233 = vmatprep.mubr.f32.mxu0 0.0
      %2234 = vmatmul.mubr.f32.gmra.mxu0 %v2057
      %v2235 = vpop.f32.mrf.mxu0
      %v2236 = vadd.f32 0.0, %v2235
      %v2237 = vpop.f32.mrf.mxu0
      %2238 = vmatprep.mubr.f32.mxu0 0.0
      %2239 = vmatmul.mubr.f32.gmra.mxu0 %v2058
      %v2240 = vpop.f32.mrf.mxu0
      %v2241 = vadd.f32 0.0, %v2240
      %v2242 = vpop.f32.mrf.mxu0
      %2243 = vmatprep.mubr.f32.mxu0 0.0
      %2244 = vmatmul.mubr.f32.gmra.mxu0 %v2059
      %v2245 = vpop.f32.mrf.mxu0
      %v2246 = vadd.f32 0.0, %v2245
      %v2247 = vpop.f32.mrf.mxu0
      %2248 = vmatprep.mubr.f32.mxu0 0.0
      %2249 = vmatmul.mubr.f32.gmra.mxu0 %v2060
      %v2250 = vpop.f32.mrf.mxu0
      %v2251 = vadd.f32 0.0, %v2250
      %v2252 = vpop.f32.mrf.mxu0
      %2253 = vmatprep.mubr.f32.mxu0 0.0
      %2254 = vmatmul.mubr.f32.gmra.mxu0 %v2061
      %v2255 = vpop.f32.mrf.mxu0
      %v2256 = vadd.f32 0.0, %v2255
      %v2257 = vpop.f32.mrf.mxu0
      %2258 = vmatprep.mubr.f32.mxu0 0.0
      %2259 = vmatmul.mubr.f32.gmra.mxu0 %v2062
      %v2260 = vpop.f32.mrf.mxu0
      %v2261 = vadd.f32 0.0, %v2260
      %v2262 = vpop.f32.mrf.mxu0
      %2263 = vmatprep.mubr.f32.mxu0 0.0
      %2264 = vmatmul.mubr.f32.gmra.mxu0 %v2063
      %v2265 = vpop.f32.mrf.mxu0
      %v2266 = vadd.f32 0.0, %v2265
      %v2267 = vpop.f32.mrf.mxu0
      %2268 = vmatprep.mubr.f32.mxu0 0.0
      %2269 = vmatmul.mubr.f32.gmra.mxu0 %v2064
      %v2270 = vpop.f32.mrf.mxu0
      %v2271 = vadd.f32 0.0, %v2270
      %v2272 = vpop.f32.mrf.mxu0
      %2273 = vmatprep.mubr.f32.mxu0 0.0
      %2274 = vmatmul.mubr.f32.gmra.mxu0 %v2065
      %v2275 = vpop.f32.mrf.mxu0
      %v2276 = vadd.f32 0.0, %v2275
      %v2277 = vpop.f32.mrf.mxu0
      %2278 = vmatprep.mubr.f32.mxu0 0.0
      %2279 = vmatmul.mubr.f32.gmra.mxu0 %v2066
      %v2280 = vpop.f32.mrf.mxu0
      %v2281 = vadd.f32 0.0, %v2280
      %v2282 = vpop.f32.mrf.mxu0
      %2283 = vmatprep.mubr.f32.mxu0 0.0
      %2284 = vmatmul.mubr.f32.gmra.mxu0 %v2067
      %v2285 = vpop.f32.mrf.mxu0
      %v2286 = vadd.f32 0.0, %v2285
      %v2287 = vpop.f32.mrf.mxu0
      %2288 = vmatprep.mubr.f32.mxu0 0.0
      %2289 = vmatmul.mubr.f32.gmra.mxu0 %v2068
      %v2290 = vpop.f32.mrf.mxu0
      %v2291 = vadd.f32 0.0, %v2290
      %v2292 = vpop.f32.mrf.mxu0
      %2293 = vmatprep.mubr.f32.mxu0 0.0
      %2294 = vmatmul.mubr.f32.gmra.mxu0 %v2069
      %v2295 = vpop.f32.mrf.mxu0
      %v2296 = vadd.f32 0.0, %v2295
      %v2297 = vpop.f32.mrf.mxu0
      %2298 = vmatprep.mubr.f32.mxu0 0.0
      %2299 = vmatmul.mubr.f32.gmra.mxu0 %v2070
      %v2300 = vpop.f32.mrf.mxu0
      %v2301 = vadd.f32 0.0, %v2300
      %v2302 = vpop.f32.mrf.mxu0
      %2303 = vmatprep.mubr.f32.mxu0 0.0
      %2304 = vmatmul.mubr.f32.gmra.mxu0 %v2071
      %v2305 = vpop.f32.mrf.mxu0
      %v2306 = vadd.f32 0.0, %v2305
      %v2307 = vpop.f32.mrf.mxu0
      %2308 = vmatprep.mubr.f32.mxu0 0.0
      %2309 = vmatmul.mubr.f32.gmra.mxu0 %v2072
      %v2310 = vpop.f32.mrf.mxu0
      %v2311 = vadd.f32 0.0, %v2310
      %v2312 = vpop.f32.mrf.mxu0
      %2313 = vdwg.mxu0
      %v2314 = vadd.f32 %v1705, %v2156
      %v2315 = vadd.f32 %v1706, %v2161
      %v2316 = vadd.f32 %v1707, %v2166
      %v2317 = vadd.f32 %v1708, %v2171
      %v2318 = vadd.f32 %v1709, %v2176
      %v2319 = vadd.f32 %v1710, %v2181
      %v2320 = vadd.f32 %v1711, %v2186
      %v2321 = vadd.f32 %v1712, %v2191
      %v2322 = vadd.f32 %v1713, %v2196
      %v2323 = vadd.f32 %v1714, %v2201
      %v2324 = vadd.f32 %v1715, %v2206
      %v2325 = vadd.f32 %v1716, %v2211
      %v2326 = vadd.f32 %v1717, %v2216
      %v2327 = vadd.f32 %v1718, %v2221
      %v2328 = vadd.f32 %v1719, %v2226
      %v2329 = vadd.f32 %v1720, %v2231
      %v2330 = vadd.f32 %v1721, %v2236
      %v2331 = vadd.f32 %v1722, %v2241
      %v2332 = vadd.f32 %v1723, %v2246
      %v2333 = vadd.f32 %v1724, %v2251
      %v2334 = vadd.f32 %v1725, %v2256
      %v2335 = vadd.f32 %v1726, %v2261
      %v2336 = vadd.f32 %v1727, %v2266
      %v2337 = vadd.f32 %v1728, %v2271
      %v2338 = vadd.f32 %v1729, %v2276
      %v2339 = vadd.f32 %v1730, %v2281
      %v2340 = vadd.f32 %v1731, %v2286
      %v2341 = vadd.f32 %v1732, %v2291
      %v2342 = vadd.f32 %v1733, %v2296
      %v2343 = vadd.f32 %v1734, %v2301
      %v2344 = vadd.f32 %v1735, %v2306
      %v2345 = vadd.f32 %v1736, %v2311
      %v2346 = vmul.f32 %v2314, 0.5
      %v2347 = vmul.f32 %v2315, 0.5
      %v2348 = vmul.f32 %v2316, 0.5
      %v2349 = vmul.f32 %v2317, 0.5
      %v2350 = vmul.f32 %v2318, 0.5
      %v2351 = vmul.f32 %v2319, 0.5
      %v2352 = vmul.f32 %v2320, 0.5
      %v2353 = vmul.f32 %v2321, 0.5
      %v2354 = vmul.f32 %v2322, 0.5
      %v2355 = vmul.f32 %v2323, 0.5
      %v2356 = vmul.f32 %v2324, 0.5
      %v2357 = vmul.f32 %v2325, 0.5
      %v2358 = vmul.f32 %v2326, 0.5
      %v2359 = vmul.f32 %v2327, 0.5
      %v2360 = vmul.f32 %v2328, 0.5
      %v2361 = vmul.f32 %v2329, 0.5
      %v2362 = vmul.f32 %v2330, 0.5
      %v2363 = vmul.f32 %v2331, 0.5
      %v2364 = vmul.f32 %v2332, 0.5
      %v2365 = vmul.f32 %v2333, 0.5
      %v2366 = vmul.f32 %v2334, 0.5
      %v2367 = vmul.f32 %v2335, 0.5
      %v2368 = vmul.f32 %v2336, 0.5
      %v2369 = vmul.f32 %v2337, 0.5
      %v2370 = vmul.f32 %v2338, 0.5
      %v2371 = vmul.f32 %v2339, 0.5
      %v2372 = vmul.f32 %v2340, 0.5
      %v2373 = vmul.f32 %v2341, 0.5
      %v2374 = vmul.f32 %v2342, 0.5
      %v2375 = vmul.f32 %v2343, 0.5
      %v2376 = vmul.f32 %v2344, 0.5
      %v2377 = vmul.f32 %v2345, 0.5
      %v2378 = vmul.f32 %v2314, 0.70710677
      %v2379 = vmul.f32 %v2315, 0.70710677
      %v2380 = vmul.f32 %v2316, 0.70710677
      %v2381 = vmul.f32 %v2317, 0.70710677
      %v2382 = vmul.f32 %v2318, 0.70710677
      %v2383 = vmul.f32 %v2319, 0.70710677
      %v2384 = vmul.f32 %v2320, 0.70710677
      %v2385 = vmul.f32 %v2321, 0.70710677
      %v2386 = vmul.f32 %v2322, 0.70710677
      %v2387 = vmul.f32 %v2323, 0.70710677
      %v2388 = vmul.f32 %v2324, 0.70710677
      %v2389 = vmul.f32 %v2325, 0.70710677
      %v2390 = vmul.f32 %v2326, 0.70710677
      %v2391 = vmul.f32 %v2327, 0.70710677
      %v2392 = vmul.f32 %v2328, 0.70710677
      %v2393 = vmul.f32 %v2329, 0.70710677
      %v2394 = vmul.f32 %v2330, 0.70710677
      %v2395 = vmul.f32 %v2331, 0.70710677
      %v2396 = vmul.f32 %v2332, 0.70710677
      %v2397 = vmul.f32 %v2333, 0.70710677
      %v2398 = vmul.f32 %v2334, 0.70710677
      %v2399 = vmul.f32 %v2335, 0.70710677
      %v2400 = vmul.f32 %v2336, 0.70710677
      %v2401 = vmul.f32 %v2337, 0.70710677
      %v2402 = vmul.f32 %v2338, 0.70710677
      %v2403 = vmul.f32 %v2339, 0.70710677
      %v2404 = vmul.f32 %v2340, 0.70710677
      %v2405 = vmul.f32 %v2341, 0.70710677
      %v2406 = vmul.f32 %v2342, 0.70710677
      %v2407 = vmul.f32 %v2343, 0.70710677
      %v2408 = vmul.f32 %v2344, 0.70710677
      %v2409 = vmul.f32 %v2345, 0.70710677
      %v2410 = verf.f32.pop %v2378
      %v2411 = verf.f32.pop %v2379
      %v2412 = verf.f32.pop %v2380
      %v2413 = verf.f32.pop %v2381
      %v2414 = verf.f32.pop %v2382
      %v2415 = verf.f32.pop %v2383
      %v2416 = verf.f32.pop %v2384
      %v2417 = verf.f32.pop %v2385
      %v2418 = verf.f32.pop %v2386
      %v2419 = verf.f32.pop %v2387
      %v2420 = verf.f32.pop %v2388
      %v2421 = verf.f32.pop %v2389
      %v2422 = verf.f32.pop %v2390
      %v2423 = verf.f32.pop %v2391
      %v2424 = verf.f32.pop %v2392
      %v2425 = verf.f32.pop %v2393
      %v2426 = verf.f32.pop %v2394
      %v2427 = verf.f32.pop %v2395
      %v2428 = verf.f32.pop %v2396
      %v2429 = verf.f32.pop %v2397
      %v2430 = verf.f32.pop %v2398
      %v2431 = verf.f32.pop %v2399
      %v2432 = verf.f32.pop %v2400
      %v2433 = verf.f32.pop %v2401
      %v2434 = verf.f32.pop %v2402
      %v2435 = verf.f32.pop %v2403
      %v2436 = verf.f32.pop %v2404
      %v2437 = verf.f32.pop %v2405
      %v2438 = verf.f32.pop %v2406
      %v2439 = verf.f32.pop %v2407
      %v2440 = verf.f32.pop %v2408
      %v2441 = verf.f32.pop %v2409
      %v2442 = vadd.f32 %v2410, 1.0
      %v2443 = vadd.f32 %v2411, 1.0
      %v2444 = vadd.f32 %v2412, 1.0
      %v2445 = vadd.f32 %v2413, 1.0
      %v2446 = vadd.f32 %v2414, 1.0
      %v2447 = vadd.f32 %v2415, 1.0
      %v2448 = vadd.f32 %v2416, 1.0
      %v2449 = vadd.f32 %v2417, 1.0
      %v2450 = vadd.f32 %v2418, 1.0
      %v2451 = vadd.f32 %v2419, 1.0
      %v2452 = vadd.f32 %v2420, 1.0
      %v2453 = vadd.f32 %v2421, 1.0
      %v2454 = vadd.f32 %v2422, 1.0
      %v2455 = vadd.f32 %v2423, 1.0
      %v2456 = vadd.f32 %v2424, 1.0
      %v2457 = vadd.f32 %v2425, 1.0
      %v2458 = vadd.f32 %v2426, 1.0
      %v2459 = vadd.f32 %v2427, 1.0
      %v2460 = vadd.f32 %v2428, 1.0
      %v2461 = vadd.f32 %v2429, 1.0
      %v2462 = vadd.f32 %v2430, 1.0
      %v2463 = vadd.f32 %v2431, 1.0
      %v2464 = vadd.f32 %v2432, 1.0
      %v2465 = vadd.f32 %v2433, 1.0
      %v2466 = vadd.f32 %v2434, 1.0
      %v2467 = vadd.f32 %v2435, 1.0
      %v2468 = vadd.f32 %v2436, 1.0
      %v2469 = vadd.f32 %v2437, 1.0
      %v2470 = vadd.f32 %v2438, 1.0
      %v2471 = vadd.f32 %v2439, 1.0
      %v2472 = vadd.f32 %v2440, 1.0
      %v2473 = vadd.f32 %v2441, 1.0
      %v2474 = vmul.f32 %v2346, %v2442
      %v2475 = vmul.f32 %v2347, %v2443
      %v2476 = vmul.f32 %v2348, %v2444
      %v2477 = vmul.f32 %v2349, %v2445
      %v2478 = vmul.f32 %v2350, %v2446
      %v2479 = vmul.f32 %v2351, %v2447
      %v2480 = vmul.f32 %v2352, %v2448
      %v2481 = vmul.f32 %v2353, %v2449
      %v2482 = vmul.f32 %v2354, %v2450
      %v2483 = vmul.f32 %v2355, %v2451
      %v2484 = vmul.f32 %v2356, %v2452
      %v2485 = vmul.f32 %v2357, %v2453
      %v2486 = vmul.f32 %v2358, %v2454
      %v2487 = vmul.f32 %v2359, %v2455
      %v2488 = vmul.f32 %v2360, %v2456
      %v2489 = vmul.f32 %v2361, %v2457
      %v2490 = vmul.f32 %v2362, %v2458
      %v2491 = vmul.f32 %v2363, %v2459
      %v2492 = vmul.f32 %v2364, %v2460
      %v2493 = vmul.f32 %v2365, %v2461
      %v2494 = vmul.f32 %v2366, %v2462
      %v2495 = vmul.f32 %v2367, %v2463
      %v2496 = vmul.f32 %v2368, %v2464
      %v2497 = vmul.f32 %v2369, %v2465
      %v2498 = vmul.f32 %v2370, %v2466
      %v2499 = vmul.f32 %v2371, %v2467
      %v2500 = vmul.f32 %v2372, %v2468
      %v2501 = vmul.f32 %v2373, %v2469
      %v2502 = vmul.f32 %v2374, %v2470
      %v2503 = vmul.f32 %v2375, %v2471
      %v2504 = vmul.f32 %v2376, %v2472
      %v2505 = vmul.f32 %v2377, %v2473
      %2506 = vst [vmem:[%s407] sm:$0xff] %v2474
      %2507 = vst [vmem:[%s407 + $0x8] sm:$0xff] %v2475
      %2508 = vst [vmem:[%s407 + $0x10] sm:$0xff] %v2476
      %2509 = vst [vmem:[%s407 + $0x18] sm:$0xff] %v2477
      %2510 = vst [vmem:[%s407 + $0x20] sm:$0xff] %v2478
      %2511 = vst [vmem:[%s407 + $0x28] sm:$0xff] %v2479
      %2512 = vst [vmem:[%s407 + $0x30] sm:$0xff] %v2480
      %2513 = vst [vmem:[%s407 + $0x38] sm:$0xff] %v2481
      %2514 = vst [vmem:[%s407 + $0x40] sm:$0xff] %v2482
      %2515 = vst [vmem:[%s407 + $0x48] sm:$0xff] %v2483
      %2516 = vst [vmem:[%s407 + $0x50] sm:$0xff] %v2484
      %2517 = vst [vmem:[%s407 + $0x58] sm:$0xff] %v2485
      %2518 = vst [vmem:[%s407 + $0x60] sm:$0xff] %v2486
      %2519 = vst [vmem:[%s407 + $0x68] sm:$0xff] %v2487
      %2520 = vst [vmem:[%s407 + $0x70] sm:$0xff] %v2488
      %2521 = vst [vmem:[%s407 + $0x78] sm:$0xff] %v2489
      %2522 = vst [vmem:[%s407 + $0x80] sm:$0xff] %v2490
      %2523 = vst [vmem:[%s407 + $0x88] sm:$0xff] %v2491
      %2524 = vst [vmem:[%s407 + $0x90] sm:$0xff] %v2492
      %2525 = vst [vmem:[%s407 + $0x98] sm:$0xff] %v2493
      %2526 = vst [vmem:[%s407 + $0xa0] sm:$0xff] %v2494
      %2527 = vst [vmem:[%s407 + $0xa8] sm:$0xff] %v2495
      %2528 = vst [vmem:[%s407 + $0xb0] sm:$0xff] %v2496
      %2529 = vst [vmem:[%s407 + $0xb8] sm:$0xff] %v2497
      %2530 = vst [vmem:[%s407 + $0xc0] sm:$0xff] %v2498
      %2531 = vst [vmem:[%s407 + $0xc8] sm:$0xff] %v2499
      %2532 = vst [vmem:[%s407 + $0xd0] sm:$0xff] %v2500
      %2533 = vst [vmem:[%s407 + $0xd8] sm:$0xff] %v2501
      %2534 = vst [vmem:[%s407 + $0xe0] sm:$0xff] %v2502
      %2535 = vst [vmem:[%s407 + $0xe8] sm:$0xff] %v2503
      %2536 = vst [vmem:[%s407 + $0xf0] sm:$0xff] %v2504
      %2537 = vst [vmem:[%s407 + $0xf8] sm:$0xff] %v2505
      %v2538 = vadd.f32 %v2474, %v2475
      %v2539 = vadd.f32 %v2538, %v2476
      %v2540 = vadd.f32 %v2539, %v2477
      %v2541 = vadd.f32 %v2540, %v2478
      %v2542 = vadd.f32 %v2541, %v2479
      %v2543 = vadd.f32 %v2542, %v2480
      %v2544 = vadd.f32 %v2543, %v2481
      %v2545 = vadd.f32 %v2544, %v2482
      %v2546 = vadd.f32 %v2545, %v2483
      %v2547 = vadd.f32 %v2546, %v2484
      %v2548 = vadd.f32 %v2547, %v2485
      %v2549 = vadd.f32 %v2548, %v2486
      %v2550 = vadd.f32 %v2549, %v2487
      %v2551 = vadd.f32 %v2550, %v2488
      %v2552 = vadd.f32 %v2551, %v2489
      %v2553 = vadd.f32 %v2552, %v2490
      %v2554 = vadd.f32 %v2553, %v2491
      %v2555 = vadd.f32 %v2554, %v2492
      %v2556 = vadd.f32 %v2555, %v2493
      %v2557 = vadd.f32 %v2556, %v2494
      %v2558 = vadd.f32 %v2557, %v2495
      %v2559 = vadd.f32 %v2558, %v2496
      %v2560 = vadd.f32 %v2559, %v2497
      %v2561 = vadd.f32 %v2560, %v2498
      %v2562 = vadd.f32 %v2561, %v2499
      %v2563 = vadd.f32 %v2562, %v2500
      %v2564 = vadd.f32 %v2563, %v2501
      %v2565 = vadd.f32 %v2564, %v2502
      %v2566 = vadd.f32 %v2565, %v2503
      %v2567 = vadd.f32 %v2566, %v2504
      %v2568 = vadd.f32 %v2567, %v2505
      %v2569 = vrot.slane %v2568, 4
      %v2570 = vadd.f32 %v2568, %v2569
      %v2571 = vrot.slane %v2570, 2
      %v2572 = vadd.f32 %v2570, %v2571
      %v2573 = vrot.slane %v2572, 1
      %v2574 = vadd.f32 %v2572, %v2573
      %v2575 = vmul.f32 %v2474, %v2474
      %v2576 = vmul.f32 %v2475, %v2475
      %v2577 = vmul.f32 %v2476, %v2476
      %v2578 = vmul.f32 %v2477, %v2477
      %v2579 = vmul.f32 %v2478, %v2478
      %v2580 = vmul.f32 %v2479, %v2479
      %v2581 = vmul.f32 %v2480, %v2480
      %v2582 = vmul.f32 %v2481, %v2481
      %v2583 = vmul.f32 %v2482, %v2482
      %v2584 = vmul.f32 %v2483, %v2483
      %v2585 = vmul.f32 %v2484, %v2484
      %v2586 = vmul.f32 %v2485, %v2485
      %v2587 = vmul.f32 %v2486, %v2486
      %v2588 = vmul.f32 %v2487, %v2487
      %v2589 = vmul.f32 %v2488, %v2488
      %v2590 = vmul.f32 %v2489, %v2489
      %v2591 = vmul.f32 %v2490, %v2490
      %v2592 = vmul.f32 %v2491, %v2491
      %v2593 = vmul.f32 %v2492, %v2492
      %v2594 = vmul.f32 %v2493, %v2493
      %v2595 = vmul.f32 %v2494, %v2494
      %v2596 = vmul.f32 %v2495, %v2495
      %v2597 = vmul.f32 %v2496, %v2496
      %v2598 = vmul.f32 %v2497, %v2497
      %v2599 = vmul.f32 %v2498, %v2498
      %v2600 = vmul.f32 %v2499, %v2499
      %v2601 = vmul.f32 %v2500, %v2500
      %v2602 = vmul.f32 %v2501, %v2501
      %v2603 = vmul.f32 %v2502, %v2502
      %v2604 = vmul.f32 %v2503, %v2503
      %v2605 = vmul.f32 %v2504, %v2504
      %v2606 = vmul.f32 %v2505, %v2505
      %v2607 = vadd.f32 %v2575, %v2576
      %v2608 = vadd.f32 %v2607, %v2577
      %v2609 = vadd.f32 %v2608, %v2578
      %v2610 = vadd.f32 %v2609, %v2579
      %v2611 = vadd.f32 %v2610, %v2580
      %v2612 = vadd.f32 %v2611, %v2581
      %v2613 = vadd.f32 %v2612, %v2582
      %v2614 = vadd.f32 %v2613, %v2583
      %v2615 = vadd.f32 %v2614, %v2584
      %v2616 = vadd.f32 %v2615, %v2585
      %v2617 = vadd.f32 %v2616, %v2586
      %v2618 = vadd.f32 %v2617, %v2587
      %v2619 = vadd.f32 %v2618, %v2588
      %v2620 = vadd.f32 %v2619, %v2589
      %v2621 = vadd.f32 %v2620, %v2590
      %v2622 = vadd.f32 %v2621, %v2591
      %v2623 = vadd.f32 %v2622, %v2592
      %v2624 = vadd.f32 %v2623, %v2593
      %v2625 = vadd.f32 %v2624, %v2594
      %v2626 = vadd.f32 %v2625, %v2595
      %v2627 = vadd.f32 %v2626, %v2596
      %v2628 = vadd.f32 %v2627, %v2597
      %v2629 = vadd.f32 %v2628, %v2598
      %v2630 = vadd.f32 %v2629, %v2599
      %v2631 = vadd.f32 %v2630, %v2600
      %v2632 = vadd.f32 %v2631, %v2601
      %v2633 = vadd.f32 %v2632, %v2602
      %v2634 = vadd.f32 %v2633, %v2603
      %v2635 = vadd.f32 %v2634, %v2604
      %v2636 = vadd.f32 %v2635, %v2605
      %v2637 = vadd.f32 %v2636, %v2606
      %v2638 = vrot.slane %v2637, 4
      %v2639 = vadd.f32 %v2637, %v2638
      %v2640 = vrot.slane %v2639, 2
      %v2641 = vadd.f32 %v2639, %v2640
      %v2642 = vrot.slane %v2641, 1
      %v2643 = vadd.f32 %v2641, %v2642
      %vm2644 = vcmask 1040384
      %v2645 = vsel %vm2644, %v2574, %v2643
      %2646 = vst [vmem:[%s412] sm:$0x3] %v2645
      %s2647 = smul.u32 32, %s21
      %p2648 = scmp.lt.s32.totalorder %s2647, 63
      %s2649 = scalar_select %p2648, %s2647, 63
      %s2650 = smul.addr %s2649, 8
      %s2651 = scalar_lea.vmem %s8, %s2650
      %p2652 = scmp.lt.s32.totalorder %s21, 1
      %s2653 = scalar_select %p2652, %s21, 1
      %s2654 = smul.addr %s2653, 2
      %s2655 = scalar_lea.vmem %s9, %s2654
      // Predicated region
      $region53: #{_lambda_.10} parent=51 // pred_check
        %p2656 = pneg %p227
      $region54: #{_lambda_.10} parent=51 // pred_check_branch
        %2658 = sbr.rel (%p2656) target = $region56
      $region55: #{_lambda_.10} parent=51 // pred_region
        %s2659 = smul.u32 32, %s21
      $region56: #{_lambda_.10} parent=51 // pred_fallthru
        _
      // Predicated region
      $region57: #{_lambda_.10} parent=51 // pred_check
        %p2660 = pneg %p253
      $region58: #{_lambda_.10} parent=51 // pred_check_branch
        %2662 = sbr.rel (%p2660) target = $region60
      $region59: #{_lambda_.10} parent=51 // pred_region
        _
      $region60: #{_lambda_.10} parent=51 // pred_fallthru
        _
    $region52: #{_lambda_.10} parent=5 // pred_fallthru
      _
    %p2663 = scmp.le.s32.totalorder 2, %s16
    // Predicated region
    $region61: #{_lambda_.10} parent=5 // pred_check
      %p2664 = pneg %p2663
    $region62: #{_lambda_.10} parent=5 // pred_check_branch
      %2666 = sbr.rel (%p2664) target = $region64
    $region63: #{_lambda_.10} parent=5 // pred_region
      %s2667 = ssub.s32 %s16, 2
      // Predicated region
      $region65: #{_lambda_.10} parent=63 // pred_check
        %p2668 = pneg %p233
      $region66: #{_lambda_.10} parent=63 // pred_check_branch
        %2670 = sbr.rel (%p2668) target = $region68
      $region67: #{_lambda_.10} parent=63 // pred_region
        %s2671 = smul.u32 32, %s22
        %p2672 = scmp.lt.s32.totalorder %s2671, 63
        %s2673 = scalar_select %p2672, %s2671, 63
        %s2674 = smul.addr %s2673, 8
        %s2675 = scalar_lea.vmem %s8, %s2674
      $region68: #{_lambda_.10} parent=63 // pred_fallthru
        _
      // Predicated region
      $region69: #{_lambda_.10} parent=63 // pred_check
        %p2676 = pneg %p259
      $region70: #{_lambda_.10} parent=63 // pred_check_branch
        %2678 = sbr.rel (%p2676) target = $region72
      $region71: #{_lambda_.10} parent=63 // pred_region
        %p2679 = scmp.lt.s32.totalorder %s22, 1
        %s2680 = scalar_select %p2679, %s22, 1
        %s2681 = smul.addr %s2680, 2
        %s2682 = scalar_lea.vmem %s9, %s2681
      $region72: #{_lambda_.10} parent=63 // pred_fallthru
        _
    $region64: #{_lambda_.10} parent=5 // pred_fallthru
      _
  $region6: #{_lambda_.10} parent=0 // loop_footer
    %s20 = sadd.s32 1, %s16
  $region7: #{_lambda_.10} parent=0 // loop_footer_branch
    %15 = sbr.rel target = $region3
  $region8: #{_lambda_.10} parent=0 // loop_exit
    _

</llo_original>
